<compile_context>
chip_gen: v5e
topology: v5e:2x2
jax: 0.10.0
libtpu: 0.0.40
codegen_flags: <defaults>
</compile_context>

<pallas_src>
import jax
import jax.numpy as jnp
from jax import lax
from jax.experimental import pallas as pl
from jax.experimental.pallas import tpu as pltpu

# ---------------- configuration (small, consistent with the module) ----------------
INPUT_SIZE = 16
HIDDEN_SIZE = 32
NUM_LAYERS = 2
NUM_BLOCKS = 2
BATCH = 2
SEQ = 8
LN_EPS = 1e-5
DECAY = 0.1


# ---------------- small in-kernel math helpers ----------------
def _gelu(x):
    # TODO(synk): PyTorch nn.GELU default is the exact erf GELU; tanh approximation used.
    c = jnp.float32(0.7978845608028654)  # sqrt(2/pi)
    return 0.5 * x * (1.0 + jnp.tanh(c * (x + 0.044715 * x * x * x)))


def _layernorm(x, gamma, beta):
    mu = jnp.mean(x, axis=-1, keepdims=True)
    var = jnp.mean((x - mu) ** 2, axis=-1, keepdims=True)
    return (x - mu) * lax.rsqrt(var + LN_EPS) * gamma + beta


# ---------------- fused forward kernel ----------------
def make_fused_kernel(B, T, H, L, NB):
    TB = T * B

    def kernel(x_ref, pw_ref, pb_ref, pg_ref, pbeta_ref,
               wih_ref, whh_ref, bias_ref, bg_ref, bbeta_ref,
               wa1_ref, ba1_ref, ga_ref, bta_ref, wa2_ref, ba2_ref,
               wr1_ref, br1_ref, gr_ref, btr_ref, wr2_ref, br2_ref,
               score_ref, h_out_ref, c_out_ref, n_out_ref, m_out_ref,
               gx_ref, lstm_ref):
        f32 = jnp.float32

        # ---- apply_exponential_attention: recency-weighted exponential scaling ----
        row = lax.broadcasted_iota(jnp.int32, (TB, 1), 0).astype(f32)
        tpos = jnp.floor(row * (1.0 / B))                         # time index of each row
        wexp = jnp.exp(jnp.float32(DECAY) * (tpos - (T - 1)))     # (TB, 1)

        # ---- feature projection: Linear -> LayerNorm -> GELU ----
        xw = x_ref[...] * wexp                                    # (TB, I)
        y = jnp.dot(xw, pw_ref[...], preferred_element_type=f32) + pb_ref[...]
        X = _gelu(_layernorm(y, pg_ref[...], pbeta_ref[...]))     # (TB, H)

        # ---- xLSTM blocks: stacked stabilized sLSTM, fully unrolled over T ----
        for blk in range(NB):
            # Hoisted non-recurrent layer-0 input projection over all timesteps.
            gx_ref[...] = (jnp.dot(X, wih_ref[blk, 0], preferred_element_type=f32)
                           + bias_ref[blk, 0])                    # (TB, 4H)

            h = [jnp.zeros((B, H), f32) for _ in range(L)]
            c = [jnp.zeros((B, H), f32) for _ in range(L)]
            n = [jnp.zeros((B, H), f32) for _ in range(L)]
            m = [jnp.zeros((B, H), f32) for _ in range(L)]

            for t in range(T):                                    # static unroll over time
                inp_new = None
                for l in range(L):                                # static unroll over layers
                    rec = jnp.dot(h[l], whh_ref[blk, l], preferred_element_type=f32)
                    if l == 0:
                        gates = gx_ref[pl.ds(t * B, B), :] + rec          # (B, 4H)
                    else:
                        gates = (jnp.dot(inp_new, wih_ref[blk, l],
                                         preferred_element_type=f32)
                                 + rec + bias_ref[blk, l])
                    i_pre = gates[:, 0 * H:1 * H]
                    f_pre = gates[:, 1 * H:2 * H]
                    z_t = jnp.tanh(gates[:, 2 * H:3 * H])
                    o_t = jax.nn.sigmoid(gates[:, 3 * H:4 * H])
                    # stabilized exponential gating
                    m_new = jnp.maximum(f_pre + m[l], i_pre)
                    i_g = jnp.exp(i_pre - m_new)
                    f_g = jnp.exp(f_pre + m[l] - m_new)
                    c_new = f_g * c[l] + i_g * z_t
                    n_new = f_g * n[l] + i_g
                    h_new = o_t * c_new * pl.reciprocal(
                        jnp.maximum(jnp.abs(n_new), 1.0), approx=True)
                    h[l], c[l], n[l], m[l] = h_new, c_new, n_new, m_new
                    inp_new = h_new
                lstm_ref[pl.ds(t * B, B), :] = inp_new            # top-layer output at t

            # Block epilogue on the whole slab: GELU + residual + LayerNorm (dropout no-op).
            res = _gelu(lstm_ref[...]) + X
            X = _layernorm(res, bg_ref[blk], bbeta_ref[blk])      # (TB, H)

            for l in range(L):
                h_out_ref[blk, l] = h[l]
                c_out_ref[blk, l] = c[l]
                n_out_ref[blk, l] = n[l]
                m_out_ref[blk, l] = m[l]

        # ---- temporal attention (batched over B): Linear -> LN -> Tanh -> Linear -> softmax(T) ----
        s1 = jnp.dot(X, wa1_ref[...], preferred_element_type=f32) + ba1_ref[...]
        s1 = jnp.tanh(_layernorm(s1, ga_ref[...], bta_ref[...]))  # (TB, Hh)
        logits = jnp.dot(s1, wa2_ref[...], preferred_element_type=f32) + ba2_ref[...]  # (TB, 1)

        # softmax over time within each batch element; a global shift is valid per group
        gmax = jnp.max(logits, axis=0, keepdims=True)
        e = jnp.exp(logits - gmax)                                # (TB, 1)

        # selection matrices (batch <-> time-major rows), built from iota: avoids reshapes
        bi = lax.broadcasted_iota(jnp.int32, (B, TB), 0).astype(f32)
        ri = lax.broadcasted_iota(jnp.int32, (B, TB), 1).astype(f32)
        rb = ri - B * jnp.floor(ri * (1.0 / B))
        sel = jnp.where(rb == bi, 1.0, 0.0)                       # (B, TB): sel[b, t*B+b] = 1
        ri2 = lax.broadcasted_iota(jnp.int32, (TB, B), 0).astype(f32)
        bi2 = lax.broadcasted_iota(jnp.int32, (TB, B), 1).astype(f32)
        rb2 = ri2 - B * jnp.floor(ri2 * (1.0 / B))
        selT = jnp.where(rb2 == bi2, 1.0, 0.0)                    # (TB, B)

        denom_b = jnp.dot(sel, e, preferred_element_type=f32)     # (B, 1)  sum_t exp
        denom_r = jnp.dot(selT, denom_b, preferred_element_type=f32)  # (TB, 1) per-row denom
        attn = e * pl.reciprocal(denom_r, approx=True)            # (TB, 1)

        weighted = X * attn                                       # (TB, H)
        # nan_to_num(nan=0, posinf=0, neginf=0) equivalent
        fmax = jnp.float32(jnp.finfo(jnp.float32).max)
        finite = (weighted == weighted) & (jnp.abs(weighted) <= fmax)
        weighted = jnp.where(finite, weighted, 0.0)
        ctx = jnp.dot(sel, weighted, preferred_element_type=f32)  # (B, H) attention pooling

        # ---- PHQ-8 regressor: Linear -> LN -> GELU -> (Dropout no-op) -> Linear, clamp ----
        r1 = jnp.dot(ctx, wr1_ref[...], preferred_element_type=f32) + br1_ref[...]
        r1 = _gelu(_layernorm(r1, gr_ref[...], btr_ref[...]))
        out = jnp.dot(r1, wr2_ref[...], preferred_element_type=f32) + br2_ref[...]
        score_ref[...] = jnp.clip(out, 0.0, 24.0)

    return kernel


def _fullspec(shape):
    zeros = (0,) * len(shape)
    return pl.BlockSpec(shape, lambda i, _z=zeros: _z)


# ---------------- forward pass (single fused pallas_call) ----------------
def depression_predictor_forward(params, x):
    B, T, I = x.shape
    H, L, NB = HIDDEN_SIZE, NUM_LAYERS, NUM_BLOCKS

    # time-major flatten on the host: row = t*B + b
    x_tb = jnp.transpose(x.astype(jnp.float32), (1, 0, 2)).reshape(T * B, I)

    inputs = (
        x_tb,
        params["proj_w"], params["proj_b"], params["proj_g"], params["proj_beta"],
        params["wih"], params["whh"], params["bias"], params["blk_g"], params["blk_beta"],
        params["attn_w1"], params["attn_b1"], params["attn_g"], params["attn_beta"],
        params["attn_w2"], params["attn_b2"],
        params["reg_w1"], params["reg_b1"], params["reg_g"], params["reg_beta"],
        params["reg_w2"], params["reg_b2"],
    )

    out_shapes = (
        jax.ShapeDtypeStruct((B, 1), jnp.float32),            # PHQ-8 score
        jax.ShapeDtypeStruct((NB, L, B, H), jnp.float32),     # h
        jax.ShapeDtypeStruct((NB, L, B, H), jnp.float32),     # c
        jax.ShapeDtypeStruct((NB, L, B, H), jnp.float32),     # n
        jax.ShapeDtypeStruct((NB, L, B, H), jnp.float32),     # m
    )

    kernel = make_fused_kernel(B, T, H, L, NB)
    score, h_s, c_s, n_s, m_s = pl.pallas_call(
        kernel,
        out_shape=out_shapes,
        grid=(1,),
        in_specs=[_fullspec(a.shape) for a in inputs],
        out_specs=tuple(_fullspec(s.shape) for s in out_shapes),
        scratch_shapes=[
            pltpu.VMEM((T * B, 4 * H), jnp.float32),   # hoisted layer-0 gates
            pltpu.VMEM((T * B, H), jnp.float32),       # top-layer outputs of current block
        ],
        compiler_params=pltpu.CompilerParams(dimension_semantics=("arbitrary",)),
    )(*inputs)

    hidden_states = [(h_s[i], c_s[i], n_s[i], m_s[i]) for i in range(NB)]
    return score, hidden_states


# ---------------- deterministic parameter construction ----------------
def init_params(key):
    H, I, Hh, L, NB = HIDDEN_SIZE, INPUT_SIZE, HIDDEN_SIZE // 2, NUM_LAYERS, NUM_BLOCKS
    ks = iter(jax.random.split(key, 12))

    def nrm(k, shape, fan_in):
        return jax.random.normal(k, shape, dtype=jnp.float32) / jnp.sqrt(jnp.float32(fan_in))

    return {
        "proj_w": nrm(next(ks), (I, H), I),
        "proj_b": jnp.zeros((1, H), jnp.float32),
        "proj_g": jnp.ones((1, H), jnp.float32),
        "proj_beta": jnp.zeros((1, H), jnp.float32),
        "wih": nrm(next(ks), (NB, L, H, 4 * H), H),
        "whh": nrm(next(ks), (NB, L, H, 4 * H), H),
        "bias": nrm(next(ks), (NB, L, 1, 4 * H), H),
        "blk_g": jnp.ones((NB, 1, H), jnp.float32),
        "blk_beta": jnp.zeros((NB, 1, H), jnp.float32),
        "attn_w1": nrm(next(ks), (H, Hh), H),
        "attn_b1": jnp.zeros((1, Hh), jnp.float32),
        "attn_g": jnp.ones((1, Hh), jnp.float32),
        "attn_beta": jnp.zeros((1, Hh), jnp.float32),
        "attn_w2": nrm(next(ks), (Hh, 1), Hh),
        "attn_b2": jnp.zeros((1, 1), jnp.float32),
        "reg_w1": nrm(next(ks), (H, H), H),
        "reg_b1": jnp.zeros((1, H), jnp.float32),
        "reg_g": jnp.ones((1, H), jnp.float32),
        "reg_beta": jnp.zeros((1, H), jnp.float32),
        "reg_w2": nrm(next(ks), (H, 1), H),
        "reg_b2": jnp.zeros((1, 1), jnp.float32),
    }


if __name__ == "__main__":
    key = jax.random.PRNGKey(0)
    pkey, xkey = jax.random.split(key)
    params = init_params(pkey)
    x = jax.random.normal(xkey, (BATCH, SEQ, INPUT_SIZE), dtype=jnp.float32)

    score, hidden_states = depression_predictor_forward(params, x)
    score = jax.block_until_ready(score)
    for st in hidden_states:
        for a in st:
            jax.block_until_ready(a)

    assert score.shape == (BATCH, 1)
    assert bool(jnp.all(jnp.isfinite(score)))
    assert bool(jnp.all(score >= 0.0)) and bool(jnp.all(score <= 24.0))
    print("KERNEL_OK")
</pallas_src>

<mosaic_0001>
module attributes {stable_mosaic.version = 11 : i64} {
  func.func @kernel(%arg0: i32, %arg1: memref<16x16xf32, #tpu.memory_space<vmem>>, %arg2: memref<16x32xf32, #tpu.memory_space<vmem>>, %arg3: memref<1x32xf32, #tpu.memory_space<vmem>>, %arg4: memref<1x32xf32, #tpu.memory_space<vmem>>, %arg5: memref<1x32xf32, #tpu.memory_space<vmem>>, %arg6: memref<2x2x32x128xf32, #tpu.memory_space<vmem>>, %arg7: memref<2x2x32x128xf32, #tpu.memory_space<vmem>>, %arg8: memref<2x2x1x128xf32, #tpu.memory_space<vmem>>, %arg9: memref<2x1x32xf32, #tpu.memory_space<vmem>>, %arg10: memref<2x1x32xf32, #tpu.memory_space<vmem>>, %arg11: memref<32x16xf32, #tpu.memory_space<vmem>>, %arg12: memref<1x16xf32, #tpu.memory_space<vmem>>, %arg13: memref<1x16xf32, #tpu.memory_space<vmem>>, %arg14: memref<1x16xf32, #tpu.memory_space<vmem>>, %arg15: memref<16x1xf32, #tpu.memory_space<vmem>>, %arg16: memref<1x1xf32, #tpu.memory_space<vmem>>, %arg17: memref<32x32xf32, #tpu.memory_space<vmem>>, %arg18: memref<1x32xf32, #tpu.memory_space<vmem>>, %arg19: memref<1x32xf32, #tpu.memory_space<vmem>>, %arg20: memref<1x32xf32, #tpu.memory_space<vmem>>, %arg21: memref<32x1xf32, #tpu.memory_space<vmem>>, %arg22: memref<1x1xf32, #tpu.memory_space<vmem>>, %arg23: memref<2x1xf32, #tpu.memory_space<vmem>>, %arg24: memref<2x2x2x32xf32, #tpu.memory_space<vmem>>, %arg25: memref<2x2x2x32xf32, #tpu.memory_space<vmem>>, %arg26: memref<2x2x2x32xf32, #tpu.memory_space<vmem>>, %arg27: memref<2x2x2x32xf32, #tpu.memory_space<vmem>>, %arg28: memref<16x128xf32, #tpu.memory_space<vmem>>, %arg29: memref<16x32xf32, #tpu.memory_space<vmem>>) attributes {dimension_semantics = [#tpu.dimension_semantics<arbitrary>], iteration_bounds = array<i64: 1>, scalar_prefetch = 0 : i64, scratch_operands = 2 : i64, tpu.core_type = #tpu.core_type<tc>, window_params = [{pipeline_mode = #tpu.pipeline_mode<synchronous>, transform_indices = @transform_0, window_bounds = array<i64: 16, 16>}, {pipeline_mode = #tpu.pipeline_mode<synchronous>, transform_indices = @transform_1, window_bounds = array<i64: 16, 32>}, {pipeline_mode = #tpu.pipeline_mode<synchronous>, transform_indices = @transform_2, window_bounds = array<i64: 1, 32>}, {pipeline_mode = #tpu.pipeline_mode<synchronous>, transform_indices = @transform_3, window_bounds = array<i64: 1, 32>}, {pipeline_mode = #tpu.pipeline_mode<synchronous>, transform_indices = @transform_4, window_bounds = array<i64: 1, 32>}, {pipeline_mode = #tpu.pipeline_mode<synchronous>, transform_indices = @transform_5, window_bounds = array<i64: 2, 2, 32, 128>}, {pipeline_mode = #tpu.pipeline_mode<synchronous>, transform_indices = @transform_6, window_bounds = array<i64: 2, 2, 32, 128>}, {pipeline_mode = #tpu.pipeline_mode<synchronous>, transform_indices = @transform_7, window_bounds = array<i64: 2, 2, 1, 128>}, {pipeline_mode = #tpu.pipeline_mode<synchronous>, transform_indices = @transform_8, window_bounds = array<i64: 2, 1, 32>}, {pipeline_mode = #tpu.pipeline_mode<synchronous>, transform_indices = @transform_9, window_bounds = array<i64: 2, 1, 32>}, {pipeline_mode = #tpu.pipeline_mode<synchronous>, transform_indices = @transform_10, window_bounds = array<i64: 32, 16>}, {pipeline_mode = #tpu.pipeline_mode<synchronous>, transform_indices = @transform_11, window_bounds = array<i64: 1, 16>}, {pipeline_mode = #tpu.pipeline_mode<synchronous>, transform_indices = @transform_12, window_bounds = array<i64: 1, 16>}, {pipeline_mode = #tpu.pipeline_mode<synchronous>, transform_indices = @transform_13, window_bounds = array<i64: 1, 16>}, {pipeline_mode = #tpu.pipeline_mode<synchronous>, transform_indices = @transform_14, window_bounds = array<i64: 16, 1>}, {pipeline_mode = #tpu.pipeline_mode<synchronous>, transform_indices = @transform_15, window_bounds = array<i64: 1, 1>}, {pipeline_mode = #tpu.pipeline_mode<synchronous>, transform_indices = @transform_16, window_bounds = array<i64: 32, 32>}, {pipeline_mode = #tpu.pipeline_mode<synchronous>, transform_indices = @transform_17, window_bounds = array<i64: 1, 32>}, {pipeline_mode = #tpu.pipeline_mode<synchronous>, transform_indices = @transform_18, window_bounds = array<i64: 1, 32>}, {pipeline_mode = #tpu.pipeline_mode<synchronous>, transform_indices = @transform_19, window_bounds = array<i64: 1, 32>}, {pipeline_mode = #tpu.pipeline_mode<synchronous>, transform_indices = @transform_20, window_bounds = array<i64: 32, 1>}, {pipeline_mode = #tpu.pipeline_mode<synchronous>, transform_indices = @transform_21, window_bounds = array<i64: 1, 1>}, {pipeline_mode = #tpu.pipeline_mode<synchronous>, transform_indices = @transform_22, window_bounds = array<i64: 2, 1>}, {pipeline_mode = #tpu.pipeline_mode<synchronous>, transform_indices = @transform_23, window_bounds = array<i64: 2, 2, 2, 32>}, {pipeline_mode = #tpu.pipeline_mode<synchronous>, transform_indices = @transform_24, window_bounds = array<i64: 2, 2, 2, 32>}, {pipeline_mode = #tpu.pipeline_mode<synchronous>, transform_indices = @transform_25, window_bounds = array<i64: 2, 2, 2, 32>}, {pipeline_mode = #tpu.pipeline_mode<synchronous>, transform_indices = @transform_26, window_bounds = array<i64: 2, 2, 2, 32>}]} {
    %0 = tpu.iota {dimensions = array<i32: 0>} : vector<16x1xi32>
    %1 = arith.sitofp %0 : vector<16x1xi32> to vector<16x1xf32>
    %cst = arith.constant 5.000000e-01 : f32
    %2 = vector.broadcast %cst : f32 to vector<16x1xf32>
    %3 = arith.mulf %1, %2 : vector<16x1xf32>
    %4 = math.floor %3 : vector<16x1xf32>
    %cst_0 = arith.constant 7.000000e+00 : f32
    %5 = vector.broadcast %cst_0 : f32 to vector<16x1xf32>
    %6 = arith.subf %4, %5 : vector<16x1xf32>
    %cst_1 = arith.constant 1.000000e-01 : f32
    %7 = vector.broadcast %cst_1 : f32 to vector<16x1xf32>
    %8 = arith.mulf %7, %6 : vector<16x1xf32>
    %9 = math.exp %8 : vector<16x1xf32>
    %c0 = arith.constant 0 : index
    %c0_2 = arith.constant 0 : index
    %10 = vector.load %arg1[%c0, %c0_2] : memref<16x16xf32, #tpu.memory_space<vmem>>, vector<16x16xf32>
    %11 = vector.broadcast %9 : vector<16x1xf32> to vector<16x16xf32>
    %12 = arith.mulf %10, %11 : vector<16x16xf32>
    %c0_3 = arith.constant 0 : index
    %c0_4 = arith.constant 0 : index
    %13 = vector.load %arg2[%c0_3, %c0_4] : memref<16x32xf32, #tpu.memory_space<vmem>>, vector<16x32xf32>
    %cst_5 = arith.constant dense<0.000000e+00> : vector<16x32xf32>
    %14 = tpu.matmul %12, %13, %cst_5 {dimension_numbers = #tpu.dot_dimension_numbers<[1], [0], [0], [1], [0, 0, 1, 1], [], []>} : vector<16x16xf32>, vector<16x32xf32>, vector<16x32xf32> -> vector<16x32xf32>
    %c0_6 = arith.constant 0 : index
    %c0_7 = arith.constant 0 : index
    %15 = vector.load %arg3[%c0_6, %c0_7] : memref<1x32xf32, #tpu.memory_space<vmem>>, vector<1x32xf32>
    %16 = vector.broadcast %15 : vector<1x32xf32> to vector<16x32xf32>
    %17 = arith.addf %14, %16 : vector<16x32xf32>
    %c0_8 = arith.constant 0 : index
    %c0_9 = arith.constant 0 : index
    %18 = vector.load %arg4[%c0_8, %c0_9] : memref<1x32xf32, #tpu.memory_space<vmem>>, vector<1x32xf32>
    %c0_10 = arith.constant 0 : index
    %c0_11 = arith.constant 0 : index
    %19 = vector.load %arg5[%c0_10, %c0_11] : memref<1x32xf32, #tpu.memory_space<vmem>>, vector<1x32xf32>
    %cst_12 = arith.constant dense<0.000000e+00> : vector<16xf32>
    %20 = vector.multi_reduction <add>, %17, %cst_12 [1] : vector<16x32xf32> to vector<16xf32>
    %21 = vector.shape_cast %20 : vector<16xf32> to vector<16x1xf32>
    %cst_13 = arith.constant 3.200000e+01 : f32
    %22 = vector.broadcast %cst_13 : f32 to vector<16x1xf32>
    %23 = arith.divf %21, %22 : vector<16x1xf32>
    %24 = vector.broadcast %23 : vector<16x1xf32> to vector<16x32xf32>
    %25 = arith.subf %17, %24 : vector<16x32xf32>
    %26 = arith.mulf %25, %25 : vector<16x32xf32>
    %cst_14 = arith.constant dense<0.000000e+00> : vector<16xf32>
    %27 = vector.multi_reduction <add>, %26, %cst_14 [1] : vector<16x32xf32> to vector<16xf32>
    %28 = vector.shape_cast %27 : vector<16xf32> to vector<16x1xf32>
    %cst_15 = arith.constant 3.200000e+01 : f32
    %29 = vector.broadcast %cst_15 : f32 to vector<16x1xf32>
    %30 = arith.divf %28, %29 : vector<16x1xf32>
    %31 = vector.broadcast %23 : vector<16x1xf32> to vector<16x32xf32>
    %32 = arith.subf %17, %31 : vector<16x32xf32>
    %cst_16 = arith.constant 9.99999974E-6 : f32
    %33 = vector.broadcast %cst_16 : f32 to vector<16x1xf32>
    %34 = arith.addf %30, %33 : vector<16x1xf32>
    %35 = math.rsqrt %34 : vector<16x1xf32>
    %36 = vector.broadcast %35 : vector<16x1xf32> to vector<16x32xf32>
    %37 = arith.mulf %32, %36 : vector<16x32xf32>
    %38 = vector.broadcast %18 : vector<1x32xf32> to vector<16x32xf32>
    %39 = arith.mulf %37, %38 : vector<16x32xf32>
    %40 = vector.broadcast %19 : vector<1x32xf32> to vector<16x32xf32>
    %41 = arith.addf %39, %40 : vector<16x32xf32>
    %cst_17 = arith.constant 5.000000e-01 : f32
    %42 = vector.broadcast %cst_17 : f32 to vector<16x32xf32>
    %43 = arith.mulf %42, %41 : vector<16x32xf32>
    %cst_18 = arith.constant 4.471500e-02 : f32
    %44 = vector.broadcast %cst_18 : f32 to vector<16x32xf32>
    %45 = arith.mulf %44, %41 : vector<16x32xf32>
    %46 = arith.mulf %45, %41 : vector<16x32xf32>
    %47 = arith.mulf %46, %41 : vector<16x32xf32>
    %48 = arith.addf %41, %47 : vector<16x32xf32>
    %cst_19 = arith.constant 0.797884583 : f32
    %49 = vector.broadcast %cst_19 : f32 to vector<16x32xf32>
    %50 = arith.mulf %49, %48 : vector<16x32xf32>
    %51 = math.tanh %50 : vector<16x32xf32>
    %cst_20 = arith.constant 1.000000e+00 : f32
    %52 = vector.broadcast %cst_20 : f32 to vector<16x32xf32>
    %53 = arith.addf %52, %51 : vector<16x32xf32>
    %54 = arith.mulf %43, %53 : vector<16x32xf32>
    %c0_21 = arith.constant 0 : index
    %c0_22 = arith.constant 0 : index
    %c0_23 = arith.constant 0 : index
    %c0_24 = arith.constant 0 : index
    %55 = vector.load %arg6[%c0_21, %c0_22, %c0_23, %c0_24] : memref<2x2x32x128xf32, #tpu.memory_space<vmem>>, vector<1x1x32x128xf32>
    %56 = vector.shape_cast %55 : vector<1x1x32x128xf32> to vector<32x128xf32>
    %cst_25 = arith.constant dense<0.000000e+00> : vector<16x128xf32>
    %57 = tpu.matmul %54, %56, %cst_25 {dimension_numbers = #tpu.dot_dimension_numbers<[1], [0], [0], [1], [0, 0, 1, 1], [], []>} : vector<16x32xf32>, vector<32x128xf32>, vector<16x128xf32> -> vector<16x128xf32>
    %c0_26 = arith.constant 0 : index
    %c0_27 = arith.constant 0 : index
    %c0_28 = arith.constant 0 : index
    %c0_29 = arith.constant 0 : index
    %58 = vector.load %arg8[%c0_26, %c0_27, %c0_28, %c0_29] : memref<2x2x1x128xf32, #tpu.memory_space<vmem>>, vector<1x1x1x128xf32>
    %59 = vector.shape_cast %58 : vector<1x1x1x128xf32> to vector<1x128xf32>
    %60 = vector.broadcast %59 : vector<1x128xf32> to vector<16x128xf32>
    %61 = arith.addf %57, %60 : vector<16x128xf32>
    %c0_30 = arith.constant 0 : index
    %c0_31 = arith.constant 0 : index
    %62 = vector.load %arg28[%c0_30, %c0_31] : memref<16x128xf32, #tpu.memory_space<vmem>>, vector<16x128xf32>
    tpu.vector_store %arg28[%c0_30, %c0_31], %61 {strides = array<i32>} : memref<16x128xf32, #tpu.memory_space<vmem>>, vector<16x128xf32>,
    %cst_32 = arith.constant 0.000000e+00 : f32
    %63 = vector.broadcast %cst_32 : f32 to vector<2x32xf32>
    %cst_33 = arith.constant 0.000000e+00 : f32
    %64 = vector.broadcast %cst_33 : f32 to vector<2x32xf32>
    %cst_34 = arith.constant 0.000000e+00 : f32
    %65 = vector.broadcast %cst_34 : f32 to vector<2x32xf32>
    %cst_35 = arith.constant 0.000000e+00 : f32
    %66 = vector.broadcast %cst_35 : f32 to vector<2x32xf32>
    %cst_36 = arith.constant 0.000000e+00 : f32
    %67 = vector.broadcast %cst_36 : f32 to vector<2x32xf32>
    %cst_37 = arith.constant 0.000000e+00 : f32
    %68 = vector.broadcast %cst_37 : f32 to vector<2x32xf32>
    %cst_38 = arith.constant 0.000000e+00 : f32
    %69 = vector.broadcast %cst_38 : f32 to vector<2x32xf32>
    %cst_39 = arith.constant 0.000000e+00 : f32
    %70 = vector.broadcast %cst_39 : f32 to vector<2x32xf32>
    %c0_40 = arith.constant 0 : index
    %c0_41 = arith.constant 0 : index
    %c0_42 = arith.constant 0 : index
    %c0_43 = arith.constant 0 : index
    %71 = vector.load %arg7[%c0_40, %c0_41, %c0_42, %c0_43] : memref<2x2x32x128xf32, #tpu.memory_space<vmem>>, vector<1x1x32x128xf32>
    %72 = vector.shape_cast %71 : vector<1x1x32x128xf32> to vector<32x128xf32>
    %cst_44 = arith.constant dense<0.000000e+00> : vector<2x128xf32>
    %73 = tpu.matmul %63, %72, %cst_44 {dimension_numbers = #tpu.dot_dimension_numbers<[1], [0], [0], [1], [0, 0, 1, 1], [], []>} : vector<2x32xf32>, vector<32x128xf32>, vector<2x128xf32> -> vector<2x128xf32>
    %c0_45 = arith.constant 0 : index
    %c0_46 = arith.constant 0 : index
    %74 = vector.load %arg28[%c0_45, %c0_46] : memref<16x128xf32, #tpu.memory_space<vmem>>, vector<2x128xf32>
    %75 = arith.addf %74, %73 : vector<2x128xf32>
    %76 = vector.extract_strided_slice %75 {offsets = [0, 0], sizes = [2, 32], strides = [1, 1]} : vector<2x128xf32> to vector<2x32xf32>
    %77 = vector.extract_strided_slice %75 {offsets = [0, 32], sizes = [2, 32], strides = [1, 1]} : vector<2x128xf32> to vector<2x32xf32>
    %78 = vector.extract_strided_slice %75 {offsets = [0, 64], sizes = [2, 32], strides = [1, 1]} : vector<2x128xf32> to vector<2x32xf32>
    %79 = math.tanh %78 : vector<2x32xf32>
    %80 = vector.extract_strided_slice %75 {offsets = [0, 96], sizes = [2, 32], strides = [1, 1]} : vector<2x128xf32> to vector<2x32xf32>
    %81 = arith.negf %80 : vector<2x32xf32>
    %82 = math.exp %81 : vector<2x32xf32>
    %cst_47 = arith.constant 1.000000e+00 : f32
    %83 = vector.broadcast %cst_47 : f32 to vector<2x32xf32>
    %84 = arith.addf %83, %82 : vector<2x32xf32>
    %85 = arith.divf %83, %84 : vector<2x32xf32>
    %86 = arith.addf %77, %69 : vector<2x32xf32>
    %87 = arith.maximumf %86, %76 : vector<2x32xf32>
    %88 = arith.subf %76, %87 : vector<2x32xf32>
    %89 = math.exp %88 : vector<2x32xf32>
    %90 = arith.addf %77, %69 : vector<2x32xf32>
    %91 = arith.subf %90, %87 : vector<2x32xf32>
    %92 = math.exp %91 : vector<2x32xf32>
    %93 = arith.mulf %92, %65 : vector<2x32xf32>
    %94 = arith.mulf %89, %79 : vector<2x32xf32>
    %95 = arith.addf %93, %94 : vector<2x32xf32>
    %96 = arith.mulf %92, %67 : vector<2x32xf32>
    %97 = arith.addf %96, %89 : vector<2x32xf32>
    %98 = arith.mulf %85, %95 : vector<2x32xf32>
    %99 = math.absf %97 : vector<2x32xf32>
    %cst_48 = arith.constant 1.000000e+00 : f32
    %100 = vector.broadcast %cst_48 : f32 to vector<2x32xf32>
    %101 = arith.maximumf %99, %100 : vector<2x32xf32>
    %102 = tpu.reciprocal %101 {approx = true} : vector<2x32xf32> -> vector<2x32xf32>
    %103 = arith.mulf %98, %102 : vector<2x32xf32>
    %c0_49 = arith.constant 0 : index
    %c1 = arith.constant 1 : index
    %c0_50 = arith.constant 0 : index
    %c0_51 = arith.constant 0 : index
    %104 = vector.load %arg7[%c0_49, %c1, %c0_50, %c0_51] : memref<2x2x32x128xf32, #tpu.memory_space<vmem>>, vector<1x1x32x128xf32>
    %105 = vector.shape_cast %104 : vector<1x1x32x128xf32> to vector<32x128xf32>
    %cst_52 = arith.constant dense<0.000000e+00> : vector<2x128xf32>
    %106 = tpu.matmul %64, %105, %cst_52 {dimension_numbers = #tpu.dot_dimension_numbers<[1], [0], [0], [1], [0, 0, 1, 1], [], []>} : vector<2x32xf32>, vector<32x128xf32>, vector<2x128xf32> -> vector<2x128xf32>
    %c0_53 = arith.constant 0 : index
    %c1_54 = arith.constant 1 : index
    %c0_55 = arith.constant 0 : index
    %c0_56 = arith.constant 0 : index
    %107 = vector.load %arg6[%c0_53, %c1_54, %c0_55, %c0_56] : memref<2x2x32x128xf32, #tpu.memory_space<vmem>>, vector<1x1x32x128xf32>
    %108 = vector.shape_cast %107 : vector<1x1x32x128xf32> to vector<32x128xf32>
    %cst_57 = arith.constant dense<0.000000e+00> : vector<2x128xf32>
    %109 = tpu.matmul %103, %108, %cst_57 {dimension_numbers = #tpu.dot_dimension_numbers<[1], [0], [0], [1], [0, 0, 1, 1], [], []>} : vector<2x32xf32>, vector<32x128xf32>, vector<2x128xf32> -> vector<2x128xf32>
    %110 = arith.addf %109, %106 : vector<2x128xf32>
    %c0_58 = arith.constant 0 : index
    %c1_59 = arith.constant 1 : index
    %c0_60 = arith.constant 0 : index
    %c0_61 = arith.constant 0 : index
    %111 = vector.load %arg8[%c0_58, %c1_59, %c0_60, %c0_61] : memref<2x2x1x128xf32, #tpu.memory_space<vmem>>, vector<1x1x1x128xf32>
    %112 = vector.shape_cast %111 : vector<1x1x1x128xf32> to vector<1x128xf32>
    %113 = vector.broadcast %112 : vector<1x128xf32> to vector<2x128xf32>
    %114 = arith.addf %110, %113 : vector<2x128xf32>
    %115 = vector.extract_strided_slice %114 {offsets = [0, 0], sizes = [2, 32], strides = [1, 1]} : vector<2x128xf32> to vector<2x32xf32>
    %116 = vector.extract_strided_slice %114 {offsets = [0, 32], sizes = [2, 32], strides = [1, 1]} : vector<2x128xf32> to vector<2x32xf32>
    %117 = vector.extract_strided_slice %114 {offsets = [0, 64], sizes = [2, 32], strides = [1, 1]} : vector<2x128xf32> to vector<2x32xf32>
    %118 = math.tanh %117 : vector<2x32xf32>
    %119 = vector.extract_strided_slice %114 {offsets = [0, 96], sizes = [2, 32], strides = [1, 1]} : vector<2x128xf32> to vector<2x32xf32>
    %120 = arith.negf %119 : vector<2x32xf32>
    %121 = math.exp %120 : vector<2x32xf32>
    %cst_62 = arith.constant 1.000000e+00 : f32
    %122 = vector.broadcast %cst_62 : f32 to vector<2x32xf32>
    %123 = arith.addf %122, %121 : vector<2x32xf32>
    %124 = arith.divf %122, %123 : vector<2x32xf32>
    %125 = arith.addf %116, %70 : vector<2x32xf32>
    %126 = arith.maximumf %125, %115 : vector<2x32xf32>
    %127 = arith.subf %115, %126 : vector<2x32xf32>
    %128 = math.exp %127 : vector<2x32xf32>
    %129 = arith.addf %116, %70 : vector<2x32xf32>
    %130 = arith.subf %129, %126 : vector<2x32xf32>
    %131 = math.exp %130 : vector<2x32xf32>
    %132 = arith.mulf %131, %66 : vector<2x32xf32>
    %133 = arith.mulf %128, %118 : vector<2x32xf32>
    %134 = arith.addf %132, %133 : vector<2x32xf32>
    %135 = arith.mulf %131, %68 : vector<2x32xf32>
    %136 = arith.addf %135, %128 : vector<2x32xf32>
    %137 = arith.mulf %124, %134 : vector<2x32xf32>
    %138 = math.absf %136 : vector<2x32xf32>
    %cst_63 = arith.constant 1.000000e+00 : f32
    %139 = vector.broadcast %cst_63 : f32 to vector<2x32xf32>
    %140 = arith.maximumf %138, %139 : vector<2x32xf32>
    %141 = tpu.reciprocal %140 {approx = true} : vector<2x32xf32> -> vector<2x32xf32>
    %142 = arith.mulf %137, %141 : vector<2x32xf32>
    %c0_64 = arith.constant 0 : index
    %c0_65 = arith.constant 0 : index
    %143 = vector.load %arg29[%c0_64, %c0_65] : memref<16x32xf32, #tpu.memory_space<vmem>>, vector<2x32xf32>
    tpu.vector_store %arg29[%c0_64, %c0_65], %142 {strides = array<i32>} : memref<16x32xf32, #tpu.memory_space<vmem>>, vector<2x32xf32>,
    %c0_66 = arith.constant 0 : index
    %c0_67 = arith.constant 0 : index
    %c0_68 = arith.constant 0 : index
    %c0_69 = arith.constant 0 : index
    %144 = vector.load %arg7[%c0_66, %c0_67, %c0_68, %c0_69] : memref<2x2x32x128xf32, #tpu.memory_space<vmem>>, vector<1x1x32x128xf32>
    %145 = vector.shape_cast %144 : vector<1x1x32x128xf32> to vector<32x128xf32>
    %cst_70 = arith.constant dense<0.000000e+00> : vector<2x128xf32>
    %146 = tpu.matmul %103, %145, %cst_70 {dimension_numbers = #tpu.dot_dimension_numbers<[1], [0], [0], [1], [0, 0, 1, 1], [], []>} : vector<2x32xf32>, vector<32x128xf32>, vector<2x128xf32> -> vector<2x128xf32>
    %c2 = arith.constant 2 : index
    %c0_71 = arith.constant 0 : index
    %147 = vector.load %arg28[%c2, %c0_71] : memref<16x128xf32, #tpu.memory_space<vmem>>, vector<2x128xf32>
    %148 = arith.addf %147, %146 : vector<2x128xf32>
    %149 = vector.extract_strided_slice %148 {offsets = [0, 0], sizes = [2, 32], strides = [1, 1]} : vector<2x128xf32> to vector<2x32xf32>
    %150 = vector.extract_strided_slice %148 {offsets = [0, 32], sizes = [2, 32], strides = [1, 1]} : vector<2x128xf32> to vector<2x32xf32>
    %151 = vector.extract_strided_slice %148 {offsets = [0, 64], sizes = [2, 32], strides = [1, 1]} : vector<2x128xf32> to vector<2x32xf32>
    %152 = math.tanh %151 : vector<2x32xf32>
    %153 = vector.extract_strided_slice %148 {offsets = [0, 96], sizes = [2, 32], strides = [1, 1]} : vector<2x128xf32> to vector<2x32xf32>
    %154 = arith.negf %153 : vector<2x32xf32>
    %155 = math.exp %154 : vector<2x32xf32>
    %cst_72 = arith.constant 1.000000e+00 : f32
    %156 = vector.broadcast %cst_72 : f32 to vector<2x32xf32>
    %157 = arith.addf %156, %155 : vector<2x32xf32>
    %158 = arith.divf %156, %157 : vector<2x32xf32>
    %159 = arith.addf %150, %87 : vector<2x32xf32>
    %160 = arith.maximumf %159, %149 : vector<2x32xf32>
    %161 = arith.subf %149, %160 : vector<2x32xf32>
    %162 = math.exp %161 : vector<2x32xf32>
    %163 = arith.addf %150, %87 : vector<2x32xf32>
    %164 = arith.subf %163, %160 : vector<2x32xf32>
    %165 = math.exp %164 : vector<2x32xf32>
    %166 = arith.mulf %165, %95 : vector<2x32xf32>
    %167 = arith.mulf %162, %152 : vector<2x32xf32>
    %168 = arith.addf %166, %167 : vector<2x32xf32>
    %169 = arith.mulf %165, %97 : vector<2x32xf32>
    %170 = arith.addf %169, %162 : vector<2x32xf32>
    %171 = arith.mulf %158, %168 : vector<2x32xf32>
    %172 = math.absf %170 : vector<2x32xf32>
    %cst_73 = arith.constant 1.000000e+00 : f32
    %173 = vector.broadcast %cst_73 : f32 to vector<2x32xf32>
    %174 = arith.maximumf %172, %173 : vector<2x32xf32>
    %175 = tpu.reciprocal %174 {approx = true} : vector<2x32xf32> -> vector<2x32xf32>
    %176 = arith.mulf %171, %175 : vector<2x32xf32>
    %c0_74 = arith.constant 0 : index
    %c1_75 = arith.constant 1 : index
    %c0_76 = arith.constant 0 : index
    %c0_77 = arith.constant 0 : index
    %177 = vector.load %arg7[%c0_74, %c1_75, %c0_76, %c0_77] : memref<2x2x32x128xf32, #tpu.memory_space<vmem>>, vector<1x1x32x128xf32>
    %178 = vector.shape_cast %177 : vector<1x1x32x128xf32> to vector<32x128xf32>
    %cst_78 = arith.constant dense<0.000000e+00> : vector<2x128xf32>
    %179 = tpu.matmul %142, %178, %cst_78 {dimension_numbers = #tpu.dot_dimension_numbers<[1], [0], [0], [1], [0, 0, 1, 1], [], []>} : vector<2x32xf32>, vector<32x128xf32>, vector<2x128xf32> -> vector<2x128xf32>
    %c0_79 = arith.constant 0 : index
    %c1_80 = arith.constant 1 : index
    %c0_81 = arith.constant 0 : index
    %c0_82 = arith.constant 0 : index
    %180 = vector.load %arg6[%c0_79, %c1_80, %c0_81, %c0_82] : memref<2x2x32x128xf32, #tpu.memory_space<vmem>>, vector<1x1x32x128xf32>
    %181 = vector.shape_cast %180 : vector<1x1x32x128xf32> to vector<32x128xf32>
    %cst_83 = arith.constant dense<0.000000e+00> : vector<2x128xf32>
    %182 = tpu.matmul %176, %181, %cst_83 {dimension_numbers = #tpu.dot_dimension_numbers<[1], [0], [0], [1], [0, 0, 1, 1], [], []>} : vector<2x32xf32>, vector<32x128xf32>, vector<2x128xf32> -> vector<2x128xf32>
    %183 = arith.addf %182, %179 : vector<2x128xf32>
    %c0_84 = arith.constant 0 : index
    %c1_85 = arith.constant 1 : index
    %c0_86 = arith.constant 0 : index
    %c0_87 = arith.constant 0 : index
    %184 = vector.load %arg8[%c0_84, %c1_85, %c0_86, %c0_87] : memref<2x2x1x128xf32, #tpu.memory_space<vmem>>, vector<1x1x1x128xf32>
    %185 = vector.shape_cast %184 : vector<1x1x1x128xf32> to vector<1x128xf32>
    %186 = vector.broadcast %185 : vector<1x128xf32> to vector<2x128xf32>
    %187 = arith.addf %183, %186 : vector<2x128xf32>
    %188 = vector.extract_strided_slice %187 {offsets = [0, 0], sizes = [2, 32], strides = [1, 1]} : vector<2x128xf32> to vector<2x32xf32>
    %189 = vector.extract_strided_slice %187 {offsets = [0, 32], sizes = [2, 32], strides = [1, 1]} : vector<2x128xf32> to vector<2x32xf32>
    %190 = vector.extract_strided_slice %187 {offsets = [0, 64], sizes = [2, 32], strides = [1, 1]} : vector<2x128xf32> to vector<2x32xf32>
    %191 = math.tanh %190 : vector<2x32xf32>
    %192 = vector.extract_strided_slice %187 {offsets = [0, 96], sizes = [2, 32], strides = [1, 1]} : vector<2x128xf32> to vector<2x32xf32>
    %193 = arith.negf %192 : vector<2x32xf32>
    %194 = math.exp %193 : vector<2x32xf32>
    %cst_88 = arith.constant 1.000000e+00 : f32
    %195 = vector.broadcast %cst_88 : f32 to vector<2x32xf32>
    %196 = arith.addf %195, %194 : vector<2x32xf32>
    %197 = arith.divf %195, %196 : vector<2x32xf32>
    %198 = arith.addf %189, %126 : vector<2x32xf32>
    %199 = arith.maximumf %198, %188 : vector<2x32xf32>
    %200 = arith.subf %188, %199 : vector<2x32xf32>
    %201 = math.exp %200 : vector<2x32xf32>
    %202 = arith.addf %189, %126 : vector<2x32xf32>
    %203 = arith.subf %202, %199 : vector<2x32xf32>
    %204 = math.exp %203 : vector<2x32xf32>
    %205 = arith.mulf %204, %134 : vector<2x32xf32>
    %206 = arith.mulf %201, %191 : vector<2x32xf32>
    %207 = arith.addf %205, %206 : vector<2x32xf32>
    %208 = arith.mulf %204, %136 : vector<2x32xf32>
    %209 = arith.addf %208, %201 : vector<2x32xf32>
    %210 = arith.mulf %197, %207 : vector<2x32xf32>
    %211 = math.absf %209 : vector<2x32xf32>
    %cst_89 = arith.constant 1.000000e+00 : f32
    %212 = vector.broadcast %cst_89 : f32 to vector<2x32xf32>
    %213 = arith.maximumf %211, %212 : vector<2x32xf32>
    %214 = tpu.reciprocal %213 {approx = true} : vector<2x32xf32> -> vector<2x32xf32>
    %215 = arith.mulf %210, %214 : vector<2x32xf32>
    %c2_90 = arith.constant 2 : index
    %c0_91 = arith.constant 0 : index
    %216 = vector.load %arg29[%c2_90, %c0_91] : memref<16x32xf32, #tpu.memory_space<vmem>>, vector<2x32xf32>
    tpu.vector_store %arg29[%c2_90, %c0_91], %215 {strides = array<i32>} : memref<16x32xf32, #tpu.memory_space<vmem>>, vector<2x32xf32>,
    %c0_92 = arith.constant 0 : index
    %c0_93 = arith.constant 0 : index
    %c0_94 = arith.constant 0 : index
    %c0_95 = arith.constant 0 : index
    %217 = vector.load %arg7[%c0_92, %c0_93, %c0_94, %c0_95] : memref<2x2x32x128xf32, #tpu.memory_space<vmem>>, vector<1x1x32x128xf32>
    %218 = vector.shape_cast %217 : vector<1x1x32x128xf32> to vector<32x128xf32>
    %cst_96 = arith.constant dense<0.000000e+00> : vector<2x128xf32>
    %219 = tpu.matmul %176, %218, %cst_96 {dimension_numbers = #tpu.dot_dimension_numbers<[1], [0], [0], [1], [0, 0, 1, 1], [], []>} : vector<2x32xf32>, vector<32x128xf32>, vector<2x128xf32> -> vector<2x128xf32>
    %c4 = arith.constant 4 : index
    %c0_97 = arith.constant 0 : index
    %220 = vector.load %arg28[%c4, %c0_97] : memref<16x128xf32, #tpu.memory_space<vmem>>, vector<2x128xf32>
    %221 = arith.addf %220, %219 : vector<2x128xf32>
    %222 = vector.extract_strided_slice %221 {offsets = [0, 0], sizes = [2, 32], strides = [1, 1]} : vector<2x128xf32> to vector<2x32xf32>
    %223 = vector.extract_strided_slice %221 {offsets = [0, 32], sizes = [2, 32], strides = [1, 1]} : vector<2x128xf32> to vector<2x32xf32>
    %224 = vector.extract_strided_slice %221 {offsets = [0, 64], sizes = [2, 32], strides = [1, 1]} : vector<2x128xf32> to vector<2x32xf32>
    %225 = math.tanh %224 : vector<2x32xf32>
    %226 = vector.extract_strided_slice %221 {offsets = [0, 96], sizes = [2, 32], strides = [1, 1]} : vector<2x128xf32> to vector<2x32xf32>
    %227 = arith.negf %226 : vector<2x32xf32>
    %228 = math.exp %227 : vector<2x32xf32>
    %cst_98 = arith.constant 1.000000e+00 : f32
    %229 = vector.broadcast %cst_98 : f32 to vector<2x32xf32>
    %230 = arith.addf %229, %228 : vector<2x32xf32>
    %231 = arith.divf %229, %230 : vector<2x32xf32>
    %232 = arith.addf %223, %160 : vector<2x32xf32>
    %233 = arith.maximumf %232, %222 : vector<2x32xf32>
    %234 = arith.subf %222, %233 : vector<2x32xf32>
    %235 = math.exp %234 : vector<2x32xf32>
    %236 = arith.addf %223, %160 : vector<2x32xf32>
    %237 = arith.subf %236, %233 : vector<2x32xf32>
    %238 = math.exp %237 : vector<2x32xf32>
    %239 = arith.mulf %238, %168 : vector<2x32xf32>
    %240 = arith.mulf %235, %225 : vector<2x32xf32>
    %241 = arith.addf %239, %240 : vector<2x32xf32>
    %242 = arith.mulf %238, %170 : vector<2x32xf32>
    %243 = arith.addf %242, %235 : vector<2x32xf32>
    %244 = arith.mulf %231, %241 : vector<2x32xf32>
    %245 = math.absf %243 : vector<2x32xf32>
    %cst_99 = arith.constant 1.000000e+00 : f32
    %246 = vector.broadcast %cst_99 : f32 to vector<2x32xf32>
    %247 = arith.maximumf %245, %246 : vector<2x32xf32>
    %248 = tpu.reciprocal %247 {approx = true} : vector<2x32xf32> -> vector<2x32xf32>
    %249 = arith.mulf %244, %248 : vector<2x32xf32>
    %c0_100 = arith.constant 0 : index
    %c1_101 = arith.constant 1 : index
    %c0_102 = arith.constant 0 : index
    %c0_103 = arith.constant 0 : index
    %250 = vector.load %arg7[%c0_100, %c1_101, %c0_102, %c0_103] : memref<2x2x32x128xf32, #tpu.memory_space<vmem>>, vector<1x1x32x128xf32>
    %251 = vector.shape_cast %250 : vector<1x1x32x128xf32> to vector<32x128xf32>
    %cst_104 = arith.constant dense<0.000000e+00> : vector<2x128xf32>
    %252 = tpu.matmul %215, %251, %cst_104 {dimension_numbers = #tpu.dot_dimension_numbers<[1], [0], [0], [1], [0, 0, 1, 1], [], []>} : vector<2x32xf32>, vector<32x128xf32>, vector<2x128xf32> -> vector<2x128xf32>
    %c0_105 = arith.constant 0 : index
    %c1_106 = arith.constant 1 : index
    %c0_107 = arith.constant 0 : index
    %c0_108 = arith.constant 0 : index
    %253 = vector.load %arg6[%c0_105, %c1_106, %c0_107, %c0_108] : memref<2x2x32x128xf32, #tpu.memory_space<vmem>>, vector<1x1x32x128xf32>
    %254 = vector.shape_cast %253 : vector<1x1x32x128xf32> to vector<32x128xf32>
    %cst_109 = arith.constant dense<0.000000e+00> : vector<2x128xf32>
    %255 = tpu.matmul %249, %254, %cst_109 {dimension_numbers = #tpu.dot_dimension_numbers<[1], [0], [0], [1], [0, 0, 1, 1], [], []>} : vector<2x32xf32>, vector<32x128xf32>, vector<2x128xf32> -> vector<2x128xf32>
    %256 = arith.addf %255, %252 : vector<2x128xf32>
    %c0_110 = arith.constant 0 : index
    %c1_111 = arith.constant 1 : index
    %c0_112 = arith.constant 0 : index
    %c0_113 = arith.constant 0 : index
    %257 = vector.load %arg8[%c0_110, %c1_111, %c0_112, %c0_113] : memref<2x2x1x128xf32, #tpu.memory_space<vmem>>, vector<1x1x1x128xf32>
    %258 = vector.shape_cast %257 : vector<1x1x1x128xf32> to vector<1x128xf32>
    %259 = vector.broadcast %258 : vector<1x128xf32> to vector<2x128xf32>
    %260 = arith.addf %256, %259 : vector<2x128xf32>
    %261 = vector.extract_strided_slice %260 {offsets = [0, 0], sizes = [2, 32], strides = [1, 1]} : vector<2x128xf32> to vector<2x32xf32>
    %262 = vector.extract_strided_slice %260 {offsets = [0, 32], sizes = [2, 32], strides = [1, 1]} : vector<2x128xf32> to vector<2x32xf32>
    %263 = vector.extract_strided_slice %260 {offsets = [0, 64], sizes = [2, 32], strides = [1, 1]} : vector<2x128xf32> to vector<2x32xf32>
    %264 = math.tanh %263 : vector<2x32xf32>
    %265 = vector.extract_strided_slice %260 {offsets = [0, 96], sizes = [2, 32], strides = [1, 1]} : vector<2x128xf32> to vector<2x32xf32>
    %266 = arith.negf %265 : vector<2x32xf32>
    %267 = math.exp %266 : vector<2x32xf32>
    %cst_114 = arith.constant 1.000000e+00 : f32
    %268 = vector.broadcast %cst_114 : f32 to vector<2x32xf32>
    %269 = arith.addf %268, %267 : vector<2x32xf32>
    %270 = arith.divf %268, %269 : vector<2x32xf32>
    %271 = arith.addf %262, %199 : vector<2x32xf32>
    %272 = arith.maximumf %271, %261 : vector<2x32xf32>
    %273 = arith.subf %261, %272 : vector<2x32xf32>
    %274 = math.exp %273 : vector<2x32xf32>
    %275 = arith.addf %262, %199 : vector<2x32xf32>
    %276 = arith.subf %275, %272 : vector<2x32xf32>
    %277 = math.exp %276 : vector<2x32xf32>
    %278 = arith.mulf %277, %207 : vector<2x32xf32>
    %279 = arith.mulf %274, %264 : vector<2x32xf32>
    %280 = arith.addf %278, %279 : vector<2x32xf32>
    %281 = arith.mulf %277, %209 : vector<2x32xf32>
    %282 = arith.addf %281, %274 : vector<2x32xf32>
    %283 = arith.mulf %270, %280 : vector<2x32xf32>
    %284 = math.absf %282 : vector<2x32xf32>
    %cst_115 = arith.constant 1.000000e+00 : f32
    %285 = vector.broadcast %cst_115 : f32 to vector<2x32xf32>
    %286 = arith.maximumf %284, %285 : vector<2x32xf32>
    %287 = tpu.reciprocal %286 {approx = true} : vector<2x32xf32> -> vector<2x32xf32>
    %288 = arith.mulf %283, %287 : vector<2x32xf32>
    %c4_116 = arith.constant 4 : index
    %c0_117 = arith.constant 0 : index
    %289 = vector.load %arg29[%c4_116, %c0_117] : memref<16x32xf32, #tpu.memory_space<vmem>>, vector<2x32xf32>
    tpu.vector_store %arg29[%c4_116, %c0_117], %288 {strides = array<i32>} : memref<16x32xf32, #tpu.memory_space<vmem>>, vector<2x32xf32>,
    %c0_118 = arith.constant 0 : index
    %c0_119 = arith.constant 0 : index
    %c0_120 = arith.constant 0 : index
    %c0_121 = arith.constant 0 : index
    %290 = vector.load %arg7[%c0_118, %c0_119, %c0_120, %c0_121] : memref<2x2x32x128xf32, #tpu.memory_space<vmem>>, vector<1x1x32x128xf32>
    %291 = vector.shape_cast %290 : vector<1x1x32x128xf32> to vector<32x128xf32>
    %cst_122 = arith.constant dense<0.000000e+00> : vector<2x128xf32>
    %292 = tpu.matmul %249, %291, %cst_122 {dimension_numbers = #tpu.dot_dimension_numbers<[1], [0], [0], [1], [0, 0, 1, 1], [], []>} : vector<2x32xf32>, vector<32x128xf32>, vector<2x128xf32> -> vector<2x128xf32>
    %c6 = arith.constant 6 : index
    %c0_123 = arith.constant 0 : index
    %293 = vector.load %arg28[%c6, %c0_123] : memref<16x128xf32, #tpu.memory_space<vmem>>, vector<2x128xf32>
    %294 = arith.addf %293, %292 : vector<2x128xf32>
    %295 = vector.extract_strided_slice %294 {offsets = [0, 0], sizes = [2, 32], strides = [1, 1]} : vector<2x128xf32> to vector<2x32xf32>
    %296 = vector.extract_strided_slice %294 {offsets = [0, 32], sizes = [2, 32], strides = [1, 1]} : vector<2x128xf32> to vector<2x32xf32>
    %297 = vector.extract_strided_slice %294 {offsets = [0, 64], sizes = [2, 32], strides = [1, 1]} : vector<2x128xf32> to vector<2x32xf32>
    %298 = math.tanh %297 : vector<2x32xf32>
    %299 = vector.extract_strided_slice %294 {offsets = [0, 96], sizes = [2, 32], strides = [1, 1]} : vector<2x128xf32> to vector<2x32xf32>
    %300 = arith.negf %299 : vector<2x32xf32>
    %301 = math.exp %300 : vector<2x32xf32>
    %cst_124 = arith.constant 1.000000e+00 : f32
    %302 = vector.broadcast %cst_124 : f32 to vector<2x32xf32>
    %303 = arith.addf %302, %301 : vector<2x32xf32>
    %304 = arith.divf %302, %303 : vector<2x32xf32>
    %305 = arith.addf %296, %233 : vector<2x32xf32>
    %306 = arith.maximumf %305, %295 : vector<2x32xf32>
    %307 = arith.subf %295, %306 : vector<2x32xf32>
    %308 = math.exp %307 : vector<2x32xf32>
    %309 = arith.addf %296, %233 : vector<2x32xf32>
    %310 = arith.subf %309, %306 : vector<2x32xf32>
    %311 = math.exp %310 : vector<2x32xf32>
    %312 = arith.mulf %311, %241 : vector<2x32xf32>
    %313 = arith.mulf %308, %298 : vector<2x32xf32>
    %314 = arith.addf %312, %313 : vector<2x32xf32>
    %315 = arith.mulf %311, %243 : vector<2x32xf32>
    %316 = arith.addf %315, %308 : vector<2x32xf32>
    %317 = arith.mulf %304, %314 : vector<2x32xf32>
    %318 = math.absf %316 : vector<2x32xf32>
    %cst_125 = arith.constant 1.000000e+00 : f32
    %319 = vector.broadcast %cst_125 : f32 to vector<2x32xf32>
    %320 = arith.maximumf %318, %319 : vector<2x32xf32>
    %321 = tpu.reciprocal %320 {approx = true} : vector<2x32xf32> -> vector<2x32xf32>
    %322 = arith.mulf %317, %321 : vector<2x32xf32>
    %c0_126 = arith.constant 0 : index
    %c1_127 = arith.constant 1 : index
    %c0_128 = arith.constant 0 : index
    %c0_129 = arith.constant 0 : index
    %323 = vector.load %arg7[%c0_126, %c1_127, %c0_128, %c0_129] : memref<2x2x32x128xf32, #tpu.memory_space<vmem>>, vector<1x1x32x128xf32>
    %324 = vector.shape_cast %323 : vector<1x1x32x128xf32> to vector<32x128xf32>
    %cst_130 = arith.constant dense<0.000000e+00> : vector<2x128xf32>
    %325 = tpu.matmul %288, %324, %cst_130 {dimension_numbers = #tpu.dot_dimension_numbers<[1], [0], [0], [1], [0, 0, 1, 1], [], []>} : vector<2x32xf32>, vector<32x128xf32>, vector<2x128xf32> -> vector<2x128xf32>
    %c0_131 = arith.constant 0 : index
    %c1_132 = arith.constant 1 : index
    %c0_133 = arith.constant 0 : index
    %c0_134 = arith.constant 0 : index
    %326 = vector.load %arg6[%c0_131, %c1_132, %c0_133, %c0_134] : memref<2x2x32x128xf32, #tpu.memory_space<vmem>>, vector<1x1x32x128xf32>
    %327 = vector.shape_cast %326 : vector<1x1x32x128xf32> to vector<32x128xf32>
    %cst_135 = arith.constant dense<0.000000e+00> : vector<2x128xf32>
    %328 = tpu.matmul %322, %327, %cst_135 {dimension_numbers = #tpu.dot_dimension_numbers<[1], [0], [0], [1], [0, 0, 1, 1], [], []>} : vector<2x32xf32>, vector<32x128xf32>, vector<2x128xf32> -> vector<2x128xf32>
    %329 = arith.addf %328, %325 : vector<2x128xf32>
    %c0_136 = arith.constant 0 : index
    %c1_137 = arith.constant 1 : index
    %c0_138 = arith.constant 0 : index
    %c0_139 = arith.constant 0 : index
    %330 = vector.load %arg8[%c0_136, %c1_137, %c0_138, %c0_139] : memref<2x2x1x128xf32, #tpu.memory_space<vmem>>, vector<1x1x1x128xf32>
    %331 = vector.shape_cast %330 : vector<1x1x1x128xf32> to vector<1x128xf32>
    %332 = vector.broadcast %331 : vector<1x128xf32> to vector<2x128xf32>
    %333 = arith.addf %329, %332 : vector<2x128xf32>
    %334 = vector.extract_strided_slice %333 {offsets = [0, 0], sizes = [2, 32], strides = [1, 1]} : vector<2x128xf32> to vector<2x32xf32>
    %335 = vector.extract_strided_slice %333 {offsets = [0, 32], sizes = [2, 32], strides = [1, 1]} : vector<2x128xf32> to vector<2x32xf32>
    %336 = vector.extract_strided_slice %333 {offsets = [0, 64], sizes = [2, 32], strides = [1, 1]} : vector<2x128xf32> to vector<2x32xf32>
    %337 = math.tanh %336 : vector<2x32xf32>
    %338 = vector.extract_strided_slice %333 {offsets = [0, 96], sizes = [2, 32], strides = [1, 1]} : vector<2x128xf32> to vector<2x32xf32>
    %339 = arith.negf %338 : vector<2x32xf32>
    %340 = math.exp %339 : vector<2x32xf32>
    %cst_140 = arith.constant 1.000000e+00 : f32
    %341 = vector.broadcast %cst_140 : f32 to vector<2x32xf32>
    %342 = arith.addf %341, %340 : vector<2x32xf32>
    %343 = arith.divf %341, %342 : vector<2x32xf32>
    %344 = arith.addf %335, %272 : vector<2x32xf32>
    %345 = arith.maximumf %344, %334 : vector<2x32xf32>
    %346 = arith.subf %334, %345 : vector<2x32xf32>
    %347 = math.exp %346 : vector<2x32xf32>
    %348 = arith.addf %335, %272 : vector<2x32xf32>
    %349 = arith.subf %348, %345 : vector<2x32xf32>
    %350 = math.exp %349 : vector<2x32xf32>
    %351 = arith.mulf %350, %280 : vector<2x32xf32>
    %352 = arith.mulf %347, %337 : vector<2x32xf32>
    %353 = arith.addf %351, %352 : vector<2x32xf32>
    %354 = arith.mulf %350, %282 : vector<2x32xf32>
    %355 = arith.addf %354, %347 : vector<2x32xf32>
    %356 = arith.mulf %343, %353 : vector<2x32xf32>
    %357 = math.absf %355 : vector<2x32xf32>
    %cst_141 = arith.constant 1.000000e+00 : f32
    %358 = vector.broadcast %cst_141 : f32 to vector<2x32xf32>
    %359 = arith.maximumf %357, %358 : vector<2x32xf32>
    %360 = tpu.reciprocal %359 {approx = true} : vector<2x32xf32> -> vector<2x32xf32>
    %361 = arith.mulf %356, %360 : vector<2x32xf32>
    %c6_142 = arith.constant 6 : index
    %c0_143 = arith.constant 0 : index
    %362 = vector.load %arg29[%c6_142, %c0_143] : memref<16x32xf32, #tpu.memory_space<vmem>>, vector<2x32xf32>
    tpu.vector_store %arg29[%c6_142, %c0_143], %361 {strides = array<i32>} : memref<16x32xf32, #tpu.memory_space<vmem>>, vector<2x32xf32>,
    %c0_144 = arith.constant 0 : index
    %c0_145 = arith.constant 0 : index
    %c0_146 = arith.constant 0 : index
    %c0_147 = arith.constant 0 : index
    %363 = vector.load %arg7[%c0_144, %c0_145, %c0_146, %c0_147] : memref<2x2x32x128xf32, #tpu.memory_space<vmem>>, vector<1x1x32x128xf32>
    %364 = vector.shape_cast %363 : vector<1x1x32x128xf32> to vector<32x128xf32>
    %cst_148 = arith.constant dense<0.000000e+00> : vector<2x128xf32>
    %365 = tpu.matmul %322, %364, %cst_148 {dimension_numbers = #tpu.dot_dimension_numbers<[1], [0], [0], [1], [0, 0, 1, 1], [], []>} : vector<2x32xf32>, vector<32x128xf32>, vector<2x128xf32> -> vector<2x128xf32>
    %c8 = arith.constant 8 : index
    %c0_149 = arith.constant 0 : index
    %366 = vector.load %arg28[%c8, %c0_149] : memref<16x128xf32, #tpu.memory_space<vmem>>, vector<2x128xf32>
    %367 = arith.addf %366, %365 : vector<2x128xf32>
    %368 = vector.extract_strided_slice %367 {offsets = [0, 0], sizes = [2, 32], strides = [1, 1]} : vector<2x128xf32> to vector<2x32xf32>
    %369 = vector.extract_strided_slice %367 {offsets = [0, 32], sizes = [2, 32], strides = [1, 1]} : vector<2x128xf32> to vector<2x32xf32>
    %370 = vector.extract_strided_slice %367 {offsets = [0, 64], sizes = [2, 32], strides = [1, 1]} : vector<2x128xf32> to vector<2x32xf32>
    %371 = math.tanh %370 : vector<2x32xf32>
    %372 = vector.extract_strided_slice %367 {offsets = [0, 96], sizes = [2, 32], strides = [1, 1]} : vector<2x128xf32> to vector<2x32xf32>
    %373 = arith.negf %372 : vector<2x32xf32>
    %374 = math.exp %373 : vector<2x32xf32>
    %cst_150 = arith.constant 1.000000e+00 : f32
    %375 = vector.broadcast %cst_150 : f32 to vector<2x32xf32>
    %376 = arith.addf %375, %374 : vector<2x32xf32>
    %377 = arith.divf %375, %376 : vector<2x32xf32>
    %378 = arith.addf %369, %306 : vector<2x32xf32>
    %379 = arith.maximumf %378, %368 : vector<2x32xf32>
    %380 = arith.subf %368, %379 : vector<2x32xf32>
    %381 = math.exp %380 : vector<2x32xf32>
    %382 = arith.addf %369, %306 : vector<2x32xf32>
    %383 = arith.subf %382, %379 : vector<2x32xf32>
    %384 = math.exp %383 : vector<2x32xf32>
    %385 = arith.mulf %384, %314 : vector<2x32xf32>
    %386 = arith.mulf %381, %371 : vector<2x32xf32>
    %387 = arith.addf %385, %386 : vector<2x32xf32>
    %388 = arith.mulf %384, %316 : vector<2x32xf32>
    %389 = arith.addf %388, %381 : vector<2x32xf32>
    %390 = arith.mulf %377, %387 : vector<2x32xf32>
    %391 = math.absf %389 : vector<2x32xf32>
    %cst_151 = arith.constant 1.000000e+00 : f32
    %392 = vector.broadcast %cst_151 : f32 to vector<2x32xf32>
    %393 = arith.maximumf %391, %392 : vector<2x32xf32>
    %394 = tpu.reciprocal %393 {approx = true} : vector<2x32xf32> -> vector<2x32xf32>
    %395 = arith.mulf %390, %394 : vector<2x32xf32>
    %c0_152 = arith.constant 0 : index
    %c1_153 = arith.constant 1 : index
    %c0_154 = arith.constant 0 : index
    %c0_155 = arith.constant 0 : index
    %396 = vector.load %arg7[%c0_152, %c1_153, %c0_154, %c0_155] : memref<2x2x32x128xf32, #tpu.memory_space<vmem>>, vector<1x1x32x128xf32>
    %397 = vector.shape_cast %396 : vector<1x1x32x128xf32> to vector<32x128xf32>
    %cst_156 = arith.constant dense<0.000000e+00> : vector<2x128xf32>
    %398 = tpu.matmul %361, %397, %cst_156 {dimension_numbers = #tpu.dot_dimension_numbers<[1], [0], [0], [1], [0, 0, 1, 1], [], []>} : vector<2x32xf32>, vector<32x128xf32>, vector<2x128xf32> -> vector<2x128xf32>
    %c0_157 = arith.constant 0 : index
    %c1_158 = arith.constant 1 : index
    %c0_159 = arith.constant 0 : index
    %c0_160 = arith.constant 0 : index
    %399 = vector.load %arg6[%c0_157, %c1_158, %c0_159, %c0_160] : memref<2x2x32x128xf32, #tpu.memory_space<vmem>>, vector<1x1x32x128xf32>
    %400 = vector.shape_cast %399 : vector<1x1x32x128xf32> to vector<32x128xf32>
    %cst_161 = arith.constant dense<0.000000e+00> : vector<2x128xf32>
    %401 = tpu.matmul %395, %400, %cst_161 {dimension_numbers = #tpu.dot_dimension_numbers<[1], [0], [0], [1], [0, 0, 1, 1], [], []>} : vector<2x32xf32>, vector<32x128xf32>, vector<2x128xf32> -> vector<2x128xf32>
    %402 = arith.addf %401, %398 : vector<2x128xf32>
    %c0_162 = arith.constant 0 : index
    %c1_163 = arith.constant 1 : index
    %c0_164 = arith.constant 0 : index
    %c0_165 = arith.constant 0 : index
    %403 = vector.load %arg8[%c0_162, %c1_163, %c0_164, %c0_165] : memref<2x2x1x128xf32, #tpu.memory_space<vmem>>, vector<1x1x1x128xf32>
    %404 = vector.shape_cast %403 : vector<1x1x1x128xf32> to vector<1x128xf32>
    %405 = vector.broadcast %404 : vector<1x128xf32> to vector<2x128xf32>
    %406 = arith.addf %402, %405 : vector<2x128xf32>
    %407 = vector.extract_strided_slice %406 {offsets = [0, 0], sizes = [2, 32], strides = [1, 1]} : vector<2x128xf32> to vector<2x32xf32>
    %408 = vector.extract_strided_slice %406 {offsets = [0, 32], sizes = [2, 32], strides = [1, 1]} : vector<2x128xf32> to vector<2x32xf32>
    %409 = vector.extract_strided_slice %406 {offsets = [0, 64], sizes = [2, 32], strides = [1, 1]} : vector<2x128xf32> to vector<2x32xf32>
    %410 = math.tanh %409 : vector<2x32xf32>
    %411 = vector.extract_strided_slice %406 {offsets = [0, 96], sizes = [2, 32], strides = [1, 1]} : vector<2x128xf32> to vector<2x32xf32>
    %412 = arith.negf %411 : vector<2x32xf32>
    %413 = math.exp %412 : vector<2x32xf32>
    %cst_166 = arith.constant 1.000000e+00 : f32
    %414 = vector.broadcast %cst_166 : f32 to vector<2x32xf32>
    %415 = arith.addf %414, %413 : vector<2x32xf32>
    %416 = arith.divf %414, %415 : vector<2x32xf32>
    %417 = arith.addf %408, %345 : vector<2x32xf32>
    %418 = arith.maximumf %417, %407 : vector<2x32xf32>
    %419 = arith.subf %407, %418 : vector<2x32xf32>
    %420 = math.exp %419 : vector<2x32xf32>
    %421 = arith.addf %408, %345 : vector<2x32xf32>
    %422 = arith.subf %421, %418 : vector<2x32xf32>
    %423 = math.exp %422 : vector<2x32xf32>
    %424 = arith.mulf %423, %353 : vector<2x32xf32>
    %425 = arith.mulf %420, %410 : vector<2x32xf32>
    %426 = arith.addf %424, %425 : vector<2x32xf32>
    %427 = arith.mulf %423, %355 : vector<2x32xf32>
    %428 = arith.addf %427, %420 : vector<2x32xf32>
    %429 = arith.mulf %416, %426 : vector<2x32xf32>
    %430 = math.absf %428 : vector<2x32xf32>
    %cst_167 = arith.constant 1.000000e+00 : f32
    %431 = vector.broadcast %cst_167 : f32 to vector<2x32xf32>
    %432 = arith.maximumf %430, %431 : vector<2x32xf32>
    %433 = tpu.reciprocal %432 {approx = true} : vector<2x32xf32> -> vector<2x32xf32>
    %434 = arith.mulf %429, %433 : vector<2x32xf32>
    %c8_168 = arith.constant 8 : index
    %c0_169 = arith.constant 0 : index
    %435 = vector.load %arg29[%c8_168, %c0_169] : memref<16x32xf32, #tpu.memory_space<vmem>>, vector<2x32xf32>
    tpu.vector_store %arg29[%c8_168, %c0_169], %434 {strides = array<i32>} : memref<16x32xf32, #tpu.memory_space<vmem>>, vector<2x32xf32>,
    %c0_170 = arith.constant 0 : index
    %c0_171 = arith.constant 0 : index
    %c0_172 = arith.constant 0 : index
    %c0_173 = arith.constant 0 : index
    %436 = vector.load %arg7[%c0_170, %c0_171, %c0_172, %c0_173] : memref<2x2x32x128xf32, #tpu.memory_space<vmem>>, vector<1x1x32x128xf32>
    %437 = vector.shape_cast %436 : vector<1x1x32x128xf32> to vector<32x128xf32>
    %cst_174 = arith.constant dense<0.000000e+00> : vector<2x128xf32>
    %438 = tpu.matmul %395, %437, %cst_174 {dimension_numbers = #tpu.dot_dimension_numbers<[1], [0], [0], [1], [0, 0, 1, 1], [], []>} : vector<2x32xf32>, vector<32x128xf32>, vector<2x128xf32> -> vector<2x128xf32>
    %c10 = arith.constant 10 : index
    %c0_175 = arith.constant 0 : index
    %439 = vector.load %arg28[%c10, %c0_175] : memref<16x128xf32, #tpu.memory_space<vmem>>, vector<2x128xf32>
    %440 = arith.addf %439, %438 : vector<2x128xf32>
    %441 = vector.extract_strided_slice %440 {offsets = [0, 0], sizes = [2, 32], strides = [1, 1]} : vector<2x128xf32> to vector<2x32xf32>
    %442 = vector.extract_strided_slice %440 {offsets = [0, 32], sizes = [2, 32], strides = [1, 1]} : vector<2x128xf32> to vector<2x32xf32>
    %443 = vector.extract_strided_slice %440 {offsets = [0, 64], sizes = [2, 32], strides = [1, 1]} : vector<2x128xf32> to vector<2x32xf32>
    %444 = math.tanh %443 : vector<2x32xf32>
    %445 = vector.extract_strided_slice %440 {offsets = [0, 96], sizes = [2, 32], strides = [1, 1]} : vector<2x128xf32> to vector<2x32xf32>
    %446 = arith.negf %445 : vector<2x32xf32>
    %447 = math.exp %446 : vector<2x32xf32>
    %cst_176 = arith.constant 1.000000e+00 : f32
    %448 = vector.broadcast %cst_176 : f32 to vector<2x32xf32>
    %449 = arith.addf %448, %447 : vector<2x32xf32>
    %450 = arith.divf %448, %449 : vector<2x32xf32>
    %451 = arith.addf %442, %379 : vector<2x32xf32>
    %452 = arith.maximumf %451, %441 : vector<2x32xf32>
    %453 = arith.subf %441, %452 : vector<2x32xf32>
    %454 = math.exp %453 : vector<2x32xf32>
    %455 = arith.addf %442, %379 : vector<2x32xf32>
    %456 = arith.subf %455, %452 : vector<2x32xf32>
    %457 = math.exp %456 : vector<2x32xf32>
    %458 = arith.mulf %457, %387 : vector<2x32xf32>
    %459 = arith.mulf %454, %444 : vector<2x32xf32>
    %460 = arith.addf %458, %459 : vector<2x32xf32>
    %461 = arith.mulf %457, %389 : vector<2x32xf32>
    %462 = arith.addf %461, %454 : vector<2x32xf32>
    %463 = arith.mulf %450, %460 : vector<2x32xf32>
    %464 = math.absf %462 : vector<2x32xf32>
    %cst_177 = arith.constant 1.000000e+00 : f32
    %465 = vector.broadcast %cst_177 : f32 to vector<2x32xf32>
    %466 = arith.maximumf %464, %465 : vector<2x32xf32>
    %467 = tpu.reciprocal %466 {approx = true} : vector<2x32xf32> -> vector<2x32xf32>
    %468 = arith.mulf %463, %467 : vector<2x32xf32>
    %c0_178 = arith.constant 0 : index
    %c1_179 = arith.constant 1 : index
    %c0_180 = arith.constant 0 : index
    %c0_181 = arith.constant 0 : index
    %469 = vector.load %arg7[%c0_178, %c1_179, %c0_180, %c0_181] : memref<2x2x32x128xf32, #tpu.memory_space<vmem>>, vector<1x1x32x128xf32>
    %470 = vector.shape_cast %469 : vector<1x1x32x128xf32> to vector<32x128xf32>
    %cst_182 = arith.constant dense<0.000000e+00> : vector<2x128xf32>
    %471 = tpu.matmul %434, %470, %cst_182 {dimension_numbers = #tpu.dot_dimension_numbers<[1], [0], [0], [1], [0, 0, 1, 1], [], []>} : vector<2x32xf32>, vector<32x128xf32>, vector<2x128xf32> -> vector<2x128xf32>
    %c0_183 = arith.constant 0 : index
    %c1_184 = arith.constant 1 : index
    %c0_185 = arith.constant 0 : index
    %c0_186 = arith.constant 0 : index
    %472 = vector.load %arg6[%c0_183, %c1_184, %c0_185, %c0_186] : memref<2x2x32x128xf32, #tpu.memory_space<vmem>>, vector<1x1x32x128xf32>
    %473 = vector.shape_cast %472 : vector<1x1x32x128xf32> to vector<32x128xf32>
    %cst_187 = arith.constant dense<0.000000e+00> : vector<2x128xf32>
    %474 = tpu.matmul %468, %473, %cst_187 {dimension_numbers = #tpu.dot_dimension_numbers<[1], [0], [0], [1], [0, 0, 1, 1], [], []>} : vector<2x32xf32>, vector<32x128xf32>, vector<2x128xf32> -> vector<2x128xf32>
    %475 = arith.addf %474, %471 : vector<2x128xf32>
    %c0_188 = arith.constant 0 : index
    %c1_189 = arith.constant 1 : index
    %c0_190 = arith.constant 0 : index
    %c0_191 = arith.constant 0 : index
    %476 = vector.load %arg8[%c0_188, %c1_189, %c0_190, %c0_191] : memref<2x2x1x128xf32, #tpu.memory_space<vmem>>, vector<1x1x1x128xf32>
    %477 = vector.shape_cast %476 : vector<1x1x1x128xf32> to vector<1x128xf32>
    %478 = vector.broadcast %477 : vector<1x128xf32> to vector<2x128xf32>
    %479 = arith.addf %475, %478 : vector<2x128xf32>
    %480 = vector.extract_strided_slice %479 {offsets = [0, 0], sizes = [2, 32], strides = [1, 1]} : vector<2x128xf32> to vector<2x32xf32>
    %481 = vector.extract_strided_slice %479 {offsets = [0, 32], sizes = [2, 32], strides = [1, 1]} : vector<2x128xf32> to vector<2x32xf32>
    %482 = vector.extract_strided_slice %479 {offsets = [0, 64], sizes = [2, 32], strides = [1, 1]} : vector<2x128xf32> to vector<2x32xf32>
    %483 = math.tanh %482 : vector<2x32xf32>
    %484 = vector.extract_strided_slice %479 {offsets = [0, 96], sizes = [2, 32], strides = [1, 1]} : vector<2x128xf32> to vector<2x32xf32>
    %485 = arith.negf %484 : vector<2x32xf32>
    %486 = math.exp %485 : vector<2x32xf32>
    %cst_192 = arith.constant 1.000000e+00 : f32
    %487 = vector.broadcast %cst_192 : f32 to vector<2x32xf32>
    %488 = arith.addf %487, %486 : vector<2x32xf32>
    %489 = arith.divf %487, %488 : vector<2x32xf32>
    %490 = arith.addf %481, %418 : vector<2x32xf32>
    %491 = arith.maximumf %490, %480 : vector<2x32xf32>
    %492 = arith.subf %480, %491 : vector<2x32xf32>
    %493 = math.exp %492 : vector<2x32xf32>
    %494 = arith.addf %481, %418 : vector<2x32xf32>
    %495 = arith.subf %494, %491 : vector<2x32xf32>
    %496 = math.exp %495 : vector<2x32xf32>
    %497 = arith.mulf %496, %426 : vector<2x32xf32>
    %498 = arith.mulf %493, %483 : vector<2x32xf32>
    %499 = arith.addf %497, %498 : vector<2x32xf32>
    %500 = arith.mulf %496, %428 : vector<2x32xf32>
    %501 = arith.addf %500, %493 : vector<2x32xf32>
    %502 = arith.mulf %489, %499 : vector<2x32xf32>
    %503 = math.absf %501 : vector<2x32xf32>
    %cst_193 = arith.constant 1.000000e+00 : f32
    %504 = vector.broadcast %cst_193 : f32 to vector<2x32xf32>
    %505 = arith.maximumf %503, %504 : vector<2x32xf32>
    %506 = tpu.reciprocal %505 {approx = true} : vector<2x32xf32> -> vector<2x32xf32>
    %507 = arith.mulf %502, %506 : vector<2x32xf32>
    %c10_194 = arith.constant 10 : index
    %c0_195 = arith.constant 0 : index
    %508 = vector.load %arg29[%c10_194, %c0_195] : memref<16x32xf32, #tpu.memory_space<vmem>>, vector<2x32xf32>
    tpu.vector_store %arg29[%c10_194, %c0_195], %507 {strides = array<i32>} : memref<16x32xf32, #tpu.memory_space<vmem>>, vector<2x32xf32>,
    %c0_196 = arith.constant 0 : index
    %c0_197 = arith.constant 0 : index
    %c0_198 = arith.constant 0 : index
    %c0_199 = arith.constant 0 : index
    %509 = vector.load %arg7[%c0_196, %c0_197, %c0_198, %c0_199] : memref<2x2x32x128xf32, #tpu.memory_space<vmem>>, vector<1x1x32x128xf32>
    %510 = vector.shape_cast %509 : vector<1x1x32x128xf32> to vector<32x128xf32>
    %cst_200 = arith.constant dense<0.000000e+00> : vector<2x128xf32>
    %511 = tpu.matmul %468, %510, %cst_200 {dimension_numbers = #tpu.dot_dimension_numbers<[1], [0], [0], [1], [0, 0, 1, 1], [], []>} : vector<2x32xf32>, vector<32x128xf32>, vector<2x128xf32> -> vector<2x128xf32>
    %c12 = arith.constant 12 : index
    %c0_201 = arith.constant 0 : index
    %512 = vector.load %arg28[%c12, %c0_201] : memref<16x128xf32, #tpu.memory_space<vmem>>, vector<2x128xf32>
    %513 = arith.addf %512, %511 : vector<2x128xf32>
    %514 = vector.extract_strided_slice %513 {offsets = [0, 0], sizes = [2, 32], strides = [1, 1]} : vector<2x128xf32> to vector<2x32xf32>
    %515 = vector.extract_strided_slice %513 {offsets = [0, 32], sizes = [2, 32], strides = [1, 1]} : vector<2x128xf32> to vector<2x32xf32>
    %516 = vector.extract_strided_slice %513 {offsets = [0, 64], sizes = [2, 32], strides = [1, 1]} : vector<2x128xf32> to vector<2x32xf32>
    %517 = math.tanh %516 : vector<2x32xf32>
    %518 = vector.extract_strided_slice %513 {offsets = [0, 96], sizes = [2, 32], strides = [1, 1]} : vector<2x128xf32> to vector<2x32xf32>
    %519 = arith.negf %518 : vector<2x32xf32>
    %520 = math.exp %519 : vector<2x32xf32>
    %cst_202 = arith.constant 1.000000e+00 : f32
    %521 = vector.broadcast %cst_202 : f32 to vector<2x32xf32>
    %522 = arith.addf %521, %520 : vector<2x32xf32>
    %523 = arith.divf %521, %522 : vector<2x32xf32>
    %524 = arith.addf %515, %452 : vector<2x32xf32>
    %525 = arith.maximumf %524, %514 : vector<2x32xf32>
    %526 = arith.subf %514, %525 : vector<2x32xf32>
    %527 = math.exp %526 : vector<2x32xf32>
    %528 = arith.addf %515, %452 : vector<2x32xf32>
    %529 = arith.subf %528, %525 : vector<2x32xf32>
    %530 = math.exp %529 : vector<2x32xf32>
    %531 = arith.mulf %530, %460 : vector<2x32xf32>
    %532 = arith.mulf %527, %517 : vector<2x32xf32>
    %533 = arith.addf %531, %532 : vector<2x32xf32>
    %534 = arith.mulf %530, %462 : vector<2x32xf32>
    %535 = arith.addf %534, %527 : vector<2x32xf32>
    %536 = arith.mulf %523, %533 : vector<2x32xf32>
    %537 = math.absf %535 : vector<2x32xf32>
    %cst_203 = arith.constant 1.000000e+00 : f32
    %538 = vector.broadcast %cst_203 : f32 to vector<2x32xf32>
    %539 = arith.maximumf %537, %538 : vector<2x32xf32>
    %540 = tpu.reciprocal %539 {approx = true} : vector<2x32xf32> -> vector<2x32xf32>
    %541 = arith.mulf %536, %540 : vector<2x32xf32>
    %c0_204 = arith.constant 0 : index
    %c1_205 = arith.constant 1 : index
    %c0_206 = arith.constant 0 : index
    %c0_207 = arith.constant 0 : index
    %542 = vector.load %arg7[%c0_204, %c1_205, %c0_206, %c0_207] : memref<2x2x32x128xf32, #tpu.memory_space<vmem>>, vector<1x1x32x128xf32>
    %543 = vector.shape_cast %542 : vector<1x1x32x128xf32> to vector<32x128xf32>
    %cst_208 = arith.constant dense<0.000000e+00> : vector<2x128xf32>
    %544 = tpu.matmul %507, %543, %cst_208 {dimension_numbers = #tpu.dot_dimension_numbers<[1], [0], [0], [1], [0, 0, 1, 1], [], []>} : vector<2x32xf32>, vector<32x128xf32>, vector<2x128xf32> -> vector<2x128xf32>
    %c0_209 = arith.constant 0 : index
    %c1_210 = arith.constant 1 : index
    %c0_211 = arith.constant 0 : index
    %c0_212 = arith.constant 0 : index
    %545 = vector.load %arg6[%c0_209, %c1_210, %c0_211, %c0_212] : memref<2x2x32x128xf32, #tpu.memory_space<vmem>>, vector<1x1x32x128xf32>
    %546 = vector.shape_cast %545 : vector<1x1x32x128xf32> to vector<32x128xf32>
    %cst_213 = arith.constant dense<0.000000e+00> : vector<2x128xf32>
    %547 = tpu.matmul %541, %546, %cst_213 {dimension_numbers = #tpu.dot_dimension_numbers<[1], [0], [0], [1], [0, 0, 1, 1], [], []>} : vector<2x32xf32>, vector<32x128xf32>, vector<2x128xf32> -> vector<2x128xf32>
    %548 = arith.addf %547, %544 : vector<2x128xf32>
    %c0_214 = arith.constant 0 : index
    %c1_215 = arith.constant 1 : index
    %c0_216 = arith.constant 0 : index
    %c0_217 = arith.constant 0 : index
    %549 = vector.load %arg8[%c0_214, %c1_215, %c0_216, %c0_217] : memref<2x2x1x128xf32, #tpu.memory_space<vmem>>, vector<1x1x1x128xf32>
    %550 = vector.shape_cast %549 : vector<1x1x1x128xf32> to vector<1x128xf32>
    %551 = vector.broadcast %550 : vector<1x128xf32> to vector<2x128xf32>
    %552 = arith.addf %548, %551 : vector<2x128xf32>
    %553 = vector.extract_strided_slice %552 {offsets = [0, 0], sizes = [2, 32], strides = [1, 1]} : vector<2x128xf32> to vector<2x32xf32>
    %554 = vector.extract_strided_slice %552 {offsets = [0, 32], sizes = [2, 32], strides = [1, 1]} : vector<2x128xf32> to vector<2x32xf32>
    %555 = vector.extract_strided_slice %552 {offsets = [0, 64], sizes = [2, 32], strides = [1, 1]} : vector<2x128xf32> to vector<2x32xf32>
    %556 = math.tanh %555 : vector<2x32xf32>
    %557 = vector.extract_strided_slice %552 {offsets = [0, 96], sizes = [2, 32], strides = [1, 1]} : vector<2x128xf32> to vector<2x32xf32>
    %558 = arith.negf %557 : vector<2x32xf32>
    %559 = math.exp %558 : vector<2x32xf32>
    %cst_218 = arith.constant 1.000000e+00 : f32
    %560 = vector.broadcast %cst_218 : f32 to vector<2x32xf32>
    %561 = arith.addf %560, %559 : vector<2x32xf32>
    %562 = arith.divf %560, %561 : vector<2x32xf32>
    %563 = arith.addf %554, %491 : vector<2x32xf32>
    %564 = arith.maximumf %563, %553 : vector<2x32xf32>
    %565 = arith.subf %553, %564 : vector<2x32xf32>
    %566 = math.exp %565 : vector<2x32xf32>
    %567 = arith.addf %554, %491 : vector<2x32xf32>
    %568 = arith.subf %567, %564 : vector<2x32xf32>
    %569 = math.exp %568 : vector<2x32xf32>
    %570 = arith.mulf %569, %499 : vector<2x32xf32>
    %571 = arith.mulf %566, %556 : vector<2x32xf32>
    %572 = arith.addf %570, %571 : vector<2x32xf32>
    %573 = arith.mulf %569, %501 : vector<2x32xf32>
    %574 = arith.addf %573, %566 : vector<2x32xf32>
    %575 = arith.mulf %562, %572 : vector<2x32xf32>
    %576 = math.absf %574 : vector<2x32xf32>
    %cst_219 = arith.constant 1.000000e+00 : f32
    %577 = vector.broadcast %cst_219 : f32 to vector<2x32xf32>
    %578 = arith.maximumf %576, %577 : vector<2x32xf32>
    %579 = tpu.reciprocal %578 {approx = true} : vector<2x32xf32> -> vector<2x32xf32>
    %580 = arith.mulf %575, %579 : vector<2x32xf32>
    %c12_220 = arith.constant 12 : index
    %c0_221 = arith.constant 0 : index
    %581 = vector.load %arg29[%c12_220, %c0_221] : memref<16x32xf32, #tpu.memory_space<vmem>>, vector<2x32xf32>
    tpu.vector_store %arg29[%c12_220, %c0_221], %580 {strides = array<i32>} : memref<16x32xf32, #tpu.memory_space<vmem>>, vector<2x32xf32>,
    %c0_222 = arith.constant 0 : index
    %c0_223 = arith.constant 0 : index
    %c0_224 = arith.constant 0 : index
    %c0_225 = arith.constant 0 : index
    %582 = vector.load %arg7[%c0_222, %c0_223, %c0_224, %c0_225] : memref<2x2x32x128xf32, #tpu.memory_space<vmem>>, vector<1x1x32x128xf32>
    %583 = vector.shape_cast %582 : vector<1x1x32x128xf32> to vector<32x128xf32>
    %cst_226 = arith.constant dense<0.000000e+00> : vector<2x128xf32>
    %584 = tpu.matmul %541, %583, %cst_226 {dimension_numbers = #tpu.dot_dimension_numbers<[1], [0], [0], [1], [0, 0, 1, 1], [], []>} : vector<2x32xf32>, vector<32x128xf32>, vector<2x128xf32> -> vector<2x128xf32>
    %c14 = arith.constant 14 : index
    %c0_227 = arith.constant 0 : index
    %585 = vector.load %arg28[%c14, %c0_227] : memref<16x128xf32, #tpu.memory_space<vmem>>, vector<2x128xf32>
    %586 = arith.addf %585, %584 : vector<2x128xf32>
    %587 = vector.extract_strided_slice %586 {offsets = [0, 0], sizes = [2, 32], strides = [1, 1]} : vector<2x128xf32> to vector<2x32xf32>
    %588 = vector.extract_strided_slice %586 {offsets = [0, 32], sizes = [2, 32], strides = [1, 1]} : vector<2x128xf32> to vector<2x32xf32>
    %589 = vector.extract_strided_slice %586 {offsets = [0, 64], sizes = [2, 32], strides = [1, 1]} : vector<2x128xf32> to vector<2x32xf32>
    %590 = math.tanh %589 : vector<2x32xf32>
    %591 = vector.extract_strided_slice %586 {offsets = [0, 96], sizes = [2, 32], strides = [1, 1]} : vector<2x128xf32> to vector<2x32xf32>
    %592 = arith.negf %591 : vector<2x32xf32>
    %593 = math.exp %592 : vector<2x32xf32>
    %cst_228 = arith.constant 1.000000e+00 : f32
    %594 = vector.broadcast %cst_228 : f32 to vector<2x32xf32>
    %595 = arith.addf %594, %593 : vector<2x32xf32>
    %596 = arith.divf %594, %595 : vector<2x32xf32>
    %597 = arith.addf %588, %525 : vector<2x32xf32>
    %598 = arith.maximumf %597, %587 : vector<2x32xf32>
    %599 = arith.subf %587, %598 : vector<2x32xf32>
    %600 = math.exp %599 : vector<2x32xf32>
    %601 = arith.addf %588, %525 : vector<2x32xf32>
    %602 = arith.subf %601, %598 : vector<2x32xf32>
    %603 = math.exp %602 : vector<2x32xf32>
    %604 = arith.mulf %603, %533 : vector<2x32xf32>
    %605 = arith.mulf %600, %590 : vector<2x32xf32>
    %606 = arith.addf %604, %605 : vector<2x32xf32>
    %607 = arith.mulf %603, %535 : vector<2x32xf32>
    %608 = arith.addf %607, %600 : vector<2x32xf32>
    %609 = arith.mulf %596, %606 : vector<2x32xf32>
    %610 = math.absf %608 : vector<2x32xf32>
    %cst_229 = arith.constant 1.000000e+00 : f32
    %611 = vector.broadcast %cst_229 : f32 to vector<2x32xf32>
    %612 = arith.maximumf %610, %611 : vector<2x32xf32>
    %613 = tpu.reciprocal %612 {approx = true} : vector<2x32xf32> -> vector<2x32xf32>
    %614 = arith.mulf %609, %613 : vector<2x32xf32>
    %c0_230 = arith.constant 0 : index
    %c1_231 = arith.constant 1 : index
    %c0_232 = arith.constant 0 : index
    %c0_233 = arith.constant 0 : index
    %615 = vector.load %arg7[%c0_230, %c1_231, %c0_232, %c0_233] : memref<2x2x32x128xf32, #tpu.memory_space<vmem>>, vector<1x1x32x128xf32>
    %616 = vector.shape_cast %615 : vector<1x1x32x128xf32> to vector<32x128xf32>
    %cst_234 = arith.constant dense<0.000000e+00> : vector<2x128xf32>
    %617 = tpu.matmul %580, %616, %cst_234 {dimension_numbers = #tpu.dot_dimension_numbers<[1], [0], [0], [1], [0, 0, 1, 1], [], []>} : vector<2x32xf32>, vector<32x128xf32>, vector<2x128xf32> -> vector<2x128xf32>
    %c0_235 = arith.constant 0 : index
    %c1_236 = arith.constant 1 : index
    %c0_237 = arith.constant 0 : index
    %c0_238 = arith.constant 0 : index
    %618 = vector.load %arg6[%c0_235, %c1_236, %c0_237, %c0_238] : memref<2x2x32x128xf32, #tpu.memory_space<vmem>>, vector<1x1x32x128xf32>
    %619 = vector.shape_cast %618 : vector<1x1x32x128xf32> to vector<32x128xf32>
    %cst_239 = arith.constant dense<0.000000e+00> : vector<2x128xf32>
    %620 = tpu.matmul %614, %619, %cst_239 {dimension_numbers = #tpu.dot_dimension_numbers<[1], [0], [0], [1], [0, 0, 1, 1], [], []>} : vector<2x32xf32>, vector<32x128xf32>, vector<2x128xf32> -> vector<2x128xf32>
    %621 = arith.addf %620, %617 : vector<2x128xf32>
    %c0_240 = arith.constant 0 : index
    %c1_241 = arith.constant 1 : index
    %c0_242 = arith.constant 0 : index
    %c0_243 = arith.constant 0 : index
    %622 = vector.load %arg8[%c0_240, %c1_241, %c0_242, %c0_243] : memref<2x2x1x128xf32, #tpu.memory_space<vmem>>, vector<1x1x1x128xf32>
    %623 = vector.shape_cast %622 : vector<1x1x1x128xf32> to vector<1x128xf32>
    %624 = vector.broadcast %623 : vector<1x128xf32> to vector<2x128xf32>
    %625 = arith.addf %621, %624 : vector<2x128xf32>
    %626 = vector.extract_strided_slice %625 {offsets = [0, 0], sizes = [2, 32], strides = [1, 1]} : vector<2x128xf32> to vector<2x32xf32>
    %627 = vector.extract_strided_slice %625 {offsets = [0, 32], sizes = [2, 32], strides = [1, 1]} : vector<2x128xf32> to vector<2x32xf32>
    %628 = vector.extract_strided_slice %625 {offsets = [0, 64], sizes = [2, 32], strides = [1, 1]} : vector<2x128xf32> to vector<2x32xf32>
    %629 = math.tanh %628 : vector<2x32xf32>
    %630 = vector.extract_strided_slice %625 {offsets = [0, 96], sizes = [2, 32], strides = [1, 1]} : vector<2x128xf32> to vector<2x32xf32>
    %631 = arith.negf %630 : vector<2x32xf32>
    %632 = math.exp %631 : vector<2x32xf32>
    %cst_244 = arith.constant 1.000000e+00 : f32
    %633 = vector.broadcast %cst_244 : f32 to vector<2x32xf32>
    %634 = arith.addf %633, %632 : vector<2x32xf32>
    %635 = arith.divf %633, %634 : vector<2x32xf32>
    %636 = arith.addf %627, %564 : vector<2x32xf32>
    %637 = arith.maximumf %636, %626 : vector<2x32xf32>
    %638 = arith.subf %626, %637 : vector<2x32xf32>
    %639 = math.exp %638 : vector<2x32xf32>
    %640 = arith.addf %627, %564 : vector<2x32xf32>
    %641 = arith.subf %640, %637 : vector<2x32xf32>
    %642 = math.exp %641 : vector<2x32xf32>
    %643 = arith.mulf %642, %572 : vector<2x32xf32>
    %644 = arith.mulf %639, %629 : vector<2x32xf32>
    %645 = arith.addf %643, %644 : vector<2x32xf32>
    %646 = arith.mulf %642, %574 : vector<2x32xf32>
    %647 = arith.addf %646, %639 : vector<2x32xf32>
    %648 = arith.mulf %635, %645 : vector<2x32xf32>
    %649 = math.absf %647 : vector<2x32xf32>
    %cst_245 = arith.constant 1.000000e+00 : f32
    %650 = vector.broadcast %cst_245 : f32 to vector<2x32xf32>
    %651 = arith.maximumf %649, %650 : vector<2x32xf32>
    %652 = tpu.reciprocal %651 {approx = true} : vector<2x32xf32> -> vector<2x32xf32>
    %653 = arith.mulf %648, %652 : vector<2x32xf32>
    %c14_246 = arith.constant 14 : index
    %c0_247 = arith.constant 0 : index
    %654 = vector.load %arg29[%c14_246, %c0_247] : memref<16x32xf32, #tpu.memory_space<vmem>>, vector<2x32xf32>
    tpu.vector_store %arg29[%c14_246, %c0_247], %653 {strides = array<i32>} : memref<16x32xf32, #tpu.memory_space<vmem>>, vector<2x32xf32>,
    %c0_248 = arith.constant 0 : index
    %c0_249 = arith.constant 0 : index
    %655 = vector.load %arg29[%c0_248, %c0_249] : memref<16x32xf32, #tpu.memory_space<vmem>>, vector<16x32xf32>
    %cst_250 = arith.constant 5.000000e-01 : f32
    %656 = vector.broadcast %cst_250 : f32 to vector<16x32xf32>
    %657 = arith.mulf %656, %655 : vector<16x32xf32>
    %cst_251 = arith.constant 4.471500e-02 : f32
    %658 = vector.broadcast %cst_251 : f32 to vector<16x32xf32>
    %659 = arith.mulf %658, %655 : vector<16x32xf32>
    %660 = arith.mulf %659, %655 : vector<16x32xf32>
    %661 = arith.mulf %660, %655 : vector<16x32xf32>
    %662 = arith.addf %655, %661 : vector<16x32xf32>
    %cst_252 = arith.constant 0.797884583 : f32
    %663 = vector.broadcast %cst_252 : f32 to vector<16x32xf32>
    %664 = arith.mulf %663, %662 : vector<16x32xf32>
    %665 = math.tanh %664 : vector<16x32xf32>
    %cst_253 = arith.constant 1.000000e+00 : f32
    %666 = vector.broadcast %cst_253 : f32 to vector<16x32xf32>
    %667 = arith.addf %666, %665 : vector<16x32xf32>
    %668 = arith.mulf %657, %667 : vector<16x32xf32>
    %669 = arith.addf %668, %54 : vector<16x32xf32>
    %c0_254 = arith.constant 0 : index
    %c0_255 = arith.constant 0 : index
    %c0_256 = arith.constant 0 : index
    %670 = vector.load %arg9[%c0_254, %c0_255, %c0_256] : memref<2x1x32xf32, #tpu.memory_space<vmem>>, vector<1x1x32xf32>
    %671 = vector.shape_cast %670 : vector<1x1x32xf32> to vector<1x32xf32>
    %c0_257 = arith.constant 0 : index
    %c0_258 = arith.constant 0 : index
    %c0_259 = arith.constant 0 : index
    %672 = vector.load %arg10[%c0_257, %c0_258, %c0_259] : memref<2x1x32xf32, #tpu.memory_space<vmem>>, vector<1x1x32xf32>
    %673 = vector.shape_cast %672 : vector<1x1x32xf32> to vector<1x32xf32>
    %cst_260 = arith.constant dense<0.000000e+00> : vector<16xf32>
    %674 = vector.multi_reduction <add>, %669, %cst_260 [1] : vector<16x32xf32> to vector<16xf32>
    %675 = vector.shape_cast %674 : vector<16xf32> to vector<16x1xf32>
    %cst_261 = arith.constant 3.200000e+01 : f32
    %676 = vector.broadcast %cst_261 : f32 to vector<16x1xf32>
    %677 = arith.divf %675, %676 : vector<16x1xf32>
    %678 = vector.broadcast %677 : vector<16x1xf32> to vector<16x32xf32>
    %679 = arith.subf %669, %678 : vector<16x32xf32>
    %680 = arith.mulf %679, %679 : vector<16x32xf32>
    %cst_262 = arith.constant dense<0.000000e+00> : vector<16xf32>
    %681 = vector.multi_reduction <add>, %680, %cst_262 [1] : vector<16x32xf32> to vector<16xf32>
    %682 = vector.shape_cast %681 : vector<16xf32> to vector<16x1xf32>
    %cst_263 = arith.constant 3.200000e+01 : f32
    %683 = vector.broadcast %cst_263 : f32 to vector<16x1xf32>
    %684 = arith.divf %682, %683 : vector<16x1xf32>
    %685 = vector.broadcast %677 : vector<16x1xf32> to vector<16x32xf32>
    %686 = arith.subf %669, %685 : vector<16x32xf32>
    %cst_264 = arith.constant 9.99999974E-6 : f32
    %687 = vector.broadcast %cst_264 : f32 to vector<16x1xf32>
    %688 = arith.addf %684, %687 : vector<16x1xf32>
    %689 = math.rsqrt %688 : vector<16x1xf32>
    %690 = vector.broadcast %689 : vector<16x1xf32> to vector<16x32xf32>
    %691 = arith.mulf %686, %690 : vector<16x32xf32>
    %692 = vector.broadcast %671 : vector<1x32xf32> to vector<16x32xf32>
    %693 = arith.mulf %691, %692 : vector<16x32xf32>
    %694 = vector.broadcast %673 : vector<1x32xf32> to vector<16x32xf32>
    %695 = arith.addf %693, %694 : vector<16x32xf32>
    %c0_265 = arith.constant 0 : index
    %c0_266 = arith.constant 0 : index
    %c0_267 = arith.constant 0 : index
    %c0_268 = arith.constant 0 : index
    %696 = vector.load %arg24[%c0_265, %c0_266, %c0_267, %c0_268] : memref<2x2x2x32xf32, #tpu.memory_space<vmem>>, vector<1x1x2x32xf32>
    %697 = vector.shape_cast %696 : vector<1x1x2x32xf32> to vector<2x32xf32>
    %698 = vector.shape_cast %614 : vector<2x32xf32> to vector<1x1x2x32xf32>
    tpu.vector_store %arg24[%c0_265, %c0_266, %c0_267, %c0_268], %698 {strides = array<i32>} : memref<2x2x2x32xf32, #tpu.memory_space<vmem>>, vector<1x1x2x32xf32>,
    %c0_269 = arith.constant 0 : index
    %c0_270 = arith.constant 0 : index
    %c0_271 = arith.constant 0 : index
    %c0_272 = arith.constant 0 : index
    %699 = vector.load %arg25[%c0_269, %c0_270, %c0_271, %c0_272] : memref<2x2x2x32xf32, #tpu.memory_space<vmem>>, vector<1x1x2x32xf32>
    %700 = vector.shape_cast %699 : vector<1x1x2x32xf32> to vector<2x32xf32>
    %701 = vector.shape_cast %606 : vector<2x32xf32> to vector<1x1x2x32xf32>
    tpu.vector_store %arg25[%c0_269, %c0_270, %c0_271, %c0_272], %701 {strides = array<i32>} : memref<2x2x2x32xf32, #tpu.memory_space<vmem>>, vector<1x1x2x32xf32>,
    %c0_273 = arith.constant 0 : index
    %c0_274 = arith.constant 0 : index
    %c0_275 = arith.constant 0 : index
    %c0_276 = arith.constant 0 : index
    %702 = vector.load %arg26[%c0_273, %c0_274, %c0_275, %c0_276] : memref<2x2x2x32xf32, #tpu.memory_space<vmem>>, vector<1x1x2x32xf32>
    %703 = vector.shape_cast %702 : vector<1x1x2x32xf32> to vector<2x32xf32>
    %704 = vector.shape_cast %608 : vector<2x32xf32> to vector<1x1x2x32xf32>
    tpu.vector_store %arg26[%c0_273, %c0_274, %c0_275, %c0_276], %704 {strides = array<i32>} : memref<2x2x2x32xf32, #tpu.memory_space<vmem>>, vector<1x1x2x32xf32>,
    %c0_277 = arith.constant 0 : index
    %c0_278 = arith.constant 0 : index
    %c0_279 = arith.constant 0 : index
    %c0_280 = arith.constant 0 : index
    %705 = vector.load %arg27[%c0_277, %c0_278, %c0_279, %c0_280] : memref<2x2x2x32xf32, #tpu.memory_space<vmem>>, vector<1x1x2x32xf32>
    %706 = vector.shape_cast %705 : vector<1x1x2x32xf32> to vector<2x32xf32>
    %707 = vector.shape_cast %598 : vector<2x32xf32> to vector<1x1x2x32xf32>
    tpu.vector_store %arg27[%c0_277, %c0_278, %c0_279, %c0_280], %707 {strides = array<i32>} : memref<2x2x2x32xf32, #tpu.memory_space<vmem>>, vector<1x1x2x32xf32>,
    %c0_281 = arith.constant 0 : index
    %c1_282 = arith.constant 1 : index
    %c0_283 = arith.constant 0 : index
    %c0_284 = arith.constant 0 : index
    %708 = vector.load %arg24[%c0_281, %c1_282, %c0_283, %c0_284] : memref<2x2x2x32xf32, #tpu.memory_space<vmem>>, vector<1x1x2x32xf32>
    %709 = vector.shape_cast %708 : vector<1x1x2x32xf32> to vector<2x32xf32>
    %710 = vector.shape_cast %653 : vector<2x32xf32> to vector<1x1x2x32xf32>
    tpu.vector_store %arg24[%c0_281, %c1_282, %c0_283, %c0_284], %710 {strides = array<i32>} : memref<2x2x2x32xf32, #tpu.memory_space<vmem>>, vector<1x1x2x32xf32>,
    %c0_285 = arith.constant 0 : index
    %c1_286 = arith.constant 1 : index
    %c0_287 = arith.constant 0 : index
    %c0_288 = arith.constant 0 : index
    %711 = vector.load %arg25[%c0_285, %c1_286, %c0_287, %c0_288] : memref<2x2x2x32xf32, #tpu.memory_space<vmem>>, vector<1x1x2x32xf32>
    %712 = vector.shape_cast %711 : vector<1x1x2x32xf32> to vector<2x32xf32>
    %713 = vector.shape_cast %645 : vector<2x32xf32> to vector<1x1x2x32xf32>
    tpu.vector_store %arg25[%c0_285, %c1_286, %c0_287, %c0_288], %713 {strides = array<i32>} : memref<2x2x2x32xf32, #tpu.memory_space<vmem>>, vector<1x1x2x32xf32>,
    %c0_289 = arith.constant 0 : index
    %c1_290 = arith.constant 1 : index
    %c0_291 = arith.constant 0 : index
    %c0_292 = arith.constant 0 : index
    %714 = vector.load %arg26[%c0_289, %c1_290, %c0_291, %c0_292] : memref<2x2x2x32xf32, #tpu.memory_space<vmem>>, vector<1x1x2x32xf32>
    %715 = vector.shape_cast %714 : vector<1x1x2x32xf32> to vector<2x32xf32>
    %716 = vector.shape_cast %647 : vector<2x32xf32> to vector<1x1x2x32xf32>
    tpu.vector_store %arg26[%c0_289, %c1_290, %c0_291, %c0_292], %716 {strides = array<i32>} : memref<2x2x2x32xf32, #tpu.memory_space<vmem>>, vector<1x1x2x32xf32>,
    %c0_293 = arith.constant 0 : index
    %c1_294 = arith.constant 1 : index
    %c0_295 = arith.constant 0 : index
    %c0_296 = arith.constant 0 : index
    %717 = vector.load %arg27[%c0_293, %c1_294, %c0_295, %c0_296] : memref<2x2x2x32xf32, #tpu.memory_space<vmem>>, vector<1x1x2x32xf32>
    %718 = vector.shape_cast %717 : vector<1x1x2x32xf32> to vector<2x32xf32>
    %719 = vector.shape_cast %637 : vector<2x32xf32> to vector<1x1x2x32xf32>
    tpu.vector_store %arg27[%c0_293, %c1_294, %c0_295, %c0_296], %719 {strides = array<i32>} : memref<2x2x2x32xf32, #tpu.memory_space<vmem>>, vector<1x1x2x32xf32>,
    %c1_297 = arith.constant 1 : index
    %c0_298 = arith.constant 0 : index
    %c0_299 = arith.constant 0 : index
    %c0_300 = arith.constant 0 : index
    %720 = vector.load %arg6[%c1_297, %c0_298, %c0_299, %c0_300] : memref<2x2x32x128xf32, #tpu.memory_space<vmem>>, vector<1x1x32x128xf32>
    %721 = vector.shape_cast %720 : vector<1x1x32x128xf32> to vector<32x128xf32>
    %cst_301 = arith.constant dense<0.000000e+00> : vector<16x128xf32>
    %722 = tpu.matmul %695, %721, %cst_301 {dimension_numbers = #tpu.dot_dimension_numbers<[1], [0], [0], [1], [0, 0, 1, 1], [], []>} : vector<16x32xf32>, vector<32x128xf32>, vector<16x128xf32> -> vector<16x128xf32>
    %c1_302 = arith.constant 1 : index
    %c0_303 = arith.constant 0 : index
    %c0_304 = arith.constant 0 : index
    %c0_305 = arith.constant 0 : index
    %723 = vector.load %arg8[%c1_302, %c0_303, %c0_304, %c0_305] : memref<2x2x1x128xf32, #tpu.memory_space<vmem>>, vector<1x1x1x128xf32>
    %724 = vector.shape_cast %723 : vector<1x1x1x128xf32> to vector<1x128xf32>
    %725 = vector.broadcast %724 : vector<1x128xf32> to vector<16x128xf32>
    %726 = arith.addf %722, %725 : vector<16x128xf32>
    %c0_306 = arith.constant 0 : index
    %c0_307 = arith.constant 0 : index
    %727 = vector.load %arg28[%c0_306, %c0_307] : memref<16x128xf32, #tpu.memory_space<vmem>>, vector<16x128xf32>
    tpu.vector_store %arg28[%c0_306, %c0_307], %726 {strides = array<i32>} : memref<16x128xf32, #tpu.memory_space<vmem>>, vector<16x128xf32>,
    %cst_308 = arith.constant 0.000000e+00 : f32
    %728 = vector.broadcast %cst_308 : f32 to vector<2x32xf32>
    %cst_309 = arith.constant 0.000000e+00 : f32
    %729 = vector.broadcast %cst_309 : f32 to vector<2x32xf32>
    %cst_310 = arith.constant 0.000000e+00 : f32
    %730 = vector.broadcast %cst_310 : f32 to vector<2x32xf32>
    %cst_311 = arith.constant 0.000000e+00 : f32
    %731 = vector.broadcast %cst_311 : f32 to vector<2x32xf32>
    %cst_312 = arith.constant 0.000000e+00 : f32
    %732 = vector.broadcast %cst_312 : f32 to vector<2x32xf32>
    %cst_313 = arith.constant 0.000000e+00 : f32
    %733 = vector.broadcast %cst_313 : f32 to vector<2x32xf32>
    %cst_314 = arith.constant 0.000000e+00 : f32
    %734 = vector.broadcast %cst_314 : f32 to vector<2x32xf32>
    %cst_315 = arith.constant 0.000000e+00 : f32
    %735 = vector.broadcast %cst_315 : f32 to vector<2x32xf32>
    %c1_316 = arith.constant 1 : index
    %c0_317 = arith.constant 0 : index
    %c0_318 = arith.constant 0 : index
    %c0_319 = arith.constant 0 : index
    %736 = vector.load %arg7[%c1_316, %c0_317, %c0_318, %c0_319] : memref<2x2x32x128xf32, #tpu.memory_space<vmem>>, vector<1x1x32x128xf32>
    %737 = vector.shape_cast %736 : vector<1x1x32x128xf32> to vector<32x128xf32>
    %cst_320 = arith.constant dense<0.000000e+00> : vector<2x128xf32>
    %738 = tpu.matmul %728, %737, %cst_320 {dimension_numbers = #tpu.dot_dimension_numbers<[1], [0], [0], [1], [0, 0, 1, 1], [], []>} : vector<2x32xf32>, vector<32x128xf32>, vector<2x128xf32> -> vector<2x128xf32>
    %c0_321 = arith.constant 0 : index
    %c0_322 = arith.constant 0 : index
    %739 = vector.load %arg28[%c0_321, %c0_322] : memref<16x128xf32, #tpu.memory_space<vmem>>, vector<2x128xf32>
    %740 = arith.addf %739, %738 : vector<2x128xf32>
    %741 = vector.extract_strided_slice %740 {offsets = [0, 0], sizes = [2, 32], strides = [1, 1]} : vector<2x128xf32> to vector<2x32xf32>
    %742 = vector.extract_strided_slice %740 {offsets = [0, 32], sizes = [2, 32], strides = [1, 1]} : vector<2x128xf32> to vector<2x32xf32>
    %743 = vector.extract_strided_slice %740 {offsets = [0, 64], sizes = [2, 32], strides = [1, 1]} : vector<2x128xf32> to vector<2x32xf32>
    %744 = math.tanh %743 : vector<2x32xf32>
    %745 = vector.extract_strided_slice %740 {offsets = [0, 96], sizes = [2, 32], strides = [1, 1]} : vector<2x128xf32> to vector<2x32xf32>
    %746 = arith.negf %745 : vector<2x32xf32>
    %747 = math.exp %746 : vector<2x32xf32>
    %cst_323 = arith.constant 1.000000e+00 : f32
    %748 = vector.broadcast %cst_323 : f32 to vector<2x32xf32>
    %749 = arith.addf %748, %747 : vector<2x32xf32>
    %750 = arith.divf %748, %749 : vector<2x32xf32>
    %751 = arith.addf %742, %734 : vector<2x32xf32>
    %752 = arith.maximumf %751, %741 : vector<2x32xf32>
    %753 = arith.subf %741, %752 : vector<2x32xf32>
    %754 = math.exp %753 : vector<2x32xf32>
    %755 = arith.addf %742, %734 : vector<2x32xf32>
    %756 = arith.subf %755, %752 : vector<2x32xf32>
    %757 = math.exp %756 : vector<2x32xf32>
    %758 = arith.mulf %757, %730 : vector<2x32xf32>
    %759 = arith.mulf %754, %744 : vector<2x32xf32>
    %760 = arith.addf %758, %759 : vector<2x32xf32>
    %761 = arith.mulf %757, %732 : vector<2x32xf32>
    %762 = arith.addf %761, %754 : vector<2x32xf32>
    %763 = arith.mulf %750, %760 : vector<2x32xf32>
    %764 = math.absf %762 : vector<2x32xf32>
    %cst_324 = arith.constant 1.000000e+00 : f32
    %765 = vector.broadcast %cst_324 : f32 to vector<2x32xf32>
    %766 = arith.maximumf %764, %765 : vector<2x32xf32>
    %767 = tpu.reciprocal %766 {approx = true} : vector<2x32xf32> -> vector<2x32xf32>
    %768 = arith.mulf %763, %767 : vector<2x32xf32>
    %c1_325 = arith.constant 1 : index
    %c1_326 = arith.constant 1 : index
    %c0_327 = arith.constant 0 : index
    %c0_328 = arith.constant 0 : index
    %769 = vector.load %arg7[%c1_325, %c1_326, %c0_327, %c0_328] : memref<2x2x32x128xf32, #tpu.memory_space<vmem>>, vector<1x1x32x128xf32>
    %770 = vector.shape_cast %769 : vector<1x1x32x128xf32> to vector<32x128xf32>
    %cst_329 = arith.constant dense<0.000000e+00> : vector<2x128xf32>
    %771 = tpu.matmul %729, %770, %cst_329 {dimension_numbers = #tpu.dot_dimension_numbers<[1], [0], [0], [1], [0, 0, 1, 1], [], []>} : vector<2x32xf32>, vector<32x128xf32>, vector<2x128xf32> -> vector<2x128xf32>
    %c1_330 = arith.constant 1 : index
    %c1_331 = arith.constant 1 : index
    %c0_332 = arith.constant 0 : index
    %c0_333 = arith.constant 0 : index
    %772 = vector.load %arg6[%c1_330, %c1_331, %c0_332, %c0_333] : memref<2x2x32x128xf32, #tpu.memory_space<vmem>>, vector<1x1x32x128xf32>
    %773 = vector.shape_cast %772 : vector<1x1x32x128xf32> to vector<32x128xf32>
    %cst_334 = arith.constant dense<0.000000e+00> : vector<2x128xf32>
    %774 = tpu.matmul %768, %773, %cst_334 {dimension_numbers = #tpu.dot_dimension_numbers<[1], [0], [0], [1], [0, 0, 1, 1], [], []>} : vector<2x32xf32>, vector<32x128xf32>, vector<2x128xf32> -> vector<2x128xf32>
    %775 = arith.addf %774, %771 : vector<2x128xf32>
    %c1_335 = arith.constant 1 : index
    %c1_336 = arith.constant 1 : index
    %c0_337 = arith.constant 0 : index
    %c0_338 = arith.constant 0 : index
    %776 = vector.load %arg8[%c1_335, %c1_336, %c0_337, %c0_338] : memref<2x2x1x128xf32, #tpu.memory_space<vmem>>, vector<1x1x1x128xf32>
    %777 = vector.shape_cast %776 : vector<1x1x1x128xf32> to vector<1x128xf32>
    %778 = vector.broadcast %777 : vector<1x128xf32> to vector<2x128xf32>
    %779 = arith.addf %775, %778 : vector<2x128xf32>
    %780 = vector.extract_strided_slice %779 {offsets = [0, 0], sizes = [2, 32], strides = [1, 1]} : vector<2x128xf32> to vector<2x32xf32>
    %781 = vector.extract_strided_slice %779 {offsets = [0, 32], sizes = [2, 32], strides = [1, 1]} : vector<2x128xf32> to vector<2x32xf32>
    %782 = vector.extract_strided_slice %779 {offsets = [0, 64], sizes = [2, 32], strides = [1, 1]} : vector<2x128xf32> to vector<2x32xf32>
    %783 = math.tanh %782 : vector<2x32xf32>
    %784 = vector.extract_strided_slice %779 {offsets = [0, 96], sizes = [2, 32], strides = [1, 1]} : vector<2x128xf32> to vector<2x32xf32>
    %785 = arith.negf %784 : vector<2x32xf32>
    %786 = math.exp %785 : vector<2x32xf32>
    %cst_339 = arith.constant 1.000000e+00 : f32
    %787 = vector.broadcast %cst_339 : f32 to vector<2x32xf32>
    %788 = arith.addf %787, %786 : vector<2x32xf32>
    %789 = arith.divf %787, %788 : vector<2x32xf32>
    %790 = arith.addf %781, %735 : vector<2x32xf32>
    %791 = arith.maximumf %790, %780 : vector<2x32xf32>
    %792 = arith.subf %780, %791 : vector<2x32xf32>
    %793 = math.exp %792 : vector<2x32xf32>
    %794 = arith.addf %781, %735 : vector<2x32xf32>
    %795 = arith.subf %794, %791 : vector<2x32xf32>
    %796 = math.exp %795 : vector<2x32xf32>
    %797 = arith.mulf %796, %731 : vector<2x32xf32>
    %798 = arith.mulf %793, %783 : vector<2x32xf32>
    %799 = arith.addf %797, %798 : vector<2x32xf32>
    %800 = arith.mulf %796, %733 : vector<2x32xf32>
    %801 = arith.addf %800, %793 : vector<2x32xf32>
    %802 = arith.mulf %789, %799 : vector<2x32xf32>
    %803 = math.absf %801 : vector<2x32xf32>
    %cst_340 = arith.constant 1.000000e+00 : f32
    %804 = vector.broadcast %cst_340 : f32 to vector<2x32xf32>
    %805 = arith.maximumf %803, %804 : vector<2x32xf32>
    %806 = tpu.reciprocal %805 {approx = true} : vector<2x32xf32> -> vector<2x32xf32>
    %807 = arith.mulf %802, %806 : vector<2x32xf32>
    %c0_341 = arith.constant 0 : index
    %c0_342 = arith.constant 0 : index
    %808 = vector.load %arg29[%c0_341, %c0_342] : memref<16x32xf32, #tpu.memory_space<vmem>>, vector<2x32xf32>
    tpu.vector_store %arg29[%c0_341, %c0_342], %807 {strides = array<i32>} : memref<16x32xf32, #tpu.memory_space<vmem>>, vector<2x32xf32>,
    %c1_343 = arith.constant 1 : index
    %c0_344 = arith.constant 0 : index
    %c0_345 = arith.constant 0 : index
    %c0_346 = arith.constant 0 : index
    %809 = vector.load %arg7[%c1_343, %c0_344, %c0_345, %c0_346] : memref<2x2x32x128xf32, #tpu.memory_space<vmem>>, vector<1x1x32x128xf32>
    %810 = vector.shape_cast %809 : vector<1x1x32x128xf32> to vector<32x128xf32>
    %cst_347 = arith.constant dense<0.000000e+00> : vector<2x128xf32>
    %811 = tpu.matmul %768, %810, %cst_347 {dimension_numbers = #tpu.dot_dimension_numbers<[1], [0], [0], [1], [0, 0, 1, 1], [], []>} : vector<2x32xf32>, vector<32x128xf32>, vector<2x128xf32> -> vector<2x128xf32>
    %c2_348 = arith.constant 2 : index
    %c0_349 = arith.constant 0 : index
    %812 = vector.load %arg28[%c2_348, %c0_349] : memref<16x128xf32, #tpu.memory_space<vmem>>, vector<2x128xf32>
    %813 = arith.addf %812, %811 : vector<2x128xf32>
    %814 = vector.extract_strided_slice %813 {offsets = [0, 0], sizes = [2, 32], strides = [1, 1]} : vector<2x128xf32> to vector<2x32xf32>
    %815 = vector.extract_strided_slice %813 {offsets = [0, 32], sizes = [2, 32], strides = [1, 1]} : vector<2x128xf32> to vector<2x32xf32>
    %816 = vector.extract_strided_slice %813 {offsets = [0, 64], sizes = [2, 32], strides = [1, 1]} : vector<2x128xf32> to vector<2x32xf32>
    %817 = math.tanh %816 : vector<2x32xf32>
    %818 = vector.extract_strided_slice %813 {offsets = [0, 96], sizes = [2, 32], strides = [1, 1]} : vector<2x128xf32> to vector<2x32xf32>
    %819 = arith.negf %818 : vector<2x32xf32>
    %820 = math.exp %819 : vector<2x32xf32>
    %cst_350 = arith.constant 1.000000e+00 : f32
    %821 = vector.broadcast %cst_350 : f32 to vector<2x32xf32>
    %822 = arith.addf %821, %820 : vector<2x32xf32>
    %823 = arith.divf %821, %822 : vector<2x32xf32>
    %824 = arith.addf %815, %752 : vector<2x32xf32>
    %825 = arith.maximumf %824, %814 : vector<2x32xf32>
    %826 = arith.subf %814, %825 : vector<2x32xf32>
    %827 = math.exp %826 : vector<2x32xf32>
    %828 = arith.addf %815, %752 : vector<2x32xf32>
    %829 = arith.subf %828, %825 : vector<2x32xf32>
    %830 = math.exp %829 : vector<2x32xf32>
    %831 = arith.mulf %830, %760 : vector<2x32xf32>
    %832 = arith.mulf %827, %817 : vector<2x32xf32>
    %833 = arith.addf %831, %832 : vector<2x32xf32>
    %834 = arith.mulf %830, %762 : vector<2x32xf32>
    %835 = arith.addf %834, %827 : vector<2x32xf32>
    %836 = arith.mulf %823, %833 : vector<2x32xf32>
    %837 = math.absf %835 : vector<2x32xf32>
    %cst_351 = arith.constant 1.000000e+00 : f32
    %838 = vector.broadcast %cst_351 : f32 to vector<2x32xf32>
    %839 = arith.maximumf %837, %838 : vector<2x32xf32>
    %840 = tpu.reciprocal %839 {approx = true} : vector<2x32xf32> -> vector<2x32xf32>
    %841 = arith.mulf %836, %840 : vector<2x32xf32>
    %c1_352 = arith.constant 1 : index
    %c1_353 = arith.constant 1 : index
    %c0_354 = arith.constant 0 : index
    %c0_355 = arith.constant 0 : index
    %842 = vector.load %arg7[%c1_352, %c1_353, %c0_354, %c0_355] : memref<2x2x32x128xf32, #tpu.memory_space<vmem>>, vector<1x1x32x128xf32>
    %843 = vector.shape_cast %842 : vector<1x1x32x128xf32> to vector<32x128xf32>
    %cst_356 = arith.constant dense<0.000000e+00> : vector<2x128xf32>
    %844 = tpu.matmul %807, %843, %cst_356 {dimension_numbers = #tpu.dot_dimension_numbers<[1], [0], [0], [1], [0, 0, 1, 1], [], []>} : vector<2x32xf32>, vector<32x128xf32>, vector<2x128xf32> -> vector<2x128xf32>
    %c1_357 = arith.constant 1 : index
    %c1_358 = arith.constant 1 : index
    %c0_359 = arith.constant 0 : index
    %c0_360 = arith.constant 0 : index
    %845 = vector.load %arg6[%c1_357, %c1_358, %c0_359, %c0_360] : memref<2x2x32x128xf32, #tpu.memory_space<vmem>>, vector<1x1x32x128xf32>
    %846 = vector.shape_cast %845 : vector<1x1x32x128xf32> to vector<32x128xf32>
    %cst_361 = arith.constant dense<0.000000e+00> : vector<2x128xf32>
    %847 = tpu.matmul %841, %846, %cst_361 {dimension_numbers = #tpu.dot_dimension_numbers<[1], [0], [0], [1], [0, 0, 1, 1], [], []>} : vector<2x32xf32>, vector<32x128xf32>, vector<2x128xf32> -> vector<2x128xf32>
    %848 = arith.addf %847, %844 : vector<2x128xf32>
    %c1_362 = arith.constant 1 : index
    %c1_363 = arith.constant 1 : index
    %c0_364 = arith.constant 0 : index
    %c0_365 = arith.constant 0 : index
    %849 = vector.load %arg8[%c1_362, %c1_363, %c0_364, %c0_365] : memref<2x2x1x128xf32, #tpu.memory_space<vmem>>, vector<1x1x1x128xf32>
    %850 = vector.shape_cast %849 : vector<1x1x1x128xf32> to vector<1x128xf32>
    %851 = vector.broadcast %850 : vector<1x128xf32> to vector<2x128xf32>
    %852 = arith.addf %848, %851 : vector<2x128xf32>
    %853 = vector.extract_strided_slice %852 {offsets = [0, 0], sizes = [2, 32], strides = [1, 1]} : vector<2x128xf32> to vector<2x32xf32>
    %854 = vector.extract_strided_slice %852 {offsets = [0, 32], sizes = [2, 32], strides = [1, 1]} : vector<2x128xf32> to vector<2x32xf32>
    %855 = vector.extract_strided_slice %852 {offsets = [0, 64], sizes = [2, 32], strides = [1, 1]} : vector<2x128xf32> to vector<2x32xf32>
    %856 = math.tanh %855 : vector<2x32xf32>
    %857 = vector.extract_strided_slice %852 {offsets = [0, 96], sizes = [2, 32], strides = [1, 1]} : vector<2x128xf32> to vector<2x32xf32>
    %858 = arith.negf %857 : vector<2x32xf32>
    %859 = math.exp %858 : vector<2x32xf32>
    %cst_366 = arith.constant 1.000000e+00 : f32
    %860 = vector.broadcast %cst_366 : f32 to vector<2x32xf32>
    %861 = arith.addf %860, %859 : vector<2x32xf32>
    %862 = arith.divf %860, %861 : vector<2x32xf32>
    %863 = arith.addf %854, %791 : vector<2x32xf32>
    %864 = arith.maximumf %863, %853 : vector<2x32xf32>
    %865 = arith.subf %853, %864 : vector<2x32xf32>
    %866 = math.exp %865 : vector<2x32xf32>
    %867 = arith.addf %854, %791 : vector<2x32xf32>
    %868 = arith.subf %867, %864 : vector<2x32xf32>
    %869 = math.exp %868 : vector<2x32xf32>
    %870 = arith.mulf %869, %799 : vector<2x32xf32>
    %871 = arith.mulf %866, %856 : vector<2x32xf32>
    %872 = arith.addf %870, %871 : vector<2x32xf32>
    %873 = arith.mulf %869, %801 : vector<2x32xf32>
    %874 = arith.addf %873, %866 : vector<2x32xf32>
    %875 = arith.mulf %862, %872 : vector<2x32xf32>
    %876 = math.absf %874 : vector<2x32xf32>
    %cst_367 = arith.constant 1.000000e+00 : f32
    %877 = vector.broadcast %cst_367 : f32 to vector<2x32xf32>
    %878 = arith.maximumf %876, %877 : vector<2x32xf32>
    %879 = tpu.reciprocal %878 {approx = true} : vector<2x32xf32> -> vector<2x32xf32>
    %880 = arith.mulf %875, %879 : vector<2x32xf32>
    %c2_368 = arith.constant 2 : index
    %c0_369 = arith.constant 0 : index
    %881 = vector.load %arg29[%c2_368, %c0_369] : memref<16x32xf32, #tpu.memory_space<vmem>>, vector<2x32xf32>
    tpu.vector_store %arg29[%c2_368, %c0_369], %880 {strides = array<i32>} : memref<16x32xf32, #tpu.memory_space<vmem>>, vector<2x32xf32>,
    %c1_370 = arith.constant 1 : index
    %c0_371 = arith.constant 0 : index
    %c0_372 = arith.constant 0 : index
    %c0_373 = arith.constant 0 : index
    %882 = vector.load %arg7[%c1_370, %c0_371, %c0_372, %c0_373] : memref<2x2x32x128xf32, #tpu.memory_space<vmem>>, vector<1x1x32x128xf32>
    %883 = vector.shape_cast %882 : vector<1x1x32x128xf32> to vector<32x128xf32>
    %cst_374 = arith.constant dense<0.000000e+00> : vector<2x128xf32>
    %884 = tpu.matmul %841, %883, %cst_374 {dimension_numbers = #tpu.dot_dimension_numbers<[1], [0], [0], [1], [0, 0, 1, 1], [], []>} : vector<2x32xf32>, vector<32x128xf32>, vector<2x128xf32> -> vector<2x128xf32>
    %c4_375 = arith.constant 4 : index
    %c0_376 = arith.constant 0 : index
    %885 = vector.load %arg28[%c4_375, %c0_376] : memref<16x128xf32, #tpu.memory_space<vmem>>, vector<2x128xf32>
    %886 = arith.addf %885, %884 : vector<2x128xf32>
    %887 = vector.extract_strided_slice %886 {offsets = [0, 0], sizes = [2, 32], strides = [1, 1]} : vector<2x128xf32> to vector<2x32xf32>
    %888 = vector.extract_strided_slice %886 {offsets = [0, 32], sizes = [2, 32], strides = [1, 1]} : vector<2x128xf32> to vector<2x32xf32>
    %889 = vector.extract_strided_slice %886 {offsets = [0, 64], sizes = [2, 32], strides = [1, 1]} : vector<2x128xf32> to vector<2x32xf32>
    %890 = math.tanh %889 : vector<2x32xf32>
    %891 = vector.extract_strided_slice %886 {offsets = [0, 96], sizes = [2, 32], strides = [1, 1]} : vector<2x128xf32> to vector<2x32xf32>
    %892 = arith.negf %891 : vector<2x32xf32>
    %893 = math.exp %892 : vector<2x32xf32>
    %cst_377 = arith.constant 1.000000e+00 : f32
    %894 = vector.broadcast %cst_377 : f32 to vector<2x32xf32>
    %895 = arith.addf %894, %893 : vector<2x32xf32>
    %896 = arith.divf %894, %895 : vector<2x32xf32>
    %897 = arith.addf %888, %825 : vector<2x32xf32>
    %898 = arith.maximumf %897, %887 : vector<2x32xf32>
    %899 = arith.subf %887, %898 : vector<2x32xf32>
    %900 = math.exp %899 : vector<2x32xf32>
    %901 = arith.addf %888, %825 : vector<2x32xf32>
    %902 = arith.subf %901, %898 : vector<2x32xf32>
    %903 = math.exp %902 : vector<2x32xf32>
    %904 = arith.mulf %903, %833 : vector<2x32xf32>
    %905 = arith.mulf %900, %890 : vector<2x32xf32>
    %906 = arith.addf %904, %905 : vector<2x32xf32>
    %907 = arith.mulf %903, %835 : vector<2x32xf32>
    %908 = arith.addf %907, %900 : vector<2x32xf32>
    %909 = arith.mulf %896, %906 : vector<2x32xf32>
    %910 = math.absf %908 : vector<2x32xf32>
    %cst_378 = arith.constant 1.000000e+00 : f32
    %911 = vector.broadcast %cst_378 : f32 to vector<2x32xf32>
    %912 = arith.maximumf %910, %911 : vector<2x32xf32>
    %913 = tpu.reciprocal %912 {approx = true} : vector<2x32xf32> -> vector<2x32xf32>
    %914 = arith.mulf %909, %913 : vector<2x32xf32>
    %c1_379 = arith.constant 1 : index
    %c1_380 = arith.constant 1 : index
    %c0_381 = arith.constant 0 : index
    %c0_382 = arith.constant 0 : index
    %915 = vector.load %arg7[%c1_379, %c1_380, %c0_381, %c0_382] : memref<2x2x32x128xf32, #tpu.memory_space<vmem>>, vector<1x1x32x128xf32>
    %916 = vector.shape_cast %915 : vector<1x1x32x128xf32> to vector<32x128xf32>
    %cst_383 = arith.constant dense<0.000000e+00> : vector<2x128xf32>
    %917 = tpu.matmul %880, %916, %cst_383 {dimension_numbers = #tpu.dot_dimension_numbers<[1], [0], [0], [1], [0, 0, 1, 1], [], []>} : vector<2x32xf32>, vector<32x128xf32>, vector<2x128xf32> -> vector<2x128xf32>
    %c1_384 = arith.constant 1 : index
    %c1_385 = arith.constant 1 : index
    %c0_386 = arith.constant 0 : index
    %c0_387 = arith.constant 0 : index
    %918 = vector.load %arg6[%c1_384, %c1_385, %c0_386, %c0_387] : memref<2x2x32x128xf32, #tpu.memory_space<vmem>>, vector<1x1x32x128xf32>
    %919 = vector.shape_cast %918 : vector<1x1x32x128xf32> to vector<32x128xf32>
    %cst_388 = arith.constant dense<0.000000e+00> : vector<2x128xf32>
    %920 = tpu.matmul %914, %919, %cst_388 {dimension_numbers = #tpu.dot_dimension_numbers<[1], [0], [0], [1], [0, 0, 1, 1], [], []>} : vector<2x32xf32>, vector<32x128xf32>, vector<2x128xf32> -> vector<2x128xf32>
    %921 = arith.addf %920, %917 : vector<2x128xf32>
    %c1_389 = arith.constant 1 : index
    %c1_390 = arith.constant 1 : index
    %c0_391 = arith.constant 0 : index
    %c0_392 = arith.constant 0 : index
    %922 = vector.load %arg8[%c1_389, %c1_390, %c0_391, %c0_392] : memref<2x2x1x128xf32, #tpu.memory_space<vmem>>, vector<1x1x1x128xf32>
    %923 = vector.shape_cast %922 : vector<1x1x1x128xf32> to vector<1x128xf32>
    %924 = vector.broadcast %923 : vector<1x128xf32> to vector<2x128xf32>
    %925 = arith.addf %921, %924 : vector<2x128xf32>
    %926 = vector.extract_strided_slice %925 {offsets = [0, 0], sizes = [2, 32], strides = [1, 1]} : vector<2x128xf32> to vector<2x32xf32>
    %927 = vector.extract_strided_slice %925 {offsets = [0, 32], sizes = [2, 32], strides = [1, 1]} : vector<2x128xf32> to vector<2x32xf32>
    %928 = vector.extract_strided_slice %925 {offsets = [0, 64], sizes = [2, 32], strides = [1, 1]} : vector<2x128xf32> to vector<2x32xf32>
    %929 = math.tanh %928 : vector<2x32xf32>
    %930 = vector.extract_strided_slice %925 {offsets = [0, 96], sizes = [2, 32], strides = [1, 1]} : vector<2x128xf32> to vector<2x32xf32>
    %931 = arith.negf %930 : vector<2x32xf32>
    %932 = math.exp %931 : vector<2x32xf32>
    %cst_393 = arith.constant 1.000000e+00 : f32
    %933 = vector.broadcast %cst_393 : f32 to vector<2x32xf32>
    %934 = arith.addf %933, %932 : vector<2x32xf32>
    %935 = arith.divf %933, %934 : vector<2x32xf32>
    %936 = arith.addf %927, %864 : vector<2x32xf32>
    %937 = arith.maximumf %936, %926 : vector<2x32xf32>
    %938 = arith.subf %926, %937 : vector<2x32xf32>
    %939 = math.exp %938 : vector<2x32xf32>
    %940 = arith.addf %927, %864 : vector<2x32xf32>
    %941 = arith.subf %940, %937 : vector<2x32xf32>
    %942 = math.exp %941 : vector<2x32xf32>
    %943 = arith.mulf %942, %872 : vector<2x32xf32>
    %944 = arith.mulf %939, %929 : vector<2x32xf32>
    %945 = arith.addf %943, %944 : vector<2x32xf32>
    %946 = arith.mulf %942, %874 : vector<2x32xf32>
    %947 = arith.addf %946, %939 : vector<2x32xf32>
    %948 = arith.mulf %935, %945 : vector<2x32xf32>
    %949 = math.absf %947 : vector<2x32xf32>
    %cst_394 = arith.constant 1.000000e+00 : f32
    %950 = vector.broadcast %cst_394 : f32 to vector<2x32xf32>
    %951 = arith.maximumf %949, %950 : vector<2x32xf32>
    %952 = tpu.reciprocal %951 {approx = true} : vector<2x32xf32> -> vector<2x32xf32>
    %953 = arith.mulf %948, %952 : vector<2x32xf32>
    %c4_395 = arith.constant 4 : index
    %c0_396 = arith.constant 0 : index
    %954 = vector.load %arg29[%c4_395, %c0_396] : memref<16x32xf32, #tpu.memory_space<vmem>>, vector<2x32xf32>
    tpu.vector_store %arg29[%c4_395, %c0_396], %953 {strides = array<i32>} : memref<16x32xf32, #tpu.memory_space<vmem>>, vector<2x32xf32>,
    %c1_397 = arith.constant 1 : index
    %c0_398 = arith.constant 0 : index
    %c0_399 = arith.constant 0 : index
    %c0_400 = arith.constant 0 : index
    %955 = vector.load %arg7[%c1_397, %c0_398, %c0_399, %c0_400] : memref<2x2x32x128xf32, #tpu.memory_space<vmem>>, vector<1x1x32x128xf32>
    %956 = vector.shape_cast %955 : vector<1x1x32x128xf32> to vector<32x128xf32>
    %cst_401 = arith.constant dense<0.000000e+00> : vector<2x128xf32>
    %957 = tpu.matmul %914, %956, %cst_401 {dimension_numbers = #tpu.dot_dimension_numbers<[1], [0], [0], [1], [0, 0, 1, 1], [], []>} : vector<2x32xf32>, vector<32x128xf32>, vector<2x128xf32> -> vector<2x128xf32>
    %c6_402 = arith.constant 6 : index
    %c0_403 = arith.constant 0 : index
    %958 = vector.load %arg28[%c6_402, %c0_403] : memref<16x128xf32, #tpu.memory_space<vmem>>, vector<2x128xf32>
    %959 = arith.addf %958, %957 : vector<2x128xf32>
    %960 = vector.extract_strided_slice %959 {offsets = [0, 0], sizes = [2, 32], strides = [1, 1]} : vector<2x128xf32> to vector<2x32xf32>
    %961 = vector.extract_strided_slice %959 {offsets = [0, 32], sizes = [2, 32], strides = [1, 1]} : vector<2x128xf32> to vector<2x32xf32>
    %962 = vector.extract_strided_slice %959 {offsets = [0, 64], sizes = [2, 32], strides = [1, 1]} : vector<2x128xf32> to vector<2x32xf32>
    %963 = math.tanh %962 : vector<2x32xf32>
    %964 = vector.extract_strided_slice %959 {offsets = [0, 96], sizes = [2, 32], strides = [1, 1]} : vector<2x128xf32> to vector<2x32xf32>
    %965 = arith.negf %964 : vector<2x32xf32>
    %966 = math.exp %965 : vector<2x32xf32>
    %cst_404 = arith.constant 1.000000e+00 : f32
    %967 = vector.broadcast %cst_404 : f32 to vector<2x32xf32>
    %968 = arith.addf %967, %966 : vector<2x32xf32>
    %969 = arith.divf %967, %968 : vector<2x32xf32>
    %970 = arith.addf %961, %898 : vector<2x32xf32>
    %971 = arith.maximumf %970, %960 : vector<2x32xf32>
    %972 = arith.subf %960, %971 : vector<2x32xf32>
    %973 = math.exp %972 : vector<2x32xf32>
    %974 = arith.addf %961, %898 : vector<2x32xf32>
    %975 = arith.subf %974, %971 : vector<2x32xf32>
    %976 = math.exp %975 : vector<2x32xf32>
    %977 = arith.mulf %976, %906 : vector<2x32xf32>
    %978 = arith.mulf %973, %963 : vector<2x32xf32>
    %979 = arith.addf %977, %978 : vector<2x32xf32>
    %980 = arith.mulf %976, %908 : vector<2x32xf32>
    %981 = arith.addf %980, %973 : vector<2x32xf32>
    %982 = arith.mulf %969, %979 : vector<2x32xf32>
    %983 = math.absf %981 : vector<2x32xf32>
    %cst_405 = arith.constant 1.000000e+00 : f32
    %984 = vector.broadcast %cst_405 : f32 to vector<2x32xf32>
    %985 = arith.maximumf %983, %984 : vector<2x32xf32>
    %986 = tpu.reciprocal %985 {approx = true} : vector<2x32xf32> -> vector<2x32xf32>
    %987 = arith.mulf %982, %986 : vector<2x32xf32>
    %c1_406 = arith.constant 1 : index
    %c1_407 = arith.constant 1 : index
    %c0_408 = arith.constant 0 : index
    %c0_409 = arith.constant 0 : index
    %988 = vector.load %arg7[%c1_406, %c1_407, %c0_408, %c0_409] : memref<2x2x32x128xf32, #tpu.memory_space<vmem>>, vector<1x1x32x128xf32>
    %989 = vector.shape_cast %988 : vector<1x1x32x128xf32> to vector<32x128xf32>
    %cst_410 = arith.constant dense<0.000000e+00> : vector<2x128xf32>
    %990 = tpu.matmul %953, %989, %cst_410 {dimension_numbers = #tpu.dot_dimension_numbers<[1], [0], [0], [1], [0, 0, 1, 1], [], []>} : vector<2x32xf32>, vector<32x128xf32>, vector<2x128xf32> -> vector<2x128xf32>
    %c1_411 = arith.constant 1 : index
    %c1_412 = arith.constant 1 : index
    %c0_413 = arith.constant 0 : index
    %c0_414 = arith.constant 0 : index
    %991 = vector.load %arg6[%c1_411, %c1_412, %c0_413, %c0_414] : memref<2x2x32x128xf32, #tpu.memory_space<vmem>>, vector<1x1x32x128xf32>
    %992 = vector.shape_cast %991 : vector<1x1x32x128xf32> to vector<32x128xf32>
    %cst_415 = arith.constant dense<0.000000e+00> : vector<2x128xf32>
    %993 = tpu.matmul %987, %992, %cst_415 {dimension_numbers = #tpu.dot_dimension_numbers<[1], [0], [0], [1], [0, 0, 1, 1], [], []>} : vector<2x32xf32>, vector<32x128xf32>, vector<2x128xf32> -> vector<2x128xf32>
    %994 = arith.addf %993, %990 : vector<2x128xf32>
    %c1_416 = arith.constant 1 : index
    %c1_417 = arith.constant 1 : index
    %c0_418 = arith.constant 0 : index
    %c0_419 = arith.constant 0 : index
    %995 = vector.load %arg8[%c1_416, %c1_417, %c0_418, %c0_419] : memref<2x2x1x128xf32, #tpu.memory_space<vmem>>, vector<1x1x1x128xf32>
    %996 = vector.shape_cast %995 : vector<1x1x1x128xf32> to vector<1x128xf32>
    %997 = vector.broadcast %996 : vector<1x128xf32> to vector<2x128xf32>
    %998 = arith.addf %994, %997 : vector<2x128xf32>
    %999 = vector.extract_strided_slice %998 {offsets = [0, 0], sizes = [2, 32], strides = [1, 1]} : vector<2x128xf32> to vector<2x32xf32>
    %1000 = vector.extract_strided_slice %998 {offsets = [0, 32], sizes = [2, 32], strides = [1, 1]} : vector<2x128xf32> to vector<2x32xf32>
    %1001 = vector.extract_strided_slice %998 {offsets = [0, 64], sizes = [2, 32], strides = [1, 1]} : vector<2x128xf32> to vector<2x32xf32>
    %1002 = math.tanh %1001 : vector<2x32xf32>
    %1003 = vector.extract_strided_slice %998 {offsets = [0, 96], sizes = [2, 32], strides = [1, 1]} : vector<2x128xf32> to vector<2x32xf32>
    %1004 = arith.negf %1003 : vector<2x32xf32>
    %1005 = math.exp %1004 : vector<2x32xf32>
    %cst_420 = arith.constant 1.000000e+00 : f32
    %1006 = vector.broadcast %cst_420 : f32 to vector<2x32xf32>
    %1007 = arith.addf %1006, %1005 : vector<2x32xf32>
    %1008 = arith.divf %1006, %1007 : vector<2x32xf32>
    %1009 = arith.addf %1000, %937 : vector<2x32xf32>
    %1010 = arith.maximumf %1009, %999 : vector<2x32xf32>
    %1011 = arith.subf %999, %1010 : vector<2x32xf32>
    %1012 = math.exp %1011 : vector<2x32xf32>
    %1013 = arith.addf %1000, %937 : vector<2x32xf32>
    %1014 = arith.subf %1013, %1010 : vector<2x32xf32>
    %1015 = math.exp %1014 : vector<2x32xf32>
    %1016 = arith.mulf %1015, %945 : vector<2x32xf32>
    %1017 = arith.mulf %1012, %1002 : vector<2x32xf32>
    %1018 = arith.addf %1016, %1017 : vector<2x32xf32>
    %1019 = arith.mulf %1015, %947 : vector<2x32xf32>
    %1020 = arith.addf %1019, %1012 : vector<2x32xf32>
    %1021 = arith.mulf %1008, %1018 : vector<2x32xf32>
    %1022 = math.absf %1020 : vector<2x32xf32>
    %cst_421 = arith.constant 1.000000e+00 : f32
    %1023 = vector.broadcast %cst_421 : f32 to vector<2x32xf32>
    %1024 = arith.maximumf %1022, %1023 : vector<2x32xf32>
    %1025 = tpu.reciprocal %1024 {approx = true} : vector<2x32xf32> -> vector<2x32xf32>
    %1026 = arith.mulf %1021, %1025 : vector<2x32xf32>
    %c6_422 = arith.constant 6 : index
    %c0_423 = arith.constant 0 : index
    %1027 = vector.load %arg29[%c6_422, %c0_423] : memref<16x32xf32, #tpu.memory_space<vmem>>, vector<2x32xf32>
    tpu.vector_store %arg29[%c6_422, %c0_423], %1026 {strides = array<i32>} : memref<16x32xf32, #tpu.memory_space<vmem>>, vector<2x32xf32>,
    %c1_424 = arith.constant 1 : index
    %c0_425 = arith.constant 0 : index
    %c0_426 = arith.constant 0 : index
    %c0_427 = arith.constant 0 : index
    %1028 = vector.load %arg7[%c1_424, %c0_425, %c0_426, %c0_427] : memref<2x2x32x128xf32, #tpu.memory_space<vmem>>, vector<1x1x32x128xf32>
    %1029 = vector.shape_cast %1028 : vector<1x1x32x128xf32> to vector<32x128xf32>
    %cst_428 = arith.constant dense<0.000000e+00> : vector<2x128xf32>
    %1030 = tpu.matmul %987, %1029, %cst_428 {dimension_numbers = #tpu.dot_dimension_numbers<[1], [0], [0], [1], [0, 0, 1, 1], [], []>} : vector<2x32xf32>, vector<32x128xf32>, vector<2x128xf32> -> vector<2x128xf32>
    %c8_429 = arith.constant 8 : index
    %c0_430 = arith.constant 0 : index
    %1031 = vector.load %arg28[%c8_429, %c0_430] : memref<16x128xf32, #tpu.memory_space<vmem>>, vector<2x128xf32>
    %1032 = arith.addf %1031, %1030 : vector<2x128xf32>
    %1033 = vector.extract_strided_slice %1032 {offsets = [0, 0], sizes = [2, 32], strides = [1, 1]} : vector<2x128xf32> to vector<2x32xf32>
    %1034 = vector.extract_strided_slice %1032 {offsets = [0, 32], sizes = [2, 32], strides = [1, 1]} : vector<2x128xf32> to vector<2x32xf32>
    %1035 = vector.extract_strided_slice %1032 {offsets = [0, 64], sizes = [2, 32], strides = [1, 1]} : vector<2x128xf32> to vector<2x32xf32>
    %1036 = math.tanh %1035 : vector<2x32xf32>
    %1037 = vector.extract_strided_slice %1032 {offsets = [0, 96], sizes = [2, 32], strides = [1, 1]} : vector<2x128xf32> to vector<2x32xf32>
    %1038 = arith.negf %1037 : vector<2x32xf32>
    %1039 = math.exp %1038 : vector<2x32xf32>
    %cst_431 = arith.constant 1.000000e+00 : f32
    %1040 = vector.broadcast %cst_431 : f32 to vector<2x32xf32>
    %1041 = arith.addf %1040, %1039 : vector<2x32xf32>
    %1042 = arith.divf %1040, %1041 : vector<2x32xf32>
    %1043 = arith.addf %1034, %971 : vector<2x32xf32>
    %1044 = arith.maximumf %1043, %1033 : vector<2x32xf32>
    %1045 = arith.subf %1033, %1044 : vector<2x32xf32>
    %1046 = math.exp %1045 : vector<2x32xf32>
    %1047 = arith.addf %1034, %971 : vector<2x32xf32>
    %1048 = arith.subf %1047, %1044 : vector<2x32xf32>
    %1049 = math.exp %1048 : vector<2x32xf32>
    %1050 = arith.mulf %1049, %979 : vector<2x32xf32>
    %1051 = arith.mulf %1046, %1036 : vector<2x32xf32>
    %1052 = arith.addf %1050, %1051 : vector<2x32xf32>
    %1053 = arith.mulf %1049, %981 : vector<2x32xf32>
    %1054 = arith.addf %1053, %1046 : vector<2x32xf32>
    %1055 = arith.mulf %1042, %1052 : vector<2x32xf32>
    %1056 = math.absf %1054 : vector<2x32xf32>
    %cst_432 = arith.constant 1.000000e+00 : f32
    %1057 = vector.broadcast %cst_432 : f32 to vector<2x32xf32>
    %1058 = arith.maximumf %1056, %1057 : vector<2x32xf32>
    %1059 = tpu.reciprocal %1058 {approx = true} : vector<2x32xf32> -> vector<2x32xf32>
    %1060 = arith.mulf %1055, %1059 : vector<2x32xf32>
    %c1_433 = arith.constant 1 : index
    %c1_434 = arith.constant 1 : index
    %c0_435 = arith.constant 0 : index
    %c0_436 = arith.constant 0 : index
    %1061 = vector.load %arg7[%c1_433, %c1_434, %c0_435, %c0_436] : memref<2x2x32x128xf32, #tpu.memory_space<vmem>>, vector<1x1x32x128xf32>
    %1062 = vector.shape_cast %1061 : vector<1x1x32x128xf32> to vector<32x128xf32>
    %cst_437 = arith.constant dense<0.000000e+00> : vector<2x128xf32>
    %1063 = tpu.matmul %1026, %1062, %cst_437 {dimension_numbers = #tpu.dot_dimension_numbers<[1], [0], [0], [1], [0, 0, 1, 1], [], []>} : vector<2x32xf32>, vector<32x128xf32>, vector<2x128xf32> -> vector<2x128xf32>
    %c1_438 = arith.constant 1 : index
    %c1_439 = arith.constant 1 : index
    %c0_440 = arith.constant 0 : index
    %c0_441 = arith.constant 0 : index
    %1064 = vector.load %arg6[%c1_438, %c1_439, %c0_440, %c0_441] : memref<2x2x32x128xf32, #tpu.memory_space<vmem>>, vector<1x1x32x128xf32>
    %1065 = vector.shape_cast %1064 : vector<1x1x32x128xf32> to vector<32x128xf32>
    %cst_442 = arith.constant dense<0.000000e+00> : vector<2x128xf32>
    %1066 = tpu.matmul %1060, %1065, %cst_442 {dimension_numbers = #tpu.dot_dimension_numbers<[1], [0], [0], [1], [0, 0, 1, 1], [], []>} : vector<2x32xf32>, vector<32x128xf32>, vector<2x128xf32> -> vector<2x128xf32>
    %1067 = arith.addf %1066, %1063 : vector<2x128xf32>
    %c1_443 = arith.constant 1 : index
    %c1_444 = arith.constant 1 : index
    %c0_445 = arith.constant 0 : index
    %c0_446 = arith.constant 0 : index
    %1068 = vector.load %arg8[%c1_443, %c1_444, %c0_445, %c0_446] : memref<2x2x1x128xf32, #tpu.memory_space<vmem>>, vector<1x1x1x128xf32>
    %1069 = vector.shape_cast %1068 : vector<1x1x1x128xf32> to vector<1x128xf32>
    %1070 = vector.broadcast %1069 : vector<1x128xf32> to vector<2x128xf32>
    %1071 = arith.addf %1067, %1070 : vector<2x128xf32>
    %1072 = vector.extract_strided_slice %1071 {offsets = [0, 0], sizes = [2, 32], strides = [1, 1]} : vector<2x128xf32> to vector<2x32xf32>
    %1073 = vector.extract_strided_slice %1071 {offsets = [0, 32], sizes = [2, 32], strides = [1, 1]} : vector<2x128xf32> to vector<2x32xf32>
    %1074 = vector.extract_strided_slice %1071 {offsets = [0, 64], sizes = [2, 32], strides = [1, 1]} : vector<2x128xf32> to vector<2x32xf32>
    %1075 = math.tanh %1074 : vector<2x32xf32>
    %1076 = vector.extract_strided_slice %1071 {offsets = [0, 96], sizes = [2, 32], strides = [1, 1]} : vector<2x128xf32> to vector<2x32xf32>
    %1077 = arith.negf %1076 : vector<2x32xf32>
    %1078 = math.exp %1077 : vector<2x32xf32>
    %cst_447 = arith.constant 1.000000e+00 : f32
    %1079 = vector.broadcast %cst_447 : f32 to vector<2x32xf32>
    %1080 = arith.addf %1079, %1078 : vector<2x32xf32>
    %1081 = arith.divf %1079, %1080 : vector<2x32xf32>
    %1082 = arith.addf %1073, %1010 : vector<2x32xf32>
    %1083 = arith.maximumf %1082, %1072 : vector<2x32xf32>
    %1084 = arith.subf %1072, %1083 : vector<2x32xf32>
    %1085 = math.exp %1084 : vector<2x32xf32>
    %1086 = arith.addf %1073, %1010 : vector<2x32xf32>
    %1087 = arith.subf %1086, %1083 : vector<2x32xf32>
    %1088 = math.exp %1087 : vector<2x32xf32>
    %1089 = arith.mulf %1088, %1018 : vector<2x32xf32>
    %1090 = arith.mulf %1085, %1075 : vector<2x32xf32>
    %1091 = arith.addf %1089, %1090 : vector<2x32xf32>
    %1092 = arith.mulf %1088, %1020 : vector<2x32xf32>
    %1093 = arith.addf %1092, %1085 : vector<2x32xf32>
    %1094 = arith.mulf %1081, %1091 : vector<2x32xf32>
    %1095 = math.absf %1093 : vector<2x32xf32>
    %cst_448 = arith.constant 1.000000e+00 : f32
    %1096 = vector.broadcast %cst_448 : f32 to vector<2x32xf32>
    %1097 = arith.maximumf %1095, %1096 : vector<2x32xf32>
    %1098 = tpu.reciprocal %1097 {approx = true} : vector<2x32xf32> -> vector<2x32xf32>
    %1099 = arith.mulf %1094, %1098 : vector<2x32xf32>
    %c8_449 = arith.constant 8 : index
    %c0_450 = arith.constant 0 : index
    %1100 = vector.load %arg29[%c8_449, %c0_450] : memref<16x32xf32, #tpu.memory_space<vmem>>, vector<2x32xf32>
    tpu.vector_store %arg29[%c8_449, %c0_450], %1099 {strides = array<i32>} : memref<16x32xf32, #tpu.memory_space<vmem>>, vector<2x32xf32>,
    %c1_451 = arith.constant 1 : index
    %c0_452 = arith.constant 0 : index
    %c0_453 = arith.constant 0 : index
    %c0_454 = arith.constant 0 : index
    %1101 = vector.load %arg7[%c1_451, %c0_452, %c0_453, %c0_454] : memref<2x2x32x128xf32, #tpu.memory_space<vmem>>, vector<1x1x32x128xf32>
    %1102 = vector.shape_cast %1101 : vector<1x1x32x128xf32> to vector<32x128xf32>
    %cst_455 = arith.constant dense<0.000000e+00> : vector<2x128xf32>
    %1103 = tpu.matmul %1060, %1102, %cst_455 {dimension_numbers = #tpu.dot_dimension_numbers<[1], [0], [0], [1], [0, 0, 1, 1], [], []>} : vector<2x32xf32>, vector<32x128xf32>, vector<2x128xf32> -> vector<2x128xf32>
    %c10_456 = arith.constant 10 : index
    %c0_457 = arith.constant 0 : index
    %1104 = vector.load %arg28[%c10_456, %c0_457] : memref<16x128xf32, #tpu.memory_space<vmem>>, vector<2x128xf32>
    %1105 = arith.addf %1104, %1103 : vector<2x128xf32>
    %1106 = vector.extract_strided_slice %1105 {offsets = [0, 0], sizes = [2, 32], strides = [1, 1]} : vector<2x128xf32> to vector<2x32xf32>
    %1107 = vector.extract_strided_slice %1105 {offsets = [0, 32], sizes = [2, 32], strides = [1, 1]} : vector<2x128xf32> to vector<2x32xf32>
    %1108 = vector.extract_strided_slice %1105 {offsets = [0, 64], sizes = [2, 32], strides = [1, 1]} : vector<2x128xf32> to vector<2x32xf32>
    %1109 = math.tanh %1108 : vector<2x32xf32>
    %1110 = vector.extract_strided_slice %1105 {offsets = [0, 96], sizes = [2, 32], strides = [1, 1]} : vector<2x128xf32> to vector<2x32xf32>
    %1111 = arith.negf %1110 : vector<2x32xf32>
    %1112 = math.exp %1111 : vector<2x32xf32>
    %cst_458 = arith.constant 1.000000e+00 : f32
    %1113 = vector.broadcast %cst_458 : f32 to vector<2x32xf32>
    %1114 = arith.addf %1113, %1112 : vector<2x32xf32>
    %1115 = arith.divf %1113, %1114 : vector<2x32xf32>
    %1116 = arith.addf %1107, %1044 : vector<2x32xf32>
    %1117 = arith.maximumf %1116, %1106 : vector<2x32xf32>
    %1118 = arith.subf %1106, %1117 : vector<2x32xf32>
    %1119 = math.exp %1118 : vector<2x32xf32>
    %1120 = arith.addf %1107, %1044 : vector<2x32xf32>
    %1121 = arith.subf %1120, %1117 : vector<2x32xf32>
    %1122 = math.exp %1121 : vector<2x32xf32>
    %1123 = arith.mulf %1122, %1052 : vector<2x32xf32>
    %1124 = arith.mulf %1119, %1109 : vector<2x32xf32>
    %1125 = arith.addf %1123, %1124 : vector<2x32xf32>
    %1126 = arith.mulf %1122, %1054 : vector<2x32xf32>
    %1127 = arith.addf %1126, %1119 : vector<2x32xf32>
    %1128 = arith.mulf %1115, %1125 : vector<2x32xf32>
    %1129 = math.absf %1127 : vector<2x32xf32>
    %cst_459 = arith.constant 1.000000e+00 : f32
    %1130 = vector.broadcast %cst_459 : f32 to vector<2x32xf32>
    %1131 = arith.maximumf %1129, %1130 : vector<2x32xf32>
    %1132 = tpu.reciprocal %1131 {approx = true} : vector<2x32xf32> -> vector<2x32xf32>
    %1133 = arith.mulf %1128, %1132 : vector<2x32xf32>
    %c1_460 = arith.constant 1 : index
    %c1_461 = arith.constant 1 : index
    %c0_462 = arith.constant 0 : index
    %c0_463 = arith.constant 0 : index
    %1134 = vector.load %arg7[%c1_460, %c1_461, %c0_462, %c0_463] : memref<2x2x32x128xf32, #tpu.memory_space<vmem>>, vector<1x1x32x128xf32>
    %1135 = vector.shape_cast %1134 : vector<1x1x32x128xf32> to vector<32x128xf32>
    %cst_464 = arith.constant dense<0.000000e+00> : vector<2x128xf32>
    %1136 = tpu.matmul %1099, %1135, %cst_464 {dimension_numbers = #tpu.dot_dimension_numbers<[1], [0], [0], [1], [0, 0, 1, 1], [], []>} : vector<2x32xf32>, vector<32x128xf32>, vector<2x128xf32> -> vector<2x128xf32>
    %c1_465 = arith.constant 1 : index
    %c1_466 = arith.constant 1 : index
    %c0_467 = arith.constant 0 : index
    %c0_468 = arith.constant 0 : index
    %1137 = vector.load %arg6[%c1_465, %c1_466, %c0_467, %c0_468] : memref<2x2x32x128xf32, #tpu.memory_space<vmem>>, vector<1x1x32x128xf32>
    %1138 = vector.shape_cast %1137 : vector<1x1x32x128xf32> to vector<32x128xf32>
    %cst_469 = arith.constant dense<0.000000e+00> : vector<2x128xf32>
    %1139 = tpu.matmul %1133, %1138, %cst_469 {dimension_numbers = #tpu.dot_dimension_numbers<[1], [0], [0], [1], [0, 0, 1, 1], [], []>} : vector<2x32xf32>, vector<32x128xf32>, vector<2x128xf32> -> vector<2x128xf32>
    %1140 = arith.addf %1139, %1136 : vector<2x128xf32>
    %c1_470 = arith.constant 1 : index
    %c1_471 = arith.constant 1 : index
    %c0_472 = arith.constant 0 : index
    %c0_473 = arith.constant 0 : index
    %1141 = vector.load %arg8[%c1_470, %c1_471, %c0_472, %c0_473] : memref<2x2x1x128xf32, #tpu.memory_space<vmem>>, vector<1x1x1x128xf32>
    %1142 = vector.shape_cast %1141 : vector<1x1x1x128xf32> to vector<1x128xf32>
    %1143 = vector.broadcast %1142 : vector<1x128xf32> to vector<2x128xf32>
    %1144 = arith.addf %1140, %1143 : vector<2x128xf32>
    %1145 = vector.extract_strided_slice %1144 {offsets = [0, 0], sizes = [2, 32], strides = [1, 1]} : vector<2x128xf32> to vector<2x32xf32>
    %1146 = vector.extract_strided_slice %1144 {offsets = [0, 32], sizes = [2, 32], strides = [1, 1]} : vector<2x128xf32> to vector<2x32xf32>
    %1147 = vector.extract_strided_slice %1144 {offsets = [0, 64], sizes = [2, 32], strides = [1, 1]} : vector<2x128xf32> to vector<2x32xf32>
    %1148 = math.tanh %1147 : vector<2x32xf32>
    %1149 = vector.extract_strided_slice %1144 {offsets = [0, 96], sizes = [2, 32], strides = [1, 1]} : vector<2x128xf32> to vector<2x32xf32>
    %1150 = arith.negf %1149 : vector<2x32xf32>
    %1151 = math.exp %1150 : vector<2x32xf32>
    %cst_474 = arith.constant 1.000000e+00 : f32
    %1152 = vector.broadcast %cst_474 : f32 to vector<2x32xf32>
    %1153 = arith.addf %1152, %1151 : vector<2x32xf32>
    %1154 = arith.divf %1152, %1153 : vector<2x32xf32>
    %1155 = arith.addf %1146, %1083 : vector<2x32xf32>
    %1156 = arith.maximumf %1155, %1145 : vector<2x32xf32>
    %1157 = arith.subf %1145, %1156 : vector<2x32xf32>
    %1158 = math.exp %1157 : vector<2x32xf32>
    %1159 = arith.addf %1146, %1083 : vector<2x32xf32>
    %1160 = arith.subf %1159, %1156 : vector<2x32xf32>
    %1161 = math.exp %1160 : vector<2x32xf32>
    %1162 = arith.mulf %1161, %1091 : vector<2x32xf32>
    %1163 = arith.mulf %1158, %1148 : vector<2x32xf32>
    %1164 = arith.addf %1162, %1163 : vector<2x32xf32>
    %1165 = arith.mulf %1161, %1093 : vector<2x32xf32>
    %1166 = arith.addf %1165, %1158 : vector<2x32xf32>
    %1167 = arith.mulf %1154, %1164 : vector<2x32xf32>
    %1168 = math.absf %1166 : vector<2x32xf32>
    %cst_475 = arith.constant 1.000000e+00 : f32
    %1169 = vector.broadcast %cst_475 : f32 to vector<2x32xf32>
    %1170 = arith.maximumf %1168, %1169 : vector<2x32xf32>
    %1171 = tpu.reciprocal %1170 {approx = true} : vector<2x32xf32> -> vector<2x32xf32>
    %1172 = arith.mulf %1167, %1171 : vector<2x32xf32>
    %c10_476 = arith.constant 10 : index
    %c0_477 = arith.constant 0 : index
    %1173 = vector.load %arg29[%c10_476, %c0_477] : memref<16x32xf32, #tpu.memory_space<vmem>>, vector<2x32xf32>
    tpu.vector_store %arg29[%c10_476, %c0_477], %1172 {strides = array<i32>} : memref<16x32xf32, #tpu.memory_space<vmem>>, vector<2x32xf32>,
    %c1_478 = arith.constant 1 : index
    %c0_479 = arith.constant 0 : index
    %c0_480 = arith.constant 0 : index
    %c0_481 = arith.constant 0 : index
    %1174 = vector.load %arg7[%c1_478, %c0_479, %c0_480, %c0_481] : memref<2x2x32x128xf32, #tpu.memory_space<vmem>>, vector<1x1x32x128xf32>
    %1175 = vector.shape_cast %1174 : vector<1x1x32x128xf32> to vector<32x128xf32>
    %cst_482 = arith.constant dense<0.000000e+00> : vector<2x128xf32>
    %1176 = tpu.matmul %1133, %1175, %cst_482 {dimension_numbers = #tpu.dot_dimension_numbers<[1], [0], [0], [1], [0, 0, 1, 1], [], []>} : vector<2x32xf32>, vector<32x128xf32>, vector<2x128xf32> -> vector<2x128xf32>
    %c12_483 = arith.constant 12 : index
    %c0_484 = arith.constant 0 : index
    %1177 = vector.load %arg28[%c12_483, %c0_484] : memref<16x128xf32, #tpu.memory_space<vmem>>, vector<2x128xf32>
    %1178 = arith.addf %1177, %1176 : vector<2x128xf32>
    %1179 = vector.extract_strided_slice %1178 {offsets = [0, 0], sizes = [2, 32], strides = [1, 1]} : vector<2x128xf32> to vector<2x32xf32>
    %1180 = vector.extract_strided_slice %1178 {offsets = [0, 32], sizes = [2, 32], strides = [1, 1]} : vector<2x128xf32> to vector<2x32xf32>
    %1181 = vector.extract_strided_slice %1178 {offsets = [0, 64], sizes = [2, 32], strides = [1, 1]} : vector<2x128xf32> to vector<2x32xf32>
    %1182 = math.tanh %1181 : vector<2x32xf32>
    %1183 = vector.extract_strided_slice %1178 {offsets = [0, 96], sizes = [2, 32], strides = [1, 1]} : vector<2x128xf32> to vector<2x32xf32>
    %1184 = arith.negf %1183 : vector<2x32xf32>
    %1185 = math.exp %1184 : vector<2x32xf32>
    %cst_485 = arith.constant 1.000000e+00 : f32
    %1186 = vector.broadcast %cst_485 : f32 to vector<2x32xf32>
    %1187 = arith.addf %1186, %1185 : vector<2x32xf32>
    %1188 = arith.divf %1186, %1187 : vector<2x32xf32>
    %1189 = arith.addf %1180, %1117 : vector<2x32xf32>
    %1190 = arith.maximumf %1189, %1179 : vector<2x32xf32>
    %1191 = arith.subf %1179, %1190 : vector<2x32xf32>
    %1192 = math.exp %1191 : vector<2x32xf32>
    %1193 = arith.addf %1180, %1117 : vector<2x32xf32>
    %1194 = arith.subf %1193, %1190 : vector<2x32xf32>
    %1195 = math.exp %1194 : vector<2x32xf32>
    %1196 = arith.mulf %1195, %1125 : vector<2x32xf32>
    %1197 = arith.mulf %1192, %1182 : vector<2x32xf32>
    %1198 = arith.addf %1196, %1197 : vector<2x32xf32>
    %1199 = arith.mulf %1195, %1127 : vector<2x32xf32>
    %1200 = arith.addf %1199, %1192 : vector<2x32xf32>
    %1201 = arith.mulf %1188, %1198 : vector<2x32xf32>
    %1202 = math.absf %1200 : vector<2x32xf32>
    %cst_486 = arith.constant 1.000000e+00 : f32
    %1203 = vector.broadcast %cst_486 : f32 to vector<2x32xf32>
    %1204 = arith.maximumf %1202, %1203 : vector<2x32xf32>
    %1205 = tpu.reciprocal %1204 {approx = true} : vector<2x32xf32> -> vector<2x32xf32>
    %1206 = arith.mulf %1201, %1205 : vector<2x32xf32>
    %c1_487 = arith.constant 1 : index
    %c1_488 = arith.constant 1 : index
    %c0_489 = arith.constant 0 : index
    %c0_490 = arith.constant 0 : index
    %1207 = vector.load %arg7[%c1_487, %c1_488, %c0_489, %c0_490] : memref<2x2x32x128xf32, #tpu.memory_space<vmem>>, vector<1x1x32x128xf32>
    %1208 = vector.shape_cast %1207 : vector<1x1x32x128xf32> to vector<32x128xf32>
    %cst_491 = arith.constant dense<0.000000e+00> : vector<2x128xf32>
    %1209 = tpu.matmul %1172, %1208, %cst_491 {dimension_numbers = #tpu.dot_dimension_numbers<[1], [0], [0], [1], [0, 0, 1, 1], [], []>} : vector<2x32xf32>, vector<32x128xf32>, vector<2x128xf32> -> vector<2x128xf32>
    %c1_492 = arith.constant 1 : index
    %c1_493 = arith.constant 1 : index
    %c0_494 = arith.constant 0 : index
    %c0_495 = arith.constant 0 : index
    %1210 = vector.load %arg6[%c1_492, %c1_493, %c0_494, %c0_495] : memref<2x2x32x128xf32, #tpu.memory_space<vmem>>, vector<1x1x32x128xf32>
    %1211 = vector.shape_cast %1210 : vector<1x1x32x128xf32> to vector<32x128xf32>
    %cst_496 = arith.constant dense<0.000000e+00> : vector<2x128xf32>
    %1212 = tpu.matmul %1206, %1211, %cst_496 {dimension_numbers = #tpu.dot_dimension_numbers<[1], [0], [0], [1], [0, 0, 1, 1], [], []>} : vector<2x32xf32>, vector<32x128xf32>, vector<2x128xf32> -> vector<2x128xf32>
    %1213 = arith.addf %1212, %1209 : vector<2x128xf32>
    %c1_497 = arith.constant 1 : index
    %c1_498 = arith.constant 1 : index
    %c0_499 = arith.constant 0 : index
    %c0_500 = arith.constant 0 : index
    %1214 = vector.load %arg8[%c1_497, %c1_498, %c0_499, %c0_500] : memref<2x2x1x128xf32, #tpu.memory_space<vmem>>, vector<1x1x1x128xf32>
    %1215 = vector.shape_cast %1214 : vector<1x1x1x128xf32> to vector<1x128xf32>
    %1216 = vector.broadcast %1215 : vector<1x128xf32> to vector<2x128xf32>
    %1217 = arith.addf %1213, %1216 : vector<2x128xf32>
    %1218 = vector.extract_strided_slice %1217 {offsets = [0, 0], sizes = [2, 32], strides = [1, 1]} : vector<2x128xf32> to vector<2x32xf32>
    %1219 = vector.extract_strided_slice %1217 {offsets = [0, 32], sizes = [2, 32], strides = [1, 1]} : vector<2x128xf32> to vector<2x32xf32>
    %1220 = vector.extract_strided_slice %1217 {offsets = [0, 64], sizes = [2, 32], strides = [1, 1]} : vector<2x128xf32> to vector<2x32xf32>
    %1221 = math.tanh %1220 : vector<2x32xf32>
    %1222 = vector.extract_strided_slice %1217 {offsets = [0, 96], sizes = [2, 32], strides = [1, 1]} : vector<2x128xf32> to vector<2x32xf32>
    %1223 = arith.negf %1222 : vector<2x32xf32>
    %1224 = math.exp %1223 : vector<2x32xf32>
    %cst_501 = arith.constant 1.000000e+00 : f32
    %1225 = vector.broadcast %cst_501 : f32 to vector<2x32xf32>
    %1226 = arith.addf %1225, %1224 : vector<2x32xf32>
    %1227 = arith.divf %1225, %1226 : vector<2x32xf32>
    %1228 = arith.addf %1219, %1156 : vector<2x32xf32>
    %1229 = arith.maximumf %1228, %1218 : vector<2x32xf32>
    %1230 = arith.subf %1218, %1229 : vector<2x32xf32>
    %1231 = math.exp %1230 : vector<2x32xf32>
    %1232 = arith.addf %1219, %1156 : vector<2x32xf32>
    %1233 = arith.subf %1232, %1229 : vector<2x32xf32>
    %1234 = math.exp %1233 : vector<2x32xf32>
    %1235 = arith.mulf %1234, %1164 : vector<2x32xf32>
    %1236 = arith.mulf %1231, %1221 : vector<2x32xf32>
    %1237 = arith.addf %1235, %1236 : vector<2x32xf32>
    %1238 = arith.mulf %1234, %1166 : vector<2x32xf32>
    %1239 = arith.addf %1238, %1231 : vector<2x32xf32>
    %1240 = arith.mulf %1227, %1237 : vector<2x32xf32>
    %1241 = math.absf %1239 : vector<2x32xf32>
    %cst_502 = arith.constant 1.000000e+00 : f32
    %1242 = vector.broadcast %cst_502 : f32 to vector<2x32xf32>
    %1243 = arith.maximumf %1241, %1242 : vector<2x32xf32>
    %1244 = tpu.reciprocal %1243 {approx = true} : vector<2x32xf32> -> vector<2x32xf32>
    %1245 = arith.mulf %1240, %1244 : vector<2x32xf32>
    %c12_503 = arith.constant 12 : index
    %c0_504 = arith.constant 0 : index
    %1246 = vector.load %arg29[%c12_503, %c0_504] : memref<16x32xf32, #tpu.memory_space<vmem>>, vector<2x32xf32>
    tpu.vector_store %arg29[%c12_503, %c0_504], %1245 {strides = array<i32>} : memref<16x32xf32, #tpu.memory_space<vmem>>, vector<2x32xf32>,
    %c1_505 = arith.constant 1 : index
    %c0_506 = arith.constant 0 : index
    %c0_507 = arith.constant 0 : index
    %c0_508 = arith.constant 0 : index
    %1247 = vector.load %arg7[%c1_505, %c0_506, %c0_507, %c0_508] : memref<2x2x32x128xf32, #tpu.memory_space<vmem>>, vector<1x1x32x128xf32>
    %1248 = vector.shape_cast %1247 : vector<1x1x32x128xf32> to vector<32x128xf32>
    %cst_509 = arith.constant dense<0.000000e+00> : vector<2x128xf32>
    %1249 = tpu.matmul %1206, %1248, %cst_509 {dimension_numbers = #tpu.dot_dimension_numbers<[1], [0], [0], [1], [0, 0, 1, 1], [], []>} : vector<2x32xf32>, vector<32x128xf32>, vector<2x128xf32> -> vector<2x128xf32>
    %c14_510 = arith.constant 14 : index
    %c0_511 = arith.constant 0 : index
    %1250 = vector.load %arg28[%c14_510, %c0_511] : memref<16x128xf32, #tpu.memory_space<vmem>>, vector<2x128xf32>
    %1251 = arith.addf %1250, %1249 : vector<2x128xf32>
    %1252 = vector.extract_strided_slice %1251 {offsets = [0, 0], sizes = [2, 32], strides = [1, 1]} : vector<2x128xf32> to vector<2x32xf32>
    %1253 = vector.extract_strided_slice %1251 {offsets = [0, 32], sizes = [2, 32], strides = [1, 1]} : vector<2x128xf32> to vector<2x32xf32>
    %1254 = vector.extract_strided_slice %1251 {offsets = [0, 64], sizes = [2, 32], strides = [1, 1]} : vector<2x128xf32> to vector<2x32xf32>
    %1255 = math.tanh %1254 : vector<2x32xf32>
    %1256 = vector.extract_strided_slice %1251 {offsets = [0, 96], sizes = [2, 32], strides = [1, 1]} : vector<2x128xf32> to vector<2x32xf32>
    %1257 = arith.negf %1256 : vector<2x32xf32>
    %1258 = math.exp %1257 : vector<2x32xf32>
    %cst_512 = arith.constant 1.000000e+00 : f32
    %1259 = vector.broadcast %cst_512 : f32 to vector<2x32xf32>
    %1260 = arith.addf %1259, %1258 : vector<2x32xf32>
    %1261 = arith.divf %1259, %1260 : vector<2x32xf32>
    %1262 = arith.addf %1253, %1190 : vector<2x32xf32>
    %1263 = arith.maximumf %1262, %1252 : vector<2x32xf32>
    %1264 = arith.subf %1252, %1263 : vector<2x32xf32>
    %1265 = math.exp %1264 : vector<2x32xf32>
    %1266 = arith.addf %1253, %1190 : vector<2x32xf32>
    %1267 = arith.subf %1266, %1263 : vector<2x32xf32>
    %1268 = math.exp %1267 : vector<2x32xf32>
    %1269 = arith.mulf %1268, %1198 : vector<2x32xf32>
    %1270 = arith.mulf %1265, %1255 : vector<2x32xf32>
    %1271 = arith.addf %1269, %1270 : vector<2x32xf32>
    %1272 = arith.mulf %1268, %1200 : vector<2x32xf32>
    %1273 = arith.addf %1272, %1265 : vector<2x32xf32>
    %1274 = arith.mulf %1261, %1271 : vector<2x32xf32>
    %1275 = math.absf %1273 : vector<2x32xf32>
    %cst_513 = arith.constant 1.000000e+00 : f32
    %1276 = vector.broadcast %cst_513 : f32 to vector<2x32xf32>
    %1277 = arith.maximumf %1275, %1276 : vector<2x32xf32>
    %1278 = tpu.reciprocal %1277 {approx = true} : vector<2x32xf32> -> vector<2x32xf32>
    %1279 = arith.mulf %1274, %1278 : vector<2x32xf32>
    %c1_514 = arith.constant 1 : index
    %c1_515 = arith.constant 1 : index
    %c0_516 = arith.constant 0 : index
    %c0_517 = arith.constant 0 : index
    %1280 = vector.load %arg7[%c1_514, %c1_515, %c0_516, %c0_517] : memref<2x2x32x128xf32, #tpu.memory_space<vmem>>, vector<1x1x32x128xf32>
    %1281 = vector.shape_cast %1280 : vector<1x1x32x128xf32> to vector<32x128xf32>
    %cst_518 = arith.constant dense<0.000000e+00> : vector<2x128xf32>
    %1282 = tpu.matmul %1245, %1281, %cst_518 {dimension_numbers = #tpu.dot_dimension_numbers<[1], [0], [0], [1], [0, 0, 1, 1], [], []>} : vector<2x32xf32>, vector<32x128xf32>, vector<2x128xf32> -> vector<2x128xf32>
    %c1_519 = arith.constant 1 : index
    %c1_520 = arith.constant 1 : index
    %c0_521 = arith.constant 0 : index
    %c0_522 = arith.constant 0 : index
    %1283 = vector.load %arg6[%c1_519, %c1_520, %c0_521, %c0_522] : memref<2x2x32x128xf32, #tpu.memory_space<vmem>>, vector<1x1x32x128xf32>
    %1284 = vector.shape_cast %1283 : vector<1x1x32x128xf32> to vector<32x128xf32>
    %cst_523 = arith.constant dense<0.000000e+00> : vector<2x128xf32>
    %1285 = tpu.matmul %1279, %1284, %cst_523 {dimension_numbers = #tpu.dot_dimension_numbers<[1], [0], [0], [1], [0, 0, 1, 1], [], []>} : vector<2x32xf32>, vector<32x128xf32>, vector<2x128xf32> -> vector<2x128xf32>
    %1286 = arith.addf %1285, %1282 : vector<2x128xf32>
    %c1_524 = arith.constant 1 : index
    %c1_525 = arith.constant 1 : index
    %c0_526 = arith.constant 0 : index
    %c0_527 = arith.constant 0 : index
    %1287 = vector.load %arg8[%c1_524, %c1_525, %c0_526, %c0_527] : memref<2x2x1x128xf32, #tpu.memory_space<vmem>>, vector<1x1x1x128xf32>
    %1288 = vector.shape_cast %1287 : vector<1x1x1x128xf32> to vector<1x128xf32>
    %1289 = vector.broadcast %1288 : vector<1x128xf32> to vector<2x128xf32>
    %1290 = arith.addf %1286, %1289 : vector<2x128xf32>
    %1291 = vector.extract_strided_slice %1290 {offsets = [0, 0], sizes = [2, 32], strides = [1, 1]} : vector<2x128xf32> to vector<2x32xf32>
    %1292 = vector.extract_strided_slice %1290 {offsets = [0, 32], sizes = [2, 32], strides = [1, 1]} : vector<2x128xf32> to vector<2x32xf32>
    %1293 = vector.extract_strided_slice %1290 {offsets = [0, 64], sizes = [2, 32], strides = [1, 1]} : vector<2x128xf32> to vector<2x32xf32>
    %1294 = math.tanh %1293 : vector<2x32xf32>
    %1295 = vector.extract_strided_slice %1290 {offsets = [0, 96], sizes = [2, 32], strides = [1, 1]} : vector<2x128xf32> to vector<2x32xf32>
    %1296 = arith.negf %1295 : vector<2x32xf32>
    %1297 = math.exp %1296 : vector<2x32xf32>
    %cst_528 = arith.constant 1.000000e+00 : f32
    %1298 = vector.broadcast %cst_528 : f32 to vector<2x32xf32>
    %1299 = arith.addf %1298, %1297 : vector<2x32xf32>
    %1300 = arith.divf %1298, %1299 : vector<2x32xf32>
    %1301 = arith.addf %1292, %1229 : vector<2x32xf32>
    %1302 = arith.maximumf %1301, %1291 : vector<2x32xf32>
    %1303 = arith.subf %1291, %1302 : vector<2x32xf32>
    %1304 = math.exp %1303 : vector<2x32xf32>
    %1305 = arith.addf %1292, %1229 : vector<2x32xf32>
    %1306 = arith.subf %1305, %1302 : vector<2x32xf32>
    %1307 = math.exp %1306 : vector<2x32xf32>
    %1308 = arith.mulf %1307, %1237 : vector<2x32xf32>
    %1309 = arith.mulf %1304, %1294 : vector<2x32xf32>
    %1310 = arith.addf %1308, %1309 : vector<2x32xf32>
    %1311 = arith.mulf %1307, %1239 : vector<2x32xf32>
    %1312 = arith.addf %1311, %1304 : vector<2x32xf32>
    %1313 = arith.mulf %1300, %1310 : vector<2x32xf32>
    %1314 = math.absf %1312 : vector<2x32xf32>
    %cst_529 = arith.constant 1.000000e+00 : f32
    %1315 = vector.broadcast %cst_529 : f32 to vector<2x32xf32>
    %1316 = arith.maximumf %1314, %1315 : vector<2x32xf32>
    %1317 = tpu.reciprocal %1316 {approx = true} : vector<2x32xf32> -> vector<2x32xf32>
    %1318 = arith.mulf %1313, %1317 : vector<2x32xf32>
    %c14_530 = arith.constant 14 : index
    %c0_531 = arith.constant 0 : index
    %1319 = vector.load %arg29[%c14_530, %c0_531] : memref<16x32xf32, #tpu.memory_space<vmem>>, vector<2x32xf32>
    tpu.vector_store %arg29[%c14_530, %c0_531], %1318 {strides = array<i32>} : memref<16x32xf32, #tpu.memory_space<vmem>>, vector<2x32xf32>,
    %c0_532 = arith.constant 0 : index
    %c0_533 = arith.constant 0 : index
    %1320 = vector.load %arg29[%c0_532, %c0_533] : memref<16x32xf32, #tpu.memory_space<vmem>>, vector<16x32xf32>
    %cst_534 = arith.constant 5.000000e-01 : f32
    %1321 = vector.broadcast %cst_534 : f32 to vector<16x32xf32>
    %1322 = arith.mulf %1321, %1320 : vector<16x32xf32>
    %cst_535 = arith.constant 4.471500e-02 : f32
    %1323 = vector.broadcast %cst_535 : f32 to vector<16x32xf32>
    %1324 = arith.mulf %1323, %1320 : vector<16x32xf32>
    %1325 = arith.mulf %1324, %1320 : vector<16x32xf32>
    %1326 = arith.mulf %1325, %1320 : vector<16x32xf32>
    %1327 = arith.addf %1320, %1326 : vector<16x32xf32>
    %cst_536 = arith.constant 0.797884583 : f32
    %1328 = vector.broadcast %cst_536 : f32 to vector<16x32xf32>
    %1329 = arith.mulf %1328, %1327 : vector<16x32xf32>
    %1330 = math.tanh %1329 : vector<16x32xf32>
    %cst_537 = arith.constant 1.000000e+00 : f32
    %1331 = vector.broadcast %cst_537 : f32 to vector<16x32xf32>
    %1332 = arith.addf %1331, %1330 : vector<16x32xf32>
    %1333 = arith.mulf %1322, %1332 : vector<16x32xf32>
    %1334 = arith.addf %1333, %695 : vector<16x32xf32>
    %c1_538 = arith.constant 1 : index
    %c0_539 = arith.constant 0 : index
    %c0_540 = arith.constant 0 : index
    %1335 = vector.load %arg9[%c1_538, %c0_539, %c0_540] : memref<2x1x32xf32, #tpu.memory_space<vmem>>, vector<1x1x32xf32>
    %1336 = vector.shape_cast %1335 : vector<1x1x32xf32> to vector<1x32xf32>
    %c1_541 = arith.constant 1 : index
    %c0_542 = arith.constant 0 : index
    %c0_543 = arith.constant 0 : index
    %1337 = vector.load %arg10[%c1_541, %c0_542, %c0_543] : memref<2x1x32xf32, #tpu.memory_space<vmem>>, vector<1x1x32xf32>
    %1338 = vector.shape_cast %1337 : vector<1x1x32xf32> to vector<1x32xf32>
    %cst_544 = arith.constant dense<0.000000e+00> : vector<16xf32>
    %1339 = vector.multi_reduction <add>, %1334, %cst_544 [1] : vector<16x32xf32> to vector<16xf32>
    %1340 = vector.shape_cast %1339 : vector<16xf32> to vector<16x1xf32>
    %cst_545 = arith.constant 3.200000e+01 : f32
    %1341 = vector.broadcast %cst_545 : f32 to vector<16x1xf32>
    %1342 = arith.divf %1340, %1341 : vector<16x1xf32>
    %1343 = vector.broadcast %1342 : vector<16x1xf32> to vector<16x32xf32>
    %1344 = arith.subf %1334, %1343 : vector<16x32xf32>
    %1345 = arith.mulf %1344, %1344 : vector<16x32xf32>
    %cst_546 = arith.constant dense<0.000000e+00> : vector<16xf32>
    %1346 = vector.multi_reduction <add>, %1345, %cst_546 [1] : vector<16x32xf32> to vector<16xf32>
    %1347 = vector.shape_cast %1346 : vector<16xf32> to vector<16x1xf32>
    %cst_547 = arith.constant 3.200000e+01 : f32
    %1348 = vector.broadcast %cst_547 : f32 to vector<16x1xf32>
    %1349 = arith.divf %1347, %1348 : vector<16x1xf32>
    %1350 = vector.broadcast %1342 : vector<16x1xf32> to vector<16x32xf32>
    %1351 = arith.subf %1334, %1350 : vector<16x32xf32>
    %cst_548 = arith.constant 9.99999974E-6 : f32
    %1352 = vector.broadcast %cst_548 : f32 to vector<16x1xf32>
    %1353 = arith.addf %1349, %1352 : vector<16x1xf32>
    %1354 = math.rsqrt %1353 : vector<16x1xf32>
    %1355 = vector.broadcast %1354 : vector<16x1xf32> to vector<16x32xf32>
    %1356 = arith.mulf %1351, %1355 : vector<16x32xf32>
    %1357 = vector.broadcast %1336 : vector<1x32xf32> to vector<16x32xf32>
    %1358 = arith.mulf %1356, %1357 : vector<16x32xf32>
    %1359 = vector.broadcast %1338 : vector<1x32xf32> to vector<16x32xf32>
    %1360 = arith.addf %1358, %1359 : vector<16x32xf32>
    %c1_549 = arith.constant 1 : index
    %c0_550 = arith.constant 0 : index
    %c0_551 = arith.constant 0 : index
    %c0_552 = arith.constant 0 : index
    %1361 = vector.load %arg24[%c1_549, %c0_550, %c0_551, %c0_552] : memref<2x2x2x32xf32, #tpu.memory_space<vmem>>, vector<1x1x2x32xf32>
    %1362 = vector.shape_cast %1361 : vector<1x1x2x32xf32> to vector<2x32xf32>
    %1363 = vector.shape_cast %1279 : vector<2x32xf32> to vector<1x1x2x32xf32>
    tpu.vector_store %arg24[%c1_549, %c0_550, %c0_551, %c0_552], %1363 {strides = array<i32>} : memref<2x2x2x32xf32, #tpu.memory_space<vmem>>, vector<1x1x2x32xf32>,
    %c1_553 = arith.constant 1 : index
    %c0_554 = arith.constant 0 : index
    %c0_555 = arith.constant 0 : index
    %c0_556 = arith.constant 0 : index
    %1364 = vector.load %arg25[%c1_553, %c0_554, %c0_555, %c0_556] : memref<2x2x2x32xf32, #tpu.memory_space<vmem>>, vector<1x1x2x32xf32>
    %1365 = vector.shape_cast %1364 : vector<1x1x2x32xf32> to vector<2x32xf32>
    %1366 = vector.shape_cast %1271 : vector<2x32xf32> to vector<1x1x2x32xf32>
    tpu.vector_store %arg25[%c1_553, %c0_554, %c0_555, %c0_556], %1366 {strides = array<i32>} : memref<2x2x2x32xf32, #tpu.memory_space<vmem>>, vector<1x1x2x32xf32>,
    %c1_557 = arith.constant 1 : index
    %c0_558 = arith.constant 0 : index
    %c0_559 = arith.constant 0 : index
    %c0_560 = arith.constant 0 : index
    %1367 = vector.load %arg26[%c1_557, %c0_558, %c0_559, %c0_560] : memref<2x2x2x32xf32, #tpu.memory_space<vmem>>, vector<1x1x2x32xf32>
    %1368 = vector.shape_cast %1367 : vector<1x1x2x32xf32> to vector<2x32xf32>
    %1369 = vector.shape_cast %1273 : vector<2x32xf32> to vector<1x1x2x32xf32>
    tpu.vector_store %arg26[%c1_557, %c0_558, %c0_559, %c0_560], %1369 {strides = array<i32>} : memref<2x2x2x32xf32, #tpu.memory_space<vmem>>, vector<1x1x2x32xf32>,
    %c1_561 = arith.constant 1 : index
    %c0_562 = arith.constant 0 : index
    %c0_563 = arith.constant 0 : index
    %c0_564 = arith.constant 0 : index
    %1370 = vector.load %arg27[%c1_561, %c0_562, %c0_563, %c0_564] : memref<2x2x2x32xf32, #tpu.memory_space<vmem>>, vector<1x1x2x32xf32>
    %1371 = vector.shape_cast %1370 : vector<1x1x2x32xf32> to vector<2x32xf32>
    %1372 = vector.shape_cast %1263 : vector<2x32xf32> to vector<1x1x2x32xf32>
    tpu.vector_store %arg27[%c1_561, %c0_562, %c0_563, %c0_564], %1372 {strides = array<i32>} : memref<2x2x2x32xf32, #tpu.memory_space<vmem>>, vector<1x1x2x32xf32>,
    %c1_565 = arith.constant 1 : index
    %c1_566 = arith.constant 1 : index
    %c0_567 = arith.constant 0 : index
    %c0_568 = arith.constant 0 : index
    %1373 = vector.load %arg24[%c1_565, %c1_566, %c0_567, %c0_568] : memref<2x2x2x32xf32, #tpu.memory_space<vmem>>, vector<1x1x2x32xf32>
    %1374 = vector.shape_cast %1373 : vector<1x1x2x32xf32> to vector<2x32xf32>
    %1375 = vector.shape_cast %1318 : vector<2x32xf32> to vector<1x1x2x32xf32>
    tpu.vector_store %arg24[%c1_565, %c1_566, %c0_567, %c0_568], %1375 {strides = array<i32>} : memref<2x2x2x32xf32, #tpu.memory_space<vmem>>, vector<1x1x2x32xf32>,
    %c1_569 = arith.constant 1 : index
    %c1_570 = arith.constant 1 : index
    %c0_571 = arith.constant 0 : index
    %c0_572 = arith.constant 0 : index
    %1376 = vector.load %arg25[%c1_569, %c1_570, %c0_571, %c0_572] : memref<2x2x2x32xf32, #tpu.memory_space<vmem>>, vector<1x1x2x32xf32>
    %1377 = vector.shape_cast %1376 : vector<1x1x2x32xf32> to vector<2x32xf32>
    %1378 = vector.shape_cast %1310 : vector<2x32xf32> to vector<1x1x2x32xf32>
    tpu.vector_store %arg25[%c1_569, %c1_570, %c0_571, %c0_572], %1378 {strides = array<i32>} : memref<2x2x2x32xf32, #tpu.memory_space<vmem>>, vector<1x1x2x32xf32>,
    %c1_573 = arith.constant 1 : index
    %c1_574 = arith.constant 1 : index
    %c0_575 = arith.constant 0 : index
    %c0_576 = arith.constant 0 : index
    %1379 = vector.load %arg26[%c1_573, %c1_574, %c0_575, %c0_576] : memref<2x2x2x32xf32, #tpu.memory_space<vmem>>, vector<1x1x2x32xf32>
    %1380 = vector.shape_cast %1379 : vector<1x1x2x32xf32> to vector<2x32xf32>
    %1381 = vector.shape_cast %1312 : vector<2x32xf32> to vector<1x1x2x32xf32>
    tpu.vector_store %arg26[%c1_573, %c1_574, %c0_575, %c0_576], %1381 {strides = array<i32>} : memref<2x2x2x32xf32, #tpu.memory_space<vmem>>, vector<1x1x2x32xf32>,
    %c1_577 = arith.constant 1 : index
    %c1_578 = arith.constant 1 : index
    %c0_579 = arith.constant 0 : index
    %c0_580 = arith.constant 0 : index
    %1382 = vector.load %arg27[%c1_577, %c1_578, %c0_579, %c0_580] : memref<2x2x2x32xf32, #tpu.memory_space<vmem>>, vector<1x1x2x32xf32>
    %1383 = vector.shape_cast %1382 : vector<1x1x2x32xf32> to vector<2x32xf32>
    %1384 = vector.shape_cast %1302 : vector<2x32xf32> to vector<1x1x2x32xf32>
    tpu.vector_store %arg27[%c1_577, %c1_578, %c0_579, %c0_580], %1384 {strides = array<i32>} : memref<2x2x2x32xf32, #tpu.memory_space<vmem>>, vector<1x1x2x32xf32>,
    %c0_581 = arith.constant 0 : index
    %c0_582 = arith.constant 0 : index
    %1385 = vector.load %arg11[%c0_581, %c0_582] : memref<32x16xf32, #tpu.memory_space<vmem>>, vector<32x16xf32>
    %cst_583 = arith.constant dense<0.000000e+00> : vector<16x16xf32>
    %1386 = tpu.matmul %1360, %1385, %cst_583 {dimension_numbers = #tpu.dot_dimension_numbers<[1], [0], [0], [1], [0, 0, 1, 1], [], []>} : vector<16x32xf32>, vector<32x16xf32>, vector<16x16xf32> -> vector<16x16xf32>
    %c0_584 = arith.constant 0 : index
    %c0_585 = arith.constant 0 : index
    %1387 = vector.load %arg12[%c0_584, %c0_585] : memref<1x16xf32, #tpu.memory_space<vmem>>, vector<1x16xf32>
    %1388 = vector.broadcast %1387 : vector<1x16xf32> to vector<16x16xf32>
    %1389 = arith.addf %1386, %1388 : vector<16x16xf32>
    %c0_586 = arith.constant 0 : index
    %c0_587 = arith.constant 0 : index
    %1390 = vector.load %arg13[%c0_586, %c0_587] : memref<1x16xf32, #tpu.memory_space<vmem>>, vector<1x16xf32>
    %c0_588 = arith.constant 0 : index
    %c0_589 = arith.constant 0 : index
    %1391 = vector.load %arg14[%c0_588, %c0_589] : memref<1x16xf32, #tpu.memory_space<vmem>>, vector<1x16xf32>
    %cst_590 = arith.constant dense<0.000000e+00> : vector<16xf32>
    %1392 = vector.multi_reduction <add>, %1389, %cst_590 [1] : vector<16x16xf32> to vector<16xf32>
    %1393 = vector.shape_cast %1392 : vector<16xf32> to vector<16x1xf32>
    %cst_591 = arith.constant 1.600000e+01 : f32
    %1394 = vector.broadcast %cst_591 : f32 to vector<16x1xf32>
    %1395 = arith.divf %1393, %1394 : vector<16x1xf32>
    %1396 = vector.broadcast %1395 : vector<16x1xf32> to vector<16x16xf32>
    %1397 = arith.subf %1389, %1396 : vector<16x16xf32>
    %1398 = arith.mulf %1397, %1397 : vector<16x16xf32>
    %cst_592 = arith.constant dense<0.000000e+00> : vector<16xf32>
    %1399 = vector.multi_reduction <add>, %1398, %cst_592 [1] : vector<16x16xf32> to vector<16xf32>
    %1400 = vector.shape_cast %1399 : vector<16xf32> to vector<16x1xf32>
    %cst_593 = arith.constant 1.600000e+01 : f32
    %1401 = vector.broadcast %cst_593 : f32 to vector<16x1xf32>
    %1402 = arith.divf %1400, %1401 : vector<16x1xf32>
    %1403 = vector.broadcast %1395 : vector<16x1xf32> to vector<16x16xf32>
    %1404 = arith.subf %1389, %1403 : vector<16x16xf32>
    %cst_594 = arith.constant 9.99999974E-6 : f32
    %1405 = vector.broadcast %cst_594 : f32 to vector<16x1xf32>
    %1406 = arith.addf %1402, %1405 : vector<16x1xf32>
    %1407 = math.rsqrt %1406 : vector<16x1xf32>
    %1408 = vector.broadcast %1407 : vector<16x1xf32> to vector<16x16xf32>
    %1409 = arith.mulf %1404, %1408 : vector<16x16xf32>
    %1410 = vector.broadcast %1390 : vector<1x16xf32> to vector<16x16xf32>
    %1411 = arith.mulf %1409, %1410 : vector<16x16xf32>
    %1412 = vector.broadcast %1391 : vector<1x16xf32> to vector<16x16xf32>
    %1413 = arith.addf %1411, %1412 : vector<16x16xf32>
    %1414 = math.tanh %1413 : vector<16x16xf32>
    %c0_595 = arith.constant 0 : index
    %c0_596 = arith.constant 0 : index
    %1415 = vector.load %arg15[%c0_595, %c0_596] : memref<16x1xf32, #tpu.memory_space<vmem>>, vector<16x1xf32>
    %cst_597 = arith.constant dense<0.000000e+00> : vector<16x1xf32>
    %1416 = tpu.matmul %1414, %1415, %cst_597 {dimension_numbers = #tpu.dot_dimension_numbers<[1], [0], [0], [1], [0, 0, 1, 1], [], []>} : vector<16x16xf32>, vector<16x1xf32>, vector<16x1xf32> -> vector<16x1xf32>
    %c0_598 = arith.constant 0 : index
    %c0_599 = arith.constant 0 : index
    %1417 = vector.load %arg16[%c0_598, %c0_599] : memref<1x1xf32, #tpu.memory_space<vmem>>, vector<1x1xf32>
    %1418 = vector.broadcast %1417 : vector<1x1xf32> to vector<16x1xf32>
    %1419 = arith.addf %1416, %1418 : vector<16x1xf32>
    %cst_600 = arith.constant dense<0xFF800000> : vector<1xf32>
    %1420 = vector.multi_reduction <maximumf>, %1419, %cst_600 [0] : vector<16x1xf32> to vector<1xf32>
    %1421 = vector.shape_cast %1420 : vector<1xf32> to vector<1x1xf32>
    %1422 = vector.broadcast %1421 : vector<1x1xf32> to vector<16x1xf32>
    %1423 = arith.subf %1419, %1422 : vector<16x1xf32>
    %1424 = math.exp %1423 : vector<16x1xf32>
    %1425 = tpu.iota {dimensions = array<i32: 0>} : vector<2x16xi32>
    %1426 = arith.sitofp %1425 : vector<2x16xi32> to vector<2x16xf32>
    %1427 = tpu.iota {dimensions = array<i32: 1>} : vector<2x16xi32>
    %1428 = arith.sitofp %1427 : vector<2x16xi32> to vector<2x16xf32>
    %cst_601 = arith.constant 5.000000e-01 : f32
    %1429 = vector.broadcast %cst_601 : f32 to vector<2x16xf32>
    %1430 = arith.mulf %1428, %1429 : vector<2x16xf32>
    %1431 = math.floor %1430 : vector<2x16xf32>
    %cst_602 = arith.constant 2.000000e+00 : f32
    %1432 = vector.broadcast %cst_602 : f32 to vector<2x16xf32>
    %1433 = arith.mulf %1432, %1431 : vector<2x16xf32>
    %1434 = arith.subf %1428, %1433 : vector<2x16xf32>
    %1435 = arith.cmpf oeq, %1434, %1426 : vector<2x16xf32>
    %cst_603 = arith.constant 1.000000e+00 : f32
    %cst_604 = arith.constant 0.000000e+00 : f32
    %1436 = vector.broadcast %cst_603 : f32 to vector<2x16xf32>
    %1437 = vector.broadcast %cst_604 : f32 to vector<2x16xf32>
    %1438 = arith.select %1435, %1436, %1437 : vector<2x16xi1>, vector<2x16xf32>
    %1439 = tpu.iota {dimensions = array<i32: 0>} : vector<16x2xi32>
    %1440 = arith.sitofp %1439 : vector<16x2xi32> to vector<16x2xf32>
    %1441 = tpu.iota {dimensions = array<i32: 1>} : vector<16x2xi32>
    %1442 = arith.sitofp %1441 : vector<16x2xi32> to vector<16x2xf32>
    %cst_605 = arith.constant 5.000000e-01 : f32
    %1443 = vector.broadcast %cst_605 : f32 to vector<16x2xf32>
    %1444 = arith.mulf %1440, %1443 : vector<16x2xf32>
    %1445 = math.floor %1444 : vector<16x2xf32>
    %cst_606 = arith.constant 2.000000e+00 : f32
    %1446 = vector.broadcast %cst_606 : f32 to vector<16x2xf32>
    %1447 = arith.mulf %1446, %1445 : vector<16x2xf32>
    %1448 = arith.subf %1440, %1447 : vector<16x2xf32>
    %1449 = arith.cmpf oeq, %1448, %1442 : vector<16x2xf32>
    %cst_607 = arith.constant 1.000000e+00 : f32
    %cst_608 = arith.constant 0.000000e+00 : f32
    %1450 = vector.broadcast %cst_607 : f32 to vector<16x2xf32>
    %1451 = vector.broadcast %cst_608 : f32 to vector<16x2xf32>
    %1452 = arith.select %1449, %1450, %1451 : vector<16x2xi1>, vector<16x2xf32>
    %cst_609 = arith.constant dense<0.000000e+00> : vector<2x1xf32>
    %1453 = tpu.matmul %1438, %1424, %cst_609 {dimension_numbers = #tpu.dot_dimension_numbers<[1], [0], [0], [1], [0, 0, 1, 1], [], []>} : vector<2x16xf32>, vector<16x1xf32>, vector<2x1xf32> -> vector<2x1xf32>
    %cst_610 = arith.constant dense<0.000000e+00> : vector<16x1xf32>
    %1454 = tpu.matmul %1452, %1453, %cst_610 {dimension_numbers = #tpu.dot_dimension_numbers<[1], [0], [0], [1], [0, 0, 1, 1], [], []>} : vector<16x2xf32>, vector<2x1xf32>, vector<16x1xf32> -> vector<16x1xf32>
    %1455 = tpu.reciprocal %1454 {approx = true} : vector<16x1xf32> -> vector<16x1xf32>
    %1456 = arith.mulf %1424, %1455 : vector<16x1xf32>
    %1457 = vector.broadcast %1456 : vector<16x1xf32> to vector<16x32xf32>
    %1458 = arith.mulf %1360, %1457 : vector<16x32xf32>
    %1459 = arith.cmpf oeq, %1458, %1458 : vector<16x32xf32>
    %1460 = math.absf %1458 : vector<16x32xf32>
    %cst_611 = arith.constant 3.40282347E+38 : f32
    %1461 = vector.broadcast %cst_611 : f32 to vector<16x32xf32>
    %1462 = arith.cmpf ole, %1460, %1461 : vector<16x32xf32>
    %1463 = arith.andi %1459, %1462 : vector<16x32xi1>
    %cst_612 = arith.constant 0.000000e+00 : f32
    %1464 = vector.broadcast %cst_612 : f32 to vector<16x32xf32>
    %1465 = arith.select %1463, %1458, %1464 : vector<16x32xi1>, vector<16x32xf32>
    %cst_613 = arith.constant dense<0.000000e+00> : vector<2x32xf32>
    %1466 = tpu.matmul %1438, %1465, %cst_613 {dimension_numbers = #tpu.dot_dimension_numbers<[1], [0], [0], [1], [0, 0, 1, 1], [], []>} : vector<2x16xf32>, vector<16x32xf32>, vector<2x32xf32> -> vector<2x32xf32>
    %c0_614 = arith.constant 0 : index
    %c0_615 = arith.constant 0 : index
    %1467 = vector.load %arg17[%c0_614, %c0_615] : memref<32x32xf32, #tpu.memory_space<vmem>>, vector<32x32xf32>
    %cst_616 = arith.constant dense<0.000000e+00> : vector<2x32xf32>
    %1468 = tpu.matmul %1466, %1467, %cst_616 {dimension_numbers = #tpu.dot_dimension_numbers<[1], [0], [0], [1], [0, 0, 1, 1], [], []>} : vector<2x32xf32>, vector<32x32xf32>, vector<2x32xf32> -> vector<2x32xf32>
    %c0_617 = arith.constant 0 : index
    %c0_618 = arith.constant 0 : index
    %1469 = vector.load %arg18[%c0_617, %c0_618] : memref<1x32xf32, #tpu.memory_space<vmem>>, vector<1x32xf32>
    %1470 = vector.broadcast %1469 : vector<1x32xf32> to vector<2x32xf32>
    %1471 = arith.addf %1468, %1470 : vector<2x32xf32>
    %c0_619 = arith.constant 0 : index
    %c0_620 = arith.constant 0 : index
    %1472 = vector.load %arg19[%c0_619, %c0_620] : memref<1x32xf32, #tpu.memory_space<vmem>>, vector<1x32xf32>
    %c0_621 = arith.constant 0 : index
    %c0_622 = arith.constant 0 : index
    %1473 = vector.load %arg20[%c0_621, %c0_622] : memref<1x32xf32, #tpu.memory_space<vmem>>, vector<1x32xf32>
    %cst_623 = arith.constant dense<0.000000e+00> : vector<2xf32>
    %1474 = vector.multi_reduction <add>, %1471, %cst_623 [1] : vector<2x32xf32> to vector<2xf32>
    %1475 = vector.shape_cast %1474 : vector<2xf32> to vector<2x1xf32>
    %cst_624 = arith.constant 3.200000e+01 : f32
    %1476 = vector.broadcast %cst_624 : f32 to vector<2x1xf32>
    %1477 = arith.divf %1475, %1476 : vector<2x1xf32>
    %1478 = vector.broadcast %1477 : vector<2x1xf32> to vector<2x32xf32>
    %1479 = arith.subf %1471, %1478 : vector<2x32xf32>
    %1480 = arith.mulf %1479, %1479 : vector<2x32xf32>
    %cst_625 = arith.constant dense<0.000000e+00> : vector<2xf32>
    %1481 = vector.multi_reduction <add>, %1480, %cst_625 [1] : vector<2x32xf32> to vector<2xf32>
    %1482 = vector.shape_cast %1481 : vector<2xf32> to vector<2x1xf32>
    %cst_626 = arith.constant 3.200000e+01 : f32
    %1483 = vector.broadcast %cst_626 : f32 to vector<2x1xf32>
    %1484 = arith.divf %1482, %1483 : vector<2x1xf32>
    %1485 = vector.broadcast %1477 : vector<2x1xf32> to vector<2x32xf32>
    %1486 = arith.subf %1471, %1485 : vector<2x32xf32>
    %cst_627 = arith.constant 9.99999974E-6 : f32
    %1487 = vector.broadcast %cst_627 : f32 to vector<2x1xf32>
    %1488 = arith.addf %1484, %1487 : vector<2x1xf32>
    %1489 = math.rsqrt %1488 : vector<2x1xf32>
    %1490 = vector.broadcast %1489 : vector<2x1xf32> to vector<2x32xf32>
    %1491 = arith.mulf %1486, %1490 : vector<2x32xf32>
    %1492 = vector.broadcast %1472 : vector<1x32xf32> to vector<2x32xf32>
    %1493 = arith.mulf %1491, %1492 : vector<2x32xf32>
    %1494 = vector.broadcast %1473 : vector<1x32xf32> to vector<2x32xf32>
    %1495 = arith.addf %1493, %1494 : vector<2x32xf32>
    %cst_628 = arith.constant 5.000000e-01 : f32
    %1496 = vector.broadcast %cst_628 : f32 to vector<2x32xf32>
    %1497 = arith.mulf %1496, %1495 : vector<2x32xf32>
    %cst_629 = arith.constant 4.471500e-02 : f32
    %1498 = vector.broadcast %cst_629 : f32 to vector<2x32xf32>
    %1499 = arith.mulf %1498, %1495 : vector<2x32xf32>
    %1500 = arith.mulf %1499, %1495 : vector<2x32xf32>
    %1501 = arith.mulf %1500, %1495 : vector<2x32xf32>
    %1502 = arith.addf %1495, %1501 : vector<2x32xf32>
    %cst_630 = arith.constant 0.797884583 : f32
    %1503 = vector.broadcast %cst_630 : f32 to vector<2x32xf32>
    %1504 = arith.mulf %1503, %1502 : vector<2x32xf32>
    %1505 = math.tanh %1504 : vector<2x32xf32>
    %cst_631 = arith.constant 1.000000e+00 : f32
    %1506 = vector.broadcast %cst_631 : f32 to vector<2x32xf32>
    %1507 = arith.addf %1506, %1505 : vector<2x32xf32>
    %1508 = arith.mulf %1497, %1507 : vector<2x32xf32>
    %c0_632 = arith.constant 0 : index
    %c0_633 = arith.constant 0 : index
    %1509 = vector.load %arg21[%c0_632, %c0_633] : memref<32x1xf32, #tpu.memory_space<vmem>>, vector<32x1xf32>
    %cst_634 = arith.constant dense<0.000000e+00> : vector<2x1xf32>
    %1510 = tpu.matmul %1508, %1509, %cst_634 {dimension_numbers = #tpu.dot_dimension_numbers<[1], [0], [0], [1], [0, 0, 1, 1], [], []>} : vector<2x32xf32>, vector<32x1xf32>, vector<2x1xf32> -> vector<2x1xf32>
    %c0_635 = arith.constant 0 : index
    %c0_636 = arith.constant 0 : index
    %1511 = vector.load %arg22[%c0_635, %c0_636] : memref<1x1xf32, #tpu.memory_space<vmem>>, vector<1x1xf32>
    %1512 = vector.broadcast %1511 : vector<1x1xf32> to vector<2x1xf32>
    %1513 = arith.addf %1510, %1512 : vector<2x1xf32>
    %cst_637 = arith.constant 0.000000e+00 : f32
    %cst_638 = arith.constant 2.400000e+01 : f32
    %1514 = vector.broadcast %cst_637 : f32 to vector<2x1xf32>
    %1515 = arith.maximumf %1514, %1513 : vector<2x1xf32>
    %1516 = vector.broadcast %cst_638 : f32 to vector<2x1xf32>
    %1517 = arith.minimumf %1516, %1515 : vector<2x1xf32>
    %c0_639 = arith.constant 0 : index
    %c0_640 = arith.constant 0 : index
    %1518 = vector.load %arg23[%c0_639, %c0_640] : memref<2x1xf32, #tpu.memory_space<vmem>>, vector<2x1xf32>
    tpu.vector_store %arg23[%c0_639, %c0_640], %1517 {strides = array<i32>} : memref<2x1xf32, #tpu.memory_space<vmem>>, vector<2x1xf32>,
    return
  }
  func.func @transform_0(%arg0: i32) -> (i32, i32) {
    %c0_i32 = arith.constant 0 : i32
    %c0_i32_0 = arith.constant 0 : i32
    %c0_i32_1 = arith.constant 0 : i32
    return %c0_i32, %c0_i32_0 : i32, i32
  }
  func.func @transform_1(%arg0: i32) -> (i32, i32) {
    %c0_i32 = arith.constant 0 : i32
    %c0_i32_0 = arith.constant 0 : i32
    %c0_i32_1 = arith.constant 0 : i32
    return %c0_i32, %c0_i32_0 : i32, i32
  }
  func.func @transform_2(%arg0: i32) -> (i32, i32) {
    %c0_i32 = arith.constant 0 : i32
    %c0_i32_0 = arith.constant 0 : i32
    %c0_i32_1 = arith.constant 0 : i32
    return %c0_i32, %c0_i32_0 : i32, i32
  }
  func.func @transform_3(%arg0: i32) -> (i32, i32) {
    %c0_i32 = arith.constant 0 : i32
    %c0_i32_0 = arith.constant 0 : i32
    %c0_i32_1 = arith.constant 0 : i32
    return %c0_i32, %c0_i32_0 : i32, i32
  }
  func.func @transform_4(%arg0: i32) -> (i32, i32) {
    %c0_i32 = arith.constant 0 : i32
    %c0_i32_0 = arith.constant 0 : i32
    %c0_i32_1 = arith.constant 0 : i32
    return %c0_i32, %c0_i32_0 : i32, i32
  }
  func.func @transform_5(%arg0: i32) -> (i32, i32, i32, i32) {
    %c0_i32 = arith.constant 0 : i32
    %c0_i32_0 = arith.constant 0 : i32
    %c0_i32_1 = arith.constant 0 : i32
    %c0_i32_2 = arith.constant 0 : i32
    %c0_i32_3 = arith.constant 0 : i32
    return %c0_i32, %c0_i32_0, %c0_i32_1, %c0_i32_2 : i32, i32, i32, i32
  }
  func.func @transform_6(%arg0: i32) -> (i32, i32, i32, i32) {
    %c0_i32 = arith.constant 0 : i32
    %c0_i32_0 = arith.constant 0 : i32
    %c0_i32_1 = arith.constant 0 : i32
    %c0_i32_2 = arith.constant 0 : i32
    %c0_i32_3 = arith.constant 0 : i32
    return %c0_i32, %c0_i32_0, %c0_i32_1, %c0_i32_2 : i32, i32, i32, i32
  }
  func.func @transform_7(%arg0: i32) -> (i32, i32, i32, i32) {
    %c0_i32 = arith.constant 0 : i32
    %c0_i32_0 = arith.constant 0 : i32
    %c0_i32_1 = arith.constant 0 : i32
    %c0_i32_2 = arith.constant 0 : i32
    %c0_i32_3 = arith.constant 0 : i32
    return %c0_i32, %c0_i32_0, %c0_i32_1, %c0_i32_2 : i32, i32, i32, i32
  }
  func.func @transform_8(%arg0: i32) -> (i32, i32, i32) {
    %c0_i32 = arith.constant 0 : i32
    %c0_i32_0 = arith.constant 0 : i32
    %c0_i32_1 = arith.constant 0 : i32
    %c0_i32_2 = arith.constant 0 : i32
    return %c0_i32, %c0_i32_0, %c0_i32_1 : i32, i32, i32
  }
  func.func @transform_9(%arg0: i32) -> (i32, i32, i32) {
    %c0_i32 = arith.constant 0 : i32
    %c0_i32_0 = arith.constant 0 : i32
    %c0_i32_1 = arith.constant 0 : i32
    %c0_i32_2 = arith.constant 0 : i32
    return %c0_i32, %c0_i32_0, %c0_i32_1 : i32, i32, i32
  }
  func.func @transform_10(%arg0: i32) -> (i32, i32) {
    %c0_i32 = arith.constant 0 : i32
    %c0_i32_0 = arith.constant 0 : i32
    %c0_i32_1 = arith.constant 0 : i32
    return %c0_i32, %c0_i32_0 : i32, i32
  }
  func.func @transform_11(%arg0: i32) -> (i32, i32) {
    %c0_i32 = arith.constant 0 : i32
    %c0_i32_0 = arith.constant 0 : i32
    %c0_i32_1 = arith.constant 0 : i32
    return %c0_i32, %c0_i32_0 : i32, i32
  }
  func.func @transform_12(%arg0: i32) -> (i32, i32) {
    %c0_i32 = arith.constant 0 : i32
    %c0_i32_0 = arith.constant 0 : i32
    %c0_i32_1 = arith.constant 0 : i32
    return %c0_i32, %c0_i32_0 : i32, i32
  }
  func.func @transform_13(%arg0: i32) -> (i32, i32) {
    %c0_i32 = arith.constant 0 : i32
    %c0_i32_0 = arith.constant 0 : i32
    %c0_i32_1 = arith.constant 0 : i32
    return %c0_i32, %c0_i32_0 : i32, i32
  }
  func.func @transform_14(%arg0: i32) -> (i32, i32) {
    %c0_i32 = arith.constant 0 : i32
    %c0_i32_0 = arith.constant 0 : i32
    %c0_i32_1 = arith.constant 0 : i32
    return %c0_i32, %c0_i32_0 : i32, i32
  }
  func.func @transform_15(%arg0: i32) -> (i32, i32) {
    %c0_i32 = arith.constant 0 : i32
    %c0_i32_0 = arith.constant 0 : i32
    %c0_i32_1 = arith.constant 0 : i32
    return %c0_i32, %c0_i32_0 : i32, i32
  }
  func.func @transform_16(%arg0: i32) -> (i32, i32) {
    %c0_i32 = arith.constant 0 : i32
    %c0_i32_0 = arith.constant 0 : i32
    %c0_i32_1 = arith.constant 0 : i32
    return %c0_i32, %c0_i32_0 : i32, i32
  }
  func.func @transform_17(%arg0: i32) -> (i32, i32) {
    %c0_i32 = arith.constant 0 : i32
    %c0_i32_0 = arith.constant 0 : i32
    %c0_i32_1 = arith.constant 0 : i32
    return %c0_i32, %c0_i32_0 : i32, i32
  }
  func.func @transform_18(%arg0: i32) -> (i32, i32) {
    %c0_i32 = arith.constant 0 : i32
    %c0_i32_0 = arith.constant 0 : i32
    %c0_i32_1 = arith.constant 0 : i32
    return %c0_i32, %c0_i32_0 : i32, i32
  }
  func.func @transform_19(%arg0: i32) -> (i32, i32) {
    %c0_i32 = arith.constant 0 : i32
    %c0_i32_0 = arith.constant 0 : i32
    %c0_i32_1 = arith.constant 0 : i32
    return %c0_i32, %c0_i32_0 : i32, i32
  }
  func.func @transform_20(%arg0: i32) -> (i32, i32) {
    %c0_i32 = arith.constant 0 : i32
    %c0_i32_0 = arith.constant 0 : i32
    %c0_i32_1 = arith.constant 0 : i32
    return %c0_i32, %c0_i32_0 : i32, i32
  }
  func.func @transform_21(%arg0: i32) -> (i32, i32) {
    %c0_i32 = arith.constant 0 : i32
    %c0_i32_0 = arith.constant 0 : i32
    %c0_i32_1 = arith.constant 0 : i32
    return %c0_i32, %c0_i32_0 : i32, i32
  }
  func.func @transform_22(%arg0: i32) -> (i32, i32) {
    %c0_i32 = arith.constant 0 : i32
    %c0_i32_0 = arith.constant 0 : i32
    %c0_i32_1 = arith.constant 0 : i32
    return %c0_i32, %c0_i32_0 : i32, i32
  }
  func.func @transform_23(%arg0: i32) -> (i32, i32, i32, i32) {
    %c0_i32 = arith.constant 0 : i32
    %c0_i32_0 = arith.constant 0 : i32
    %c0_i32_1 = arith.constant 0 : i32
    %c0_i32_2 = arith.constant 0 : i32
    %c0_i32_3 = arith.constant 0 : i32
    return %c0_i32, %c0_i32_0, %c0_i32_1, %c0_i32_2 : i32, i32, i32, i32
  }
  func.func @transform_24(%arg0: i32) -> (i32, i32, i32, i32) {
    %c0_i32 = arith.constant 0 : i32
    %c0_i32_0 = arith.constant 0 : i32
    %c0_i32_1 = arith.constant 0 : i32
    %c0_i32_2 = arith.constant 0 : i32
    %c0_i32_3 = arith.constant 0 : i32
    return %c0_i32, %c0_i32_0, %c0_i32_1, %c0_i32_2 : i32, i32, i32, i32
  }
  func.func @transform_25(%arg0: i32) -> (i32, i32, i32, i32) {
    %c0_i32 = arith.constant 0 : i32
    %c0_i32_0 = arith.constant 0 : i32
    %c0_i32_1 = arith.constant 0 : i32
    %c0_i32_2 = arith.constant 0 : i32
    %c0_i32_3 = arith.constant 0 : i32
    return %c0_i32, %c0_i32_0, %c0_i32_1, %c0_i32_2 : i32, i32, i32, i32
  }
  func.func @transform_26(%arg0: i32) -> (i32, i32, i32, i32) {
    %c0_i32 = arith.constant 0 : i32
    %c0_i32_0 = arith.constant 0 : i32
    %c0_i32_1 = arith.constant 0 : i32
    %c0_i32_2 = arith.constant 0 : i32
    %c0_i32_3 = arith.constant 0 : i32
    return %c0_i32, %c0_i32_0, %c0_i32_1, %c0_i32_2 : i32, i32, i32, i32
  }
}

</mosaic_0001>

<llo_original>
// kernel: tpu_custom_call.1
$region0: #{tpu_custom_call.1}
  #allocation0 [shape = 'u32[]', space=smem, size = 0x4, offset = 0x4, fixed_abs, tag = 'smem constant byte address 0x4 - core index']
  #allocation1 [shape = 'u32[72,128]{1,0:T(1,128)}', space=vmem, size = 0x9000, scoped, tag = 'internal scratch']
  #allocation2 [shape = 'f32[16,128]{1,0:T(8,128)}', space=vmem, size = 0x2000, scoped, tag = 'scratch operand']
  #allocation3 [shape = 'f32[16,32]{1,0:T(8,128)}', space=vmem, size = 0x2000, scoped, tag = 'scratch operand']
  #allocation4 [shape = 'f32[1,1]{1,0:T(1,128)S(1)}', space=vmem, size = 0x200, scoped, tag = 'scoped memory for tpu_custom_call.1']
  #allocation5 [shape = 'f32[1,1]{1,0:T(1,128)S(1)}', space=vmem, size = 0x200, scoped, tag = 'scoped memory for tpu_custom_call.1']
  %s0 = inlined_call_operand.vmem [shape: f32[16,16], index: 0, kind: input, shape index: {}]
  %s1 = inlined_call_operand.vmem [shape: f32[16,32], index: 1, kind: input, shape index: {}]
  %s2 = inlined_call_operand.vmem [shape: f32[1,32], index: 2, kind: input, shape index: {}]
  %s3 = inlined_call_operand.vmem [shape: f32[1,32], index: 3, kind: input, shape index: {}]
  %s4 = inlined_call_operand.vmem [shape: f32[1,32], index: 4, kind: input, shape index: {}]
  %s5 = inlined_call_operand.hbm [shape: f32[2,2,32,128], index: 5, kind: input, shape index: {}]
  %s6 = inlined_call_operand.hbm [shape: f32[2,2,32,128], index: 6, kind: input, shape index: {}]
  %s7 = inlined_call_operand.vmem [shape: f32[2,2,1,128], index: 7, kind: input, shape index: {}]
  %s8 = inlined_call_operand.vmem [shape: f32[2,1,32], index: 8, kind: input, shape index: {}]
  %s9 = inlined_call_operand.vmem [shape: f32[2,1,32], index: 9, kind: input, shape index: {}]
  %s10 = inlined_call_operand.vmem [shape: f32[32,16], index: 10, kind: input, shape index: {}]
  %s11 = inlined_call_operand.vmem [shape: f32[1,16], index: 11, kind: input, shape index: {}]
  %s12 = inlined_call_operand.vmem [shape: f32[1,16], index: 12, kind: input, shape index: {}]
  %s13 = inlined_call_operand.vmem [shape: f32[1,16], index: 13, kind: input, shape index: {}]
  %s14 = inlined_call_operand.vmem [shape: f32[16,1], index: 14, kind: input, shape index: {}]
  %s15 = inlined_call_operand.<no memory space> [shape: f32[1,1], index: 15, kind: input, shape index: {}]
  %s16 = inlined_call_operand.vmem [shape: f32[32,32], index: 16, kind: input, shape index: {}]
  %s17 = inlined_call_operand.vmem [shape: f32[1,32], index: 17, kind: input, shape index: {}]
  %s18 = inlined_call_operand.vmem [shape: f32[1,32], index: 18, kind: input, shape index: {}]
  %s19 = inlined_call_operand.vmem [shape: f32[1,32], index: 19, kind: input, shape index: {}]
  %s20 = inlined_call_operand.vmem [shape: f32[32,1], index: 20, kind: input, shape index: {}]
  %s21 = inlined_call_operand.<no memory space> [shape: f32[1,1], index: 21, kind: input, shape index: {}]
  %s22 = inlined_call_operand.vmem [shape: f32[2,1], index: 22, kind: output, shape index: {0}]
  %s23 = inlined_call_operand.hbm [shape: f32[2,2,2,32], index: 23, kind: output, shape index: {1}]
  %s24 = inlined_call_operand.hbm [shape: f32[2,2,2,32], index: 24, kind: output, shape index: {2}]
  %s25 = inlined_call_operand.hbm [shape: f32[2,2,2,32], index: 25, kind: output, shape index: {3}]
  %s26 = inlined_call_operand.hbm [shape: f32[2,2,2,32], index: 26, kind: output, shape index: {4}]
  %27 = xla_tuple %s22, %s23, %s24, %s25, %s26
  %s28 = sld [smem:[#allocation0]]
  $region138: #{tpu_custom_call.1} parent=0
    _
  %s30 = ssub.s32 1, %s28
  %s31 = scalar_select 0, %s30, %s28
  %v32 = vstv %s15
  %33 = vst [vmem:[#allocation4] sm:$0x1] %v32
  %v34 = vstv %s21
  %35 = vst [vmem:[#allocation5] sm:$0x1] %v34
  $region1: #{tpu_custom_call.1} parent=0
    #allocation6 [shape = 'u8[65536]{0}', space=vmem, size = 0x10000, scoped, tag = 'input window, operand 5, single buffered']
    #allocation7 [shape = 's32[1]{0}', space=sflag, size = 0x4, scoped, tag = 'scoped memory for tpu_custom_call.1']
    #allocation8 [shape = 's32[1]{0}', space=sflag, size = 0x4, scoped, tag = 'scoped memory for tpu_custom_call.1']
    #allocation9 [shape = 'u8[65536]{0}', space=vmem, size = 0x10000, scoped, tag = 'input window, operand 6, single buffered']
    #allocation10 [shape = 's32[1]{0}', space=sflag, size = 0x4, scoped, tag = 'scoped memory for tpu_custom_call.1']
    #allocation11 [shape = 'u8[4096]{0}', space=vmem, size = 0x1000, scoped, tag = 'output window, operand 1, single buffered']
    #allocation12 [shape = 'u8[4096]{0}', space=vmem, size = 0x1000, scoped, tag = 'output window, operand 2, single buffered']
    #allocation13 [shape = 's32[1]{0}', space=sflag, size = 0x4, scoped, tag = 'scoped memory for tpu_custom_call.1']
    #allocation14 [shape = 'u8[4096]{0}', space=vmem, size = 0x1000, scoped, tag = 'output window, operand 3, single buffered']
    #allocation15 [shape = 'u8[4096]{0}', space=vmem, size = 0x1000, scoped, tag = 'output window, operand 4, single buffered']
    #allocation16 [shape = 's32[1]{0}', space=sflag, size = 0x4, scoped, tag = 'scoped memory for tpu_custom_call.1']
    %36 = vsyncpa [#allocation7], 0
    %37 = vsyncpa [#allocation10], 0
    %38 = vsyncpa [#allocation8], 0
    %39 = vsyncpa [#allocation13], 0
    %40 = vsyncpa [#allocation16], 0
    // Predicated region
    $region2: #{tpu_custom_call.1} parent=1 // pred_check
      _
    $region3: #{tpu_custom_call.1} parent=1 // pred_check_branch
      %42 = sbr.rel (0) target = $region5
    $region4: #{tpu_custom_call.1} parent=1 // pred_region
      _
    $region5: #{tpu_custom_call.1} parent=1 // pred_fallthru
      _
    // Predicated region
    $region6: #{tpu_custom_call.1} parent=1 // pred_check
      _
    $region7: #{tpu_custom_call.1} parent=1 // pred_check_branch
      %44 = sbr.rel (0) target = $region9
    $region8: #{tpu_custom_call.1} parent=1 // pred_region
      _
    $region9: #{tpu_custom_call.1} parent=1 // pred_fallthru
      _
    // Predicated region
    $region10: #{tpu_custom_call.1} parent=1 // pred_check
      _
    $region11: #{tpu_custom_call.1} parent=1 // pred_check_branch
      %46 = sbr.rel (0) target = $region13
    $region12: #{tpu_custom_call.1} parent=1 // pred_region
      _
    $region13: #{tpu_custom_call.1} parent=1 // pred_fallthru
      _
    // Predicated region
    $region14: #{tpu_custom_call.1} parent=1 // pred_check
      _
    $region15: #{tpu_custom_call.1} parent=1 // pred_check_branch
      %48 = sbr.rel (0) target = $region17
    $region16: #{tpu_custom_call.1} parent=1 // pred_region
      _
    $region17: #{tpu_custom_call.1} parent=1 // pred_fallthru
      _
    // Predicated region
    $region18: #{tpu_custom_call.1} parent=1 // pred_check
      _
    $region19: #{tpu_custom_call.1} parent=1 // pred_check_branch
      %50 = sbr.rel (0) target = $region21
    $region20: #{tpu_custom_call.1} parent=1 // pred_region
      _
    $region21: #{tpu_custom_call.1} parent=1 // pred_fallthru
      _
    // Predicated region
    $region22: #{tpu_custom_call.1} parent=1 // pred_check
      _
    $region23: #{tpu_custom_call.1} parent=1 // pred_check_branch
      %52 = sbr.rel (0) target = $region25
    $region24: #{tpu_custom_call.1} parent=1 // pred_region
      %54 = vsyncadd [#allocation7], 0
      %s55 = sshll.u32 %s5, 4
      %s56 = int_to_ptr.hbm [resolvable:$true] %s55
      %s57 = sshll.u32 [#allocation6], 4
      %s58 = int_to_ptr.vmem [resolvable:$true] %s57
      %63 = dma.hbm_to_vmem [thread:$0]  %s56, 2048, %s58, [#allocation7], 128, 128, 8
    $region25: #{tpu_custom_call.1} parent=1 // pred_fallthru
      _
    // Predicated region
    $region26: #{tpu_custom_call.1} parent=1 // pred_check
      _
    $region27: #{tpu_custom_call.1} parent=1 // pred_check_branch
      %65 = sbr.rel (0) target = $region29
    $region28: #{tpu_custom_call.1} parent=1 // pred_region
      %67 = vsyncadd [#allocation10], 0
      %s68 = sshll.u32 %s6, 4
      %s69 = int_to_ptr.hbm [resolvable:$true] %s68
      %s70 = sshll.u32 [#allocation9], 4
      %s71 = int_to_ptr.vmem [resolvable:$true] %s70
      %76 = dma.hbm_to_vmem [thread:$0]  %s69, 2048, %s71, [#allocation10], 128, 128, 8
    $region29: #{tpu_custom_call.1} parent=1 // pred_fallthru
      _
    // Predicated region
    $region30: #{tpu_custom_call.1} parent=1 // pred_check
      _
    $region31: #{tpu_custom_call.1} parent=1 // pred_check_branch
      %78 = sbr.rel (0) target = $region33
    $region32: #{tpu_custom_call.1} parent=1 // pred_region
      _
    $region33: #{tpu_custom_call.1} parent=1 // pred_fallthru
      _
    // Predicated region
    $region34: #{tpu_custom_call.1} parent=1 // pred_check
      _
    $region35: #{tpu_custom_call.1} parent=1 // pred_check_branch
      %80 = sbr.rel (0) target = $region37
    $region36: #{tpu_custom_call.1} parent=1 // pred_region
      _
    $region37: #{tpu_custom_call.1} parent=1 // pred_fallthru
      _
    // Predicated region
    $region38: #{tpu_custom_call.1} parent=1 // pred_check
      _
    $region39: #{tpu_custom_call.1} parent=1 // pred_check_branch
      %82 = sbr.rel (0) target = $region41
    $region40: #{tpu_custom_call.1} parent=1 // pred_region
      _
    $region41: #{tpu_custom_call.1} parent=1 // pred_fallthru
      _
    // Predicated region
    $region42: #{tpu_custom_call.1} parent=1 // pred_check
      _
    $region43: #{tpu_custom_call.1} parent=1 // pred_check_branch
      %84 = sbr.rel (0) target = $region45
    $region44: #{tpu_custom_call.1} parent=1 // pred_region
      _
    $region45: #{tpu_custom_call.1} parent=1 // pred_fallthru
      _
    // Predicated region
    $region46: #{tpu_custom_call.1} parent=1 // pred_check
      _
    $region47: #{tpu_custom_call.1} parent=1 // pred_check_branch
      %86 = sbr.rel (0) target = $region49
    $region48: #{tpu_custom_call.1} parent=1 // pred_region
      _
    $region49: #{tpu_custom_call.1} parent=1 // pred_fallthru
      _
    // Predicated region
    $region50: #{tpu_custom_call.1} parent=1 // pred_check
      _
    $region51: #{tpu_custom_call.1} parent=1 // pred_check_branch
      %88 = sbr.rel (0) target = $region53
    $region52: #{tpu_custom_call.1} parent=1 // pred_region
      _
    $region53: #{tpu_custom_call.1} parent=1 // pred_fallthru
      _
    // Predicated region
    $region54: #{tpu_custom_call.1} parent=1 // pred_check
      _
    $region55: #{tpu_custom_call.1} parent=1 // pred_check_branch
      %90 = sbr.rel (0) target = $region57
    $region56: #{tpu_custom_call.1} parent=1 // pred_region
      _
    $region57: #{tpu_custom_call.1} parent=1 // pred_fallthru
      _
    // Predicated region
    $region58: #{tpu_custom_call.1} parent=1 // pred_check
      _
    $region59: #{tpu_custom_call.1} parent=1 // pred_check_branch
      %92 = sbr.rel (0) target = $region61
    $region60: #{tpu_custom_call.1} parent=1 // pred_region
      _
    $region61: #{tpu_custom_call.1} parent=1 // pred_fallthru
      _
    // Predicated region
    $region62: #{tpu_custom_call.1} parent=1 // pred_check
      _
    $region63: #{tpu_custom_call.1} parent=1 // pred_check_branch
      %94 = sbr.rel (0) target = $region65
    $region64: #{tpu_custom_call.1} parent=1 // pred_region
      _
    $region65: #{tpu_custom_call.1} parent=1 // pred_fallthru
      _
    // Predicated region
    $region66: #{tpu_custom_call.1} parent=1 // pred_check
      _
    $region67: #{tpu_custom_call.1} parent=1 // pred_check_branch
      %96 = sbr.rel (0) target = $region69
    $region68: #{tpu_custom_call.1} parent=1 // pred_region
      _
    $region69: #{tpu_custom_call.1} parent=1 // pred_fallthru
      _
    // Predicated region
    $region70: #{tpu_custom_call.1} parent=1 // pred_check
      _
    $region71: #{tpu_custom_call.1} parent=1 // pred_check_branch
      %98 = sbr.rel (0) target = $region73
    $region72: #{tpu_custom_call.1} parent=1 // pred_region
      _
    $region73: #{tpu_custom_call.1} parent=1 // pred_fallthru
      _
    // Predicated region
    $region74: #{tpu_custom_call.1} parent=1 // pred_check
      _
    $region75: #{tpu_custom_call.1} parent=1 // pred_check_branch
      %100 = sbr.rel (0) target = $region77
    $region76: #{tpu_custom_call.1} parent=1 // pred_region
      _
    $region77: #{tpu_custom_call.1} parent=1 // pred_fallthru
      _
    // Predicated region
    $region78: #{tpu_custom_call.1} parent=1 // pred_check
      _
    $region79: #{tpu_custom_call.1} parent=1 // pred_check_branch
      %102 = sbr.rel (0) target = $region81
    $region80: #{tpu_custom_call.1} parent=1 // pred_region
      _
    $region81: #{tpu_custom_call.1} parent=1 // pred_fallthru
      _
    // Predicated region
    $region82: #{tpu_custom_call.1} parent=1 // pred_check
      _
    $region83: #{tpu_custom_call.1} parent=1 // pred_check_branch
      %104 = sbr.rel (0) target = $region85
    $region84: #{tpu_custom_call.1} parent=1 // pred_region
      _
    $region85: #{tpu_custom_call.1} parent=1 // pred_fallthru
      _
    // Predicated region
    $region86: #{tpu_custom_call.1} parent=1 // pred_check
      _
    $region87: #{tpu_custom_call.1} parent=1 // pred_check_branch
      %106 = sbr.rel (0) target = $region89
    $region88: #{tpu_custom_call.1} parent=1 // pred_region
      _
    $region89: #{tpu_custom_call.1} parent=1 // pred_fallthru
      _
    // Predicated region
    $region90: #{tpu_custom_call.1} parent=1 // pred_check
      _
    $region91: #{tpu_custom_call.1} parent=1 // pred_check_branch
      %108 = sbr.rel (0) target = $region93
    $region92: #{tpu_custom_call.1} parent=1 // pred_region
      %110 = dma.done [#allocation7], 2048
    $region93: #{tpu_custom_call.1} parent=1 // pred_fallthru
      _
    // Predicated region
    $region94: #{tpu_custom_call.1} parent=1 // pred_check
      _
    $region95: #{tpu_custom_call.1} parent=1 // pred_check_branch
      %112 = sbr.rel (0) target = $region97
    $region96: #{tpu_custom_call.1} parent=1 // pred_region
      %114 = dma.done [#allocation10], 2048
    $region97: #{tpu_custom_call.1} parent=1 // pred_fallthru
      _
    %v115 = vlaneseq
    %v116 = vshrl.u32 %v115, 7
    %v117 = vadd.s32 %v116, 8
    %v118 = vcvt.s32.f32 %v116
    %v119 = vcvt.s32.f32 %v117
    %v120 = vmul.f32 %v118, 0.5
    %v121 = vmul.f32 %v119, 0.5
    %v122 = vfloor.f32 %v120
    %v123 = vfloor.f32 %v121
    %v124 = vsub.f32 %v122, 7.0
    %v125 = vsub.f32 %v123, 7.0
    %v126 = vmul.f32 %v124, 0.1
    %v127 = vmul.f32 %v125, 0.1
    %v128 = vmul.f32 %v126, 1.442695
    %v129 = vpow.pop %v128
    %v130 = vmul.f32 %v127, 1.442695
    %v131 = vpow.pop %v130
    %v132 = vld [vmem:[%s0] sm:$0xff]
    %v133 = vld [vmem:[%s0 + $0x8] sm:$0xff]
    %v134 = vmul.f32 %v132, %v129
    %v135 = vmul.f32 %v133, %v131
    %v136 = vld [vmem:[%s1] sm:$0xff]
    %v137 = vld [vmem:[%s1 + $0x8] sm:$0xff]
    %v138 = vld [vmem:[%s2] sm:$0x1]
    %v140 = vperm.slane %v138, 0
    %vm142 = vcmask 130048
    %v144 = vsel %vm142, %v134, 0
    %v147 = vsel %vm142, %v135, 0
    %149 = vmatpush.msra.mxu0 0.0
    %150 = vmatpush.msra.mxu0 0.0
    %151 = vmatpush.msra.mxu0 0.0
    %152 = vmatpush.msra.mxu0 0.0
    %153 = vmatpush.msra.mxu0 0.0
    %154 = vmatpush.msra.mxu0 0.0
    %155 = vmatpush.msra.mxu0 0.0
    %156 = vmatpush.msra.mxu0 0.0
    %157 = vmatpush.msra.mxu0 0.0
    %158 = vmatpush.msra.mxu0 0.0
    %159 = vmatpush.msra.mxu0 0.0
    %160 = vmatpush.msra.mxu0 0.0
    %161 = vmatpush.msra.mxu0 0.0
    %162 = vmatpush.msra.mxu0 0.0
    %163 = vmatpush.msra.mxu0 %v137
    %164 = vmatpush.msra.mxu0 %v136
    %165 = vmatmul.f32.gmra.mxu0 %v144
    %v166 = vpop.f32.mrf.mxu0
    %v167 = vadd.f32 %v140, %v166
    %168 = vmatmul.f32.gmra.mxu0 %v147
    %v169 = vpop.f32.mrf.mxu0
    %v170 = vadd.f32 %v140, %v169
    %171 = vdwg.mxu0
    %v172 = vld [vmem:[%s3] sm:$0x1]
    %v173 = vld [vmem:[%s4] sm:$0x1]
    %vm174 = vcmask 261120
    %v175 = vsel %vm174, %v167, 0.0
    %176 = vadd.xlane.f32.xlu0 %v175
    %v177 = vpop.xlane.xlu0 %176
    %v178 = vsel %vm174, %v170, 0.0
    %179 = vadd.xlane.f32.xlu0 %v178
    %v180 = vpop.xlane.xlu0 %179
    %v181 = vrcp.pop 32.0
    %v182 = vmul.f32 32.0, %v181
    %v183 = vsub.f32 1.0, %v182
    %v184 = vmul.f32 %v181, %v183
    %v185 = vadd.f32 %v181, %v184
    %vm186 = vweird.f32 %v181
    %v187 = vsel %vm186, %v181, %v185
    %v188 = vmul.f32 %v177, %v187
    %v189 = vmul.f32 %v180, %v187
    %v190 = vsub.f32 %v167, %v188
    %v191 = vsub.f32 %v170, %v189
    %v192 = vmul.f32 %v190, %v190
    %v193 = vmul.f32 %v191, %v191
    %v194 = vsel %vm174, %v192, 0.0
    %195 = vadd.xlane.f32.xlu0 %v194
    %v196 = vpop.xlane.xlu0 %195
    %v197 = vsel %vm174, %v193, 0.0
    %198 = vadd.xlane.f32.xlu0 %v197
    %v199 = vpop.xlane.xlu0 %198
    %v200 = vmul.f32 %v196, %v187
    %v201 = vmul.f32 %v199, %v187
    %v202 = vadd.f32 %v200, 1e-05
    %v203 = vadd.f32 %v201, 1e-05
    %v204 = vrsqrt.pop %v202
    %v205 = vmul.f32 %v204, %v202
    %v206 = vmul.f32 %v205, %v204
    %v207 = vmul.f32 0.5, %v206
    %v208 = vsub.f32 1.5, %v207
    %v209 = vmul.f32 %v204, %v208
    %vm210 = vweird.f32 %v202
    %vm211 = vweird.f32 %v204
    %vm212 = vmor %vm210, %vm211
    %v213 = vsel %vm212, %v204, %v209
    %v214 = vrsqrt.pop %v203
    %v215 = vmul.f32 %v214, %v203
    %v216 = vmul.f32 %v215, %v214
    %v217 = vmul.f32 0.5, %v216
    %v218 = vsub.f32 1.5, %v217
    %v219 = vmul.f32 %v214, %v218
    %vm220 = vweird.f32 %v203
    %vm221 = vweird.f32 %v214
    %vm222 = vmor %vm220, %vm221
    %v223 = vsel %vm222, %v214, %v219
    %v224 = vmul.f32 %v190, %v213
    %v225 = vmul.f32 %v191, %v223
    %v227 = vperm.slane %v172, 0
    %v229 = vmul.f32 %v224, %v227
    %v230 = vmul.f32 %v225, %v227
    %v232 = vperm.slane %v173, 0
    %v234 = vadd.f32 %v229, %v232
    %v235 = vadd.f32 %v230, %v232
    %v236 = vmul.f32 %v234, 0.5
    %v237 = vmul.f32 %v235, 0.5
    %v238 = vmul.f32 %v234, 0.044715
    %v239 = vmul.f32 %v235, 0.044715
    %v240 = vmul.f32 %v238, %v234
    %v241 = vmul.f32 %v239, %v235
    %v242 = vmul.f32 %v240, %v234
    %v243 = vmul.f32 %v241, %v235
    %v244 = vadd.f32 %v234, %v242
    %v245 = vadd.f32 %v235, %v243
    %v246 = vmul.f32 %v244, 0.7978846
    %v247 = vmul.f32 %v245, 0.7978846
    %v248 = vtanh.pop %v246
    %v249 = vtanh.pop %v247
    %v250 = vadd.f32 %v248, 1.0
    %v251 = vadd.f32 %v249, 1.0
    %v252 = vmul.f32 %v236, %v250
    %v253 = vmul.f32 %v237, %v251
    %v254 = vld [vmem:[#allocation6] sm:$0xff]
    %v255 = vld [vmem:[#allocation6 + $0x8] sm:$0xff]
    %v256 = vld [vmem:[#allocation6 + $0x10] sm:$0xff]
    %v257 = vld [vmem:[#allocation6 + $0x18] sm:$0xff]
    %v258 = vld [vmem:[%s7] sm:$0x1]
    %v260 = vperm.slane %v258, 0
    %v263 = vsel %vm174, %v252, 0
    %v266 = vsel %vm174, %v253, 0
    %268 = vmatpush.msra.mxu0 0.0
    %269 = vmatpush.msra.mxu0 0.0
    %270 = vmatpush.msra.mxu0 0.0
    %271 = vmatpush.msra.mxu0 0.0
    %272 = vmatpush.msra.mxu0 0.0
    %273 = vmatpush.msra.mxu0 0.0
    %274 = vmatpush.msra.mxu0 0.0
    %275 = vmatpush.msra.mxu0 0.0
    %276 = vmatpush.msra.mxu0 0.0
    %277 = vmatpush.msra.mxu0 0.0
    %278 = vmatpush.msra.mxu0 0.0
    %279 = vmatpush.msra.mxu0 0.0
    %280 = vmatpush.msra.mxu0 %v257
    %281 = vmatpush.msra.mxu0 %v256
    %282 = vmatpush.msra.mxu0 %v255
    %283 = vmatpush.msra.mxu0 %v254
    %284 = vmatmul.f32.gmra.mxu0 %v263
    %v285 = vpop.f32.mrf.mxu0
    %v286 = vadd.f32 %v260, %v285
    %287 = vmatmul.f32.gmra.mxu0 %v266
    %v288 = vpop.f32.mrf.mxu0
    %v289 = vadd.f32 %v260, %v288
    %290 = vdwg.mxu0
    %291 = vst [vmem:[#allocation2] sm:$0xff] %v286
    %292 = vst [vmem:[#allocation2 + $0x8] sm:$0xff] %v289
    %v293 = vld [vmem:[#allocation9] sm:$0xff]
    %v294 = vld [vmem:[#allocation9 + $0x8] sm:$0xff]
    %v295 = vld [vmem:[#allocation9 + $0x10] sm:$0xff]
    %v296 = vld [vmem:[#allocation9 + $0x18] sm:$0xff]
    %v298 = vsel %vm174, 0.0, 0
    %300 = vmatpush.msra.mxu0 0.0
    %301 = vmatpush.msra.mxu0 0.0
    %302 = vmatpush.msra.mxu0 0.0
    %303 = vmatpush.msra.mxu0 0.0
    %304 = vmatpush.msra.mxu0 0.0
    %305 = vmatpush.msra.mxu0 0.0
    %306 = vmatpush.msra.mxu0 0.0
    %307 = vmatpush.msra.mxu0 0.0
    %308 = vmatpush.msra.mxu0 0.0
    %309 = vmatpush.msra.mxu0 0.0
    %310 = vmatpush.msra.mxu0 0.0
    %311 = vmatpush.msra.mxu0 0.0
    %312 = vmatpush.msra.mxu0 %v296
    %313 = vmatpush.msra.mxu0 %v295
    %314 = vmatpush.msra.mxu0 %v294
    %315 = vmatpush.msra.mxu0 %v293
    %316 = vmatmul.f32.gmra.mxu0 %v298
    %v317 = vpop.f32.mrf.mxu0
    %v318 = vadd.f32 0.0, %v317
    %319 = vdwg.mxu0
    %v320 = vld [vmem:[#allocation2] sm:$0x3]
    %v321 = vadd.f32 %v320, %v318
    %v322 = vtanh.pop %v321
    %v323 = vxor.u32 %v321, 2147483648
    %v324 = vmul.f32 %v323, 1.442695
    %v325 = vpow.pop %v324
    %v326 = vadd.f32 %v325, 1.0
    %v327 = vrcp.pop %v326
    %v328 = vmul.f32 %v326, %v327
    %v329 = vsub.f32 1.0, %v328
    %v330 = vmul.f32 %v327, %v329
    %v331 = vadd.f32 %v327, %v330
    %vm332 = vweird.f32 %v326
    %vm333 = vweird.f32 %v327
    %vm334 = vmor %vm332, %vm333
    %v335 = vsel %vm334, %v327, %v331
    %v336 = vand.u32 2147483647, %v326
    %vm337 = vcmp.eq.f32.partialorder %v336, 8.507059e+37
    %v338 = vand.u32 %v326, 2147483648
    %v339 = vor.u32 1.1754944e-38, %v338
    %v340 = vsel %vm337, %v339, %v335
    %v341 = vmul.f32 1.0, %v340
    %v342 = vadd.f32 %v321, 0.0
    %344 = vrot.lane.b32.xlu0 %v321, 32
    %v345 = vpop.permute.xlu0 %344
    %v347 = vmax.f32 %v342, %v345
    %349 = vrot.lane.b32.xlu0 %v347, 96
    %v350 = vpop.permute.xlu0 %349
    %v352 = vsub.f32 %v321, %v350
    %v353 = vmul.f32 %v352, 1.442695
    %v354 = vpow.pop %v353
    %v355 = vsub.f32 %v342, %v347
    %v356 = vmul.f32 %v355, 1.442695
    %v357 = vpow.pop %v356
    %v358 = vmul.f32 %v357, 0.0
    %360 = vrot.lane.b32.xlu0 %v322, 64
    %v361 = vpop.permute.xlu0 %360
    %v363 = vmul.f32 %v354, %v361
    %365 = vrot.lane.b32.xlu0 %v363, 32
    %v366 = vpop.permute.xlu0 %365
    %v368 = vadd.f32 %v358, %v366
    %370 = vrot.lane.b32.xlu0 %v354, 32
    %v371 = vpop.permute.xlu0 %370
    %v373 = vadd.f32 %v358, %v371
    %375 = vrot.lane.b32.xlu0 %v368, 64
    %v376 = vpop.permute.xlu0 %375
    %v378 = vmul.f32 %v341, %v376
    %v379 = vand.u32 2147483647, %v373
    %v380 = vmax.f32 %v379, 1.0
    %v381 = vrcp.pop %v380
    %383 = vrot.lane.b32.xlu0 %v381, 64
    %v384 = vpop.permute.xlu0 %383
    %v386 = vmul.f32 %v378, %v384
    %s387 = scalar_lea.vmem [#allocation9], 32
    %v388 = vld [vmem:[%s387] sm:$0xff]
    %v389 = vld [vmem:[%s387 + $0x8] sm:$0xff]
    %v390 = vld [vmem:[%s387 + $0x10] sm:$0xff]
    %v391 = vld [vmem:[%s387 + $0x18] sm:$0xff]
    %392 = vmatpush.msra.mxu0 0.0
    %393 = vmatpush.msra.mxu0 0.0
    %394 = vmatpush.msra.mxu0 0.0
    %395 = vmatpush.msra.mxu0 0.0
    %396 = vmatpush.msra.mxu0 0.0
    %397 = vmatpush.msra.mxu0 0.0
    %398 = vmatpush.msra.mxu0 0.0
    %399 = vmatpush.msra.mxu0 0.0
    %400 = vmatpush.msra.mxu0 0.0
    %401 = vmatpush.msra.mxu0 0.0
    %402 = vmatpush.msra.mxu0 0.0
    %403 = vmatpush.msra.mxu0 0.0
    %404 = vmatpush.msra.mxu0 %v391
    %405 = vmatpush.msra.mxu0 %v390
    %406 = vmatpush.msra.mxu0 %v389
    %407 = vmatpush.msra.mxu0 %v388
    %408 = vmatmul.f32.gmra.mxu0 %v298
    %v409 = vpop.f32.mrf.mxu0
    %v410 = vadd.f32 0.0, %v409
    %411 = vdwg.mxu0
    %s412 = scalar_lea.vmem [#allocation6], 32
    %v413 = vld [vmem:[%s412] sm:$0xff]
    %v414 = vld [vmem:[%s412 + $0x8] sm:$0xff]
    %v415 = vld [vmem:[%s412 + $0x10] sm:$0xff]
    %v416 = vld [vmem:[%s412 + $0x18] sm:$0xff]
    %418 = vrot.lane.b32.xlu0 %v386, 32
    %v419 = vpop.permute.xlu0 %418
    %v420 = vsel %vm174, %v419, 0
    %422 = vmatpush.msra.mxu0 0.0
    %423 = vmatpush.msra.mxu0 0.0
    %424 = vmatpush.msra.mxu0 0.0
    %425 = vmatpush.msra.mxu0 0.0
    %426 = vmatpush.msra.mxu0 0.0
    %427 = vmatpush.msra.mxu0 0.0
    %428 = vmatpush.msra.mxu0 0.0
    %429 = vmatpush.msra.mxu0 0.0
    %430 = vmatpush.msra.mxu0 0.0
    %431 = vmatpush.msra.mxu0 0.0
    %432 = vmatpush.msra.mxu0 0.0
    %433 = vmatpush.msra.mxu0 0.0
    %434 = vmatpush.msra.mxu0 %v416
    %435 = vmatpush.msra.mxu0 %v415
    %436 = vmatpush.msra.mxu0 %v414
    %437 = vmatpush.msra.mxu0 %v413
    %438 = vmatmul.f32.gmra.mxu0 %v420
    %v439 = vpop.f32.mrf.mxu0
    %v440 = vadd.f32 %v410, %v439
    %441 = vdwg.mxu0
    %s442 = scalar_lea.vmem %s7, 1
    %v443 = vld [vmem:[%s442] sm:$0x1]
    %v445 = vperm.slane %v443, 0
    %v447 = vadd.f32 %v440, %v445
    %v448 = vtanh.pop %v447
    %v449 = vxor.u32 %v447, 2147483648
    %v450 = vmul.f32 %v449, 1.442695
    %v451 = vpow.pop %v450
    %v452 = vadd.f32 %v451, 1.0
    %v453 = vrcp.pop %v452
    %v454 = vmul.f32 %v452, %v453
    %v455 = vsub.f32 1.0, %v454
    %v456 = vmul.f32 %v453, %v455
    %v457 = vadd.f32 %v453, %v456
    %vm458 = vweird.f32 %v452
    %vm459 = vweird.f32 %v453
    %vm460 = vmor %vm458, %vm459
    %v461 = vsel %vm460, %v453, %v457
    %v462 = vand.u32 2147483647, %v452
    %vm463 = vcmp.eq.f32.partialorder %v462, 8.507059e+37
    %v464 = vand.u32 %v452, 2147483648
    %v465 = vor.u32 1.1754944e-38, %v464
    %v466 = vsel %vm463, %v465, %v461
    %v467 = vmul.f32 1.0, %v466
    %v468 = vadd.f32 %v447, 0.0
    %470 = vrot.lane.b32.xlu0 %v447, 32
    %v471 = vpop.permute.xlu0 %470
    %v473 = vmax.f32 %v468, %v471
    %475 = vrot.lane.b32.xlu0 %v473, 96
    %v476 = vpop.permute.xlu0 %475
    %v478 = vsub.f32 %v447, %v476
    %v479 = vmul.f32 %v478, 1.442695
    %v480 = vpow.pop %v479
    %v481 = vsub.f32 %v468, %v473
    %v482 = vmul.f32 %v481, 1.442695
    %v483 = vpow.pop %v482
    %v484 = vmul.f32 %v483, 0.0
    %486 = vrot.lane.b32.xlu0 %v448, 64
    %v487 = vpop.permute.xlu0 %486
    %v489 = vmul.f32 %v480, %v487
    %491 = vrot.lane.b32.xlu0 %v489, 32
    %v492 = vpop.permute.xlu0 %491
    %v494 = vadd.f32 %v484, %v492
    %496 = vrot.lane.b32.xlu0 %v480, 32
    %v497 = vpop.permute.xlu0 %496
    %v499 = vadd.f32 %v484, %v497
    %501 = vrot.lane.b32.xlu0 %v494, 64
    %v502 = vpop.permute.xlu0 %501
    %v504 = vmul.f32 %v467, %v502
    %v505 = vand.u32 2147483647, %v499
    %v506 = vmax.f32 %v505, 1.0
    %v507 = vrcp.pop %v506
    %509 = vrot.lane.b32.xlu0 %v507, 64
    %v510 = vpop.permute.xlu0 %509
    %v512 = vmul.f32 %v504, %v510
    %514 = vrot.lane.b32.xlu0 %v512, 32
    %v515 = vpop.permute.xlu0 %514
    %vm517 = vcmask 254976
    %518 = vst.msk [vmem:[#allocation3] sm:$0x3] %vm517, %v515
    %v519 = vld [vmem:[#allocation9] sm:$0xff]
    %v520 = vld [vmem:[#allocation9 + $0x8] sm:$0xff]
    %v521 = vld [vmem:[#allocation9 + $0x10] sm:$0xff]
    %v522 = vld [vmem:[#allocation9 + $0x18] sm:$0xff]
    %523 = vmatpush.msra.mxu0 0.0
    %524 = vmatpush.msra.mxu0 0.0
    %525 = vmatpush.msra.mxu0 0.0
    %526 = vmatpush.msra.mxu0 0.0
    %527 = vmatpush.msra.mxu0 0.0
    %528 = vmatpush.msra.mxu0 0.0
    %529 = vmatpush.msra.mxu0 0.0
    %530 = vmatpush.msra.mxu0 0.0
    %531 = vmatpush.msra.mxu0 0.0
    %532 = vmatpush.msra.mxu0 0.0
    %533 = vmatpush.msra.mxu0 0.0
    %534 = vmatpush.msra.mxu0 0.0
    %535 = vmatpush.msra.mxu0 %v522
    %536 = vmatpush.msra.mxu0 %v521
    %537 = vmatpush.msra.mxu0 %v520
    %538 = vmatpush.msra.mxu0 %v519
    %539 = vmatmul.f32.gmra.mxu0 %v420
    %v540 = vpop.f32.mrf.mxu0
    %v541 = vadd.f32 0.0, %v540
    %542 = vdwg.mxu0
    %v543 = vld [vmem:[#allocation2 + $0x2] sm:$0x3]
    %v544 = vadd.f32 %v543, %v541
    %v545 = vtanh.pop %v544
    %v546 = vxor.u32 %v544, 2147483648
    %v547 = vmul.f32 %v546, 1.442695
    %v548 = vpow.pop %v547
    %v549 = vadd.f32 %v548, 1.0
    %v550 = vrcp.pop %v549
    %v551 = vmul.f32 %v549, %v550
    %v552 = vsub.f32 1.0, %v551
    %v553 = vmul.f32 %v550, %v552
    %v554 = vadd.f32 %v550, %v553
    %vm555 = vweird.f32 %v549
    %vm556 = vweird.f32 %v550
    %vm557 = vmor %vm555, %vm556
    %v558 = vsel %vm557, %v550, %v554
    %v559 = vand.u32 2147483647, %v549
    %vm560 = vcmp.eq.f32.partialorder %v559, 8.507059e+37
    %v561 = vand.u32 %v549, 2147483648
    %v562 = vor.u32 1.1754944e-38, %v561
    %v563 = vsel %vm560, %v562, %v558
    %v564 = vmul.f32 1.0, %v563
    %v565 = vadd.f32 %v544, %v347
    %567 = vrot.lane.b32.xlu0 %v544, 32
    %v568 = vpop.permute.xlu0 %567
    %v570 = vmax.f32 %v565, %v568
    %572 = vrot.lane.b32.xlu0 %v570, 96
    %v573 = vpop.permute.xlu0 %572
    %v575 = vsub.f32 %v544, %v573
    %v576 = vmul.f32 %v575, 1.442695
    %v577 = vpow.pop %v576
    %v578 = vsub.f32 %v565, %v570
    %v579 = vmul.f32 %v578, 1.442695
    %v580 = vpow.pop %v579
    %v581 = vmul.f32 %v580, %v368
    %583 = vrot.lane.b32.xlu0 %v545, 64
    %v584 = vpop.permute.xlu0 %583
    %v586 = vmul.f32 %v577, %v584
    %588 = vrot.lane.b32.xlu0 %v586, 32
    %v589 = vpop.permute.xlu0 %588
    %v591 = vadd.f32 %v581, %v589
    %v592 = vmul.f32 %v580, %v373
    %594 = vrot.lane.b32.xlu0 %v577, 32
    %v595 = vpop.permute.xlu0 %594
    %v597 = vadd.f32 %v592, %v595
    %599 = vrot.lane.b32.xlu0 %v591, 64
    %v600 = vpop.permute.xlu0 %599
    %v602 = vmul.f32 %v564, %v600
    %v603 = vand.u32 2147483647, %v597
    %v604 = vmax.f32 %v603, 1.0
    %v605 = vrcp.pop %v604
    %607 = vrot.lane.b32.xlu0 %v605, 64
    %v608 = vpop.permute.xlu0 %607
    %v610 = vmul.f32 %v602, %v608
    %v611 = vld [vmem:[%s387] sm:$0xff]
    %v612 = vld [vmem:[%s387 + $0x8] sm:$0xff]
    %v613 = vld [vmem:[%s387 + $0x10] sm:$0xff]
    %v614 = vld [vmem:[%s387 + $0x18] sm:$0xff]
    %v615 = vsel %vm174, %v515, 0
    %617 = vmatpush.msra.mxu0 0.0
    %618 = vmatpush.msra.mxu0 0.0
    %619 = vmatpush.msra.mxu0 0.0
    %620 = vmatpush.msra.mxu0 0.0
    %621 = vmatpush.msra.mxu0 0.0
    %622 = vmatpush.msra.mxu0 0.0
    %623 = vmatpush.msra.mxu0 0.0
    %624 = vmatpush.msra.mxu0 0.0
    %625 = vmatpush.msra.mxu0 0.0
    %626 = vmatpush.msra.mxu0 0.0
    %627 = vmatpush.msra.mxu0 0.0
    %628 = vmatpush.msra.mxu0 0.0
    %629 = vmatpush.msra.mxu0 %v614
    %630 = vmatpush.msra.mxu0 %v613
    %631 = vmatpush.msra.mxu0 %v612
    %632 = vmatpush.msra.mxu0 %v611
    %633 = vmatmul.f32.gmra.mxu0 %v615
    %v634 = vpop.f32.mrf.mxu0
    %v635 = vadd.f32 0.0, %v634
    %636 = vdwg.mxu0
    %v637 = vld [vmem:[%s412] sm:$0xff]
    %v638 = vld [vmem:[%s412 + $0x8] sm:$0xff]
    %v639 = vld [vmem:[%s412 + $0x10] sm:$0xff]
    %v640 = vld [vmem:[%s412 + $0x18] sm:$0xff]
    %642 = vrot.lane.b32.xlu0 %v610, 32
    %v643 = vpop.permute.xlu0 %642
    %v644 = vsel %vm174, %v643, 0
    %646 = vmatpush.msra.mxu0 0.0
    %647 = vmatpush.msra.mxu0 0.0
    %648 = vmatpush.msra.mxu0 0.0
    %649 = vmatpush.msra.mxu0 0.0
    %650 = vmatpush.msra.mxu0 0.0
    %651 = vmatpush.msra.mxu0 0.0
    %652 = vmatpush.msra.mxu0 0.0
    %653 = vmatpush.msra.mxu0 0.0
    %654 = vmatpush.msra.mxu0 0.0
    %655 = vmatpush.msra.mxu0 0.0
    %656 = vmatpush.msra.mxu0 0.0
    %657 = vmatpush.msra.mxu0 0.0
    %658 = vmatpush.msra.mxu0 %v640
    %659 = vmatpush.msra.mxu0 %v639
    %660 = vmatpush.msra.mxu0 %v638
    %661 = vmatpush.msra.mxu0 %v637
    %662 = vmatmul.f32.gmra.mxu0 %v644
    %v663 = vpop.f32.mrf.mxu0
    %v664 = vadd.f32 %v635, %v663
    %665 = vdwg.mxu0
    %v666 = vld [vmem:[%s442] sm:$0x1]
    %v668 = vperm.slane %v666, 0
    %v670 = vadd.f32 %v664, %v668
    %v671 = vtanh.pop %v670
    %v672 = vxor.u32 %v670, 2147483648
    %v673 = vmul.f32 %v672, 1.442695
    %v674 = vpow.pop %v673
    %v675 = vadd.f32 %v674, 1.0
    %v676 = vrcp.pop %v675
    %v677 = vmul.f32 %v675, %v676
    %v678 = vsub.f32 1.0, %v677
    %v679 = vmul.f32 %v676, %v678
    %v680 = vadd.f32 %v676, %v679
    %vm681 = vweird.f32 %v675
    %vm682 = vweird.f32 %v676
    %vm683 = vmor %vm681, %vm682
    %v684 = vsel %vm683, %v676, %v680
    %v685 = vand.u32 2147483647, %v675
    %vm686 = vcmp.eq.f32.partialorder %v685, 8.507059e+37
    %v687 = vand.u32 %v675, 2147483648
    %v688 = vor.u32 1.1754944e-38, %v687
    %v689 = vsel %vm686, %v688, %v684
    %v690 = vmul.f32 1.0, %v689
    %v691 = vadd.f32 %v670, %v473
    %693 = vrot.lane.b32.xlu0 %v670, 32
    %v694 = vpop.permute.xlu0 %693
    %v696 = vmax.f32 %v691, %v694
    %698 = vrot.lane.b32.xlu0 %v696, 96
    %v699 = vpop.permute.xlu0 %698
    %v701 = vsub.f32 %v670, %v699
    %v702 = vmul.f32 %v701, 1.442695
    %v703 = vpow.pop %v702
    %v704 = vsub.f32 %v691, %v696
    %v705 = vmul.f32 %v704, 1.442695
    %v706 = vpow.pop %v705
    %v707 = vmul.f32 %v706, %v494
    %709 = vrot.lane.b32.xlu0 %v671, 64
    %v710 = vpop.permute.xlu0 %709
    %v712 = vmul.f32 %v703, %v710
    %714 = vrot.lane.b32.xlu0 %v712, 32
    %v715 = vpop.permute.xlu0 %714
    %v717 = vadd.f32 %v707, %v715
    %v718 = vmul.f32 %v706, %v499
    %720 = vrot.lane.b32.xlu0 %v703, 32
    %v721 = vpop.permute.xlu0 %720
    %v723 = vadd.f32 %v718, %v721
    %725 = vrot.lane.b32.xlu0 %v717, 64
    %v726 = vpop.permute.xlu0 %725
    %v728 = vmul.f32 %v690, %v726
    %v729 = vand.u32 2147483647, %v723
    %v730 = vmax.f32 %v729, 1.0
    %v731 = vrcp.pop %v730
    %733 = vrot.lane.b32.xlu0 %v731, 64
    %v734 = vpop.permute.xlu0 %733
    %v736 = vmul.f32 %v728, %v734
    %738 = vrot.lane.b32.xlu0 %v736, 32
    %v739 = vpop.permute.xlu0 %738
    %741 = vst.msk [vmem:[#allocation3 + $0x2] sm:$0x3] %vm517, %v739
    %v742 = vld [vmem:[#allocation9] sm:$0xff]
    %v743 = vld [vmem:[#allocation9 + $0x8] sm:$0xff]
    %v744 = vld [vmem:[#allocation9 + $0x10] sm:$0xff]
    %v745 = vld [vmem:[#allocation9 + $0x18] sm:$0xff]
    %746 = vmatpush.msra.mxu0 0.0
    %747 = vmatpush.msra.mxu0 0.0
    %748 = vmatpush.msra.mxu0 0.0
    %749 = vmatpush.msra.mxu0 0.0
    %750 = vmatpush.msra.mxu0 0.0
    %751 = vmatpush.msra.mxu0 0.0
    %752 = vmatpush.msra.mxu0 0.0
    %753 = vmatpush.msra.mxu0 0.0
    %754 = vmatpush.msra.mxu0 0.0
    %755 = vmatpush.msra.mxu0 0.0
    %756 = vmatpush.msra.mxu0 0.0
    %757 = vmatpush.msra.mxu0 0.0
    %758 = vmatpush.msra.mxu0 %v745
    %759 = vmatpush.msra.mxu0 %v744
    %760 = vmatpush.msra.mxu0 %v743
    %761 = vmatpush.msra.mxu0 %v742
    %762 = vmatmul.f32.gmra.mxu0 %v644
    %v763 = vpop.f32.mrf.mxu0
    %v764 = vadd.f32 0.0, %v763
    %765 = vdwg.mxu0
    %v766 = vld [vmem:[#allocation2 + $0x4] sm:$0x3]
    %v767 = vadd.f32 %v766, %v764
    %v768 = vtanh.pop %v767
    %v769 = vxor.u32 %v767, 2147483648
    %v770 = vmul.f32 %v769, 1.442695
    %v771 = vpow.pop %v770
    %v772 = vadd.f32 %v771, 1.0
    %v773 = vrcp.pop %v772
    %v774 = vmul.f32 %v772, %v773
    %v775 = vsub.f32 1.0, %v774
    %v776 = vmul.f32 %v773, %v775
    %v777 = vadd.f32 %v773, %v776
    %vm778 = vweird.f32 %v772
    %vm779 = vweird.f32 %v773
    %vm780 = vmor %vm778, %vm779
    %v781 = vsel %vm780, %v773, %v777
    %v782 = vand.u32 2147483647, %v772
    %vm783 = vcmp.eq.f32.partialorder %v782, 8.507059e+37
    %v784 = vand.u32 %v772, 2147483648
    %v785 = vor.u32 1.1754944e-38, %v784
    %v786 = vsel %vm783, %v785, %v781
    %v787 = vmul.f32 1.0, %v786
    %v788 = vadd.f32 %v767, %v570
    %790 = vrot.lane.b32.xlu0 %v767, 32
    %v791 = vpop.permute.xlu0 %790
    %v793 = vmax.f32 %v788, %v791
    %795 = vrot.lane.b32.xlu0 %v793, 96
    %v796 = vpop.permute.xlu0 %795
    %v798 = vsub.f32 %v767, %v796
    %v799 = vmul.f32 %v798, 1.442695
    %v800 = vpow.pop %v799
    %v801 = vsub.f32 %v788, %v793
    %v802 = vmul.f32 %v801, 1.442695
    %v803 = vpow.pop %v802
    %v804 = vmul.f32 %v803, %v591
    %806 = vrot.lane.b32.xlu0 %v768, 64
    %v807 = vpop.permute.xlu0 %806
    %v809 = vmul.f32 %v800, %v807
    %811 = vrot.lane.b32.xlu0 %v809, 32
    %v812 = vpop.permute.xlu0 %811
    %v814 = vadd.f32 %v804, %v812
    %v815 = vmul.f32 %v803, %v597
    %817 = vrot.lane.b32.xlu0 %v800, 32
    %v818 = vpop.permute.xlu0 %817
    %v820 = vadd.f32 %v815, %v818
    %822 = vrot.lane.b32.xlu0 %v814, 64
    %v823 = vpop.permute.xlu0 %822
    %v825 = vmul.f32 %v787, %v823
    %v826 = vand.u32 2147483647, %v820
    %v827 = vmax.f32 %v826, 1.0
    %v828 = vrcp.pop %v827
    %830 = vrot.lane.b32.xlu0 %v828, 64
    %v831 = vpop.permute.xlu0 %830
    %v833 = vmul.f32 %v825, %v831
    %v834 = vld [vmem:[%s387] sm:$0xff]
    %v835 = vld [vmem:[%s387 + $0x8] sm:$0xff]
    %v836 = vld [vmem:[%s387 + $0x10] sm:$0xff]
    %v837 = vld [vmem:[%s387 + $0x18] sm:$0xff]
    %v838 = vsel %vm174, %v739, 0
    %840 = vmatpush.msra.mxu0 0.0
    %841 = vmatpush.msra.mxu0 0.0
    %842 = vmatpush.msra.mxu0 0.0
    %843 = vmatpush.msra.mxu0 0.0
    %844 = vmatpush.msra.mxu0 0.0
    %845 = vmatpush.msra.mxu0 0.0
    %846 = vmatpush.msra.mxu0 0.0
    %847 = vmatpush.msra.mxu0 0.0
    %848 = vmatpush.msra.mxu0 0.0
    %849 = vmatpush.msra.mxu0 0.0
    %850 = vmatpush.msra.mxu0 0.0
    %851 = vmatpush.msra.mxu0 0.0
    %852 = vmatpush.msra.mxu0 %v837
    %853 = vmatpush.msra.mxu0 %v836
    %854 = vmatpush.msra.mxu0 %v835
    %855 = vmatpush.msra.mxu0 %v834
    %856 = vmatmul.f32.gmra.mxu0 %v838
    %v857 = vpop.f32.mrf.mxu0
    %v858 = vadd.f32 0.0, %v857
    %859 = vdwg.mxu0
    %v860 = vld [vmem:[%s412] sm:$0xff]
    %v861 = vld [vmem:[%s412 + $0x8] sm:$0xff]
    %v862 = vld [vmem:[%s412 + $0x10] sm:$0xff]
    %v863 = vld [vmem:[%s412 + $0x18] sm:$0xff]
    %865 = vrot.lane.b32.xlu0 %v833, 32
    %v866 = vpop.permute.xlu0 %865
    %v867 = vsel %vm174, %v866, 0
    %869 = vmatpush.msra.mxu0 0.0
    %870 = vmatpush.msra.mxu0 0.0
    %871 = vmatpush.msra.mxu0 0.0
    %872 = vmatpush.msra.mxu0 0.0
    %873 = vmatpush.msra.mxu0 0.0
    %874 = vmatpush.msra.mxu0 0.0
    %875 = vmatpush.msra.mxu0 0.0
    %876 = vmatpush.msra.mxu0 0.0
    %877 = vmatpush.msra.mxu0 0.0
    %878 = vmatpush.msra.mxu0 0.0
    %879 = vmatpush.msra.mxu0 0.0
    %880 = vmatpush.msra.mxu0 0.0
    %881 = vmatpush.msra.mxu0 %v863
    %882 = vmatpush.msra.mxu0 %v862
    %883 = vmatpush.msra.mxu0 %v861
    %884 = vmatpush.msra.mxu0 %v860
    %885 = vmatmul.f32.gmra.mxu0 %v867
    %v886 = vpop.f32.mrf.mxu0
    %v887 = vadd.f32 %v858, %v886
    %888 = vdwg.mxu0
    %v889 = vld [vmem:[%s442] sm:$0x1]
    %v891 = vperm.slane %v889, 0
    %v893 = vadd.f32 %v887, %v891
    %v894 = vtanh.pop %v893
    %v895 = vxor.u32 %v893, 2147483648
    %v896 = vmul.f32 %v895, 1.442695
    %v897 = vpow.pop %v896
    %v898 = vadd.f32 %v897, 1.0
    %v899 = vrcp.pop %v898
    %v900 = vmul.f32 %v898, %v899
    %v901 = vsub.f32 1.0, %v900
    %v902 = vmul.f32 %v899, %v901
    %v903 = vadd.f32 %v899, %v902
    %vm904 = vweird.f32 %v898
    %vm905 = vweird.f32 %v899
    %vm906 = vmor %vm904, %vm905
    %v907 = vsel %vm906, %v899, %v903
    %v908 = vand.u32 2147483647, %v898
    %vm909 = vcmp.eq.f32.partialorder %v908, 8.507059e+37
    %v910 = vand.u32 %v898, 2147483648
    %v911 = vor.u32 1.1754944e-38, %v910
    %v912 = vsel %vm909, %v911, %v907
    %v913 = vmul.f32 1.0, %v912
    %v914 = vadd.f32 %v893, %v696
    %916 = vrot.lane.b32.xlu0 %v893, 32
    %v917 = vpop.permute.xlu0 %916
    %v919 = vmax.f32 %v914, %v917
    %921 = vrot.lane.b32.xlu0 %v919, 96
    %v922 = vpop.permute.xlu0 %921
    %v924 = vsub.f32 %v893, %v922
    %v925 = vmul.f32 %v924, 1.442695
    %v926 = vpow.pop %v925
    %v927 = vsub.f32 %v914, %v919
    %v928 = vmul.f32 %v927, 1.442695
    %v929 = vpow.pop %v928
    %v930 = vmul.f32 %v929, %v717
    %932 = vrot.lane.b32.xlu0 %v894, 64
    %v933 = vpop.permute.xlu0 %932
    %v935 = vmul.f32 %v926, %v933
    %937 = vrot.lane.b32.xlu0 %v935, 32
    %v938 = vpop.permute.xlu0 %937
    %v940 = vadd.f32 %v930, %v938
    %v941 = vmul.f32 %v929, %v723
    %943 = vrot.lane.b32.xlu0 %v926, 32
    %v944 = vpop.permute.xlu0 %943
    %v946 = vadd.f32 %v941, %v944
    %948 = vrot.lane.b32.xlu0 %v940, 64
    %v949 = vpop.permute.xlu0 %948
    %v951 = vmul.f32 %v913, %v949
    %v952 = vand.u32 2147483647, %v946
    %v953 = vmax.f32 %v952, 1.0
    %v954 = vrcp.pop %v953
    %956 = vrot.lane.b32.xlu0 %v954, 64
    %v957 = vpop.permute.xlu0 %956
    %v959 = vmul.f32 %v951, %v957
    %961 = vrot.lane.b32.xlu0 %v959, 32
    %v962 = vpop.permute.xlu0 %961
    %964 = vst.msk [vmem:[#allocation3 + $0x4] sm:$0x3] %vm517, %v962
    %v965 = vld [vmem:[#allocation9] sm:$0xff]
    %v966 = vld [vmem:[#allocation9 + $0x8] sm:$0xff]
    %v967 = vld [vmem:[#allocation9 + $0x10] sm:$0xff]
    %v968 = vld [vmem:[#allocation9 + $0x18] sm:$0xff]
    %969 = vmatpush.msra.mxu0 0.0
    %970 = vmatpush.msra.mxu0 0.0
    %971 = vmatpush.msra.mxu0 0.0
    %972 = vmatpush.msra.mxu0 0.0
    %973 = vmatpush.msra.mxu0 0.0
    %974 = vmatpush.msra.mxu0 0.0
    %975 = vmatpush.msra.mxu0 0.0
    %976 = vmatpush.msra.mxu0 0.0
    %977 = vmatpush.msra.mxu0 0.0
    %978 = vmatpush.msra.mxu0 0.0
    %979 = vmatpush.msra.mxu0 0.0
    %980 = vmatpush.msra.mxu0 0.0
    %981 = vmatpush.msra.mxu0 %v968
    %982 = vmatpush.msra.mxu0 %v967
    %983 = vmatpush.msra.mxu0 %v966
    %984 = vmatpush.msra.mxu0 %v965
    %985 = vmatmul.f32.gmra.mxu0 %v867
    %v986 = vpop.f32.mrf.mxu0
    %v987 = vadd.f32 0.0, %v986
    %988 = vdwg.mxu0
    %v989 = vld [vmem:[#allocation2 + $0x6] sm:$0x3]
    %v990 = vadd.f32 %v989, %v987
    %v991 = vtanh.pop %v990
    %v992 = vxor.u32 %v990, 2147483648
    %v993 = vmul.f32 %v992, 1.442695
    %v994 = vpow.pop %v993
    %v995 = vadd.f32 %v994, 1.0
    %v996 = vrcp.pop %v995
    %v997 = vmul.f32 %v995, %v996
    %v998 = vsub.f32 1.0, %v997
    %v999 = vmul.f32 %v996, %v998
    %v1000 = vadd.f32 %v996, %v999
    %vm1001 = vweird.f32 %v995
    %vm1002 = vweird.f32 %v996
    %vm1003 = vmor %vm1001, %vm1002
    %v1004 = vsel %vm1003, %v996, %v1000
    %v1005 = vand.u32 2147483647, %v995
    %vm1006 = vcmp.eq.f32.partialorder %v1005, 8.507059e+37
    %v1007 = vand.u32 %v995, 2147483648
    %v1008 = vor.u32 1.1754944e-38, %v1007
    %v1009 = vsel %vm1006, %v1008, %v1004
    %v1010 = vmul.f32 1.0, %v1009
    %v1011 = vadd.f32 %v990, %v793
    %1013 = vrot.lane.b32.xlu0 %v990, 32
    %v1014 = vpop.permute.xlu0 %1013
    %v1016 = vmax.f32 %v1011, %v1014
    %1018 = vrot.lane.b32.xlu0 %v1016, 96
    %v1019 = vpop.permute.xlu0 %1018
    %v1021 = vsub.f32 %v990, %v1019
    %v1022 = vmul.f32 %v1021, 1.442695
    %v1023 = vpow.pop %v1022
    %v1024 = vsub.f32 %v1011, %v1016
    %v1025 = vmul.f32 %v1024, 1.442695
    %v1026 = vpow.pop %v1025
    %v1027 = vmul.f32 %v1026, %v814
    %1029 = vrot.lane.b32.xlu0 %v991, 64
    %v1030 = vpop.permute.xlu0 %1029
    %v1032 = vmul.f32 %v1023, %v1030
    %1034 = vrot.lane.b32.xlu0 %v1032, 32
    %v1035 = vpop.permute.xlu0 %1034
    %v1037 = vadd.f32 %v1027, %v1035
    %v1038 = vmul.f32 %v1026, %v820
    %1040 = vrot.lane.b32.xlu0 %v1023, 32
    %v1041 = vpop.permute.xlu0 %1040
    %v1043 = vadd.f32 %v1038, %v1041
    %1045 = vrot.lane.b32.xlu0 %v1037, 64
    %v1046 = vpop.permute.xlu0 %1045
    %v1048 = vmul.f32 %v1010, %v1046
    %v1049 = vand.u32 2147483647, %v1043
    %v1050 = vmax.f32 %v1049, 1.0
    %v1051 = vrcp.pop %v1050
    %1053 = vrot.lane.b32.xlu0 %v1051, 64
    %v1054 = vpop.permute.xlu0 %1053
    %v1056 = vmul.f32 %v1048, %v1054
    %v1057 = vld [vmem:[%s387] sm:$0xff]
    %v1058 = vld [vmem:[%s387 + $0x8] sm:$0xff]
    %v1059 = vld [vmem:[%s387 + $0x10] sm:$0xff]
    %v1060 = vld [vmem:[%s387 + $0x18] sm:$0xff]
    %v1061 = vsel %vm174, %v962, 0
    %1063 = vmatpush.msra.mxu0 0.0
    %1064 = vmatpush.msra.mxu0 0.0
    %1065 = vmatpush.msra.mxu0 0.0
    %1066 = vmatpush.msra.mxu0 0.0
    %1067 = vmatpush.msra.mxu0 0.0
    %1068 = vmatpush.msra.mxu0 0.0
    %1069 = vmatpush.msra.mxu0 0.0
    %1070 = vmatpush.msra.mxu0 0.0
    %1071 = vmatpush.msra.mxu0 0.0
    %1072 = vmatpush.msra.mxu0 0.0
    %1073 = vmatpush.msra.mxu0 0.0
    %1074 = vmatpush.msra.mxu0 0.0
    %1075 = vmatpush.msra.mxu0 %v1060
    %1076 = vmatpush.msra.mxu0 %v1059
    %1077 = vmatpush.msra.mxu0 %v1058
    %1078 = vmatpush.msra.mxu0 %v1057
    %1079 = vmatmul.f32.gmra.mxu0 %v1061
    %v1080 = vpop.f32.mrf.mxu0
    %v1081 = vadd.f32 0.0, %v1080
    %1082 = vdwg.mxu0
    %v1083 = vld [vmem:[%s412] sm:$0xff]
    %v1084 = vld [vmem:[%s412 + $0x8] sm:$0xff]
    %v1085 = vld [vmem:[%s412 + $0x10] sm:$0xff]
    %v1086 = vld [vmem:[%s412 + $0x18] sm:$0xff]
    %1088 = vrot.lane.b32.xlu0 %v1056, 32
    %v1089 = vpop.permute.xlu0 %1088
    %v1090 = vsel %vm174, %v1089, 0
    %1092 = vmatpush.msra.mxu0 0.0
    %1093 = vmatpush.msra.mxu0 0.0
    %1094 = vmatpush.msra.mxu0 0.0
    %1095 = vmatpush.msra.mxu0 0.0
    %1096 = vmatpush.msra.mxu0 0.0
    %1097 = vmatpush.msra.mxu0 0.0
    %1098 = vmatpush.msra.mxu0 0.0
    %1099 = vmatpush.msra.mxu0 0.0
    %1100 = vmatpush.msra.mxu0 0.0
    %1101 = vmatpush.msra.mxu0 0.0
    %1102 = vmatpush.msra.mxu0 0.0
    %1103 = vmatpush.msra.mxu0 0.0
    %1104 = vmatpush.msra.mxu0 %v1086
    %1105 = vmatpush.msra.mxu0 %v1085
    %1106 = vmatpush.msra.mxu0 %v1084
    %1107 = vmatpush.msra.mxu0 %v1083
    %1108 = vmatmul.f32.gmra.mxu0 %v1090
    %v1109 = vpop.f32.mrf.mxu0
    %v1110 = vadd.f32 %v1081, %v1109
    %1111 = vdwg.mxu0
    %v1112 = vld [vmem:[%s442] sm:$0x1]
    %v1114 = vperm.slane %v1112, 0
    %v1116 = vadd.f32 %v1110, %v1114
    %v1117 = vtanh.pop %v1116
    %v1118 = vxor.u32 %v1116, 2147483648
    %v1119 = vmul.f32 %v1118, 1.442695
    %v1120 = vpow.pop %v1119
    %v1121 = vadd.f32 %v1120, 1.0
    %v1122 = vrcp.pop %v1121
    %v1123 = vmul.f32 %v1121, %v1122
    %v1124 = vsub.f32 1.0, %v1123
    %v1125 = vmul.f32 %v1122, %v1124
    %v1126 = vadd.f32 %v1122, %v1125
    %vm1127 = vweird.f32 %v1121
    %vm1128 = vweird.f32 %v1122
    %vm1129 = vmor %vm1127, %vm1128
    %v1130 = vsel %vm1129, %v1122, %v1126
    %v1131 = vand.u32 2147483647, %v1121
    %vm1132 = vcmp.eq.f32.partialorder %v1131, 8.507059e+37
    %v1133 = vand.u32 %v1121, 2147483648
    %v1134 = vor.u32 1.1754944e-38, %v1133
    %v1135 = vsel %vm1132, %v1134, %v1130
    %v1136 = vmul.f32 1.0, %v1135
    %v1137 = vadd.f32 %v1116, %v919
    %1139 = vrot.lane.b32.xlu0 %v1116, 32
    %v1140 = vpop.permute.xlu0 %1139
    %v1142 = vmax.f32 %v1137, %v1140
    %1144 = vrot.lane.b32.xlu0 %v1142, 96
    %v1145 = vpop.permute.xlu0 %1144
    %v1147 = vsub.f32 %v1116, %v1145
    %v1148 = vmul.f32 %v1147, 1.442695
    %v1149 = vpow.pop %v1148
    %v1150 = vsub.f32 %v1137, %v1142
    %v1151 = vmul.f32 %v1150, 1.442695
    %v1152 = vpow.pop %v1151
    %v1153 = vmul.f32 %v1152, %v940
    %1155 = vrot.lane.b32.xlu0 %v1117, 64
    %v1156 = vpop.permute.xlu0 %1155
    %v1158 = vmul.f32 %v1149, %v1156
    %1160 = vrot.lane.b32.xlu0 %v1158, 32
    %v1161 = vpop.permute.xlu0 %1160
    %v1163 = vadd.f32 %v1153, %v1161
    %v1164 = vmul.f32 %v1152, %v946
    %1166 = vrot.lane.b32.xlu0 %v1149, 32
    %v1167 = vpop.permute.xlu0 %1166
    %v1169 = vadd.f32 %v1164, %v1167
    %1171 = vrot.lane.b32.xlu0 %v1163, 64
    %v1172 = vpop.permute.xlu0 %1171
    %v1174 = vmul.f32 %v1136, %v1172
    %v1175 = vand.u32 2147483647, %v1169
    %v1176 = vmax.f32 %v1175, 1.0
    %v1177 = vrcp.pop %v1176
    %1179 = vrot.lane.b32.xlu0 %v1177, 64
    %v1180 = vpop.permute.xlu0 %1179
    %v1182 = vmul.f32 %v1174, %v1180
    %1184 = vrot.lane.b32.xlu0 %v1182, 32
    %v1185 = vpop.permute.xlu0 %1184
    %1187 = vst.msk [vmem:[#allocation3 + $0x6] sm:$0x3] %vm517, %v1185
    %v1188 = vld [vmem:[#allocation9] sm:$0xff]
    %v1189 = vld [vmem:[#allocation9 + $0x8] sm:$0xff]
    %v1190 = vld [vmem:[#allocation9 + $0x10] sm:$0xff]
    %v1191 = vld [vmem:[#allocation9 + $0x18] sm:$0xff]
    %1192 = vmatpush.msra.mxu0 0.0
    %1193 = vmatpush.msra.mxu0 0.0
    %1194 = vmatpush.msra.mxu0 0.0
    %1195 = vmatpush.msra.mxu0 0.0
    %1196 = vmatpush.msra.mxu0 0.0
    %1197 = vmatpush.msra.mxu0 0.0
    %1198 = vmatpush.msra.mxu0 0.0
    %1199 = vmatpush.msra.mxu0 0.0
    %1200 = vmatpush.msra.mxu0 0.0
    %1201 = vmatpush.msra.mxu0 0.0
    %1202 = vmatpush.msra.mxu0 0.0
    %1203 = vmatpush.msra.mxu0 0.0
    %1204 = vmatpush.msra.mxu0 %v1191
    %1205 = vmatpush.msra.mxu0 %v1190
    %1206 = vmatpush.msra.mxu0 %v1189
    %1207 = vmatpush.msra.mxu0 %v1188
    %1208 = vmatmul.f32.gmra.mxu0 %v1090
    %v1209 = vpop.f32.mrf.mxu0
    %v1210 = vadd.f32 0.0, %v1209
    %1211 = vdwg.mxu0
    %v1212 = vld [vmem:[#allocation2 + $0x8] sm:$0x3]
    %v1213 = vadd.f32 %v1212, %v1210
    %v1214 = vtanh.pop %v1213
    %v1215 = vxor.u32 %v1213, 2147483648
    %v1216 = vmul.f32 %v1215, 1.442695
    %v1217 = vpow.pop %v1216
    %v1218 = vadd.f32 %v1217, 1.0
    %v1219 = vrcp.pop %v1218
    %v1220 = vmul.f32 %v1218, %v1219
    %v1221 = vsub.f32 1.0, %v1220
    %v1222 = vmul.f32 %v1219, %v1221
    %v1223 = vadd.f32 %v1219, %v1222
    %vm1224 = vweird.f32 %v1218
    %vm1225 = vweird.f32 %v1219
    %vm1226 = vmor %vm1224, %vm1225
    %v1227 = vsel %vm1226, %v1219, %v1223
    %v1228 = vand.u32 2147483647, %v1218
    %vm1229 = vcmp.eq.f32.partialorder %v1228, 8.507059e+37
    %v1230 = vand.u32 %v1218, 2147483648
    %v1231 = vor.u32 1.1754944e-38, %v1230
    %v1232 = vsel %vm1229, %v1231, %v1227
    %v1233 = vmul.f32 1.0, %v1232
    %v1234 = vadd.f32 %v1213, %v1016
    %1236 = vrot.lane.b32.xlu0 %v1213, 32
    %v1237 = vpop.permute.xlu0 %1236
    %v1239 = vmax.f32 %v1234, %v1237
    %1241 = vrot.lane.b32.xlu0 %v1239, 96
    %v1242 = vpop.permute.xlu0 %1241
    %v1244 = vsub.f32 %v1213, %v1242
    %v1245 = vmul.f32 %v1244, 1.442695
    %v1246 = vpow.pop %v1245
    %v1247 = vsub.f32 %v1234, %v1239
    %v1248 = vmul.f32 %v1247, 1.442695
    %v1249 = vpow.pop %v1248
    %v1250 = vmul.f32 %v1249, %v1037
    %1252 = vrot.lane.b32.xlu0 %v1214, 64
    %v1253 = vpop.permute.xlu0 %1252
    %v1255 = vmul.f32 %v1246, %v1253
    %1257 = vrot.lane.b32.xlu0 %v1255, 32
    %v1258 = vpop.permute.xlu0 %1257
    %v1260 = vadd.f32 %v1250, %v1258
    %v1261 = vmul.f32 %v1249, %v1043
    %1263 = vrot.lane.b32.xlu0 %v1246, 32
    %v1264 = vpop.permute.xlu0 %1263
    %v1266 = vadd.f32 %v1261, %v1264
    %1268 = vrot.lane.b32.xlu0 %v1260, 64
    %v1269 = vpop.permute.xlu0 %1268
    %v1271 = vmul.f32 %v1233, %v1269
    %v1272 = vand.u32 2147483647, %v1266
    %v1273 = vmax.f32 %v1272, 1.0
    %v1274 = vrcp.pop %v1273
    %1276 = vrot.lane.b32.xlu0 %v1274, 64
    %v1277 = vpop.permute.xlu0 %1276
    %v1279 = vmul.f32 %v1271, %v1277
    %v1280 = vld [vmem:[%s387] sm:$0xff]
    %v1281 = vld [vmem:[%s387 + $0x8] sm:$0xff]
    %v1282 = vld [vmem:[%s387 + $0x10] sm:$0xff]
    %v1283 = vld [vmem:[%s387 + $0x18] sm:$0xff]
    %v1284 = vsel %vm174, %v1185, 0
    %1286 = vmatpush.msra.mxu0 0.0
    %1287 = vmatpush.msra.mxu0 0.0
    %1288 = vmatpush.msra.mxu0 0.0
    %1289 = vmatpush.msra.mxu0 0.0
    %1290 = vmatpush.msra.mxu0 0.0
    %1291 = vmatpush.msra.mxu0 0.0
    %1292 = vmatpush.msra.mxu0 0.0
    %1293 = vmatpush.msra.mxu0 0.0
    %1294 = vmatpush.msra.mxu0 0.0
    %1295 = vmatpush.msra.mxu0 0.0
    %1296 = vmatpush.msra.mxu0 0.0
    %1297 = vmatpush.msra.mxu0 0.0
    %1298 = vmatpush.msra.mxu0 %v1283
    %1299 = vmatpush.msra.mxu0 %v1282
    %1300 = vmatpush.msra.mxu0 %v1281
    %1301 = vmatpush.msra.mxu0 %v1280
    %1302 = vmatmul.f32.gmra.mxu0 %v1284
    %v1303 = vpop.f32.mrf.mxu0
    %v1304 = vadd.f32 0.0, %v1303
    %1305 = vdwg.mxu0
    %v1306 = vld [vmem:[%s412] sm:$0xff]
    %v1307 = vld [vmem:[%s412 + $0x8] sm:$0xff]
    %v1308 = vld [vmem:[%s412 + $0x10] sm:$0xff]
    %v1309 = vld [vmem:[%s412 + $0x18] sm:$0xff]
    %1311 = vrot.lane.b32.xlu0 %v1279, 32
    %v1312 = vpop.permute.xlu0 %1311
    %v1313 = vsel %vm174, %v1312, 0
    %1315 = vmatpush.msra.mxu0 0.0
    %1316 = vmatpush.msra.mxu0 0.0
    %1317 = vmatpush.msra.mxu0 0.0
    %1318 = vmatpush.msra.mxu0 0.0
    %1319 = vmatpush.msra.mxu0 0.0
    %1320 = vmatpush.msra.mxu0 0.0
    %1321 = vmatpush.msra.mxu0 0.0
    %1322 = vmatpush.msra.mxu0 0.0
    %1323 = vmatpush.msra.mxu0 0.0
    %1324 = vmatpush.msra.mxu0 0.0
    %1325 = vmatpush.msra.mxu0 0.0
    %1326 = vmatpush.msra.mxu0 0.0
    %1327 = vmatpush.msra.mxu0 %v1309
    %1328 = vmatpush.msra.mxu0 %v1308
    %1329 = vmatpush.msra.mxu0 %v1307
    %1330 = vmatpush.msra.mxu0 %v1306
    %1331 = vmatmul.f32.gmra.mxu0 %v1313
    %v1332 = vpop.f32.mrf.mxu0
    %v1333 = vadd.f32 %v1304, %v1332
    %1334 = vdwg.mxu0
    %v1335 = vld [vmem:[%s442] sm:$0x1]
    %v1337 = vperm.slane %v1335, 0
    %v1339 = vadd.f32 %v1333, %v1337
    %v1340 = vtanh.pop %v1339
    %v1341 = vxor.u32 %v1339, 2147483648
    %v1342 = vmul.f32 %v1341, 1.442695
    %v1343 = vpow.pop %v1342
    %v1344 = vadd.f32 %v1343, 1.0
    %v1345 = vrcp.pop %v1344
    %v1346 = vmul.f32 %v1344, %v1345
    %v1347 = vsub.f32 1.0, %v1346
    %v1348 = vmul.f32 %v1345, %v1347
    %v1349 = vadd.f32 %v1345, %v1348
    %vm1350 = vweird.f32 %v1344
    %vm1351 = vweird.f32 %v1345
    %vm1352 = vmor %vm1350, %vm1351
    %v1353 = vsel %vm1352, %v1345, %v1349
    %v1354 = vand.u32 2147483647, %v1344
    %vm1355 = vcmp.eq.f32.partialorder %v1354, 8.507059e+37
    %v1356 = vand.u32 %v1344, 2147483648
    %v1357 = vor.u32 1.1754944e-38, %v1356
    %v1358 = vsel %vm1355, %v1357, %v1353
    %v1359 = vmul.f32 1.0, %v1358
    %v1360 = vadd.f32 %v1339, %v1142
    %1362 = vrot.lane.b32.xlu0 %v1339, 32
    %v1363 = vpop.permute.xlu0 %1362
    %v1365 = vmax.f32 %v1360, %v1363
    %1367 = vrot.lane.b32.xlu0 %v1365, 96
    %v1368 = vpop.permute.xlu0 %1367
    %v1370 = vsub.f32 %v1339, %v1368
    %v1371 = vmul.f32 %v1370, 1.442695
    %v1372 = vpow.pop %v1371
    %v1373 = vsub.f32 %v1360, %v1365
    %v1374 = vmul.f32 %v1373, 1.442695
    %v1375 = vpow.pop %v1374
    %v1376 = vmul.f32 %v1375, %v1163
    %1378 = vrot.lane.b32.xlu0 %v1340, 64
    %v1379 = vpop.permute.xlu0 %1378
    %v1381 = vmul.f32 %v1372, %v1379
    %1383 = vrot.lane.b32.xlu0 %v1381, 32
    %v1384 = vpop.permute.xlu0 %1383
    %v1386 = vadd.f32 %v1376, %v1384
    %v1387 = vmul.f32 %v1375, %v1169
    %1389 = vrot.lane.b32.xlu0 %v1372, 32
    %v1390 = vpop.permute.xlu0 %1389
    %v1392 = vadd.f32 %v1387, %v1390
    %1394 = vrot.lane.b32.xlu0 %v1386, 64
    %v1395 = vpop.permute.xlu0 %1394
    %v1397 = vmul.f32 %v1359, %v1395
    %v1398 = vand.u32 2147483647, %v1392
    %v1399 = vmax.f32 %v1398, 1.0
    %v1400 = vrcp.pop %v1399
    %1402 = vrot.lane.b32.xlu0 %v1400, 64
    %v1403 = vpop.permute.xlu0 %1402
    %v1405 = vmul.f32 %v1397, %v1403
    %1407 = vrot.lane.b32.xlu0 %v1405, 32
    %v1408 = vpop.permute.xlu0 %1407
    %1410 = vst.msk [vmem:[#allocation3 + $0x8] sm:$0x3] %vm517, %v1408
    %v1411 = vld [vmem:[#allocation9] sm:$0xff]
    %v1412 = vld [vmem:[#allocation9 + $0x8] sm:$0xff]
    %v1413 = vld [vmem:[#allocation9 + $0x10] sm:$0xff]
    %v1414 = vld [vmem:[#allocation9 + $0x18] sm:$0xff]
    %1415 = vmatpush.msra.mxu0 0.0
    %1416 = vmatpush.msra.mxu0 0.0
    %1417 = vmatpush.msra.mxu0 0.0
    %1418 = vmatpush.msra.mxu0 0.0
    %1419 = vmatpush.msra.mxu0 0.0
    %1420 = vmatpush.msra.mxu0 0.0
    %1421 = vmatpush.msra.mxu0 0.0
    %1422 = vmatpush.msra.mxu0 0.0
    %1423 = vmatpush.msra.mxu0 0.0
    %1424 = vmatpush.msra.mxu0 0.0
    %1425 = vmatpush.msra.mxu0 0.0
    %1426 = vmatpush.msra.mxu0 0.0
    %1427 = vmatpush.msra.mxu0 %v1414
    %1428 = vmatpush.msra.mxu0 %v1413
    %1429 = vmatpush.msra.mxu0 %v1412
    %1430 = vmatpush.msra.mxu0 %v1411
    %1431 = vmatmul.f32.gmra.mxu0 %v1313
    %v1432 = vpop.f32.mrf.mxu0
    %v1433 = vadd.f32 0.0, %v1432
    %1434 = vdwg.mxu0
    %v1435 = vld [vmem:[#allocation2 + $0xa] sm:$0x3]
    %v1436 = vadd.f32 %v1435, %v1433
    %v1437 = vtanh.pop %v1436
    %v1438 = vxor.u32 %v1436, 2147483648
    %v1439 = vmul.f32 %v1438, 1.442695
    %v1440 = vpow.pop %v1439
    %v1441 = vadd.f32 %v1440, 1.0
    %v1442 = vrcp.pop %v1441
    %v1443 = vmul.f32 %v1441, %v1442
    %v1444 = vsub.f32 1.0, %v1443
    %v1445 = vmul.f32 %v1442, %v1444
    %v1446 = vadd.f32 %v1442, %v1445
    %vm1447 = vweird.f32 %v1441
    %vm1448 = vweird.f32 %v1442
    %vm1449 = vmor %vm1447, %vm1448
    %v1450 = vsel %vm1449, %v1442, %v1446
    %v1451 = vand.u32 2147483647, %v1441
    %vm1452 = vcmp.eq.f32.partialorder %v1451, 8.507059e+37
    %v1453 = vand.u32 %v1441, 2147483648
    %v1454 = vor.u32 1.1754944e-38, %v1453
    %v1455 = vsel %vm1452, %v1454, %v1450
    %v1456 = vmul.f32 1.0, %v1455
    %v1457 = vadd.f32 %v1436, %v1239
    %1459 = vrot.lane.b32.xlu0 %v1436, 32
    %v1460 = vpop.permute.xlu0 %1459
    %v1462 = vmax.f32 %v1457, %v1460
    %1464 = vrot.lane.b32.xlu0 %v1462, 96
    %v1465 = vpop.permute.xlu0 %1464
    %v1467 = vsub.f32 %v1436, %v1465
    %v1468 = vmul.f32 %v1467, 1.442695
    %v1469 = vpow.pop %v1468
    %v1470 = vsub.f32 %v1457, %v1462
    %v1471 = vmul.f32 %v1470, 1.442695
    %v1472 = vpow.pop %v1471
    %v1473 = vmul.f32 %v1472, %v1260
    %1475 = vrot.lane.b32.xlu0 %v1437, 64
    %v1476 = vpop.permute.xlu0 %1475
    %v1478 = vmul.f32 %v1469, %v1476
    %1480 = vrot.lane.b32.xlu0 %v1478, 32
    %v1481 = vpop.permute.xlu0 %1480
    %v1483 = vadd.f32 %v1473, %v1481
    %v1484 = vmul.f32 %v1472, %v1266
    %1486 = vrot.lane.b32.xlu0 %v1469, 32
    %v1487 = vpop.permute.xlu0 %1486
    %v1489 = vadd.f32 %v1484, %v1487
    %1491 = vrot.lane.b32.xlu0 %v1483, 64
    %v1492 = vpop.permute.xlu0 %1491
    %v1494 = vmul.f32 %v1456, %v1492
    %v1495 = vand.u32 2147483647, %v1489
    %v1496 = vmax.f32 %v1495, 1.0
    %v1497 = vrcp.pop %v1496
    %1499 = vrot.lane.b32.xlu0 %v1497, 64
    %v1500 = vpop.permute.xlu0 %1499
    %v1502 = vmul.f32 %v1494, %v1500
    %v1503 = vld [vmem:[%s387] sm:$0xff]
    %v1504 = vld [vmem:[%s387 + $0x8] sm:$0xff]
    %v1505 = vld [vmem:[%s387 + $0x10] sm:$0xff]
    %v1506 = vld [vmem:[%s387 + $0x18] sm:$0xff]
    %v1507 = vsel %vm174, %v1408, 0
    %1509 = vmatpush.msra.mxu0 0.0
    %1510 = vmatpush.msra.mxu0 0.0
    %1511 = vmatpush.msra.mxu0 0.0
    %1512 = vmatpush.msra.mxu0 0.0
    %1513 = vmatpush.msra.mxu0 0.0
    %1514 = vmatpush.msra.mxu0 0.0
    %1515 = vmatpush.msra.mxu0 0.0
    %1516 = vmatpush.msra.mxu0 0.0
    %1517 = vmatpush.msra.mxu0 0.0
    %1518 = vmatpush.msra.mxu0 0.0
    %1519 = vmatpush.msra.mxu0 0.0
    %1520 = vmatpush.msra.mxu0 0.0
    %1521 = vmatpush.msra.mxu0 %v1506
    %1522 = vmatpush.msra.mxu0 %v1505
    %1523 = vmatpush.msra.mxu0 %v1504
    %1524 = vmatpush.msra.mxu0 %v1503
    %1525 = vmatmul.f32.gmra.mxu0 %v1507
    %v1526 = vpop.f32.mrf.mxu0
    %v1527 = vadd.f32 0.0, %v1526
    %1528 = vdwg.mxu0
    %v1529 = vld [vmem:[%s412] sm:$0xff]
    %v1530 = vld [vmem:[%s412 + $0x8] sm:$0xff]
    %v1531 = vld [vmem:[%s412 + $0x10] sm:$0xff]
    %v1532 = vld [vmem:[%s412 + $0x18] sm:$0xff]
    %1534 = vrot.lane.b32.xlu0 %v1502, 32
    %v1535 = vpop.permute.xlu0 %1534
    %v1536 = vsel %vm174, %v1535, 0
    %1538 = vmatpush.msra.mxu0 0.0
    %1539 = vmatpush.msra.mxu0 0.0
    %1540 = vmatpush.msra.mxu0 0.0
    %1541 = vmatpush.msra.mxu0 0.0
    %1542 = vmatpush.msra.mxu0 0.0
    %1543 = vmatpush.msra.mxu0 0.0
    %1544 = vmatpush.msra.mxu0 0.0
    %1545 = vmatpush.msra.mxu0 0.0
    %1546 = vmatpush.msra.mxu0 0.0
    %1547 = vmatpush.msra.mxu0 0.0
    %1548 = vmatpush.msra.mxu0 0.0
    %1549 = vmatpush.msra.mxu0 0.0
    %1550 = vmatpush.msra.mxu0 %v1532
    %1551 = vmatpush.msra.mxu0 %v1531
    %1552 = vmatpush.msra.mxu0 %v1530
    %1553 = vmatpush.msra.mxu0 %v1529
    %1554 = vmatmul.f32.gmra.mxu0 %v1536
    %v1555 = vpop.f32.mrf.mxu0
    %v1556 = vadd.f32 %v1527, %v1555
    %1557 = vdwg.mxu0
    %v1558 = vld [vmem:[%s442] sm:$0x1]
    %v1560 = vperm.slane %v1558, 0
    %v1562 = vadd.f32 %v1556, %v1560
    %v1563 = vtanh.pop %v1562
    %v1564 = vxor.u32 %v1562, 2147483648
    %v1565 = vmul.f32 %v1564, 1.442695
    %v1566 = vpow.pop %v1565
    %v1567 = vadd.f32 %v1566, 1.0
    %v1568 = vrcp.pop %v1567
    %v1569 = vmul.f32 %v1567, %v1568
    %v1570 = vsub.f32 1.0, %v1569
    %v1571 = vmul.f32 %v1568, %v1570
    %v1572 = vadd.f32 %v1568, %v1571
    %vm1573 = vweird.f32 %v1567
    %vm1574 = vweird.f32 %v1568
    %vm1575 = vmor %vm1573, %vm1574
    %v1576 = vsel %vm1575, %v1568, %v1572
    %v1577 = vand.u32 2147483647, %v1567
    %vm1578 = vcmp.eq.f32.partialorder %v1577, 8.507059e+37
    %v1579 = vand.u32 %v1567, 2147483648
    %v1580 = vor.u32 1.1754944e-38, %v1579
    %v1581 = vsel %vm1578, %v1580, %v1576
    %v1582 = vmul.f32 1.0, %v1581
    %v1583 = vadd.f32 %v1562, %v1365
    %1585 = vrot.lane.b32.xlu0 %v1562, 32
    %v1586 = vpop.permute.xlu0 %1585
    %v1588 = vmax.f32 %v1583, %v1586
    %1590 = vrot.lane.b32.xlu0 %v1588, 96
    %v1591 = vpop.permute.xlu0 %1590
    %v1593 = vsub.f32 %v1562, %v1591
    %v1594 = vmul.f32 %v1593, 1.442695
    %v1595 = vpow.pop %v1594
    %v1596 = vsub.f32 %v1583, %v1588
    %v1597 = vmul.f32 %v1596, 1.442695
    %v1598 = vpow.pop %v1597
    %v1599 = vmul.f32 %v1598, %v1386
    %1601 = vrot.lane.b32.xlu0 %v1563, 64
    %v1602 = vpop.permute.xlu0 %1601
    %v1604 = vmul.f32 %v1595, %v1602
    %1606 = vrot.lane.b32.xlu0 %v1604, 32
    %v1607 = vpop.permute.xlu0 %1606
    %v1609 = vadd.f32 %v1599, %v1607
    %v1610 = vmul.f32 %v1598, %v1392
    %1612 = vrot.lane.b32.xlu0 %v1595, 32
    %v1613 = vpop.permute.xlu0 %1612
    %v1615 = vadd.f32 %v1610, %v1613
    %1617 = vrot.lane.b32.xlu0 %v1609, 64
    %v1618 = vpop.permute.xlu0 %1617
    %v1620 = vmul.f32 %v1582, %v1618
    %v1621 = vand.u32 2147483647, %v1615
    %v1622 = vmax.f32 %v1621, 1.0
    %v1623 = vrcp.pop %v1622
    %1625 = vrot.lane.b32.xlu0 %v1623, 64
    %v1626 = vpop.permute.xlu0 %1625
    %v1628 = vmul.f32 %v1620, %v1626
    %1630 = vrot.lane.b32.xlu0 %v1628, 32
    %v1631 = vpop.permute.xlu0 %1630
    %1633 = vst.msk [vmem:[#allocation3 + $0xa] sm:$0x3] %vm517, %v1631
    %v1634 = vld [vmem:[#allocation9] sm:$0xff]
    %v1635 = vld [vmem:[#allocation9 + $0x8] sm:$0xff]
    %v1636 = vld [vmem:[#allocation9 + $0x10] sm:$0xff]
    %v1637 = vld [vmem:[#allocation9 + $0x18] sm:$0xff]
    %1638 = vmatpush.msra.mxu0 0.0
    %1639 = vmatpush.msra.mxu0 0.0
    %1640 = vmatpush.msra.mxu0 0.0
    %1641 = vmatpush.msra.mxu0 0.0
    %1642 = vmatpush.msra.mxu0 0.0
    %1643 = vmatpush.msra.mxu0 0.0
    %1644 = vmatpush.msra.mxu0 0.0
    %1645 = vmatpush.msra.mxu0 0.0
    %1646 = vmatpush.msra.mxu0 0.0
    %1647 = vmatpush.msra.mxu0 0.0
    %1648 = vmatpush.msra.mxu0 0.0
    %1649 = vmatpush.msra.mxu0 0.0
    %1650 = vmatpush.msra.mxu0 %v1637
    %1651 = vmatpush.msra.mxu0 %v1636
    %1652 = vmatpush.msra.mxu0 %v1635
    %1653 = vmatpush.msra.mxu0 %v1634
    %1654 = vmatmul.f32.gmra.mxu0 %v1536
    %v1655 = vpop.f32.mrf.mxu0
    %v1656 = vadd.f32 0.0, %v1655
    %1657 = vdwg.mxu0
    %v1658 = vld [vmem:[#allocation2 + $0xc] sm:$0x3]
    %v1659 = vadd.f32 %v1658, %v1656
    %v1660 = vtanh.pop %v1659
    %v1661 = vxor.u32 %v1659, 2147483648
    %v1662 = vmul.f32 %v1661, 1.442695
    %v1663 = vpow.pop %v1662
    %v1664 = vadd.f32 %v1663, 1.0
    %v1665 = vrcp.pop %v1664
    %v1666 = vmul.f32 %v1664, %v1665
    %v1667 = vsub.f32 1.0, %v1666
    %v1668 = vmul.f32 %v1665, %v1667
    %v1669 = vadd.f32 %v1665, %v1668
    %vm1670 = vweird.f32 %v1664
    %vm1671 = vweird.f32 %v1665
    %vm1672 = vmor %vm1670, %vm1671
    %v1673 = vsel %vm1672, %v1665, %v1669
    %v1674 = vand.u32 2147483647, %v1664
    %vm1675 = vcmp.eq.f32.partialorder %v1674, 8.507059e+37
    %v1676 = vand.u32 %v1664, 2147483648
    %v1677 = vor.u32 1.1754944e-38, %v1676
    %v1678 = vsel %vm1675, %v1677, %v1673
    %v1679 = vmul.f32 1.0, %v1678
    %v1680 = vadd.f32 %v1659, %v1462
    %1682 = vrot.lane.b32.xlu0 %v1659, 32
    %v1683 = vpop.permute.xlu0 %1682
    %v1685 = vmax.f32 %v1680, %v1683
    %1687 = vrot.lane.b32.xlu0 %v1685, 96
    %v1688 = vpop.permute.xlu0 %1687
    %v1690 = vsub.f32 %v1659, %v1688
    %v1691 = vmul.f32 %v1690, 1.442695
    %v1692 = vpow.pop %v1691
    %v1693 = vsub.f32 %v1680, %v1685
    %v1694 = vmul.f32 %v1693, 1.442695
    %v1695 = vpow.pop %v1694
    %v1696 = vmul.f32 %v1695, %v1483
    %1698 = vrot.lane.b32.xlu0 %v1660, 64
    %v1699 = vpop.permute.xlu0 %1698
    %v1701 = vmul.f32 %v1692, %v1699
    %1703 = vrot.lane.b32.xlu0 %v1701, 32
    %v1704 = vpop.permute.xlu0 %1703
    %v1706 = vadd.f32 %v1696, %v1704
    %v1707 = vmul.f32 %v1695, %v1489
    %1709 = vrot.lane.b32.xlu0 %v1692, 32
    %v1710 = vpop.permute.xlu0 %1709
    %v1712 = vadd.f32 %v1707, %v1710
    %1714 = vrot.lane.b32.xlu0 %v1706, 64
    %v1715 = vpop.permute.xlu0 %1714
    %v1717 = vmul.f32 %v1679, %v1715
    %v1718 = vand.u32 2147483647, %v1712
    %v1719 = vmax.f32 %v1718, 1.0
    %v1720 = vrcp.pop %v1719
    %1722 = vrot.lane.b32.xlu0 %v1720, 64
    %v1723 = vpop.permute.xlu0 %1722
    %v1725 = vmul.f32 %v1717, %v1723
    %v1726 = vld [vmem:[%s387] sm:$0xff]
    %v1727 = vld [vmem:[%s387 + $0x8] sm:$0xff]
    %v1728 = vld [vmem:[%s387 + $0x10] sm:$0xff]
    %v1729 = vld [vmem:[%s387 + $0x18] sm:$0xff]
    %v1730 = vsel %vm174, %v1631, 0
    %1732 = vmatpush.msra.mxu0 0.0
    %1733 = vmatpush.msra.mxu0 0.0
    %1734 = vmatpush.msra.mxu0 0.0
    %1735 = vmatpush.msra.mxu0 0.0
    %1736 = vmatpush.msra.mxu0 0.0
    %1737 = vmatpush.msra.mxu0 0.0
    %1738 = vmatpush.msra.mxu0 0.0
    %1739 = vmatpush.msra.mxu0 0.0
    %1740 = vmatpush.msra.mxu0 0.0
    %1741 = vmatpush.msra.mxu0 0.0
    %1742 = vmatpush.msra.mxu0 0.0
    %1743 = vmatpush.msra.mxu0 0.0
    %1744 = vmatpush.msra.mxu0 %v1729
    %1745 = vmatpush.msra.mxu0 %v1728
    %1746 = vmatpush.msra.mxu0 %v1727
    %1747 = vmatpush.msra.mxu0 %v1726
    %1748 = vmatmul.f32.gmra.mxu0 %v1730
    %v1749 = vpop.f32.mrf.mxu0
    %v1750 = vadd.f32 0.0, %v1749
    %1751 = vdwg.mxu0
    %v1752 = vld [vmem:[%s412] sm:$0xff]
    %v1753 = vld [vmem:[%s412 + $0x8] sm:$0xff]
    %v1754 = vld [vmem:[%s412 + $0x10] sm:$0xff]
    %v1755 = vld [vmem:[%s412 + $0x18] sm:$0xff]
    %1757 = vrot.lane.b32.xlu0 %v1725, 32
    %v1758 = vpop.permute.xlu0 %1757
    %v1759 = vsel %vm174, %v1758, 0
    %1761 = vmatpush.msra.mxu0 0.0
    %1762 = vmatpush.msra.mxu0 0.0
    %1763 = vmatpush.msra.mxu0 0.0
    %1764 = vmatpush.msra.mxu0 0.0
    %1765 = vmatpush.msra.mxu0 0.0
    %1766 = vmatpush.msra.mxu0 0.0
    %1767 = vmatpush.msra.mxu0 0.0
    %1768 = vmatpush.msra.mxu0 0.0
    %1769 = vmatpush.msra.mxu0 0.0
    %1770 = vmatpush.msra.mxu0 0.0
    %1771 = vmatpush.msra.mxu0 0.0
    %1772 = vmatpush.msra.mxu0 0.0
    %1773 = vmatpush.msra.mxu0 %v1755
    %1774 = vmatpush.msra.mxu0 %v1754
    %1775 = vmatpush.msra.mxu0 %v1753
    %1776 = vmatpush.msra.mxu0 %v1752
    %1777 = vmatmul.f32.gmra.mxu0 %v1759
    %v1778 = vpop.f32.mrf.mxu0
    %v1779 = vadd.f32 %v1750, %v1778
    %1780 = vdwg.mxu0
    %v1781 = vld [vmem:[%s442] sm:$0x1]
    %v1783 = vperm.slane %v1781, 0
    %v1785 = vadd.f32 %v1779, %v1783
    %v1786 = vtanh.pop %v1785
    %v1787 = vxor.u32 %v1785, 2147483648
    %v1788 = vmul.f32 %v1787, 1.442695
    %v1789 = vpow.pop %v1788
    %v1790 = vadd.f32 %v1789, 1.0
    %v1791 = vrcp.pop %v1790
    %v1792 = vmul.f32 %v1790, %v1791
    %v1793 = vsub.f32 1.0, %v1792
    %v1794 = vmul.f32 %v1791, %v1793
    %v1795 = vadd.f32 %v1791, %v1794
    %vm1796 = vweird.f32 %v1790
    %vm1797 = vweird.f32 %v1791
    %vm1798 = vmor %vm1796, %vm1797
    %v1799 = vsel %vm1798, %v1791, %v1795
    %v1800 = vand.u32 2147483647, %v1790
    %vm1801 = vcmp.eq.f32.partialorder %v1800, 8.507059e+37
    %v1802 = vand.u32 %v1790, 2147483648
    %v1803 = vor.u32 1.1754944e-38, %v1802
    %v1804 = vsel %vm1801, %v1803, %v1799
    %v1805 = vmul.f32 1.0, %v1804
    %v1806 = vadd.f32 %v1785, %v1588
    %1808 = vrot.lane.b32.xlu0 %v1785, 32
    %v1809 = vpop.permute.xlu0 %1808
    %v1811 = vmax.f32 %v1806, %v1809
    %1813 = vrot.lane.b32.xlu0 %v1811, 96
    %v1814 = vpop.permute.xlu0 %1813
    %v1816 = vsub.f32 %v1785, %v1814
    %v1817 = vmul.f32 %v1816, 1.442695
    %v1818 = vpow.pop %v1817
    %v1819 = vsub.f32 %v1806, %v1811
    %v1820 = vmul.f32 %v1819, 1.442695
    %v1821 = vpow.pop %v1820
    %v1822 = vmul.f32 %v1821, %v1609
    %1824 = vrot.lane.b32.xlu0 %v1786, 64
    %v1825 = vpop.permute.xlu0 %1824
    %v1827 = vmul.f32 %v1818, %v1825
    %1829 = vrot.lane.b32.xlu0 %v1827, 32
    %v1830 = vpop.permute.xlu0 %1829
    %v1832 = vadd.f32 %v1822, %v1830
    %v1833 = vmul.f32 %v1821, %v1615
    %1835 = vrot.lane.b32.xlu0 %v1818, 32
    %v1836 = vpop.permute.xlu0 %1835
    %v1838 = vadd.f32 %v1833, %v1836
    %1840 = vrot.lane.b32.xlu0 %v1832, 64
    %v1841 = vpop.permute.xlu0 %1840
    %v1843 = vmul.f32 %v1805, %v1841
    %v1844 = vand.u32 2147483647, %v1838
    %v1845 = vmax.f32 %v1844, 1.0
    %v1846 = vrcp.pop %v1845
    %1848 = vrot.lane.b32.xlu0 %v1846, 64
    %v1849 = vpop.permute.xlu0 %1848
    %v1851 = vmul.f32 %v1843, %v1849
    %1853 = vrot.lane.b32.xlu0 %v1851, 32
    %v1854 = vpop.permute.xlu0 %1853
    %1856 = vst.msk [vmem:[#allocation3 + $0xc] sm:$0x3] %vm517, %v1854
    %v1857 = vld [vmem:[#allocation9] sm:$0xff]
    %v1858 = vld [vmem:[#allocation9 + $0x8] sm:$0xff]
    %v1859 = vld [vmem:[#allocation9 + $0x10] sm:$0xff]
    %v1860 = vld [vmem:[#allocation9 + $0x18] sm:$0xff]
    %1861 = vmatpush.msra.mxu0 0.0
    %1862 = vmatpush.msra.mxu0 0.0
    %1863 = vmatpush.msra.mxu0 0.0
    %1864 = vmatpush.msra.mxu0 0.0
    %1865 = vmatpush.msra.mxu0 0.0
    %1866 = vmatpush.msra.mxu0 0.0
    %1867 = vmatpush.msra.mxu0 0.0
    %1868 = vmatpush.msra.mxu0 0.0
    %1869 = vmatpush.msra.mxu0 0.0
    %1870 = vmatpush.msra.mxu0 0.0
    %1871 = vmatpush.msra.mxu0 0.0
    %1872 = vmatpush.msra.mxu0 0.0
    %1873 = vmatpush.msra.mxu0 %v1860
    %1874 = vmatpush.msra.mxu0 %v1859
    %1875 = vmatpush.msra.mxu0 %v1858
    %1876 = vmatpush.msra.mxu0 %v1857
    %1877 = vmatmul.f32.gmra.mxu0 %v1759
    %v1878 = vpop.f32.mrf.mxu0
    %v1879 = vadd.f32 0.0, %v1878
    %1880 = vdwg.mxu0
    %v1881 = vld [vmem:[#allocation2 + $0xe] sm:$0x3]
    %v1882 = vadd.f32 %v1881, %v1879
    %v1883 = vtanh.pop %v1882
    %v1884 = vxor.u32 %v1882, 2147483648
    %v1885 = vmul.f32 %v1884, 1.442695
    %v1886 = vpow.pop %v1885
    %v1887 = vadd.f32 %v1886, 1.0
    %v1888 = vrcp.pop %v1887
    %v1889 = vmul.f32 %v1887, %v1888
    %v1890 = vsub.f32 1.0, %v1889
    %v1891 = vmul.f32 %v1888, %v1890
    %v1892 = vadd.f32 %v1888, %v1891
    %vm1893 = vweird.f32 %v1887
    %vm1894 = vweird.f32 %v1888
    %vm1895 = vmor %vm1893, %vm1894
    %v1896 = vsel %vm1895, %v1888, %v1892
    %v1897 = vand.u32 2147483647, %v1887
    %vm1898 = vcmp.eq.f32.partialorder %v1897, 8.507059e+37
    %v1899 = vand.u32 %v1887, 2147483648
    %v1900 = vor.u32 1.1754944e-38, %v1899
    %v1901 = vsel %vm1898, %v1900, %v1896
    %v1902 = vmul.f32 1.0, %v1901
    %v1903 = vadd.f32 %v1882, %v1685
    %1905 = vrot.lane.b32.xlu0 %v1882, 32
    %v1906 = vpop.permute.xlu0 %1905
    %v1908 = vmax.f32 %v1903, %v1906
    %1910 = vrot.lane.b32.xlu0 %v1908, 96
    %v1911 = vpop.permute.xlu0 %1910
    %v1913 = vsub.f32 %v1882, %v1911
    %v1914 = vmul.f32 %v1913, 1.442695
    %v1915 = vpow.pop %v1914
    %v1916 = vsub.f32 %v1903, %v1908
    %v1917 = vmul.f32 %v1916, 1.442695
    %v1918 = vpow.pop %v1917
    %v1919 = vmul.f32 %v1918, %v1706
    %1921 = vrot.lane.b32.xlu0 %v1883, 64
    %v1922 = vpop.permute.xlu0 %1921
    %v1924 = vmul.f32 %v1915, %v1922
    %1926 = vrot.lane.b32.xlu0 %v1924, 32
    %v1927 = vpop.permute.xlu0 %1926
    %v1929 = vadd.f32 %v1919, %v1927
    %v1930 = vmul.f32 %v1918, %v1712
    %1932 = vrot.lane.b32.xlu0 %v1915, 32
    %v1933 = vpop.permute.xlu0 %1932
    %v1935 = vadd.f32 %v1930, %v1933
    %1937 = vrot.lane.b32.xlu0 %v1929, 64
    %v1938 = vpop.permute.xlu0 %1937
    %v1940 = vmul.f32 %v1902, %v1938
    %v1941 = vand.u32 2147483647, %v1935
    %v1942 = vmax.f32 %v1941, 1.0
    %v1943 = vrcp.pop %v1942
    %1945 = vrot.lane.b32.xlu0 %v1943, 64
    %v1946 = vpop.permute.xlu0 %1945
    %v1948 = vmul.f32 %v1940, %v1946
    %v1949 = vld [vmem:[%s387] sm:$0xff]
    %v1950 = vld [vmem:[%s387 + $0x8] sm:$0xff]
    %v1951 = vld [vmem:[%s387 + $0x10] sm:$0xff]
    %v1952 = vld [vmem:[%s387 + $0x18] sm:$0xff]
    %v1953 = vsel %vm174, %v1854, 0
    %1955 = vmatpush.msra.mxu0 0.0
    %1956 = vmatpush.msra.mxu0 0.0
    %1957 = vmatpush.msra.mxu0 0.0
    %1958 = vmatpush.msra.mxu0 0.0
    %1959 = vmatpush.msra.mxu0 0.0
    %1960 = vmatpush.msra.mxu0 0.0
    %1961 = vmatpush.msra.mxu0 0.0
    %1962 = vmatpush.msra.mxu0 0.0
    %1963 = vmatpush.msra.mxu0 0.0
    %1964 = vmatpush.msra.mxu0 0.0
    %1965 = vmatpush.msra.mxu0 0.0
    %1966 = vmatpush.msra.mxu0 0.0
    %1967 = vmatpush.msra.mxu0 %v1952
    %1968 = vmatpush.msra.mxu0 %v1951
    %1969 = vmatpush.msra.mxu0 %v1950
    %1970 = vmatpush.msra.mxu0 %v1949
    %1971 = vmatmul.f32.gmra.mxu0 %v1953
    %v1972 = vpop.f32.mrf.mxu0
    %v1973 = vadd.f32 0.0, %v1972
    %1974 = vdwg.mxu0
    %v1975 = vld [vmem:[%s412] sm:$0xff]
    %v1976 = vld [vmem:[%s412 + $0x8] sm:$0xff]
    %v1977 = vld [vmem:[%s412 + $0x10] sm:$0xff]
    %v1978 = vld [vmem:[%s412 + $0x18] sm:$0xff]
    %1980 = vrot.lane.b32.xlu0 %v1948, 32
    %v1981 = vpop.permute.xlu0 %1980
    %v1982 = vsel %vm174, %v1981, 0
    %1984 = vmatpush.msra.mxu0 0.0
    %1985 = vmatpush.msra.mxu0 0.0
    %1986 = vmatpush.msra.mxu0 0.0
    %1987 = vmatpush.msra.mxu0 0.0
    %1988 = vmatpush.msra.mxu0 0.0
    %1989 = vmatpush.msra.mxu0 0.0
    %1990 = vmatpush.msra.mxu0 0.0
    %1991 = vmatpush.msra.mxu0 0.0
    %1992 = vmatpush.msra.mxu0 0.0
    %1993 = vmatpush.msra.mxu0 0.0
    %1994 = vmatpush.msra.mxu0 0.0
    %1995 = vmatpush.msra.mxu0 0.0
    %1996 = vmatpush.msra.mxu0 %v1978
    %1997 = vmatpush.msra.mxu0 %v1977
    %1998 = vmatpush.msra.mxu0 %v1976
    %1999 = vmatpush.msra.mxu0 %v1975
    %2000 = vmatmul.f32.gmra.mxu0 %v1982
    %v2001 = vpop.f32.mrf.mxu0
    %v2002 = vadd.f32 %v1973, %v2001
    %2003 = vdwg.mxu0
    %v2004 = vld [vmem:[%s442] sm:$0x1]
    %v2006 = vperm.slane %v2004, 0
    %v2008 = vadd.f32 %v2002, %v2006
    %v2009 = vtanh.pop %v2008
    %v2010 = vxor.u32 %v2008, 2147483648
    %v2011 = vmul.f32 %v2010, 1.442695
    %v2012 = vpow.pop %v2011
    %v2013 = vadd.f32 %v2012, 1.0
    %v2014 = vrcp.pop %v2013
    %v2015 = vmul.f32 %v2013, %v2014
    %v2016 = vsub.f32 1.0, %v2015
    %v2017 = vmul.f32 %v2014, %v2016
    %v2018 = vadd.f32 %v2014, %v2017
    %vm2019 = vweird.f32 %v2013
    %vm2020 = vweird.f32 %v2014
    %vm2021 = vmor %vm2019, %vm2020
    %v2022 = vsel %vm2021, %v2014, %v2018
    %v2023 = vand.u32 2147483647, %v2013
    %vm2024 = vcmp.eq.f32.partialorder %v2023, 8.507059e+37
    %v2025 = vand.u32 %v2013, 2147483648
    %v2026 = vor.u32 1.1754944e-38, %v2025
    %v2027 = vsel %vm2024, %v2026, %v2022
    %v2028 = vmul.f32 1.0, %v2027
    %v2029 = vadd.f32 %v2008, %v1811
    %2031 = vrot.lane.b32.xlu0 %v2008, 32
    %v2032 = vpop.permute.xlu0 %2031
    %v2034 = vmax.f32 %v2029, %v2032
    %2036 = vrot.lane.b32.xlu0 %v2034, 96
    %v2037 = vpop.permute.xlu0 %2036
    %v2039 = vsub.f32 %v2008, %v2037
    %v2040 = vmul.f32 %v2039, 1.442695
    %v2041 = vpow.pop %v2040
    %v2042 = vsub.f32 %v2029, %v2034
    %v2043 = vmul.f32 %v2042, 1.442695
    %v2044 = vpow.pop %v2043
    %v2045 = vmul.f32 %v2044, %v1832
    %2047 = vrot.lane.b32.xlu0 %v2009, 64
    %v2048 = vpop.permute.xlu0 %2047
    %v2050 = vmul.f32 %v2041, %v2048
    %2052 = vrot.lane.b32.xlu0 %v2050, 32
    %v2053 = vpop.permute.xlu0 %2052
    %v2055 = vadd.f32 %v2045, %v2053
    %v2056 = vmul.f32 %v2044, %v1838
    %2058 = vrot.lane.b32.xlu0 %v2041, 32
    %v2059 = vpop.permute.xlu0 %2058
    %v2061 = vadd.f32 %v2056, %v2059
    %2063 = vrot.lane.b32.xlu0 %v2055, 64
    %v2064 = vpop.permute.xlu0 %2063
    %v2066 = vmul.f32 %v2028, %v2064
    %v2067 = vand.u32 2147483647, %v2061
    %v2068 = vmax.f32 %v2067, 1.0
    %v2069 = vrcp.pop %v2068
    %2071 = vrot.lane.b32.xlu0 %v2069, 64
    %v2072 = vpop.permute.xlu0 %2071
    %v2074 = vmul.f32 %v2066, %v2072
    %2076 = vrot.lane.b32.xlu0 %v2074, 32
    %v2077 = vpop.permute.xlu0 %2076
    %2079 = vst.msk [vmem:[#allocation3 + $0xe] sm:$0x3] %vm517, %v2077
    %v2080 = vld [vmem:[#allocation3] sm:$0xff]
    %v2081 = vld [vmem:[#allocation3 + $0x8] sm:$0xff]
    %v2082 = vmul.f32 %v2080, 0.5
    %v2083 = vmul.f32 %v2081, 0.5
    %v2084 = vmul.f32 %v2080, 0.044715
    %v2085 = vmul.f32 %v2081, 0.044715
    %v2086 = vmul.f32 %v2084, %v2080
    %v2087 = vmul.f32 %v2085, %v2081
    %v2088 = vmul.f32 %v2086, %v2080
    %v2089 = vmul.f32 %v2087, %v2081
    %v2090 = vadd.f32 %v2080, %v2088
    %v2091 = vadd.f32 %v2081, %v2089
    %v2092 = vmul.f32 %v2090, 0.7978846
    %v2093 = vmul.f32 %v2091, 0.7978846
    %v2094 = vtanh.pop %v2092
    %v2095 = vtanh.pop %v2093
    %v2096 = vadd.f32 %v2094, 1.0
    %v2097 = vadd.f32 %v2095, 1.0
    %v2098 = vmul.f32 %v2082, %v2096
    %v2099 = vmul.f32 %v2083, %v2097
    %v2100 = vadd.f32 %v2098, %v252
    %v2101 = vadd.f32 %v2099, %v253
    %v2102 = vld [vmem:[%s8] sm:$0x1]
    %v2103 = vld [vmem:[%s9] sm:$0x1]
    %v2104 = vsel %vm174, %v2100, 0.0
    %2105 = vadd.xlane.f32.xlu0 %v2104
    %v2106 = vpop.xlane.xlu0 %2105
    %v2107 = vsel %vm174, %v2101, 0.0
    %2108 = vadd.xlane.f32.xlu0 %v2107
    %v2109 = vpop.xlane.xlu0 %2108
    %v2110 = vmul.f32 %v2106, %v187
    %v2111 = vmul.f32 %v2109, %v187
    %v2112 = vsub.f32 %v2100, %v2110
    %v2113 = vsub.f32 %v2101, %v2111
    %v2114 = vmul.f32 %v2112, %v2112
    %v2115 = vmul.f32 %v2113, %v2113
    %v2116 = vsel %vm174, %v2114, 0.0
    %2117 = vadd.xlane.f32.xlu0 %v2116
    %v2118 = vpop.xlane.xlu0 %2117
    %v2119 = vsel %vm174, %v2115, 0.0
    %2120 = vadd.xlane.f32.xlu0 %v2119
    %v2121 = vpop.xlane.xlu0 %2120
    %v2122 = vmul.f32 %v2118, %v187
    %v2123 = vmul.f32 %v2121, %v187
    %v2124 = vadd.f32 %v2122, 1e-05
    %v2125 = vadd.f32 %v2123, 1e-05
    %v2126 = vrsqrt.pop %v2124
    %v2127 = vmul.f32 %v2126, %v2124
    %v2128 = vmul.f32 %v2127, %v2126
    %v2129 = vmul.f32 0.5, %v2128
    %v2130 = vsub.f32 1.5, %v2129
    %v2131 = vmul.f32 %v2126, %v2130
    %vm2132 = vweird.f32 %v2124
    %vm2133 = vweird.f32 %v2126
    %vm2134 = vmor %vm2132, %vm2133
    %v2135 = vsel %vm2134, %v2126, %v2131
    %v2136 = vrsqrt.pop %v2125
    %v2137 = vmul.f32 %v2136, %v2125
    %v2138 = vmul.f32 %v2137, %v2136
    %v2139 = vmul.f32 0.5, %v2138
    %v2140 = vsub.f32 1.5, %v2139
    %v2141 = vmul.f32 %v2136, %v2140
    %vm2142 = vweird.f32 %v2125
    %vm2143 = vweird.f32 %v2136
    %vm2144 = vmor %vm2142, %vm2143
    %v2145 = vsel %vm2144, %v2136, %v2141
    %v2146 = vmul.f32 %v2112, %v2135
    %v2147 = vmul.f32 %v2113, %v2145
    %v2149 = vperm.slane %v2102, 0
    %v2151 = vmul.f32 %v2146, %v2149
    %v2152 = vmul.f32 %v2147, %v2149
    %v2154 = vperm.slane %v2103, 0
    %v2156 = vadd.f32 %v2151, %v2154
    %v2157 = vadd.f32 %v2152, %v2154
    %2159 = vst.msk [vmem:[#allocation11] sm:$0x3] %vm517, %v1981
    %2160 = vrot.lane.b32.xlu0 %v1929, 96
    %v2161 = vpop.permute.xlu0 %2160
    %2163 = vst.msk [vmem:[#allocation12] sm:$0x3] %vm517, %v2161
    %2165 = vrot.lane.b32.xlu0 %v1935, 96
    %v2166 = vpop.permute.xlu0 %2165
    %2168 = vst.msk [vmem:[#allocation14] sm:$0x3] %vm517, %v2166
    %2169 = vst.msk [vmem:[#allocation15] sm:$0x3] %vm517, %v1911
    %s2170 = scalar_lea.vmem [#allocation11], 2
    %2171 = vst.msk [vmem:[%s2170] sm:$0x3] %vm517, %v2077
    %2172 = vrot.lane.b32.xlu0 %v2055, 96
    %v2173 = vpop.permute.xlu0 %2172
    %s2175 = scalar_lea.vmem [#allocation12], 2
    %2176 = vst.msk [vmem:[%s2175] sm:$0x3] %vm517, %v2173
    %2178 = vrot.lane.b32.xlu0 %v2061, 96
    %v2179 = vpop.permute.xlu0 %2178
    %s2181 = scalar_lea.vmem [#allocation14], 2
    %2182 = vst.msk [vmem:[%s2181] sm:$0x3] %vm517, %v2179
    %s2183 = scalar_lea.vmem [#allocation15], 2
    %2184 = vst.msk [vmem:[%s2183] sm:$0x3] %vm517, %v2037
    %s2185 = scalar_lea.vmem [#allocation6], 64
    %v2186 = vld [vmem:[%s2185] sm:$0xff]
    %v2187 = vld [vmem:[%s2185 + $0x8] sm:$0xff]
    %v2188 = vld [vmem:[%s2185 + $0x10] sm:$0xff]
    %v2189 = vld [vmem:[%s2185 + $0x18] sm:$0xff]
    %s2190 = scalar_lea.vmem %s7, 2
    %v2191 = vld [vmem:[%s2190] sm:$0x1]
    %v2193 = vperm.slane %v2191, 0
    %v2196 = vsel %vm174, %v2156, 0
    %v2199 = vsel %vm174, %v2157, 0
    %2201 = vmatpush.msra.mxu0 0.0
    %2202 = vmatpush.msra.mxu0 0.0
    %2203 = vmatpush.msra.mxu0 0.0
    %2204 = vmatpush.msra.mxu0 0.0
    %2205 = vmatpush.msra.mxu0 0.0
    %2206 = vmatpush.msra.mxu0 0.0
    %2207 = vmatpush.msra.mxu0 0.0
    %2208 = vmatpush.msra.mxu0 0.0
    %2209 = vmatpush.msra.mxu0 0.0
    %2210 = vmatpush.msra.mxu0 0.0
    %2211 = vmatpush.msra.mxu0 0.0
    %2212 = vmatpush.msra.mxu0 0.0
    %2213 = vmatpush.msra.mxu0 %v2189
    %2214 = vmatpush.msra.mxu0 %v2188
    %2215 = vmatpush.msra.mxu0 %v2187
    %2216 = vmatpush.msra.mxu0 %v2186
    %2217 = vmatmul.f32.gmra.mxu0 %v2196
    %v2218 = vpop.f32.mrf.mxu0
    %v2219 = vadd.f32 %v2193, %v2218
    %2220 = vmatmul.f32.gmra.mxu0 %v2199
    %v2221 = vpop.f32.mrf.mxu0
    %v2222 = vadd.f32 %v2193, %v2221
    %2223 = vdwg.mxu0
    %2224 = vst [vmem:[#allocation2] sm:$0xff] %v2219
    %2225 = vst [vmem:[#allocation2 + $0x8] sm:$0xff] %v2222
    %s2226 = scalar_lea.vmem [#allocation9], 64
    %v2227 = vld [vmem:[%s2226] sm:$0xff]
    %v2228 = vld [vmem:[%s2226 + $0x8] sm:$0xff]
    %v2229 = vld [vmem:[%s2226 + $0x10] sm:$0xff]
    %v2230 = vld [vmem:[%s2226 + $0x18] sm:$0xff]
    %2231 = vmatpush.msra.mxu0 0.0
    %2232 = vmatpush.msra.mxu0 0.0
    %2233 = vmatpush.msra.mxu0 0.0
    %2234 = vmatpush.msra.mxu0 0.0
    %2235 = vmatpush.msra.mxu0 0.0
    %2236 = vmatpush.msra.mxu0 0.0
    %2237 = vmatpush.msra.mxu0 0.0
    %2238 = vmatpush.msra.mxu0 0.0
    %2239 = vmatpush.msra.mxu0 0.0
    %2240 = vmatpush.msra.mxu0 0.0
    %2241 = vmatpush.msra.mxu0 0.0
    %2242 = vmatpush.msra.mxu0 0.0
    %2243 = vmatpush.msra.mxu0 %v2230
    %2244 = vmatpush.msra.mxu0 %v2229
    %2245 = vmatpush.msra.mxu0 %v2228
    %2246 = vmatpush.msra.mxu0 %v2227
    %2247 = vmatmul.f32.gmra.mxu0 %v298
    %v2248 = vpop.f32.mrf.mxu0
    %v2249 = vadd.f32 0.0, %v2248
    %2250 = vdwg.mxu0
    %v2251 = vld [vmem:[#allocation2] sm:$0x3]
    %v2252 = vadd.f32 %v2251, %v2249
    %v2253 = vtanh.pop %v2252
    %v2254 = vxor.u32 %v2252, 2147483648
    %v2255 = vmul.f32 %v2254, 1.442695
    %v2256 = vpow.pop %v2255
    %v2257 = vadd.f32 %v2256, 1.0
    %v2258 = vrcp.pop %v2257
    %v2259 = vmul.f32 %v2257, %v2258
    %v2260 = vsub.f32 1.0, %v2259
    %v2261 = vmul.f32 %v2258, %v2260
    %v2262 = vadd.f32 %v2258, %v2261
    %vm2263 = vweird.f32 %v2257
    %vm2264 = vweird.f32 %v2258
    %vm2265 = vmor %vm2263, %vm2264
    %v2266 = vsel %vm2265, %v2258, %v2262
    %v2267 = vand.u32 2147483647, %v2257
    %vm2268 = vcmp.eq.f32.partialorder %v2267, 8.507059e+37
    %v2269 = vand.u32 %v2257, 2147483648
    %v2270 = vor.u32 1.1754944e-38, %v2269
    %v2271 = vsel %vm2268, %v2270, %v2266
    %v2272 = vmul.f32 1.0, %v2271
    %v2273 = vadd.f32 %v2252, 0.0
    %2275 = vrot.lane.b32.xlu0 %v2252, 32
    %v2276 = vpop.permute.xlu0 %2275
    %v2278 = vmax.f32 %v2273, %v2276
    %2280 = vrot.lane.b32.xlu0 %v2278, 96
    %v2281 = vpop.permute.xlu0 %2280
    %v2283 = vsub.f32 %v2252, %v2281
    %v2284 = vmul.f32 %v2283, 1.442695
    %v2285 = vpow.pop %v2284
    %v2286 = vsub.f32 %v2273, %v2278
    %v2287 = vmul.f32 %v2286, 1.442695
    %v2288 = vpow.pop %v2287
    %v2289 = vmul.f32 %v2288, 0.0
    %2291 = vrot.lane.b32.xlu0 %v2253, 64
    %v2292 = vpop.permute.xlu0 %2291
    %v2294 = vmul.f32 %v2285, %v2292
    %2296 = vrot.lane.b32.xlu0 %v2294, 32
    %v2297 = vpop.permute.xlu0 %2296
    %v2299 = vadd.f32 %v2289, %v2297
    %2301 = vrot.lane.b32.xlu0 %v2285, 32
    %v2302 = vpop.permute.xlu0 %2301
    %v2304 = vadd.f32 %v2289, %v2302
    %2306 = vrot.lane.b32.xlu0 %v2299, 64
    %v2307 = vpop.permute.xlu0 %2306
    %v2309 = vmul.f32 %v2272, %v2307
    %v2310 = vand.u32 2147483647, %v2304
    %v2311 = vmax.f32 %v2310, 1.0
    %v2312 = vrcp.pop %v2311
    %2314 = vrot.lane.b32.xlu0 %v2312, 64
    %v2315 = vpop.permute.xlu0 %2314
    %v2317 = vmul.f32 %v2309, %v2315
    %s2318 = scalar_lea.vmem [#allocation9], 96
    %v2319 = vld [vmem:[%s2318] sm:$0xff]
    %v2320 = vld [vmem:[%s2318 + $0x8] sm:$0xff]
    %v2321 = vld [vmem:[%s2318 + $0x10] sm:$0xff]
    %v2322 = vld [vmem:[%s2318 + $0x18] sm:$0xff]
    %2323 = vmatpush.msra.mxu0 0.0
    %2324 = vmatpush.msra.mxu0 0.0
    %2325 = vmatpush.msra.mxu0 0.0
    %2326 = vmatpush.msra.mxu0 0.0
    %2327 = vmatpush.msra.mxu0 0.0
    %2328 = vmatpush.msra.mxu0 0.0
    %2329 = vmatpush.msra.mxu0 0.0
    %2330 = vmatpush.msra.mxu0 0.0
    %2331 = vmatpush.msra.mxu0 0.0
    %2332 = vmatpush.msra.mxu0 0.0
    %2333 = vmatpush.msra.mxu0 0.0
    %2334 = vmatpush.msra.mxu0 0.0
    %2335 = vmatpush.msra.mxu0 %v2322
    %2336 = vmatpush.msra.mxu0 %v2321
    %2337 = vmatpush.msra.mxu0 %v2320
    %2338 = vmatpush.msra.mxu0 %v2319
    %2339 = vmatmul.f32.gmra.mxu0 %v298
    %v2340 = vpop.f32.mrf.mxu0
    %v2341 = vadd.f32 0.0, %v2340
    %2342 = vdwg.mxu0
    %s2343 = scalar_lea.vmem [#allocation6], 96
    %v2344 = vld [vmem:[%s2343] sm:$0xff]
    %v2345 = vld [vmem:[%s2343 + $0x8] sm:$0xff]
    %v2346 = vld [vmem:[%s2343 + $0x10] sm:$0xff]
    %v2347 = vld [vmem:[%s2343 + $0x18] sm:$0xff]
    %2349 = vrot.lane.b32.xlu0 %v2317, 32
    %v2350 = vpop.permute.xlu0 %2349
    %v2351 = vsel %vm174, %v2350, 0
    %2353 = vmatpush.msra.mxu0 0.0
    %2354 = vmatpush.msra.mxu0 0.0
    %2355 = vmatpush.msra.mxu0 0.0
    %2356 = vmatpush.msra.mxu0 0.0
    %2357 = vmatpush.msra.mxu0 0.0
    %2358 = vmatpush.msra.mxu0 0.0
    %2359 = vmatpush.msra.mxu0 0.0
    %2360 = vmatpush.msra.mxu0 0.0
    %2361 = vmatpush.msra.mxu0 0.0
    %2362 = vmatpush.msra.mxu0 0.0
    %2363 = vmatpush.msra.mxu0 0.0
    %2364 = vmatpush.msra.mxu0 0.0
    %2365 = vmatpush.msra.mxu0 %v2347
    %2366 = vmatpush.msra.mxu0 %v2346
    %2367 = vmatpush.msra.mxu0 %v2345
    %2368 = vmatpush.msra.mxu0 %v2344
    %2369 = vmatmul.f32.gmra.mxu0 %v2351
    %v2370 = vpop.f32.mrf.mxu0
    %v2371 = vadd.f32 %v2341, %v2370
    %2372 = vdwg.mxu0
    %s2373 = scalar_lea.vmem %s7, 3
    %v2374 = vld [vmem:[%s2373] sm:$0x1]
    %v2376 = vperm.slane %v2374, 0
    %v2378 = vadd.f32 %v2371, %v2376
    %v2379 = vtanh.pop %v2378
    %v2380 = vxor.u32 %v2378, 2147483648
    %v2381 = vmul.f32 %v2380, 1.442695
    %v2382 = vpow.pop %v2381
    %v2383 = vadd.f32 %v2382, 1.0
    %v2384 = vrcp.pop %v2383
    %v2385 = vmul.f32 %v2383, %v2384
    %v2386 = vsub.f32 1.0, %v2385
    %v2387 = vmul.f32 %v2384, %v2386
    %v2388 = vadd.f32 %v2384, %v2387
    %vm2389 = vweird.f32 %v2383
    %vm2390 = vweird.f32 %v2384
    %vm2391 = vmor %vm2389, %vm2390
    %v2392 = vsel %vm2391, %v2384, %v2388
    %v2393 = vand.u32 2147483647, %v2383
    %vm2394 = vcmp.eq.f32.partialorder %v2393, 8.507059e+37
    %v2395 = vand.u32 %v2383, 2147483648
    %v2396 = vor.u32 1.1754944e-38, %v2395
    %v2397 = vsel %vm2394, %v2396, %v2392
    %v2398 = vmul.f32 1.0, %v2397
    %v2399 = vadd.f32 %v2378, 0.0
    %2401 = vrot.lane.b32.xlu0 %v2378, 32
    %v2402 = vpop.permute.xlu0 %2401
    %v2404 = vmax.f32 %v2399, %v2402
    %2406 = vrot.lane.b32.xlu0 %v2404, 96
    %v2407 = vpop.permute.xlu0 %2406
    %v2409 = vsub.f32 %v2378, %v2407
    %v2410 = vmul.f32 %v2409, 1.442695
    %v2411 = vpow.pop %v2410
    %v2412 = vsub.f32 %v2399, %v2404
    %v2413 = vmul.f32 %v2412, 1.442695
    %v2414 = vpow.pop %v2413
    %v2415 = vmul.f32 %v2414, 0.0
    %2417 = vrot.lane.b32.xlu0 %v2379, 64
    %v2418 = vpop.permute.xlu0 %2417
    %v2420 = vmul.f32 %v2411, %v2418
    %2422 = vrot.lane.b32.xlu0 %v2420, 32
    %v2423 = vpop.permute.xlu0 %2422
    %v2425 = vadd.f32 %v2415, %v2423
    %2427 = vrot.lane.b32.xlu0 %v2411, 32
    %v2428 = vpop.permute.xlu0 %2427
    %v2430 = vadd.f32 %v2415, %v2428
    %2432 = vrot.lane.b32.xlu0 %v2425, 64
    %v2433 = vpop.permute.xlu0 %2432
    %v2435 = vmul.f32 %v2398, %v2433
    %v2436 = vand.u32 2147483647, %v2430
    %v2437 = vmax.f32 %v2436, 1.0
    %v2438 = vrcp.pop %v2437
    %2440 = vrot.lane.b32.xlu0 %v2438, 64
    %v2441 = vpop.permute.xlu0 %2440
    %v2443 = vmul.f32 %v2435, %v2441
    %2445 = vrot.lane.b32.xlu0 %v2443, 32
    %v2446 = vpop.permute.xlu0 %2445
    %2448 = vst.msk [vmem:[#allocation3] sm:$0x3] %vm517, %v2446
    %v2449 = vld [vmem:[%s2226] sm:$0xff]
    %v2450 = vld [vmem:[%s2226 + $0x8] sm:$0xff]
    %v2451 = vld [vmem:[%s2226 + $0x10] sm:$0xff]
    %v2452 = vld [vmem:[%s2226 + $0x18] sm:$0xff]
    %2453 = vmatpush.msra.mxu0 0.0
    %2454 = vmatpush.msra.mxu0 0.0
    %2455 = vmatpush.msra.mxu0 0.0
    %2456 = vmatpush.msra.mxu0 0.0
    %2457 = vmatpush.msra.mxu0 0.0
    %2458 = vmatpush.msra.mxu0 0.0
    %2459 = vmatpush.msra.mxu0 0.0
    %2460 = vmatpush.msra.mxu0 0.0
    %2461 = vmatpush.msra.mxu0 0.0
    %2462 = vmatpush.msra.mxu0 0.0
    %2463 = vmatpush.msra.mxu0 0.0
    %2464 = vmatpush.msra.mxu0 0.0
    %2465 = vmatpush.msra.mxu0 %v2452
    %2466 = vmatpush.msra.mxu0 %v2451
    %2467 = vmatpush.msra.mxu0 %v2450
    %2468 = vmatpush.msra.mxu0 %v2449
    %2469 = vmatmul.f32.gmra.mxu0 %v2351
    %v2470 = vpop.f32.mrf.mxu0
    %v2471 = vadd.f32 0.0, %v2470
    %2472 = vdwg.mxu0
    %v2473 = vld [vmem:[#allocation2 + $0x2] sm:$0x3]
    %v2474 = vadd.f32 %v2473, %v2471
    %v2475 = vtanh.pop %v2474
    %v2476 = vxor.u32 %v2474, 2147483648
    %v2477 = vmul.f32 %v2476, 1.442695
    %v2478 = vpow.pop %v2477
    %v2479 = vadd.f32 %v2478, 1.0
    %v2480 = vrcp.pop %v2479
    %v2481 = vmul.f32 %v2479, %v2480
    %v2482 = vsub.f32 1.0, %v2481
    %v2483 = vmul.f32 %v2480, %v2482
    %v2484 = vadd.f32 %v2480, %v2483
    %vm2485 = vweird.f32 %v2479
    %vm2486 = vweird.f32 %v2480
    %vm2487 = vmor %vm2485, %vm2486
    %v2488 = vsel %vm2487, %v2480, %v2484
    %v2489 = vand.u32 2147483647, %v2479
    %vm2490 = vcmp.eq.f32.partialorder %v2489, 8.507059e+37
    %v2491 = vand.u32 %v2479, 2147483648
    %v2492 = vor.u32 1.1754944e-38, %v2491
    %v2493 = vsel %vm2490, %v2492, %v2488
    %v2494 = vmul.f32 1.0, %v2493
    %v2495 = vadd.f32 %v2474, %v2278
    %2497 = vrot.lane.b32.xlu0 %v2474, 32
    %v2498 = vpop.permute.xlu0 %2497
    %v2500 = vmax.f32 %v2495, %v2498
    %2502 = vrot.lane.b32.xlu0 %v2500, 96
    %v2503 = vpop.permute.xlu0 %2502
    %v2505 = vsub.f32 %v2474, %v2503
    %v2506 = vmul.f32 %v2505, 1.442695
    %v2507 = vpow.pop %v2506
    %v2508 = vsub.f32 %v2495, %v2500
    %v2509 = vmul.f32 %v2508, 1.442695
    %v2510 = vpow.pop %v2509
    %v2511 = vmul.f32 %v2510, %v2299
    %2513 = vrot.lane.b32.xlu0 %v2475, 64
    %v2514 = vpop.permute.xlu0 %2513
    %v2516 = vmul.f32 %v2507, %v2514
    %2518 = vrot.lane.b32.xlu0 %v2516, 32
    %v2519 = vpop.permute.xlu0 %2518
    %v2521 = vadd.f32 %v2511, %v2519
    %v2522 = vmul.f32 %v2510, %v2304
    %2524 = vrot.lane.b32.xlu0 %v2507, 32
    %v2525 = vpop.permute.xlu0 %2524
    %v2527 = vadd.f32 %v2522, %v2525
    %2529 = vrot.lane.b32.xlu0 %v2521, 64
    %v2530 = vpop.permute.xlu0 %2529
    %v2532 = vmul.f32 %v2494, %v2530
    %v2533 = vand.u32 2147483647, %v2527
    %v2534 = vmax.f32 %v2533, 1.0
    %v2535 = vrcp.pop %v2534
    %2537 = vrot.lane.b32.xlu0 %v2535, 64
    %v2538 = vpop.permute.xlu0 %2537
    %v2540 = vmul.f32 %v2532, %v2538
    %v2541 = vld [vmem:[%s2318] sm:$0xff]
    %v2542 = vld [vmem:[%s2318 + $0x8] sm:$0xff]
    %v2543 = vld [vmem:[%s2318 + $0x10] sm:$0xff]
    %v2544 = vld [vmem:[%s2318 + $0x18] sm:$0xff]
    %v2545 = vsel %vm174, %v2446, 0
    %2547 = vmatpush.msra.mxu0 0.0
    %2548 = vmatpush.msra.mxu0 0.0
    %2549 = vmatpush.msra.mxu0 0.0
    %2550 = vmatpush.msra.mxu0 0.0
    %2551 = vmatpush.msra.mxu0 0.0
    %2552 = vmatpush.msra.mxu0 0.0
    %2553 = vmatpush.msra.mxu0 0.0
    %2554 = vmatpush.msra.mxu0 0.0
    %2555 = vmatpush.msra.mxu0 0.0
    %2556 = vmatpush.msra.mxu0 0.0
    %2557 = vmatpush.msra.mxu0 0.0
    %2558 = vmatpush.msra.mxu0 0.0
    %2559 = vmatpush.msra.mxu0 %v2544
    %2560 = vmatpush.msra.mxu0 %v2543
    %2561 = vmatpush.msra.mxu0 %v2542
    %2562 = vmatpush.msra.mxu0 %v2541
    %2563 = vmatmul.f32.gmra.mxu0 %v2545
    %v2564 = vpop.f32.mrf.mxu0
    %v2565 = vadd.f32 0.0, %v2564
    %2566 = vdwg.mxu0
    %v2567 = vld [vmem:[%s2343] sm:$0xff]
    %v2568 = vld [vmem:[%s2343 + $0x8] sm:$0xff]
    %v2569 = vld [vmem:[%s2343 + $0x10] sm:$0xff]
    %v2570 = vld [vmem:[%s2343 + $0x18] sm:$0xff]
    %2572 = vrot.lane.b32.xlu0 %v2540, 32
    %v2573 = vpop.permute.xlu0 %2572
    %v2574 = vsel %vm174, %v2573, 0
    %2576 = vmatpush.msra.mxu0 0.0
    %2577 = vmatpush.msra.mxu0 0.0
    %2578 = vmatpush.msra.mxu0 0.0
    %2579 = vmatpush.msra.mxu0 0.0
    %2580 = vmatpush.msra.mxu0 0.0
    %2581 = vmatpush.msra.mxu0 0.0
    %2582 = vmatpush.msra.mxu0 0.0
    %2583 = vmatpush.msra.mxu0 0.0
    %2584 = vmatpush.msra.mxu0 0.0
    %2585 = vmatpush.msra.mxu0 0.0
    %2586 = vmatpush.msra.mxu0 0.0
    %2587 = vmatpush.msra.mxu0 0.0
    %2588 = vmatpush.msra.mxu0 %v2570
    %2589 = vmatpush.msra.mxu0 %v2569
    %2590 = vmatpush.msra.mxu0 %v2568
    %2591 = vmatpush.msra.mxu0 %v2567
    %2592 = vmatmul.f32.gmra.mxu0 %v2574
    %v2593 = vpop.f32.mrf.mxu0
    %v2594 = vadd.f32 %v2565, %v2593
    %2595 = vdwg.mxu0
    %v2596 = vld [vmem:[%s2373] sm:$0x1]
    %v2598 = vperm.slane %v2596, 0
    %v2600 = vadd.f32 %v2594, %v2598
    %v2601 = vtanh.pop %v2600
    %v2602 = vxor.u32 %v2600, 2147483648
    %v2603 = vmul.f32 %v2602, 1.442695
    %v2604 = vpow.pop %v2603
    %v2605 = vadd.f32 %v2604, 1.0
    %v2606 = vrcp.pop %v2605
    %v2607 = vmul.f32 %v2605, %v2606
    %v2608 = vsub.f32 1.0, %v2607
    %v2609 = vmul.f32 %v2606, %v2608
    %v2610 = vadd.f32 %v2606, %v2609
    %vm2611 = vweird.f32 %v2605
    %vm2612 = vweird.f32 %v2606
    %vm2613 = vmor %vm2611, %vm2612
    %v2614 = vsel %vm2613, %v2606, %v2610
    %v2615 = vand.u32 2147483647, %v2605
    %vm2616 = vcmp.eq.f32.partialorder %v2615, 8.507059e+37
    %v2617 = vand.u32 %v2605, 2147483648
    %v2618 = vor.u32 1.1754944e-38, %v2617
    %v2619 = vsel %vm2616, %v2618, %v2614
    %v2620 = vmul.f32 1.0, %v2619
    %v2621 = vadd.f32 %v2600, %v2404
    %2623 = vrot.lane.b32.xlu0 %v2600, 32
    %v2624 = vpop.permute.xlu0 %2623
    %v2626 = vmax.f32 %v2621, %v2624
    %2628 = vrot.lane.b32.xlu0 %v2626, 96
    %v2629 = vpop.permute.xlu0 %2628
    %v2631 = vsub.f32 %v2600, %v2629
    %v2632 = vmul.f32 %v2631, 1.442695
    %v2633 = vpow.pop %v2632
    %v2634 = vsub.f32 %v2621, %v2626
    %v2635 = vmul.f32 %v2634, 1.442695
    %v2636 = vpow.pop %v2635
    %v2637 = vmul.f32 %v2636, %v2425
    %2639 = vrot.lane.b32.xlu0 %v2601, 64
    %v2640 = vpop.permute.xlu0 %2639
    %v2642 = vmul.f32 %v2633, %v2640
    %2644 = vrot.lane.b32.xlu0 %v2642, 32
    %v2645 = vpop.permute.xlu0 %2644
    %v2647 = vadd.f32 %v2637, %v2645
    %v2648 = vmul.f32 %v2636, %v2430
    %2650 = vrot.lane.b32.xlu0 %v2633, 32
    %v2651 = vpop.permute.xlu0 %2650
    %v2653 = vadd.f32 %v2648, %v2651
    %2655 = vrot.lane.b32.xlu0 %v2647, 64
    %v2656 = vpop.permute.xlu0 %2655
    %v2658 = vmul.f32 %v2620, %v2656
    %v2659 = vand.u32 2147483647, %v2653
    %v2660 = vmax.f32 %v2659, 1.0
    %v2661 = vrcp.pop %v2660
    %2663 = vrot.lane.b32.xlu0 %v2661, 64
    %v2664 = vpop.permute.xlu0 %2663
    %v2666 = vmul.f32 %v2658, %v2664
    %2668 = vrot.lane.b32.xlu0 %v2666, 32
    %v2669 = vpop.permute.xlu0 %2668
    %2671 = vst.msk [vmem:[#allocation3 + $0x2] sm:$0x3] %vm517, %v2669
    %v2672 = vld [vmem:[%s2226] sm:$0xff]
    %v2673 = vld [vmem:[%s2226 + $0x8] sm:$0xff]
    %v2674 = vld [vmem:[%s2226 + $0x10] sm:$0xff]
    %v2675 = vld [vmem:[%s2226 + $0x18] sm:$0xff]
    %2676 = vmatpush.msra.mxu0 0.0
    %2677 = vmatpush.msra.mxu0 0.0
    %2678 = vmatpush.msra.mxu0 0.0
    %2679 = vmatpush.msra.mxu0 0.0
    %2680 = vmatpush.msra.mxu0 0.0
    %2681 = vmatpush.msra.mxu0 0.0
    %2682 = vmatpush.msra.mxu0 0.0
    %2683 = vmatpush.msra.mxu0 0.0
    %2684 = vmatpush.msra.mxu0 0.0
    %2685 = vmatpush.msra.mxu0 0.0
    %2686 = vmatpush.msra.mxu0 0.0
    %2687 = vmatpush.msra.mxu0 0.0
    %2688 = vmatpush.msra.mxu0 %v2675
    %2689 = vmatpush.msra.mxu0 %v2674
    %2690 = vmatpush.msra.mxu0 %v2673
    %2691 = vmatpush.msra.mxu0 %v2672
    %2692 = vmatmul.f32.gmra.mxu0 %v2574
    %v2693 = vpop.f32.mrf.mxu0
    %v2694 = vadd.f32 0.0, %v2693
    %2695 = vdwg.mxu0
    %v2696 = vld [vmem:[#allocation2 + $0x4] sm:$0x3]
    %v2697 = vadd.f32 %v2696, %v2694
    %v2698 = vtanh.pop %v2697
    %v2699 = vxor.u32 %v2697, 2147483648
    %v2700 = vmul.f32 %v2699, 1.442695
    %v2701 = vpow.pop %v2700
    %v2702 = vadd.f32 %v2701, 1.0
    %v2703 = vrcp.pop %v2702
    %v2704 = vmul.f32 %v2702, %v2703
    %v2705 = vsub.f32 1.0, %v2704
    %v2706 = vmul.f32 %v2703, %v2705
    %v2707 = vadd.f32 %v2703, %v2706
    %vm2708 = vweird.f32 %v2702
    %vm2709 = vweird.f32 %v2703
    %vm2710 = vmor %vm2708, %vm2709
    %v2711 = vsel %vm2710, %v2703, %v2707
    %v2712 = vand.u32 2147483647, %v2702
    %vm2713 = vcmp.eq.f32.partialorder %v2712, 8.507059e+37
    %v2714 = vand.u32 %v2702, 2147483648
    %v2715 = vor.u32 1.1754944e-38, %v2714
    %v2716 = vsel %vm2713, %v2715, %v2711
    %v2717 = vmul.f32 1.0, %v2716
    %v2718 = vadd.f32 %v2697, %v2500
    %2720 = vrot.lane.b32.xlu0 %v2697, 32
    %v2721 = vpop.permute.xlu0 %2720
    %v2723 = vmax.f32 %v2718, %v2721
    %2725 = vrot.lane.b32.xlu0 %v2723, 96
    %v2726 = vpop.permute.xlu0 %2725
    %v2728 = vsub.f32 %v2697, %v2726
    %v2729 = vmul.f32 %v2728, 1.442695
    %v2730 = vpow.pop %v2729
    %v2731 = vsub.f32 %v2718, %v2723
    %v2732 = vmul.f32 %v2731, 1.442695
    %v2733 = vpow.pop %v2732
    %v2734 = vmul.f32 %v2733, %v2521
    %2736 = vrot.lane.b32.xlu0 %v2698, 64
    %v2737 = vpop.permute.xlu0 %2736
    %v2739 = vmul.f32 %v2730, %v2737
    %2741 = vrot.lane.b32.xlu0 %v2739, 32
    %v2742 = vpop.permute.xlu0 %2741
    %v2744 = vadd.f32 %v2734, %v2742
    %v2745 = vmul.f32 %v2733, %v2527
    %2747 = vrot.lane.b32.xlu0 %v2730, 32
    %v2748 = vpop.permute.xlu0 %2747
    %v2750 = vadd.f32 %v2745, %v2748
    %2752 = vrot.lane.b32.xlu0 %v2744, 64
    %v2753 = vpop.permute.xlu0 %2752
    %v2755 = vmul.f32 %v2717, %v2753
    %v2756 = vand.u32 2147483647, %v2750
    %v2757 = vmax.f32 %v2756, 1.0
    %v2758 = vrcp.pop %v2757
    %2760 = vrot.lane.b32.xlu0 %v2758, 64
    %v2761 = vpop.permute.xlu0 %2760
    %v2763 = vmul.f32 %v2755, %v2761
    %v2764 = vld [vmem:[%s2318] sm:$0xff]
    %v2765 = vld [vmem:[%s2318 + $0x8] sm:$0xff]
    %v2766 = vld [vmem:[%s2318 + $0x10] sm:$0xff]
    %v2767 = vld [vmem:[%s2318 + $0x18] sm:$0xff]
    %v2768 = vsel %vm174, %v2669, 0
    %2770 = vmatpush.msra.mxu0 0.0
    %2771 = vmatpush.msra.mxu0 0.0
    %2772 = vmatpush.msra.mxu0 0.0
    %2773 = vmatpush.msra.mxu0 0.0
    %2774 = vmatpush.msra.mxu0 0.0
    %2775 = vmatpush.msra.mxu0 0.0
    %2776 = vmatpush.msra.mxu0 0.0
    %2777 = vmatpush.msra.mxu0 0.0
    %2778 = vmatpush.msra.mxu0 0.0
    %2779 = vmatpush.msra.mxu0 0.0
    %2780 = vmatpush.msra.mxu0 0.0
    %2781 = vmatpush.msra.mxu0 0.0
    %2782 = vmatpush.msra.mxu0 %v2767
    %2783 = vmatpush.msra.mxu0 %v2766
    %2784 = vmatpush.msra.mxu0 %v2765
    %2785 = vmatpush.msra.mxu0 %v2764
    %2786 = vmatmul.f32.gmra.mxu0 %v2768
    %v2787 = vpop.f32.mrf.mxu0
    %v2788 = vadd.f32 0.0, %v2787
    %2789 = vdwg.mxu0
    %v2790 = vld [vmem:[%s2343] sm:$0xff]
    %v2791 = vld [vmem:[%s2343 + $0x8] sm:$0xff]
    %v2792 = vld [vmem:[%s2343 + $0x10] sm:$0xff]
    %v2793 = vld [vmem:[%s2343 + $0x18] sm:$0xff]
    %2795 = vrot.lane.b32.xlu0 %v2763, 32
    %v2796 = vpop.permute.xlu0 %2795
    %v2797 = vsel %vm174, %v2796, 0
    %2799 = vmatpush.msra.mxu0 0.0
    %2800 = vmatpush.msra.mxu0 0.0
    %2801 = vmatpush.msra.mxu0 0.0
    %2802 = vmatpush.msra.mxu0 0.0
    %2803 = vmatpush.msra.mxu0 0.0
    %2804 = vmatpush.msra.mxu0 0.0
    %2805 = vmatpush.msra.mxu0 0.0
    %2806 = vmatpush.msra.mxu0 0.0
    %2807 = vmatpush.msra.mxu0 0.0
    %2808 = vmatpush.msra.mxu0 0.0
    %2809 = vmatpush.msra.mxu0 0.0
    %2810 = vmatpush.msra.mxu0 0.0
    %2811 = vmatpush.msra.mxu0 %v2793
    %2812 = vmatpush.msra.mxu0 %v2792
    %2813 = vmatpush.msra.mxu0 %v2791
    %2814 = vmatpush.msra.mxu0 %v2790
    %2815 = vmatmul.f32.gmra.mxu0 %v2797
    %v2816 = vpop.f32.mrf.mxu0
    %v2817 = vadd.f32 %v2788, %v2816
    %2818 = vdwg.mxu0
    %v2819 = vld [vmem:[%s2373] sm:$0x1]
    %v2821 = vperm.slane %v2819, 0
    %v2823 = vadd.f32 %v2817, %v2821
    %v2824 = vtanh.pop %v2823
    %v2825 = vxor.u32 %v2823, 2147483648
    %v2826 = vmul.f32 %v2825, 1.442695
    %v2827 = vpow.pop %v2826
    %v2828 = vadd.f32 %v2827, 1.0
    %v2829 = vrcp.pop %v2828
    %v2830 = vmul.f32 %v2828, %v2829
    %v2831 = vsub.f32 1.0, %v2830
    %v2832 = vmul.f32 %v2829, %v2831
    %v2833 = vadd.f32 %v2829, %v2832
    %vm2834 = vweird.f32 %v2828
    %vm2835 = vweird.f32 %v2829
    %vm2836 = vmor %vm2834, %vm2835
    %v2837 = vsel %vm2836, %v2829, %v2833
    %v2838 = vand.u32 2147483647, %v2828
    %vm2839 = vcmp.eq.f32.partialorder %v2838, 8.507059e+37
    %v2840 = vand.u32 %v2828, 2147483648
    %v2841 = vor.u32 1.1754944e-38, %v2840
    %v2842 = vsel %vm2839, %v2841, %v2837
    %v2843 = vmul.f32 1.0, %v2842
    %v2844 = vadd.f32 %v2823, %v2626
    %2846 = vrot.lane.b32.xlu0 %v2823, 32
    %v2847 = vpop.permute.xlu0 %2846
    %v2849 = vmax.f32 %v2844, %v2847
    %2851 = vrot.lane.b32.xlu0 %v2849, 96
    %v2852 = vpop.permute.xlu0 %2851
    %v2854 = vsub.f32 %v2823, %v2852
    %v2855 = vmul.f32 %v2854, 1.442695
    %v2856 = vpow.pop %v2855
    %v2857 = vsub.f32 %v2844, %v2849
    %v2858 = vmul.f32 %v2857, 1.442695
    %v2859 = vpow.pop %v2858
    %v2860 = vmul.f32 %v2859, %v2647
    %2862 = vrot.lane.b32.xlu0 %v2824, 64
    %v2863 = vpop.permute.xlu0 %2862
    %v2865 = vmul.f32 %v2856, %v2863
    %2867 = vrot.lane.b32.xlu0 %v2865, 32
    %v2868 = vpop.permute.xlu0 %2867
    %v2870 = vadd.f32 %v2860, %v2868
    %v2871 = vmul.f32 %v2859, %v2653
    %2873 = vrot.lane.b32.xlu0 %v2856, 32
    %v2874 = vpop.permute.xlu0 %2873
    %v2876 = vadd.f32 %v2871, %v2874
    %2878 = vrot.lane.b32.xlu0 %v2870, 64
    %v2879 = vpop.permute.xlu0 %2878
    %v2881 = vmul.f32 %v2843, %v2879
    %v2882 = vand.u32 2147483647, %v2876
    %v2883 = vmax.f32 %v2882, 1.0
    %v2884 = vrcp.pop %v2883
    %2886 = vrot.lane.b32.xlu0 %v2884, 64
    %v2887 = vpop.permute.xlu0 %2886
    %v2889 = vmul.f32 %v2881, %v2887
    %2891 = vrot.lane.b32.xlu0 %v2889, 32
    %v2892 = vpop.permute.xlu0 %2891
    %2894 = vst.msk [vmem:[#allocation3 + $0x4] sm:$0x3] %vm517, %v2892
    %v2895 = vld [vmem:[%s2226] sm:$0xff]
    %v2896 = vld [vmem:[%s2226 + $0x8] sm:$0xff]
    %v2897 = vld [vmem:[%s2226 + $0x10] sm:$0xff]
    %v2898 = vld [vmem:[%s2226 + $0x18] sm:$0xff]
    %2899 = vmatpush.msra.mxu0 0.0
    %2900 = vmatpush.msra.mxu0 0.0
    %2901 = vmatpush.msra.mxu0 0.0
    %2902 = vmatpush.msra.mxu0 0.0
    %2903 = vmatpush.msra.mxu0 0.0
    %2904 = vmatpush.msra.mxu0 0.0
    %2905 = vmatpush.msra.mxu0 0.0
    %2906 = vmatpush.msra.mxu0 0.0
    %2907 = vmatpush.msra.mxu0 0.0
    %2908 = vmatpush.msra.mxu0 0.0
    %2909 = vmatpush.msra.mxu0 0.0
    %2910 = vmatpush.msra.mxu0 0.0
    %2911 = vmatpush.msra.mxu0 %v2898
    %2912 = vmatpush.msra.mxu0 %v2897
    %2913 = vmatpush.msra.mxu0 %v2896
    %2914 = vmatpush.msra.mxu0 %v2895
    %2915 = vmatmul.f32.gmra.mxu0 %v2797
    %v2916 = vpop.f32.mrf.mxu0
    %v2917 = vadd.f32 0.0, %v2916
    %2918 = vdwg.mxu0
    %v2919 = vld [vmem:[#allocation2 + $0x6] sm:$0x3]
    %v2920 = vadd.f32 %v2919, %v2917
    %v2921 = vtanh.pop %v2920
    %v2922 = vxor.u32 %v2920, 2147483648
    %v2923 = vmul.f32 %v2922, 1.442695
    %v2924 = vpow.pop %v2923
    %v2925 = vadd.f32 %v2924, 1.0
    %v2926 = vrcp.pop %v2925
    %v2927 = vmul.f32 %v2925, %v2926
    %v2928 = vsub.f32 1.0, %v2927
    %v2929 = vmul.f32 %v2926, %v2928
    %v2930 = vadd.f32 %v2926, %v2929
    %vm2931 = vweird.f32 %v2925
    %vm2932 = vweird.f32 %v2926
    %vm2933 = vmor %vm2931, %vm2932
    %v2934 = vsel %vm2933, %v2926, %v2930
    %v2935 = vand.u32 2147483647, %v2925
    %vm2936 = vcmp.eq.f32.partialorder %v2935, 8.507059e+37
    %v2937 = vand.u32 %v2925, 2147483648
    %v2938 = vor.u32 1.1754944e-38, %v2937
    %v2939 = vsel %vm2936, %v2938, %v2934
    %v2940 = vmul.f32 1.0, %v2939
    %v2941 = vadd.f32 %v2920, %v2723
    %2943 = vrot.lane.b32.xlu0 %v2920, 32
    %v2944 = vpop.permute.xlu0 %2943
    %v2946 = vmax.f32 %v2941, %v2944
    %2948 = vrot.lane.b32.xlu0 %v2946, 96
    %v2949 = vpop.permute.xlu0 %2948
    %v2951 = vsub.f32 %v2920, %v2949
    %v2952 = vmul.f32 %v2951, 1.442695
    %v2953 = vpow.pop %v2952
    %v2954 = vsub.f32 %v2941, %v2946
    %v2955 = vmul.f32 %v2954, 1.442695
    %v2956 = vpow.pop %v2955
    %v2957 = vmul.f32 %v2956, %v2744
    %2959 = vrot.lane.b32.xlu0 %v2921, 64
    %v2960 = vpop.permute.xlu0 %2959
    %v2962 = vmul.f32 %v2953, %v2960
    %2964 = vrot.lane.b32.xlu0 %v2962, 32
    %v2965 = vpop.permute.xlu0 %2964
    %v2967 = vadd.f32 %v2957, %v2965
    %v2968 = vmul.f32 %v2956, %v2750
    %2970 = vrot.lane.b32.xlu0 %v2953, 32
    %v2971 = vpop.permute.xlu0 %2970
    %v2973 = vadd.f32 %v2968, %v2971
    %2975 = vrot.lane.b32.xlu0 %v2967, 64
    %v2976 = vpop.permute.xlu0 %2975
    %v2978 = vmul.f32 %v2940, %v2976
    %v2979 = vand.u32 2147483647, %v2973
    %v2980 = vmax.f32 %v2979, 1.0
    %v2981 = vrcp.pop %v2980
    %2983 = vrot.lane.b32.xlu0 %v2981, 64
    %v2984 = vpop.permute.xlu0 %2983
    %v2986 = vmul.f32 %v2978, %v2984
    %v2987 = vld [vmem:[%s2318] sm:$0xff]
    %v2988 = vld [vmem:[%s2318 + $0x8] sm:$0xff]
    %v2989 = vld [vmem:[%s2318 + $0x10] sm:$0xff]
    %v2990 = vld [vmem:[%s2318 + $0x18] sm:$0xff]
    %v2991 = vsel %vm174, %v2892, 0
    %2993 = vmatpush.msra.mxu0 0.0
    %2994 = vmatpush.msra.mxu0 0.0
    %2995 = vmatpush.msra.mxu0 0.0
    %2996 = vmatpush.msra.mxu0 0.0
    %2997 = vmatpush.msra.mxu0 0.0
    %2998 = vmatpush.msra.mxu0 0.0
    %2999 = vmatpush.msra.mxu0 0.0
    %3000 = vmatpush.msra.mxu0 0.0
    %3001 = vmatpush.msra.mxu0 0.0
    %3002 = vmatpush.msra.mxu0 0.0
    %3003 = vmatpush.msra.mxu0 0.0
    %3004 = vmatpush.msra.mxu0 0.0
    %3005 = vmatpush.msra.mxu0 %v2990
    %3006 = vmatpush.msra.mxu0 %v2989
    %3007 = vmatpush.msra.mxu0 %v2988
    %3008 = vmatpush.msra.mxu0 %v2987
    %3009 = vmatmul.f32.gmra.mxu0 %v2991
    %v3010 = vpop.f32.mrf.mxu0
    %v3011 = vadd.f32 0.0, %v3010
    %3012 = vdwg.mxu0
    %v3013 = vld [vmem:[%s2343] sm:$0xff]
    %v3014 = vld [vmem:[%s2343 + $0x8] sm:$0xff]
    %v3015 = vld [vmem:[%s2343 + $0x10] sm:$0xff]
    %v3016 = vld [vmem:[%s2343 + $0x18] sm:$0xff]
    %3018 = vrot.lane.b32.xlu0 %v2986, 32
    %v3019 = vpop.permute.xlu0 %3018
    %v3020 = vsel %vm174, %v3019, 0
    %3022 = vmatpush.msra.mxu0 0.0
    %3023 = vmatpush.msra.mxu0 0.0
    %3024 = vmatpush.msra.mxu0 0.0
    %3025 = vmatpush.msra.mxu0 0.0
    %3026 = vmatpush.msra.mxu0 0.0
    %3027 = vmatpush.msra.mxu0 0.0
    %3028 = vmatpush.msra.mxu0 0.0
    %3029 = vmatpush.msra.mxu0 0.0
    %3030 = vmatpush.msra.mxu0 0.0
    %3031 = vmatpush.msra.mxu0 0.0
    %3032 = vmatpush.msra.mxu0 0.0
    %3033 = vmatpush.msra.mxu0 0.0
    %3034 = vmatpush.msra.mxu0 %v3016
    %3035 = vmatpush.msra.mxu0 %v3015
    %3036 = vmatpush.msra.mxu0 %v3014
    %3037 = vmatpush.msra.mxu0 %v3013
    %3038 = vmatmul.f32.gmra.mxu0 %v3020
    %v3039 = vpop.f32.mrf.mxu0
    %v3040 = vadd.f32 %v3011, %v3039
    %3041 = vdwg.mxu0
    %v3042 = vld [vmem:[%s2373] sm:$0x1]
    %v3044 = vperm.slane %v3042, 0
    %v3046 = vadd.f32 %v3040, %v3044
    %v3047 = vtanh.pop %v3046
    %v3048 = vxor.u32 %v3046, 2147483648
    %v3049 = vmul.f32 %v3048, 1.442695
    %v3050 = vpow.pop %v3049
    %v3051 = vadd.f32 %v3050, 1.0
    %v3052 = vrcp.pop %v3051
    %v3053 = vmul.f32 %v3051, %v3052
    %v3054 = vsub.f32 1.0, %v3053
    %v3055 = vmul.f32 %v3052, %v3054
    %v3056 = vadd.f32 %v3052, %v3055
    %vm3057 = vweird.f32 %v3051
    %vm3058 = vweird.f32 %v3052
    %vm3059 = vmor %vm3057, %vm3058
    %v3060 = vsel %vm3059, %v3052, %v3056
    %v3061 = vand.u32 2147483647, %v3051
    %vm3062 = vcmp.eq.f32.partialorder %v3061, 8.507059e+37
    %v3063 = vand.u32 %v3051, 2147483648
    %v3064 = vor.u32 1.1754944e-38, %v3063
    %v3065 = vsel %vm3062, %v3064, %v3060
    %v3066 = vmul.f32 1.0, %v3065
    %v3067 = vadd.f32 %v3046, %v2849
    %3069 = vrot.lane.b32.xlu0 %v3046, 32
    %v3070 = vpop.permute.xlu0 %3069
    %v3072 = vmax.f32 %v3067, %v3070
    %3074 = vrot.lane.b32.xlu0 %v3072, 96
    %v3075 = vpop.permute.xlu0 %3074
    %v3077 = vsub.f32 %v3046, %v3075
    %v3078 = vmul.f32 %v3077, 1.442695
    %v3079 = vpow.pop %v3078
    %v3080 = vsub.f32 %v3067, %v3072
    %v3081 = vmul.f32 %v3080, 1.442695
    %v3082 = vpow.pop %v3081
    %v3083 = vmul.f32 %v3082, %v2870
    %3085 = vrot.lane.b32.xlu0 %v3047, 64
    %v3086 = vpop.permute.xlu0 %3085
    %v3088 = vmul.f32 %v3079, %v3086
    %3090 = vrot.lane.b32.xlu0 %v3088, 32
    %v3091 = vpop.permute.xlu0 %3090
    %v3093 = vadd.f32 %v3083, %v3091
    %v3094 = vmul.f32 %v3082, %v2876
    %3096 = vrot.lane.b32.xlu0 %v3079, 32
    %v3097 = vpop.permute.xlu0 %3096
    %v3099 = vadd.f32 %v3094, %v3097
    %3101 = vrot.lane.b32.xlu0 %v3093, 64
    %v3102 = vpop.permute.xlu0 %3101
    %v3104 = vmul.f32 %v3066, %v3102
    %v3105 = vand.u32 2147483647, %v3099
    %v3106 = vmax.f32 %v3105, 1.0
    %v3107 = vrcp.pop %v3106
    %3109 = vrot.lane.b32.xlu0 %v3107, 64
    %v3110 = vpop.permute.xlu0 %3109
    %v3112 = vmul.f32 %v3104, %v3110
    %3114 = vrot.lane.b32.xlu0 %v3112, 32
    %v3115 = vpop.permute.xlu0 %3114
    %3117 = vst.msk [vmem:[#allocation3 + $0x6] sm:$0x3] %vm517, %v3115
    %v3118 = vld [vmem:[%s2226] sm:$0xff]
    %v3119 = vld [vmem:[%s2226 + $0x8] sm:$0xff]
    %v3120 = vld [vmem:[%s2226 + $0x10] sm:$0xff]
    %v3121 = vld [vmem:[%s2226 + $0x18] sm:$0xff]
    %3122 = vmatpush.msra.mxu0 0.0
    %3123 = vmatpush.msra.mxu0 0.0
    %3124 = vmatpush.msra.mxu0 0.0
    %3125 = vmatpush.msra.mxu0 0.0
    %3126 = vmatpush.msra.mxu0 0.0
    %3127 = vmatpush.msra.mxu0 0.0
    %3128 = vmatpush.msra.mxu0 0.0
    %3129 = vmatpush.msra.mxu0 0.0
    %3130 = vmatpush.msra.mxu0 0.0
    %3131 = vmatpush.msra.mxu0 0.0
    %3132 = vmatpush.msra.mxu0 0.0
    %3133 = vmatpush.msra.mxu0 0.0
    %3134 = vmatpush.msra.mxu0 %v3121
    %3135 = vmatpush.msra.mxu0 %v3120
    %3136 = vmatpush.msra.mxu0 %v3119
    %3137 = vmatpush.msra.mxu0 %v3118
    %3138 = vmatmul.f32.gmra.mxu0 %v3020
    %v3139 = vpop.f32.mrf.mxu0
    %v3140 = vadd.f32 0.0, %v3139
    %3141 = vdwg.mxu0
    %v3142 = vld [vmem:[#allocation2 + $0x8] sm:$0x3]
    %v3143 = vadd.f32 %v3142, %v3140
    %v3144 = vtanh.pop %v3143
    %v3145 = vxor.u32 %v3143, 2147483648
    %v3146 = vmul.f32 %v3145, 1.442695
    %v3147 = vpow.pop %v3146
    %v3148 = vadd.f32 %v3147, 1.0
    %v3149 = vrcp.pop %v3148
    %v3150 = vmul.f32 %v3148, %v3149
    %v3151 = vsub.f32 1.0, %v3150
    %v3152 = vmul.f32 %v3149, %v3151
    %v3153 = vadd.f32 %v3149, %v3152
    %vm3154 = vweird.f32 %v3148
    %vm3155 = vweird.f32 %v3149
    %vm3156 = vmor %vm3154, %vm3155
    %v3157 = vsel %vm3156, %v3149, %v3153
    %v3158 = vand.u32 2147483647, %v3148
    %vm3159 = vcmp.eq.f32.partialorder %v3158, 8.507059e+37
    %v3160 = vand.u32 %v3148, 2147483648
    %v3161 = vor.u32 1.1754944e-38, %v3160
    %v3162 = vsel %vm3159, %v3161, %v3157
    %v3163 = vmul.f32 1.0, %v3162
    %v3164 = vadd.f32 %v3143, %v2946
    %3166 = vrot.lane.b32.xlu0 %v3143, 32
    %v3167 = vpop.permute.xlu0 %3166
    %v3169 = vmax.f32 %v3164, %v3167
    %3171 = vrot.lane.b32.xlu0 %v3169, 96
    %v3172 = vpop.permute.xlu0 %3171
    %v3174 = vsub.f32 %v3143, %v3172
    %v3175 = vmul.f32 %v3174, 1.442695
    %v3176 = vpow.pop %v3175
    %v3177 = vsub.f32 %v3164, %v3169
    %v3178 = vmul.f32 %v3177, 1.442695
    %v3179 = vpow.pop %v3178
    %v3180 = vmul.f32 %v3179, %v2967
    %3182 = vrot.lane.b32.xlu0 %v3144, 64
    %v3183 = vpop.permute.xlu0 %3182
    %v3185 = vmul.f32 %v3176, %v3183
    %3187 = vrot.lane.b32.xlu0 %v3185, 32
    %v3188 = vpop.permute.xlu0 %3187
    %v3190 = vadd.f32 %v3180, %v3188
    %v3191 = vmul.f32 %v3179, %v2973
    %3193 = vrot.lane.b32.xlu0 %v3176, 32
    %v3194 = vpop.permute.xlu0 %3193
    %v3196 = vadd.f32 %v3191, %v3194
    %3198 = vrot.lane.b32.xlu0 %v3190, 64
    %v3199 = vpop.permute.xlu0 %3198
    %v3201 = vmul.f32 %v3163, %v3199
    %v3202 = vand.u32 2147483647, %v3196
    %v3203 = vmax.f32 %v3202, 1.0
    %v3204 = vrcp.pop %v3203
    %3206 = vrot.lane.b32.xlu0 %v3204, 64
    %v3207 = vpop.permute.xlu0 %3206
    %v3209 = vmul.f32 %v3201, %v3207
    %v3210 = vld [vmem:[%s2318] sm:$0xff]
    %v3211 = vld [vmem:[%s2318 + $0x8] sm:$0xff]
    %v3212 = vld [vmem:[%s2318 + $0x10] sm:$0xff]
    %v3213 = vld [vmem:[%s2318 + $0x18] sm:$0xff]
    %v3214 = vsel %vm174, %v3115, 0
    %3216 = vmatpush.msra.mxu0 0.0
    %3217 = vmatpush.msra.mxu0 0.0
    %3218 = vmatpush.msra.mxu0 0.0
    %3219 = vmatpush.msra.mxu0 0.0
    %3220 = vmatpush.msra.mxu0 0.0
    %3221 = vmatpush.msra.mxu0 0.0
    %3222 = vmatpush.msra.mxu0 0.0
    %3223 = vmatpush.msra.mxu0 0.0
    %3224 = vmatpush.msra.mxu0 0.0
    %3225 = vmatpush.msra.mxu0 0.0
    %3226 = vmatpush.msra.mxu0 0.0
    %3227 = vmatpush.msra.mxu0 0.0
    %3228 = vmatpush.msra.mxu0 %v3213
    %3229 = vmatpush.msra.mxu0 %v3212
    %3230 = vmatpush.msra.mxu0 %v3211
    %3231 = vmatpush.msra.mxu0 %v3210
    %3232 = vmatmul.f32.gmra.mxu0 %v3214
    %v3233 = vpop.f32.mrf.mxu0
    %v3234 = vadd.f32 0.0, %v3233
    %3235 = vdwg.mxu0
    %v3236 = vld [vmem:[%s2343] sm:$0xff]
    %v3237 = vld [vmem:[%s2343 + $0x8] sm:$0xff]
    %v3238 = vld [vmem:[%s2343 + $0x10] sm:$0xff]
    %v3239 = vld [vmem:[%s2343 + $0x18] sm:$0xff]
    %3241 = vrot.lane.b32.xlu0 %v3209, 32
    %v3242 = vpop.permute.xlu0 %3241
    %v3243 = vsel %vm174, %v3242, 0
    %3245 = vmatpush.msra.mxu0 0.0
    %3246 = vmatpush.msra.mxu0 0.0
    %3247 = vmatpush.msra.mxu0 0.0
    %3248 = vmatpush.msra.mxu0 0.0
    %3249 = vmatpush.msra.mxu0 0.0
    %3250 = vmatpush.msra.mxu0 0.0
    %3251 = vmatpush.msra.mxu0 0.0
    %3252 = vmatpush.msra.mxu0 0.0
    %3253 = vmatpush.msra.mxu0 0.0
    %3254 = vmatpush.msra.mxu0 0.0
    %3255 = vmatpush.msra.mxu0 0.0
    %3256 = vmatpush.msra.mxu0 0.0
    %3257 = vmatpush.msra.mxu0 %v3239
    %3258 = vmatpush.msra.mxu0 %v3238
    %3259 = vmatpush.msra.mxu0 %v3237
    %3260 = vmatpush.msra.mxu0 %v3236
    %3261 = vmatmul.f32.gmra.mxu0 %v3243
    %v3262 = vpop.f32.mrf.mxu0
    %v3263 = vadd.f32 %v3234, %v3262
    %3264 = vdwg.mxu0
    %v3265 = vld [vmem:[%s2373] sm:$0x1]
    %v3267 = vperm.slane %v3265, 0
    %v3269 = vadd.f32 %v3263, %v3267
    %v3270 = vtanh.pop %v3269
    %v3271 = vxor.u32 %v3269, 2147483648
    %v3272 = vmul.f32 %v3271, 1.442695
    %v3273 = vpow.pop %v3272
    %v3274 = vadd.f32 %v3273, 1.0
    %v3275 = vrcp.pop %v3274
    %v3276 = vmul.f32 %v3274, %v3275
    %v3277 = vsub.f32 1.0, %v3276
    %v3278 = vmul.f32 %v3275, %v3277
    %v3279 = vadd.f32 %v3275, %v3278
    %vm3280 = vweird.f32 %v3274
    %vm3281 = vweird.f32 %v3275
    %vm3282 = vmor %vm3280, %vm3281
    %v3283 = vsel %vm3282, %v3275, %v3279
    %v3284 = vand.u32 2147483647, %v3274
    %vm3285 = vcmp.eq.f32.partialorder %v3284, 8.507059e+37
    %v3286 = vand.u32 %v3274, 2147483648
    %v3287 = vor.u32 1.1754944e-38, %v3286
    %v3288 = vsel %vm3285, %v3287, %v3283
    %v3289 = vmul.f32 1.0, %v3288
    %v3290 = vadd.f32 %v3269, %v3072
    %3292 = vrot.lane.b32.xlu0 %v3269, 32
    %v3293 = vpop.permute.xlu0 %3292
    %v3295 = vmax.f32 %v3290, %v3293
    %3297 = vrot.lane.b32.xlu0 %v3295, 96
    %v3298 = vpop.permute.xlu0 %3297
    %v3300 = vsub.f32 %v3269, %v3298
    %v3301 = vmul.f32 %v3300, 1.442695
    %v3302 = vpow.pop %v3301
    %v3303 = vsub.f32 %v3290, %v3295
    %v3304 = vmul.f32 %v3303, 1.442695
    %v3305 = vpow.pop %v3304
    %v3306 = vmul.f32 %v3305, %v3093
    %3308 = vrot.lane.b32.xlu0 %v3270, 64
    %v3309 = vpop.permute.xlu0 %3308
    %v3311 = vmul.f32 %v3302, %v3309
    %3313 = vrot.lane.b32.xlu0 %v3311, 32
    %v3314 = vpop.permute.xlu0 %3313
    %v3316 = vadd.f32 %v3306, %v3314
    %v3317 = vmul.f32 %v3305, %v3099
    %3319 = vrot.lane.b32.xlu0 %v3302, 32
    %v3320 = vpop.permute.xlu0 %3319
    %v3322 = vadd.f32 %v3317, %v3320
    %3324 = vrot.lane.b32.xlu0 %v3316, 64
    %v3325 = vpop.permute.xlu0 %3324
    %v3327 = vmul.f32 %v3289, %v3325
    %v3328 = vand.u32 2147483647, %v3322
    %v3329 = vmax.f32 %v3328, 1.0
    %v3330 = vrcp.pop %v3329
    %3332 = vrot.lane.b32.xlu0 %v3330, 64
    %v3333 = vpop.permute.xlu0 %3332
    %v3335 = vmul.f32 %v3327, %v3333
    %3337 = vrot.lane.b32.xlu0 %v3335, 32
    %v3338 = vpop.permute.xlu0 %3337
    %3340 = vst.msk [vmem:[#allocation3 + $0x8] sm:$0x3] %vm517, %v3338
    %v3341 = vld [vmem:[%s2226] sm:$0xff]
    %v3342 = vld [vmem:[%s2226 + $0x8] sm:$0xff]
    %v3343 = vld [vmem:[%s2226 + $0x10] sm:$0xff]
    %v3344 = vld [vmem:[%s2226 + $0x18] sm:$0xff]
    %3345 = vmatpush.msra.mxu0 0.0
    %3346 = vmatpush.msra.mxu0 0.0
    %3347 = vmatpush.msra.mxu0 0.0
    %3348 = vmatpush.msra.mxu0 0.0
    %3349 = vmatpush.msra.mxu0 0.0
    %3350 = vmatpush.msra.mxu0 0.0
    %3351 = vmatpush.msra.mxu0 0.0
    %3352 = vmatpush.msra.mxu0 0.0
    %3353 = vmatpush.msra.mxu0 0.0
    %3354 = vmatpush.msra.mxu0 0.0
    %3355 = vmatpush.msra.mxu0 0.0
    %3356 = vmatpush.msra.mxu0 0.0
    %3357 = vmatpush.msra.mxu0 %v3344
    %3358 = vmatpush.msra.mxu0 %v3343
    %3359 = vmatpush.msra.mxu0 %v3342
    %3360 = vmatpush.msra.mxu0 %v3341
    %3361 = vmatmul.f32.gmra.mxu0 %v3243
    %v3362 = vpop.f32.mrf.mxu0
    %v3363 = vadd.f32 0.0, %v3362
    %3364 = vdwg.mxu0
    %v3365 = vld [vmem:[#allocation2 + $0xa] sm:$0x3]
    %v3366 = vadd.f32 %v3365, %v3363
    %v3367 = vtanh.pop %v3366
    %v3368 = vxor.u32 %v3366, 2147483648
    %v3369 = vmul.f32 %v3368, 1.442695
    %v3370 = vpow.pop %v3369
    %v3371 = vadd.f32 %v3370, 1.0
    %v3372 = vrcp.pop %v3371
    %v3373 = vmul.f32 %v3371, %v3372
    %v3374 = vsub.f32 1.0, %v3373
    %v3375 = vmul.f32 %v3372, %v3374
    %v3376 = vadd.f32 %v3372, %v3375
    %vm3377 = vweird.f32 %v3371
    %vm3378 = vweird.f32 %v3372
    %vm3379 = vmor %vm3377, %vm3378
    %v3380 = vsel %vm3379, %v3372, %v3376
    %v3381 = vand.u32 2147483647, %v3371
    %vm3382 = vcmp.eq.f32.partialorder %v3381, 8.507059e+37
    %v3383 = vand.u32 %v3371, 2147483648
    %v3384 = vor.u32 1.1754944e-38, %v3383
    %v3385 = vsel %vm3382, %v3384, %v3380
    %v3386 = vmul.f32 1.0, %v3385
    %v3387 = vadd.f32 %v3366, %v3169
    %3389 = vrot.lane.b32.xlu0 %v3366, 32
    %v3390 = vpop.permute.xlu0 %3389
    %v3392 = vmax.f32 %v3387, %v3390
    %3394 = vrot.lane.b32.xlu0 %v3392, 96
    %v3395 = vpop.permute.xlu0 %3394
    %v3397 = vsub.f32 %v3366, %v3395
    %v3398 = vmul.f32 %v3397, 1.442695
    %v3399 = vpow.pop %v3398
    %v3400 = vsub.f32 %v3387, %v3392
    %v3401 = vmul.f32 %v3400, 1.442695
    %v3402 = vpow.pop %v3401
    %v3403 = vmul.f32 %v3402, %v3190
    %3405 = vrot.lane.b32.xlu0 %v3367, 64
    %v3406 = vpop.permute.xlu0 %3405
    %v3408 = vmul.f32 %v3399, %v3406
    %3410 = vrot.lane.b32.xlu0 %v3408, 32
    %v3411 = vpop.permute.xlu0 %3410
    %v3413 = vadd.f32 %v3403, %v3411
    %v3414 = vmul.f32 %v3402, %v3196
    %3416 = vrot.lane.b32.xlu0 %v3399, 32
    %v3417 = vpop.permute.xlu0 %3416
    %v3419 = vadd.f32 %v3414, %v3417
    %3421 = vrot.lane.b32.xlu0 %v3413, 64
    %v3422 = vpop.permute.xlu0 %3421
    %v3424 = vmul.f32 %v3386, %v3422
    %v3425 = vand.u32 2147483647, %v3419
    %v3426 = vmax.f32 %v3425, 1.0
    %v3427 = vrcp.pop %v3426
    %3429 = vrot.lane.b32.xlu0 %v3427, 64
    %v3430 = vpop.permute.xlu0 %3429
    %v3432 = vmul.f32 %v3424, %v3430
    %v3433 = vld [vmem:[%s2318] sm:$0xff]
    %v3434 = vld [vmem:[%s2318 + $0x8] sm:$0xff]
    %v3435 = vld [vmem:[%s2318 + $0x10] sm:$0xff]
    %v3436 = vld [vmem:[%s2318 + $0x18] sm:$0xff]
    %v3437 = vsel %vm174, %v3338, 0
    %3439 = vmatpush.msra.mxu0 0.0
    %3440 = vmatpush.msra.mxu0 0.0
    %3441 = vmatpush.msra.mxu0 0.0
    %3442 = vmatpush.msra.mxu0 0.0
    %3443 = vmatpush.msra.mxu0 0.0
    %3444 = vmatpush.msra.mxu0 0.0
    %3445 = vmatpush.msra.mxu0 0.0
    %3446 = vmatpush.msra.mxu0 0.0
    %3447 = vmatpush.msra.mxu0 0.0
    %3448 = vmatpush.msra.mxu0 0.0
    %3449 = vmatpush.msra.mxu0 0.0
    %3450 = vmatpush.msra.mxu0 0.0
    %3451 = vmatpush.msra.mxu0 %v3436
    %3452 = vmatpush.msra.mxu0 %v3435
    %3453 = vmatpush.msra.mxu0 %v3434
    %3454 = vmatpush.msra.mxu0 %v3433
    %3455 = vmatmul.f32.gmra.mxu0 %v3437
    %v3456 = vpop.f32.mrf.mxu0
    %v3457 = vadd.f32 0.0, %v3456
    %3458 = vdwg.mxu0
    %v3459 = vld [vmem:[%s2343] sm:$0xff]
    %v3460 = vld [vmem:[%s2343 + $0x8] sm:$0xff]
    %v3461 = vld [vmem:[%s2343 + $0x10] sm:$0xff]
    %v3462 = vld [vmem:[%s2343 + $0x18] sm:$0xff]
    %3464 = vrot.lane.b32.xlu0 %v3432, 32
    %v3465 = vpop.permute.xlu0 %3464
    %v3466 = vsel %vm174, %v3465, 0
    %3468 = vmatpush.msra.mxu0 0.0
    %3469 = vmatpush.msra.mxu0 0.0
    %3470 = vmatpush.msra.mxu0 0.0
    %3471 = vmatpush.msra.mxu0 0.0
    %3472 = vmatpush.msra.mxu0 0.0
    %3473 = vmatpush.msra.mxu0 0.0
    %3474 = vmatpush.msra.mxu0 0.0
    %3475 = vmatpush.msra.mxu0 0.0
    %3476 = vmatpush.msra.mxu0 0.0
    %3477 = vmatpush.msra.mxu0 0.0
    %3478 = vmatpush.msra.mxu0 0.0
    %3479 = vmatpush.msra.mxu0 0.0
    %3480 = vmatpush.msra.mxu0 %v3462
    %3481 = vmatpush.msra.mxu0 %v3461
    %3482 = vmatpush.msra.mxu0 %v3460
    %3483 = vmatpush.msra.mxu0 %v3459
    %3484 = vmatmul.f32.gmra.mxu0 %v3466
    %v3485 = vpop.f32.mrf.mxu0
    %v3486 = vadd.f32 %v3457, %v3485
    %3487 = vdwg.mxu0
    %v3488 = vld [vmem:[%s2373] sm:$0x1]
    %v3490 = vperm.slane %v3488, 0
    %v3492 = vadd.f32 %v3486, %v3490
    %v3493 = vtanh.pop %v3492
    %v3494 = vxor.u32 %v3492, 2147483648
    %v3495 = vmul.f32 %v3494, 1.442695
    %v3496 = vpow.pop %v3495
    %v3497 = vadd.f32 %v3496, 1.0
    %v3498 = vrcp.pop %v3497
    %v3499 = vmul.f32 %v3497, %v3498
    %v3500 = vsub.f32 1.0, %v3499
    %v3501 = vmul.f32 %v3498, %v3500
    %v3502 = vadd.f32 %v3498, %v3501
    %vm3503 = vweird.f32 %v3497
    %vm3504 = vweird.f32 %v3498
    %vm3505 = vmor %vm3503, %vm3504
    %v3506 = vsel %vm3505, %v3498, %v3502
    %v3507 = vand.u32 2147483647, %v3497
    %vm3508 = vcmp.eq.f32.partialorder %v3507, 8.507059e+37
    %v3509 = vand.u32 %v3497, 2147483648
    %v3510 = vor.u32 1.1754944e-38, %v3509
    %v3511 = vsel %vm3508, %v3510, %v3506
    %v3512 = vmul.f32 1.0, %v3511
    %v3513 = vadd.f32 %v3492, %v3295
    %3515 = vrot.lane.b32.xlu0 %v3492, 32
    %v3516 = vpop.permute.xlu0 %3515
    %v3518 = vmax.f32 %v3513, %v3516
    %3520 = vrot.lane.b32.xlu0 %v3518, 96
    %v3521 = vpop.permute.xlu0 %3520
    %v3523 = vsub.f32 %v3492, %v3521
    %v3524 = vmul.f32 %v3523, 1.442695
    %v3525 = vpow.pop %v3524
    %v3526 = vsub.f32 %v3513, %v3518
    %v3527 = vmul.f32 %v3526, 1.442695
    %v3528 = vpow.pop %v3527
    %v3529 = vmul.f32 %v3528, %v3316
    %3531 = vrot.lane.b32.xlu0 %v3493, 64
    %v3532 = vpop.permute.xlu0 %3531
    %v3534 = vmul.f32 %v3525, %v3532
    %3536 = vrot.lane.b32.xlu0 %v3534, 32
    %v3537 = vpop.permute.xlu0 %3536
    %v3539 = vadd.f32 %v3529, %v3537
    %v3540 = vmul.f32 %v3528, %v3322
    %3542 = vrot.lane.b32.xlu0 %v3525, 32
    %v3543 = vpop.permute.xlu0 %3542
    %v3545 = vadd.f32 %v3540, %v3543
    %3547 = vrot.lane.b32.xlu0 %v3539, 64
    %v3548 = vpop.permute.xlu0 %3547
    %v3550 = vmul.f32 %v3512, %v3548
    %v3551 = vand.u32 2147483647, %v3545
    %v3552 = vmax.f32 %v3551, 1.0
    %v3553 = vrcp.pop %v3552
    %3555 = vrot.lane.b32.xlu0 %v3553, 64
    %v3556 = vpop.permute.xlu0 %3555
    %v3558 = vmul.f32 %v3550, %v3556
    %3560 = vrot.lane.b32.xlu0 %v3558, 32
    %v3561 = vpop.permute.xlu0 %3560
    %3563 = vst.msk [vmem:[#allocation3 + $0xa] sm:$0x3] %vm517, %v3561
    %v3564 = vld [vmem:[%s2226] sm:$0xff]
    %v3565 = vld [vmem:[%s2226 + $0x8] sm:$0xff]
    %v3566 = vld [vmem:[%s2226 + $0x10] sm:$0xff]
    %v3567 = vld [vmem:[%s2226 + $0x18] sm:$0xff]
    %3568 = vmatpush.msra.mxu0 0.0
    %3569 = vmatpush.msra.mxu0 0.0
    %3570 = vmatpush.msra.mxu0 0.0
    %3571 = vmatpush.msra.mxu0 0.0
    %3572 = vmatpush.msra.mxu0 0.0
    %3573 = vmatpush.msra.mxu0 0.0
    %3574 = vmatpush.msra.mxu0 0.0
    %3575 = vmatpush.msra.mxu0 0.0
    %3576 = vmatpush.msra.mxu0 0.0
    %3577 = vmatpush.msra.mxu0 0.0
    %3578 = vmatpush.msra.mxu0 0.0
    %3579 = vmatpush.msra.mxu0 0.0
    %3580 = vmatpush.msra.mxu0 %v3567
    %3581 = vmatpush.msra.mxu0 %v3566
    %3582 = vmatpush.msra.mxu0 %v3565
    %3583 = vmatpush.msra.mxu0 %v3564
    %3584 = vmatmul.f32.gmra.mxu0 %v3466
    %v3585 = vpop.f32.mrf.mxu0
    %v3586 = vadd.f32 0.0, %v3585
    %3587 = vdwg.mxu0
    %v3588 = vld [vmem:[#allocation2 + $0xc] sm:$0x3]
    %v3589 = vadd.f32 %v3588, %v3586
    %v3590 = vtanh.pop %v3589
    %v3591 = vxor.u32 %v3589, 2147483648
    %v3592 = vmul.f32 %v3591, 1.442695
    %v3593 = vpow.pop %v3592
    %v3594 = vadd.f32 %v3593, 1.0
    %v3595 = vrcp.pop %v3594
    %v3596 = vmul.f32 %v3594, %v3595
    %v3597 = vsub.f32 1.0, %v3596
    %v3598 = vmul.f32 %v3595, %v3597
    %v3599 = vadd.f32 %v3595, %v3598
    %vm3600 = vweird.f32 %v3594
    %vm3601 = vweird.f32 %v3595
    %vm3602 = vmor %vm3600, %vm3601
    %v3603 = vsel %vm3602, %v3595, %v3599
    %v3604 = vand.u32 2147483647, %v3594
    %vm3605 = vcmp.eq.f32.partialorder %v3604, 8.507059e+37
    %v3606 = vand.u32 %v3594, 2147483648
    %v3607 = vor.u32 1.1754944e-38, %v3606
    %v3608 = vsel %vm3605, %v3607, %v3603
    %v3609 = vmul.f32 1.0, %v3608
    %v3610 = vadd.f32 %v3589, %v3392
    %3612 = vrot.lane.b32.xlu0 %v3589, 32
    %v3613 = vpop.permute.xlu0 %3612
    %v3615 = vmax.f32 %v3610, %v3613
    %3617 = vrot.lane.b32.xlu0 %v3615, 96
    %v3618 = vpop.permute.xlu0 %3617
    %v3620 = vsub.f32 %v3589, %v3618
    %v3621 = vmul.f32 %v3620, 1.442695
    %v3622 = vpow.pop %v3621
    %v3623 = vsub.f32 %v3610, %v3615
    %v3624 = vmul.f32 %v3623, 1.442695
    %v3625 = vpow.pop %v3624
    %v3626 = vmul.f32 %v3625, %v3413
    %3628 = vrot.lane.b32.xlu0 %v3590, 64
    %v3629 = vpop.permute.xlu0 %3628
    %v3631 = vmul.f32 %v3622, %v3629
    %3633 = vrot.lane.b32.xlu0 %v3631, 32
    %v3634 = vpop.permute.xlu0 %3633
    %v3636 = vadd.f32 %v3626, %v3634
    %v3637 = vmul.f32 %v3625, %v3419
    %3639 = vrot.lane.b32.xlu0 %v3622, 32
    %v3640 = vpop.permute.xlu0 %3639
    %v3642 = vadd.f32 %v3637, %v3640
    %3644 = vrot.lane.b32.xlu0 %v3636, 64
    %v3645 = vpop.permute.xlu0 %3644
    %v3647 = vmul.f32 %v3609, %v3645
    %v3648 = vand.u32 2147483647, %v3642
    %v3649 = vmax.f32 %v3648, 1.0
    %v3650 = vrcp.pop %v3649
    %3652 = vrot.lane.b32.xlu0 %v3650, 64
    %v3653 = vpop.permute.xlu0 %3652
    %v3655 = vmul.f32 %v3647, %v3653
    %v3656 = vld [vmem:[%s2318] sm:$0xff]
    %v3657 = vld [vmem:[%s2318 + $0x8] sm:$0xff]
    %v3658 = vld [vmem:[%s2318 + $0x10] sm:$0xff]
    %v3659 = vld [vmem:[%s2318 + $0x18] sm:$0xff]
    %v3660 = vsel %vm174, %v3561, 0
    %3662 = vmatpush.msra.mxu0 0.0
    %3663 = vmatpush.msra.mxu0 0.0
    %3664 = vmatpush.msra.mxu0 0.0
    %3665 = vmatpush.msra.mxu0 0.0
    %3666 = vmatpush.msra.mxu0 0.0
    %3667 = vmatpush.msra.mxu0 0.0
    %3668 = vmatpush.msra.mxu0 0.0
    %3669 = vmatpush.msra.mxu0 0.0
    %3670 = vmatpush.msra.mxu0 0.0
    %3671 = vmatpush.msra.mxu0 0.0
    %3672 = vmatpush.msra.mxu0 0.0
    %3673 = vmatpush.msra.mxu0 0.0
    %3674 = vmatpush.msra.mxu0 %v3659
    %3675 = vmatpush.msra.mxu0 %v3658
    %3676 = vmatpush.msra.mxu0 %v3657
    %3677 = vmatpush.msra.mxu0 %v3656
    %3678 = vmatmul.f32.gmra.mxu0 %v3660
    %v3679 = vpop.f32.mrf.mxu0
    %v3680 = vadd.f32 0.0, %v3679
    %3681 = vdwg.mxu0
    %v3682 = vld [vmem:[%s2343] sm:$0xff]
    %v3683 = vld [vmem:[%s2343 + $0x8] sm:$0xff]
    %v3684 = vld [vmem:[%s2343 + $0x10] sm:$0xff]
    %v3685 = vld [vmem:[%s2343 + $0x18] sm:$0xff]
    %3687 = vrot.lane.b32.xlu0 %v3655, 32
    %v3688 = vpop.permute.xlu0 %3687
    %v3689 = vsel %vm174, %v3688, 0
    %3691 = vmatpush.msra.mxu0 0.0
    %3692 = vmatpush.msra.mxu0 0.0
    %3693 = vmatpush.msra.mxu0 0.0
    %3694 = vmatpush.msra.mxu0 0.0
    %3695 = vmatpush.msra.mxu0 0.0
    %3696 = vmatpush.msra.mxu0 0.0
    %3697 = vmatpush.msra.mxu0 0.0
    %3698 = vmatpush.msra.mxu0 0.0
    %3699 = vmatpush.msra.mxu0 0.0
    %3700 = vmatpush.msra.mxu0 0.0
    %3701 = vmatpush.msra.mxu0 0.0
    %3702 = vmatpush.msra.mxu0 0.0
    %3703 = vmatpush.msra.mxu0 %v3685
    %3704 = vmatpush.msra.mxu0 %v3684
    %3705 = vmatpush.msra.mxu0 %v3683
    %3706 = vmatpush.msra.mxu0 %v3682
    %3707 = vmatmul.f32.gmra.mxu0 %v3689
    %v3708 = vpop.f32.mrf.mxu0
    %v3709 = vadd.f32 %v3680, %v3708
    %3710 = vdwg.mxu0
    %v3711 = vld [vmem:[%s2373] sm:$0x1]
    %v3713 = vperm.slane %v3711, 0
    %v3715 = vadd.f32 %v3709, %v3713
    %v3716 = vtanh.pop %v3715
    %v3717 = vxor.u32 %v3715, 2147483648
    %v3718 = vmul.f32 %v3717, 1.442695
    %v3719 = vpow.pop %v3718
    %v3720 = vadd.f32 %v3719, 1.0
    %v3721 = vrcp.pop %v3720
    %v3722 = vmul.f32 %v3720, %v3721
    %v3723 = vsub.f32 1.0, %v3722
    %v3724 = vmul.f32 %v3721, %v3723
    %v3725 = vadd.f32 %v3721, %v3724
    %vm3726 = vweird.f32 %v3720
    %vm3727 = vweird.f32 %v3721
    %vm3728 = vmor %vm3726, %vm3727
    %v3729 = vsel %vm3728, %v3721, %v3725
    %v3730 = vand.u32 2147483647, %v3720
    %vm3731 = vcmp.eq.f32.partialorder %v3730, 8.507059e+37
    %v3732 = vand.u32 %v3720, 2147483648
    %v3733 = vor.u32 1.1754944e-38, %v3732
    %v3734 = vsel %vm3731, %v3733, %v3729
    %v3735 = vmul.f32 1.0, %v3734
    %v3736 = vadd.f32 %v3715, %v3518
    %3738 = vrot.lane.b32.xlu0 %v3715, 32
    %v3739 = vpop.permute.xlu0 %3738
    %v3741 = vmax.f32 %v3736, %v3739
    %3743 = vrot.lane.b32.xlu0 %v3741, 96
    %v3744 = vpop.permute.xlu0 %3743
    %v3746 = vsub.f32 %v3715, %v3744
    %v3747 = vmul.f32 %v3746, 1.442695
    %v3748 = vpow.pop %v3747
    %v3749 = vsub.f32 %v3736, %v3741
    %v3750 = vmul.f32 %v3749, 1.442695
    %v3751 = vpow.pop %v3750
    %v3752 = vmul.f32 %v3751, %v3539
    %3754 = vrot.lane.b32.xlu0 %v3716, 64
    %v3755 = vpop.permute.xlu0 %3754
    %v3757 = vmul.f32 %v3748, %v3755
    %3759 = vrot.lane.b32.xlu0 %v3757, 32
    %v3760 = vpop.permute.xlu0 %3759
    %v3762 = vadd.f32 %v3752, %v3760
    %v3763 = vmul.f32 %v3751, %v3545
    %3765 = vrot.lane.b32.xlu0 %v3748, 32
    %v3766 = vpop.permute.xlu0 %3765
    %v3768 = vadd.f32 %v3763, %v3766
    %3770 = vrot.lane.b32.xlu0 %v3762, 64
    %v3771 = vpop.permute.xlu0 %3770
    %v3773 = vmul.f32 %v3735, %v3771
    %v3774 = vand.u32 2147483647, %v3768
    %v3775 = vmax.f32 %v3774, 1.0
    %v3776 = vrcp.pop %v3775
    %3778 = vrot.lane.b32.xlu0 %v3776, 64
    %v3779 = vpop.permute.xlu0 %3778
    %v3781 = vmul.f32 %v3773, %v3779
    %3783 = vrot.lane.b32.xlu0 %v3781, 32
    %v3784 = vpop.permute.xlu0 %3783
    %3786 = vst.msk [vmem:[#allocation3 + $0xc] sm:$0x3] %vm517, %v3784
    %v3787 = vld [vmem:[%s2226] sm:$0xff]
    %v3788 = vld [vmem:[%s2226 + $0x8] sm:$0xff]
    %v3789 = vld [vmem:[%s2226 + $0x10] sm:$0xff]
    %v3790 = vld [vmem:[%s2226 + $0x18] sm:$0xff]
    %3791 = vmatpush.msra.mxu0 0.0
    %3792 = vmatpush.msra.mxu0 0.0
    %3793 = vmatpush.msra.mxu0 0.0
    %3794 = vmatpush.msra.mxu0 0.0
    %3795 = vmatpush.msra.mxu0 0.0
    %3796 = vmatpush.msra.mxu0 0.0
    %3797 = vmatpush.msra.mxu0 0.0
    %3798 = vmatpush.msra.mxu0 0.0
    %3799 = vmatpush.msra.mxu0 0.0
    %3800 = vmatpush.msra.mxu0 0.0
    %3801 = vmatpush.msra.mxu0 0.0
    %3802 = vmatpush.msra.mxu0 0.0
    %3803 = vmatpush.msra.mxu0 %v3790
    %3804 = vmatpush.msra.mxu0 %v3789
    %3805 = vmatpush.msra.mxu0 %v3788
    %3806 = vmatpush.msra.mxu0 %v3787
    %3807 = vmatmul.f32.gmra.mxu0 %v3689
    %v3808 = vpop.f32.mrf.mxu0
    %v3809 = vadd.f32 0.0, %v3808
    %3810 = vdwg.mxu0
    %v3811 = vld [vmem:[#allocation2 + $0xe] sm:$0x3]
    %v3812 = vadd.f32 %v3811, %v3809
    %v3813 = vtanh.pop %v3812
    %v3814 = vxor.u32 %v3812, 2147483648
    %v3815 = vmul.f32 %v3814, 1.442695
    %v3816 = vpow.pop %v3815
    %v3817 = vadd.f32 %v3816, 1.0
    %v3818 = vrcp.pop %v3817
    %v3819 = vmul.f32 %v3817, %v3818
    %v3820 = vsub.f32 1.0, %v3819
    %v3821 = vmul.f32 %v3818, %v3820
    %v3822 = vadd.f32 %v3818, %v3821
    %vm3823 = vweird.f32 %v3817
    %vm3824 = vweird.f32 %v3818
    %vm3825 = vmor %vm3823, %vm3824
    %v3826 = vsel %vm3825, %v3818, %v3822
    %v3827 = vand.u32 2147483647, %v3817
    %vm3828 = vcmp.eq.f32.partialorder %v3827, 8.507059e+37
    %v3829 = vand.u32 %v3817, 2147483648
    %v3830 = vor.u32 1.1754944e-38, %v3829
    %v3831 = vsel %vm3828, %v3830, %v3826
    %v3832 = vmul.f32 1.0, %v3831
    %v3833 = vadd.f32 %v3812, %v3615
    %3835 = vrot.lane.b32.xlu0 %v3812, 32
    %v3836 = vpop.permute.xlu0 %3835
    %v3838 = vmax.f32 %v3833, %v3836
    %3840 = vrot.lane.b32.xlu0 %v3838, 96
    %v3841 = vpop.permute.xlu0 %3840
    %v3843 = vsub.f32 %v3812, %v3841
    %v3844 = vmul.f32 %v3843, 1.442695
    %v3845 = vpow.pop %v3844
    %v3846 = vsub.f32 %v3833, %v3838
    %v3847 = vmul.f32 %v3846, 1.442695
    %v3848 = vpow.pop %v3847
    %v3849 = vmul.f32 %v3848, %v3636
    %3851 = vrot.lane.b32.xlu0 %v3813, 64
    %v3852 = vpop.permute.xlu0 %3851
    %v3854 = vmul.f32 %v3845, %v3852
    %3856 = vrot.lane.b32.xlu0 %v3854, 32
    %v3857 = vpop.permute.xlu0 %3856
    %v3859 = vadd.f32 %v3849, %v3857
    %v3860 = vmul.f32 %v3848, %v3642
    %3862 = vrot.lane.b32.xlu0 %v3845, 32
    %v3863 = vpop.permute.xlu0 %3862
    %v3865 = vadd.f32 %v3860, %v3863
    %3867 = vrot.lane.b32.xlu0 %v3859, 64
    %v3868 = vpop.permute.xlu0 %3867
    %v3870 = vmul.f32 %v3832, %v3868
    %v3871 = vand.u32 2147483647, %v3865
    %v3872 = vmax.f32 %v3871, 1.0
    %v3873 = vrcp.pop %v3872
    %3875 = vrot.lane.b32.xlu0 %v3873, 64
    %v3876 = vpop.permute.xlu0 %3875
    %v3878 = vmul.f32 %v3870, %v3876
    %v3879 = vld [vmem:[%s2318] sm:$0xff]
    %v3880 = vld [vmem:[%s2318 + $0x8] sm:$0xff]
    %v3881 = vld [vmem:[%s2318 + $0x10] sm:$0xff]
    %v3882 = vld [vmem:[%s2318 + $0x18] sm:$0xff]
    %v3883 = vsel %vm174, %v3784, 0
    %3885 = vmatpush.msra.mxu0 0.0
    %3886 = vmatpush.msra.mxu0 0.0
    %3887 = vmatpush.msra.mxu0 0.0
    %3888 = vmatpush.msra.mxu0 0.0
    %3889 = vmatpush.msra.mxu0 0.0
    %3890 = vmatpush.msra.mxu0 0.0
    %3891 = vmatpush.msra.mxu0 0.0
    %3892 = vmatpush.msra.mxu0 0.0
    %3893 = vmatpush.msra.mxu0 0.0
    %3894 = vmatpush.msra.mxu0 0.0
    %3895 = vmatpush.msra.mxu0 0.0
    %3896 = vmatpush.msra.mxu0 0.0
    %3897 = vmatpush.msra.mxu0 %v3882
    %3898 = vmatpush.msra.mxu0 %v3881
    %3899 = vmatpush.msra.mxu0 %v3880
    %3900 = vmatpush.msra.mxu0 %v3879
    %3901 = vmatmul.f32.gmra.mxu0 %v3883
    %v3902 = vpop.f32.mrf.mxu0
    %v3903 = vadd.f32 0.0, %v3902
    %3904 = vdwg.mxu0
    %v3905 = vld [vmem:[%s2343] sm:$0xff]
    %v3906 = vld [vmem:[%s2343 + $0x8] sm:$0xff]
    %v3907 = vld [vmem:[%s2343 + $0x10] sm:$0xff]
    %v3908 = vld [vmem:[%s2343 + $0x18] sm:$0xff]
    %3910 = vrot.lane.b32.xlu0 %v3878, 32
    %v3911 = vpop.permute.xlu0 %3910
    %v3912 = vsel %vm174, %v3911, 0
    %3914 = vmatpush.msra.mxu0 0.0
    %3915 = vmatpush.msra.mxu0 0.0
    %3916 = vmatpush.msra.mxu0 0.0
    %3917 = vmatpush.msra.mxu0 0.0
    %3918 = vmatpush.msra.mxu0 0.0
    %3919 = vmatpush.msra.mxu0 0.0
    %3920 = vmatpush.msra.mxu0 0.0
    %3921 = vmatpush.msra.mxu0 0.0
    %3922 = vmatpush.msra.mxu0 0.0
    %3923 = vmatpush.msra.mxu0 0.0
    %3924 = vmatpush.msra.mxu0 0.0
    %3925 = vmatpush.msra.mxu0 0.0
    %3926 = vmatpush.msra.mxu0 %v3908
    %3927 = vmatpush.msra.mxu0 %v3907
    %3928 = vmatpush.msra.mxu0 %v3906
    %3929 = vmatpush.msra.mxu0 %v3905
    %3930 = vmatmul.f32.gmra.mxu0 %v3912
    %v3931 = vpop.f32.mrf.mxu0
    %v3932 = vadd.f32 %v3903, %v3931
    %3933 = vdwg.mxu0
    %v3934 = vld [vmem:[%s2373] sm:$0x1]
    %v3936 = vperm.slane %v3934, 0
    %v3938 = vadd.f32 %v3932, %v3936
    %v3939 = vtanh.pop %v3938
    %v3940 = vxor.u32 %v3938, 2147483648
    %v3941 = vmul.f32 %v3940, 1.442695
    %v3942 = vpow.pop %v3941
    %v3943 = vadd.f32 %v3942, 1.0
    %v3944 = vrcp.pop %v3943
    %v3945 = vmul.f32 %v3943, %v3944
    %v3946 = vsub.f32 1.0, %v3945
    %v3947 = vmul.f32 %v3944, %v3946
    %v3948 = vadd.f32 %v3944, %v3947
    %vm3949 = vweird.f32 %v3943
    %vm3950 = vweird.f32 %v3944
    %vm3951 = vmor %vm3949, %vm3950
    %v3952 = vsel %vm3951, %v3944, %v3948
    %v3953 = vand.u32 2147483647, %v3943
    %vm3954 = vcmp.eq.f32.partialorder %v3953, 8.507059e+37
    %v3955 = vand.u32 %v3943, 2147483648
    %v3956 = vor.u32 1.1754944e-38, %v3955
    %v3957 = vsel %vm3954, %v3956, %v3952
    %v3958 = vmul.f32 1.0, %v3957
    %v3959 = vadd.f32 %v3938, %v3741
    %3961 = vrot.lane.b32.xlu0 %v3938, 32
    %v3962 = vpop.permute.xlu0 %3961
    %v3964 = vmax.f32 %v3959, %v3962
    %3966 = vrot.lane.b32.xlu0 %v3964, 96
    %v3967 = vpop.permute.xlu0 %3966
    %v3969 = vsub.f32 %v3938, %v3967
    %v3970 = vmul.f32 %v3969, 1.442695
    %v3971 = vpow.pop %v3970
    %v3972 = vsub.f32 %v3959, %v3964
    %v3973 = vmul.f32 %v3972, 1.442695
    %v3974 = vpow.pop %v3973
    %v3975 = vmul.f32 %v3974, %v3762
    %3977 = vrot.lane.b32.xlu0 %v3939, 64
    %v3978 = vpop.permute.xlu0 %3977
    %v3980 = vmul.f32 %v3971, %v3978
    %3982 = vrot.lane.b32.xlu0 %v3980, 32
    %v3983 = vpop.permute.xlu0 %3982
    %v3985 = vadd.f32 %v3975, %v3983
    %v3986 = vmul.f32 %v3974, %v3768
    %3988 = vrot.lane.b32.xlu0 %v3971, 32
    %v3989 = vpop.permute.xlu0 %3988
    %v3991 = vadd.f32 %v3986, %v3989
    %3993 = vrot.lane.b32.xlu0 %v3985, 64
    %v3994 = vpop.permute.xlu0 %3993
    %v3996 = vmul.f32 %v3958, %v3994
    %v3997 = vand.u32 2147483647, %v3991
    %v3998 = vmax.f32 %v3997, 1.0
    %v3999 = vrcp.pop %v3998
    %4001 = vrot.lane.b32.xlu0 %v3999, 64
    %v4002 = vpop.permute.xlu0 %4001
    %v4004 = vmul.f32 %v3996, %v4002
    %4006 = vrot.lane.b32.xlu0 %v4004, 32
    %v4007 = vpop.permute.xlu0 %4006
    %4009 = vst.msk [vmem:[#allocation3 + $0xe] sm:$0x3] %vm517, %v4007
    %v4010 = vld [vmem:[#allocation3] sm:$0xff]
    %v4011 = vld [vmem:[#allocation3 + $0x8] sm:$0xff]
    %v4012 = vmul.f32 %v4010, 0.5
    %v4013 = vmul.f32 %v4011, 0.5
    %v4014 = vmul.f32 %v4010, 0.044715
    %v4015 = vmul.f32 %v4011, 0.044715
    %v4016 = vmul.f32 %v4014, %v4010
    %v4017 = vmul.f32 %v4015, %v4011
    %v4018 = vmul.f32 %v4016, %v4010
    %v4019 = vmul.f32 %v4017, %v4011
    %v4020 = vadd.f32 %v4010, %v4018
    %v4021 = vadd.f32 %v4011, %v4019
    %v4022 = vmul.f32 %v4020, 0.7978846
    %v4023 = vmul.f32 %v4021, 0.7978846
    %v4024 = vtanh.pop %v4022
    %v4025 = vtanh.pop %v4023
    %v4026 = vadd.f32 %v4024, 1.0
    %v4027 = vadd.f32 %v4025, 1.0
    %v4028 = vmul.f32 %v4012, %v4026
    %v4029 = vmul.f32 %v4013, %v4027
    %v4030 = vadd.f32 %v4028, %v2156
    %v4031 = vadd.f32 %v4029, %v2157
    %s4032 = scalar_lea.vmem %s8, 1
    %v4033 = vld [vmem:[%s4032] sm:$0x1]
    %s4034 = scalar_lea.vmem %s9, 1
    %v4035 = vld [vmem:[%s4034] sm:$0x1]
    %v4036 = vsel %vm174, %v4030, 0.0
    %4037 = vadd.xlane.f32.xlu0 %v4036
    %v4038 = vpop.xlane.xlu0 %4037
    %v4039 = vsel %vm174, %v4031, 0.0
    %4040 = vadd.xlane.f32.xlu0 %v4039
    %v4041 = vpop.xlane.xlu0 %4040
    %v4042 = vmul.f32 %v4038, %v187
    %v4043 = vmul.f32 %v4041, %v187
    %v4044 = vsub.f32 %v4030, %v4042
    %v4045 = vsub.f32 %v4031, %v4043
    %v4046 = vmul.f32 %v4044, %v4044
    %v4047 = vmul.f32 %v4045, %v4045
    %v4048 = vsel %vm174, %v4046, 0.0
    %4049 = vadd.xlane.f32.xlu0 %v4048
    %v4050 = vpop.xlane.xlu0 %4049
    %v4051 = vsel %vm174, %v4047, 0.0
    %4052 = vadd.xlane.f32.xlu0 %v4051
    %v4053 = vpop.xlane.xlu0 %4052
    %v4054 = vmul.f32 %v4050, %v187
    %v4055 = vmul.f32 %v4053, %v187
    %v4056 = vadd.f32 %v4054, 1e-05
    %v4057 = vadd.f32 %v4055, 1e-05
    %v4058 = vrsqrt.pop %v4056
    %v4059 = vmul.f32 %v4058, %v4056
    %v4060 = vmul.f32 %v4059, %v4058
    %v4061 = vmul.f32 0.5, %v4060
    %v4062 = vsub.f32 1.5, %v4061
    %v4063 = vmul.f32 %v4058, %v4062
    %vm4064 = vweird.f32 %v4056
    %vm4065 = vweird.f32 %v4058
    %vm4066 = vmor %vm4064, %vm4065
    %v4067 = vsel %vm4066, %v4058, %v4063
    %v4068 = vrsqrt.pop %v4057
    %v4069 = vmul.f32 %v4068, %v4057
    %v4070 = vmul.f32 %v4069, %v4068
    %v4071 = vmul.f32 0.5, %v4070
    %v4072 = vsub.f32 1.5, %v4071
    %v4073 = vmul.f32 %v4068, %v4072
    %vm4074 = vweird.f32 %v4057
    %vm4075 = vweird.f32 %v4068
    %vm4076 = vmor %vm4074, %vm4075
    %v4077 = vsel %vm4076, %v4068, %v4073
    %v4078 = vmul.f32 %v4044, %v4067
    %v4079 = vmul.f32 %v4045, %v4077
    %v4081 = vperm.slane %v4033, 0
    %v4083 = vmul.f32 %v4078, %v4081
    %v4084 = vmul.f32 %v4079, %v4081
    %v4086 = vperm.slane %v4035, 0
    %v4088 = vadd.f32 %v4083, %v4086
    %v4089 = vadd.f32 %v4084, %v4086
    %s4091 = scalar_lea.vmem [#allocation11], 4
    %4092 = vst.msk [vmem:[%s4091] sm:$0x3] %vm517, %v3911
    %4093 = vrot.lane.b32.xlu0 %v3859, 96
    %v4094 = vpop.permute.xlu0 %4093
    %s4096 = scalar_lea.vmem [#allocation12], 4
    %4097 = vst.msk [vmem:[%s4096] sm:$0x3] %vm517, %v4094
    %4099 = vrot.lane.b32.xlu0 %v3865, 96
    %v4100 = vpop.permute.xlu0 %4099
    %s4102 = scalar_lea.vmem [#allocation14], 4
    %4103 = vst.msk [vmem:[%s4102] sm:$0x3] %vm517, %v4100
    %s4104 = scalar_lea.vmem [#allocation15], 4
    %4105 = vst.msk [vmem:[%s4104] sm:$0x3] %vm517, %v3841
    %s4106 = scalar_lea.vmem [#allocation11], 6
    %4107 = vst.msk [vmem:[%s4106] sm:$0x3] %vm517, %v4007
    %4108 = vrot.lane.b32.xlu0 %v3985, 96
    %v4109 = vpop.permute.xlu0 %4108
    %s4111 = scalar_lea.vmem [#allocation12], 6
    %4112 = vst.msk [vmem:[%s4111] sm:$0x3] %vm517, %v4109
    %4114 = vrot.lane.b32.xlu0 %v3991, 96
    %v4115 = vpop.permute.xlu0 %4114
    %s4117 = scalar_lea.vmem [#allocation14], 6
    %4118 = vst.msk [vmem:[%s4117] sm:$0x3] %vm517, %v4115
    %s4119 = scalar_lea.vmem [#allocation15], 6
    %4120 = vst.msk [vmem:[%s4119] sm:$0x3] %vm517, %v3967
    %v4121 = vld [vmem:[%s10] sm:$0xff]
    %v4122 = vld [vmem:[%s10 + $0x8] sm:$0xff]
    %v4123 = vld [vmem:[%s10 + $0x10] sm:$0xff]
    %v4124 = vld [vmem:[%s10 + $0x18] sm:$0xff]
    %v4125 = vld [vmem:[%s11] sm:$0x1]
    %v4127 = vperm.slane %v4125, 0
    %v4130 = vsel %vm174, %v4088, 0
    %v4133 = vsel %vm174, %v4089, 0
    %4135 = vmatpush.msra.mxu0 0.0
    %4136 = vmatpush.msra.mxu0 0.0
    %4137 = vmatpush.msra.mxu0 0.0
    %4138 = vmatpush.msra.mxu0 0.0
    %4139 = vmatpush.msra.mxu0 0.0
    %4140 = vmatpush.msra.mxu0 0.0
    %4141 = vmatpush.msra.mxu0 0.0
    %4142 = vmatpush.msra.mxu0 0.0
    %4143 = vmatpush.msra.mxu0 0.0
    %4144 = vmatpush.msra.mxu0 0.0
    %4145 = vmatpush.msra.mxu0 0.0
    %4146 = vmatpush.msra.mxu0 0.0
    %4147 = vmatpush.msra.mxu0 %v4124
    %4148 = vmatpush.msra.mxu0 %v4123
    %4149 = vmatpush.msra.mxu0 %v4122
    %4150 = vmatpush.msra.mxu0 %v4121
    %4151 = vmatmul.f32.gmra.mxu0 %v4130
    %v4152 = vpop.f32.mrf.mxu0
    %v4153 = vadd.f32 %v4127, %v4152
    %4154 = vmatmul.f32.gmra.mxu0 %v4133
    %v4155 = vpop.f32.mrf.mxu0
    %v4156 = vadd.f32 %v4127, %v4155
    %4157 = vdwg.mxu0
    %v4158 = vld [vmem:[%s12] sm:$0x1]
    %v4159 = vld [vmem:[%s13] sm:$0x1]
    %v4160 = vsel %vm142, %v4153, 0.0
    %4161 = vadd.xlane.f32.xlu0 %v4160
    %v4162 = vpop.xlane.xlu0 %4161
    %v4163 = vsel %vm142, %v4156, 0.0
    %4164 = vadd.xlane.f32.xlu0 %v4163
    %v4165 = vpop.xlane.xlu0 %4164
    %v4166 = vrcp.pop 16.0
    %v4167 = vmul.f32 16.0, %v4166
    %v4168 = vsub.f32 1.0, %v4167
    %v4169 = vmul.f32 %v4166, %v4168
    %v4170 = vadd.f32 %v4166, %v4169
    %vm4171 = vweird.f32 %v4166
    %v4172 = vsel %vm4171, %v4166, %v4170
    %v4173 = vmul.f32 %v4162, %v4172
    %v4174 = vmul.f32 %v4165, %v4172
    %v4175 = vsub.f32 %v4153, %v4173
    %v4176 = vsub.f32 %v4156, %v4174
    %v4177 = vmul.f32 %v4175, %v4175
    %v4178 = vmul.f32 %v4176, %v4176
    %v4179 = vsel %vm142, %v4177, 0.0
    %4180 = vadd.xlane.f32.xlu0 %v4179
    %v4181 = vpop.xlane.xlu0 %4180
    %v4182 = vsel %vm142, %v4178, 0.0
    %4183 = vadd.xlane.f32.xlu0 %v4182
    %v4184 = vpop.xlane.xlu0 %4183
    %v4185 = vmul.f32 %v4181, %v4172
    %v4186 = vmul.f32 %v4184, %v4172
    %v4187 = vadd.f32 %v4185, 1e-05
    %v4188 = vadd.f32 %v4186, 1e-05
    %v4189 = vrsqrt.pop %v4187
    %v4190 = vmul.f32 %v4189, %v4187
    %v4191 = vmul.f32 %v4190, %v4189
    %v4192 = vmul.f32 0.5, %v4191
    %v4193 = vsub.f32 1.5, %v4192
    %v4194 = vmul.f32 %v4189, %v4193
    %vm4195 = vweird.f32 %v4187
    %vm4196 = vweird.f32 %v4189
    %vm4197 = vmor %vm4195, %vm4196
    %v4198 = vsel %vm4197, %v4189, %v4194
    %v4199 = vrsqrt.pop %v4188
    %v4200 = vmul.f32 %v4199, %v4188
    %v4201 = vmul.f32 %v4200, %v4199
    %v4202 = vmul.f32 0.5, %v4201
    %v4203 = vsub.f32 1.5, %v4202
    %v4204 = vmul.f32 %v4199, %v4203
    %vm4205 = vweird.f32 %v4188
    %vm4206 = vweird.f32 %v4199
    %vm4207 = vmor %vm4205, %vm4206
    %v4208 = vsel %vm4207, %v4199, %v4204
    %v4209 = vmul.f32 %v4175, %v4198
    %v4210 = vmul.f32 %v4176, %v4208
    %v4212 = vperm.slane %v4158, 0
    %v4214 = vmul.f32 %v4209, %v4212
    %v4215 = vmul.f32 %v4210, %v4212
    %v4217 = vperm.slane %v4159, 0
    %v4219 = vadd.f32 %v4214, %v4217
    %v4220 = vadd.f32 %v4215, %v4217
    %v4221 = vtanh.pop %v4219
    %v4222 = vtanh.pop %v4220
    %v4223 = vld [vmem:[%s14] sm:$0xff]
    %v4224 = vld [vmem:[%s14 + $0x8] sm:$0xff]
    %v4225 = vld [vmem:[#allocation4] sm:$0x1]
    %v4227 = vperm.slane %v4225, 0
    %v4230 = vsel %vm142, %v4221, 0
    %v4233 = vsel %vm142, %v4222, 0
    %4235 = vmatpush.msra.mxu0 0.0
    %4236 = vmatpush.msra.mxu0 0.0
    %4237 = vmatpush.msra.mxu0 0.0
    %4238 = vmatpush.msra.mxu0 0.0
    %4239 = vmatpush.msra.mxu0 0.0
    %4240 = vmatpush.msra.mxu0 0.0
    %4241 = vmatpush.msra.mxu0 0.0
    %4242 = vmatpush.msra.mxu0 0.0
    %4243 = vmatpush.msra.mxu0 0.0
    %4244 = vmatpush.msra.mxu0 0.0
    %4245 = vmatpush.msra.mxu0 0.0
    %4246 = vmatpush.msra.mxu0 0.0
    %4247 = vmatpush.msra.mxu0 0.0
    %4248 = vmatpush.msra.mxu0 0.0
    %4249 = vmatpush.msra.mxu0 %v4224
    %4250 = vmatpush.msra.mxu0 %v4223
    %4251 = vmatmul.f32.gmra.mxu0 %v4230
    %v4252 = vpop.f32.mrf.mxu0
    %v4253 = vadd.f32 %v4227, %v4252
    %4254 = vmatmul.f32.gmra.mxu0 %v4233
    %v4255 = vpop.f32.mrf.mxu0
    %v4256 = vadd.f32 %v4227, %v4255
    %4257 = vdwg.mxu0
    %vm4258 = vcmask 7168
    %v4259 = vsel %vm4258, %v4253, -inf
    %v4260 = vsel %vm4258, %v4256, -inf
    %v4261 = vmax.f32 %v4259, %v4260
    %v4262 = vrot.slane %v4261, 4
    %v4263 = vmax.f32 %v4261, %v4262
    %v4264 = vrot.slane %v4263, 2
    %v4265 = vmax.f32 %v4263, %v4264
    %v4266 = vrot.slane %v4265, 1
    %v4267 = vmax.f32 %v4265, %v4266
    %v4268 = vsub.f32 %v4253, %v4267
    %v4269 = vsub.f32 %v4256, %v4267
    %v4270 = vmul.f32 %v4268, 1.442695
    %v4271 = vpow.pop %v4270
    %v4272 = vmul.f32 %v4269, 1.442695
    %v4273 = vpow.pop %v4272
    %v4274 = vlaneseq
    %v4275 = vand.u32 %v4274, 127
    %v4276 = vcvt.s32.f32 %v4275
    %v4277 = vmul.f32 %v4276, 0.5
    %v4278 = vfloor.f32 %v4277
    %v4279 = vmul.f32 %v4278, 2.0
    %v4280 = vsub.f32 %v4276, %v4279
    %vm4281 = vcmp.eq.f32.partialorder %v4280, %v118
    %v4282 = vsel %vm4281, 1.0, 0.0
    %v4283 = vmul.f32 %v122, 2.0
    %v4284 = vmul.f32 %v123, 2.0
    %v4285 = vsub.f32 %v118, %v4283
    %v4286 = vsub.f32 %v119, %v4284
    %vm4287 = vcmp.eq.f32.partialorder %v4285, %v4276
    %vm4288 = vcmp.eq.f32.partialorder %v4286, %v4276
    %v4289 = vsel %vm4287, 1.0, 0.0
    %v4290 = vsel %vm4288, 1.0, 0.0
    %v4292 = vsel %vm142, %v4282, 0
    %4294 = vmatpush.msra.mxu0 0.0
    %4295 = vmatpush.msra.mxu0 0.0
    %4296 = vmatpush.msra.mxu0 0.0
    %4297 = vmatpush.msra.mxu0 0.0
    %4298 = vmatpush.msra.mxu0 0.0
    %4299 = vmatpush.msra.mxu0 0.0
    %4300 = vmatpush.msra.mxu0 0.0
    %4301 = vmatpush.msra.mxu0 0.0
    %4302 = vmatpush.msra.mxu0 0.0
    %4303 = vmatpush.msra.mxu0 0.0
    %4304 = vmatpush.msra.mxu0 0.0
    %4305 = vmatpush.msra.mxu0 0.0
    %4306 = vmatpush.msra.mxu0 0.0
    %4307 = vmatpush.msra.mxu0 0.0
    %4308 = vmatpush.msra.mxu0 %v4273
    %4309 = vmatpush.msra.mxu0 %v4271
    %4310 = vmatmul.f32.gmra.mxu0 %v4292
    %v4311 = vpop.f32.mrf.mxu0
    %v4312 = vadd.f32 0.0, %v4311
    %4313 = vdwg.mxu0
    %vm4314 = vcmask 15360
    %v4316 = vsel %vm4314, %v4289, 0
    %v4319 = vsel %vm4314, %v4290, 0
    %vm4321 = vcmask 1041408
    %v4323 = vsel %vm4321, %v4312, 0
    %4325 = vmatpush.msra.mxu0 0.0
    %4326 = vmatpush.msra.mxu0 0.0
    %4327 = vmatpush.msra.mxu0 0.0
    %4328 = vmatpush.msra.mxu0 0.0
    %4329 = vmatpush.msra.mxu0 0.0
    %4330 = vmatpush.msra.mxu0 0.0
    %4331 = vmatpush.msra.mxu0 0.0
    %4332 = vmatpush.msra.mxu0 0.0
    %4333 = vmatpush.msra.mxu0 0.0
    %4334 = vmatpush.msra.mxu0 0.0
    %4335 = vmatpush.msra.mxu0 0.0
    %4336 = vmatpush.msra.mxu0 0.0
    %4337 = vmatpush.msra.mxu0 0.0
    %4338 = vmatpush.msra.mxu0 0.0
    %4339 = vmatpush.msra.mxu0 0.0
    %4340 = vmatpush.msra.mxu0 %v4323
    %4341 = vmatmul.f32.gmra.mxu0 %v4316
    %v4342 = vpop.f32.mrf.mxu0
    %v4343 = vadd.f32 0.0, %v4342
    %4344 = vmatmul.f32.gmra.mxu0 %v4319
    %v4345 = vpop.f32.mrf.mxu0
    %v4346 = vadd.f32 0.0, %v4345
    %4347 = vdwg.mxu0
    %v4348 = vrcp.pop %v4343
    %v4349 = vrcp.pop %v4346
    %v4350 = vmul.f32 %v4271, %v4348
    %v4351 = vmul.f32 %v4273, %v4349
    %4353 = vset.pattern.permute.xlu0 0
    %4354 = vperm.xlu0 %4353, %v4350
    %v4355 = vpop.permute.xlu0 %4354
    %4358 = vset.pattern.permute.xlu0 0
    %4359 = vperm.xlu0 %4358, %v4351
    %v4360 = vpop.permute.xlu0 %4359
    %v4362 = vmul.f32 %v4088, %v4355
    %v4363 = vmul.f32 %v4089, %v4360
    %vm4364 = vcmp.eq.f32.partialorder %v4362, %v4362
    %vm4365 = vcmp.eq.f32.partialorder %v4363, %v4363
    %v4366 = vand.u32 2147483647, %v4362
    %v4367 = vand.u32 2147483647, %v4363
    %vm4368 = vcmp.le.f32.partialorder %v4366, 3.4028235e+38
    %vm4369 = vcmp.le.f32.partialorder %v4367, 3.4028235e+38
    %vm4370 = vmand %vm4364, %vm4368
    %vm4371 = vmand %vm4365, %vm4369
    %v4372 = vsel %vm4370, %v4362, 0.0
    %v4373 = vsel %vm4371, %v4363, 0.0
    %4374 = vmatpush.msra.mxu0 0.0
    %4375 = vmatpush.msra.mxu0 0.0
    %4376 = vmatpush.msra.mxu0 0.0
    %4377 = vmatpush.msra.mxu0 0.0
    %4378 = vmatpush.msra.mxu0 0.0
    %4379 = vmatpush.msra.mxu0 0.0
    %4380 = vmatpush.msra.mxu0 0.0
    %4381 = vmatpush.msra.mxu0 0.0
    %4382 = vmatpush.msra.mxu0 0.0
    %4383 = vmatpush.msra.mxu0 0.0
    %4384 = vmatpush.msra.mxu0 0.0
    %4385 = vmatpush.msra.mxu0 0.0
    %4386 = vmatpush.msra.mxu0 0.0
    %4387 = vmatpush.msra.mxu0 0.0
    %4388 = vmatpush.msra.mxu0 %v4373
    %4389 = vmatpush.msra.mxu0 %v4372
    %4390 = vmatmul.f32.gmra.mxu0 %v4292
    %v4391 = vpop.f32.mrf.mxu0
    %v4392 = vadd.f32 0.0, %v4391
    %4393 = vdwg.mxu0
    %v4394 = vld [vmem:[%s16] sm:$0xff]
    %v4395 = vld [vmem:[%s16 + $0x8] sm:$0xff]
    %v4396 = vld [vmem:[%s16 + $0x10] sm:$0xff]
    %v4397 = vld [vmem:[%s16 + $0x18] sm:$0xff]
    %v4398 = vld [vmem:[%s17] sm:$0x1]
    %v4400 = vperm.slane %v4398, 0
    %v4403 = vsel %vm174, %v4392, 0
    %4405 = vmatpush.msra.mxu0 0.0
    %4406 = vmatpush.msra.mxu0 0.0
    %4407 = vmatpush.msra.mxu0 0.0
    %4408 = vmatpush.msra.mxu0 0.0
    %4409 = vmatpush.msra.mxu0 0.0
    %4410 = vmatpush.msra.mxu0 0.0
    %4411 = vmatpush.msra.mxu0 0.0
    %4412 = vmatpush.msra.mxu0 0.0
    %4413 = vmatpush.msra.mxu0 0.0
    %4414 = vmatpush.msra.mxu0 0.0
    %4415 = vmatpush.msra.mxu0 0.0
    %4416 = vmatpush.msra.mxu0 0.0
    %4417 = vmatpush.msra.mxu0 %v4397
    %4418 = vmatpush.msra.mxu0 %v4396
    %4419 = vmatpush.msra.mxu0 %v4395
    %4420 = vmatpush.msra.mxu0 %v4394
    %4421 = vmatmul.f32.gmra.mxu0 %v4403
    %v4422 = vpop.f32.mrf.mxu0
    %v4423 = vadd.f32 %v4400, %v4422
    %4424 = vdwg.mxu0
    %v4425 = vld [vmem:[%s18] sm:$0x1]
    %v4426 = vld [vmem:[%s19] sm:$0x1]
    %v4427 = vsel %vm517, %v4423, 0.0
    %4428 = vadd.xlane.f32.xlu0 %v4427
    %v4429 = vpop.xlane.xlu0 %4428
    %v4430 = vmul.f32 %v4429, %v187
    %v4431 = vsub.f32 %v4423, %v4430
    %v4432 = vmul.f32 %v4431, %v4431
    %v4433 = vsel %vm517, %v4432, 0.0
    %4434 = vadd.xlane.f32.xlu0 %v4433
    %v4435 = vpop.xlane.xlu0 %4434
    %v4436 = vmul.f32 %v4435, %v187
    %v4437 = vadd.f32 %v4436, 1e-05
    %v4438 = vrsqrt.pop %v4437
    %v4439 = vmul.f32 %v4438, %v4437
    %v4440 = vmul.f32 %v4439, %v4438
    %v4441 = vmul.f32 0.5, %v4440
    %v4442 = vsub.f32 1.5, %v4441
    %v4443 = vmul.f32 %v4438, %v4442
    %vm4444 = vweird.f32 %v4437
    %vm4445 = vweird.f32 %v4438
    %vm4446 = vmor %vm4444, %vm4445
    %v4447 = vsel %vm4446, %v4438, %v4443
    %v4448 = vmul.f32 %v4431, %v4447
    %v4450 = vperm.slane %v4425, 0
    %v4452 = vmul.f32 %v4448, %v4450
    %v4454 = vperm.slane %v4426, 0
    %v4456 = vadd.f32 %v4452, %v4454
    %v4457 = vmul.f32 %v4456, 0.5
    %v4458 = vmul.f32 %v4456, 0.044715
    %v4459 = vmul.f32 %v4458, %v4456
    %v4460 = vmul.f32 %v4459, %v4456
    %v4461 = vadd.f32 %v4456, %v4460
    %v4462 = vmul.f32 %v4461, 0.7978846
    %v4463 = vtanh.pop %v4462
    %v4464 = vadd.f32 %v4463, 1.0
    %v4465 = vmul.f32 %v4457, %v4464
    %v4466 = vld [vmem:[%s20] sm:$0xff]
    %v4467 = vld [vmem:[%s20 + $0x8] sm:$0xff]
    %v4468 = vld [vmem:[%s20 + $0x10] sm:$0xff]
    %v4469 = vld [vmem:[%s20 + $0x18] sm:$0xff]
    %v4470 = vld [vmem:[#allocation5] sm:$0x1]
    %v4472 = vperm.slane %v4470, 0
    %v4475 = vsel %vm174, %v4465, 0
    %4477 = vmatpush.msra.mxu0 0.0
    %4478 = vmatpush.msra.mxu0 0.0
    %4479 = vmatpush.msra.mxu0 0.0
    %4480 = vmatpush.msra.mxu0 0.0
    %4481 = vmatpush.msra.mxu0 0.0
    %4482 = vmatpush.msra.mxu0 0.0
    %4483 = vmatpush.msra.mxu0 0.0
    %4484 = vmatpush.msra.mxu0 0.0
    %4485 = vmatpush.msra.mxu0 0.0
    %4486 = vmatpush.msra.mxu0 0.0
    %4487 = vmatpush.msra.mxu0 0.0
    %4488 = vmatpush.msra.mxu0 0.0
    %4489 = vmatpush.msra.mxu0 %v4469
    %4490 = vmatpush.msra.mxu0 %v4468
    %4491 = vmatpush.msra.mxu0 %v4467
    %4492 = vmatpush.msra.mxu0 %v4466
    %4493 = vmatmul.f32.gmra.mxu0 %v4475
    %v4494 = vpop.f32.mrf.mxu0
    %v4495 = vadd.f32 %v4472, %v4494
    %4496 = vdwg.mxu0
    %v4497 = vmax.f32 %v4495, 0.0
    %v4498 = vmin.f32 %v4497, 24.0
    %vm4499 = vcmask 1024
    %4500 = vst.msk [vmem:[%s22] sm:$0x3] %vm4499, %v4498
    // Predicated region
    $region98: #{tpu_custom_call.1} parent=1 // pred_check
      _
    $region99: #{tpu_custom_call.1} parent=1 // pred_check_branch
      %4502 = sbr.rel (0) target = $region101
    $region100: #{tpu_custom_call.1} parent=1 // pred_region
      _
    $region101: #{tpu_custom_call.1} parent=1 // pred_fallthru
      _
    // Predicated region
    $region102: #{tpu_custom_call.1} parent=1 // pred_check
      _
    $region103: #{tpu_custom_call.1} parent=1 // pred_check_branch
      %4504 = sbr.rel (0) target = $region105
    $region104: #{tpu_custom_call.1} parent=1 // pred_region
      %4506 = vsyncadd [#allocation8], 0
      %s4507 = sshll.u32 [#allocation11], 4
      %s4508 = int_to_ptr.vmem [resolvable:$true] %s4507
      %s4509 = sshll.u32 %s23, 4
      %s4510 = int_to_ptr.hbm [resolvable:$true] %s4509
      %4515 = dma.vmem_to_hbm [thread:$0]  %s4508, 128, %s4510, [#allocation8], 32, 32, 2
    $region105: #{tpu_custom_call.1} parent=1 // pred_fallthru
      _
    // Predicated region
    $region106: #{tpu_custom_call.1} parent=1 // pred_check
      _
    $region107: #{tpu_custom_call.1} parent=1 // pred_check_branch
      %4517 = sbr.rel (0) target = $region109
    $region108: #{tpu_custom_call.1} parent=1 // pred_region
      %4519 = vsyncadd [#allocation13], 0
      %s4520 = sshll.u32 [#allocation12], 4
      %s4521 = int_to_ptr.vmem [resolvable:$true] %s4520
      %s4522 = sshll.u32 %s24, 4
      %s4523 = int_to_ptr.hbm [resolvable:$true] %s4522
      %4528 = dma.vmem_to_hbm [thread:$0]  %s4521, 128, %s4523, [#allocation13], 32, 32, 2
    $region109: #{tpu_custom_call.1} parent=1 // pred_fallthru
      _
    // Predicated region
    $region110: #{tpu_custom_call.1} parent=1 // pred_check
      _
    $region111: #{tpu_custom_call.1} parent=1 // pred_check_branch
      %4530 = sbr.rel (0) target = $region113
    $region112: #{tpu_custom_call.1} parent=1 // pred_region
      %4532 = vsyncadd [#allocation13], 0
      %s4533 = sshll.u32 [#allocation14], 4
      %s4534 = int_to_ptr.vmem [resolvable:$true] %s4533
      %s4535 = sshll.u32 %s25, 4
      %s4536 = int_to_ptr.hbm [resolvable:$true] %s4535
      %4541 = dma.vmem_to_hbm [thread:$0]  %s4534, 128, %s4536, [#allocation13], 32, 32, 2
    $region113: #{tpu_custom_call.1} parent=1 // pred_fallthru
      _
    // Predicated region
    $region114: #{tpu_custom_call.1} parent=1 // pred_check
      _
    $region115: #{tpu_custom_call.1} parent=1 // pred_check_branch
      %4543 = sbr.rel (0) target = $region117
    $region116: #{tpu_custom_call.1} parent=1 // pred_region
      %4545 = vsyncadd [#allocation16], 0
      %s4546 = sshll.u32 [#allocation15], 4
      %s4547 = int_to_ptr.vmem [resolvable:$true] %s4546
      %s4548 = sshll.u32 %s26, 4
      %s4549 = int_to_ptr.hbm [resolvable:$true] %s4548
      %4554 = dma.vmem_to_hbm [thread:$0]  %s4547, 128, %s4549, [#allocation16], 32, 32, 2
    $region117: #{tpu_custom_call.1} parent=1 // pred_fallthru
      _
    // Predicated region
    $region118: #{tpu_custom_call.1} parent=1 // pred_check
      _
    $region119: #{tpu_custom_call.1} parent=1 // pred_check_branch
      %4556 = sbr.rel (0) target = $region121
    $region120: #{tpu_custom_call.1} parent=1 // pred_region
      _
    $region121: #{tpu_custom_call.1} parent=1 // pred_fallthru
      _
    // Predicated region
    $region122: #{tpu_custom_call.1} parent=1 // pred_check
      _
    $region123: #{tpu_custom_call.1} parent=1 // pred_check_branch
      %4558 = sbr.rel (0) target = $region125
    $region124: #{tpu_custom_call.1} parent=1 // pred_region
      %4560 = dma.done [#allocation8], 128
    $region125: #{tpu_custom_call.1} parent=1 // pred_fallthru
      _
    // Predicated region
    $region126: #{tpu_custom_call.1} parent=1 // pred_check
      _
    $region127: #{tpu_custom_call.1} parent=1 // pred_check_branch
      %4562 = sbr.rel (0) target = $region129
    $region128: #{tpu_custom_call.1} parent=1 // pred_region
      %4564 = dma.done [#allocation13], 128
    $region129: #{tpu_custom_call.1} parent=1 // pred_fallthru
      _
    // Predicated region
    $region130: #{tpu_custom_call.1} parent=1 // pred_check
      _
    $region131: #{tpu_custom_call.1} parent=1 // pred_check_branch
      %4566 = sbr.rel (0) target = $region133
    $region132: #{tpu_custom_call.1} parent=1 // pred_region
      %4568 = dma.done [#allocation13], 128
    $region133: #{tpu_custom_call.1} parent=1 // pred_fallthru
      _
    // Predicated region
    $region134: #{tpu_custom_call.1} parent=1 // pred_check
      _
    $region135: #{tpu_custom_call.1} parent=1 // pred_check_branch
      %4570 = sbr.rel (0) target = $region137
    $region136: #{tpu_custom_call.1} parent=1 // pred_region
      %4572 = dma.done [#allocation16], 128
    $region137: #{tpu_custom_call.1} parent=1 // pred_fallthru
      _
    %4573 = vsyncpa [#allocation7], 1
    %4574 = vsyncpa [#allocation10], 1
    %4575 = vsyncpa [#allocation8], 1
    %4576 = vsyncpa [#allocation13], 1
    %4577 = vsyncpa [#allocation16], 1

</llo_original>
